<compile_context>
chip_gen: v6e
topology: v6e:2x2x1
jax: 0.10.0
libtpu: 0.0.40
codegen_flags: <defaults>
</compile_context>

<pallas_src>
import functools

import jax
import jax.numpy as jnp
import numpy as np
from jax import lax
from jax.experimental import pallas as pl
from jax.experimental.pallas import tpu as pltpu

_VMEM_LIMIT = 48 * 1024 * 1024   # <= v7x 64 MiB physical; headroom on v5e/v6e 128 MiB
_BN_EPS = 1e-5


def _mosaic(sem, vmem_limit):
    return pltpu.CompilerParams(dimension_semantics=tuple(sem),
                                vmem_limit_bytes=int(vmem_limit))


def _round_up(x, m):
    return (x + m - 1) // m * m


def _row_tile(M, target):
    """Row-tile size (multiple of 8) and padded row count for a (M, C) array."""
    tm = min(int(target), _round_up(M, 8))
    tm = max(8, tm - tm % 8)
    return tm, _round_up(M, tm)


def _pad_rows(x, rows):
    if x.shape[0] == rows:
        return x
    pad = [(0, rows - x.shape[0])] + [(0, 0)] * (x.ndim - 1)
    return jnp.pad(x, pad)


def _pick_row_tile(H, W, target_rows):
    """Rows per spatial tile: largest divisor of H with TR*W <= target_rows."""
    hi = min(H, max(1, int(target_rows) // max(W, 1)))
    for tr in range(hi, 0, -1):
        if H % tr == 0 and (tr * W) % 8 == 0:
            return tr
    for tr in range(hi, 0, -1):
        if H % tr == 0:
            return tr
    return H


# ----------------------------------------------------------------------------
# Pallas kernels
# ----------------------------------------------------------------------------

def _fused1x1_kernel(x_ref, w_ref, y_ref, st_ref):
    """1x1 complex conv tile: one stacked matmul + per-tile channel sum/sumsq."""
    y = jnp.dot(x_ref[...], w_ref[...], preferred_element_type=jnp.float32)
    y_ref[...] = y.astype(y_ref.dtype)
    st_ref[...] = jnp.concatenate(
        [jnp.sum(y, axis=0, keepdims=True),
         jnp.sum(y * y, axis=0, keepdims=True)], axis=0)


def _kxk_conv_kernel(x_ref, w_ref, s_ref, b_ref, y_ref, st_ref, xn_ref, *,
                     H, W, TR, kh, kw, cdt):
    """'same' kh x kw complex conv on one (row-tile + halo) block.

    x_ref : (Lt, 2*Cin) UN-normalized 1x1 output rows (garbage in pad positions)
    s/b   : (1, 2*Cin)  per-channel BN scale/shift of the INPUT (fused affine)
    w_ref : (kh*kw, 2*Cin, 2*Cout) stacked complex weight per tap
    y_ref : (TR*W, 2*Cout) un-normalized conv output; st_ref: (2, 2*Cout) stats
    xn_ref: VMEM scratch holding the normalized + pad-masked input block.
    """
    ph, pw = (kh - 1) // 2, (kw - 1) // 2
    TRW = TR * W
    Lt = xn_ref.shape[0]
    cout2 = y_ref.shape[-1]
    j = pl.program_id(1)

    # Fused input BatchNorm + ReLU, then zero every position that is not a real
    # image pixel (H-pad rows + flat halo) -- masks built from in-kernel iota.
    f = lax.broadcasted_iota(jnp.int32, (Lt, 1), 0)
    v = j * TRW + f                              # flat idx in per-image padded layout
    lo = ph * W + pw
    h_ok = jnp.logical_and(v >= lo, v < lo + H * W)
    xn = jnp.maximum(x_ref[...].astype(jnp.float32) * s_ref[...] + b_ref[...], 0.0)
    xn_ref[...] = jnp.where(h_ok, xn, 0.0)

    col = lax.broadcasted_iota(jnp.int32, (TRW, 1), 0) % W
    acc = jnp.zeros((TRW, cout2), jnp.float32)   # stays in registers
    for di in range(kh):
        for dj in range(kw):
            xs = xn_ref[pl.ds(di * W + dj, TRW), :]
            if dj != pw:                         # W wrap-around (center col always ok)
                c = col + (dj - pw)
                xs = jnp.where(jnp.logical_and(c >= 0, c < W), xs, 0.0)
            acc = acc + jnp.dot(xs.astype(cdt), w_ref[di * kw + dj],
                                preferred_element_type=jnp.float32)
    y_ref[...] = acc.astype(y_ref.dtype)
    st_ref[...] = jnp.concatenate(
        [jnp.sum(acc, axis=0, keepdims=True),
         jnp.sum(acc * acc, axis=0, keepdims=True)], axis=0)


def _pool_conv_kernel(x_ref, w_ref, y_ref, st_ref, xp_ref, *, H, W, TR, cdt):
    """3x3/s1/p1 max-pool fused with the following 1x1 complex conv (one block)."""
    TRW = TR * W
    Lt = xp_ref.shape[0]
    j = pl.program_id(1)

    f = lax.broadcasted_iota(jnp.int32, (Lt, 1), 0)
    v = j * TRW + f
    lo = W + 1                                    # ph*W + pw with ph = pw = 1
    h_ok = jnp.logical_and(v >= lo, v < lo + H * W)
    neg = jnp.float32(-jnp.inf)
    xp_ref[...] = jnp.where(h_ok, x_ref[...].astype(jnp.float32), neg)

    col = lax.broadcasted_iota(jnp.int32, (TRW, 1), 0) % W
    p = None
    for di in range(3):
        for dj in range(3):
            xs = xp_ref[pl.ds(di * W + dj, TRW), :]
            if dj != 1:
                c = col + (dj - 1)
                xs = jnp.where(jnp.logical_and(c >= 0, c < W), xs, neg)
            p = xs if p is None else jnp.maximum(p, xs)
    y = jnp.dot(p.astype(cdt), w_ref[...], preferred_element_type=jnp.float32)
    y_ref[...] = y.astype(y_ref.dtype)
    st_ref[...] = jnp.concatenate(
        [jnp.sum(y, axis=0, keepdims=True),
         jnp.sum(y * y, axis=0, keepdims=True)], axis=0)


def _affine_relu_kernel(y_ref, s_ref, b_ref, o_ref):
    """BatchNorm normalize (precomputed per-channel scale/shift) + ReLU."""
    y = y_ref[...].astype(jnp.float32)
    o_ref[...] = jnp.maximum(y * s_ref[...] + b_ref[...], 0.0)


# ----------------------------------------------------------------------------
# pallas_call wrappers
# ----------------------------------------------------------------------------

def complex_conv1x1(x_rows, w_stack, *, tm_target=512, vmem_limit=_VMEM_LIMIT):
    """x_rows: (M, 2*Cin) [real|imag]; w_stack: (2*Cin, 2*Cout)."""
    M, cin2 = x_rows.shape
    cout2 = w_stack.shape[1]
    tm, Mp = _row_tile(M, tm_target)
    G = Mp // tm
    y, st = pl.pallas_call(
        _fused1x1_kernel,
        out_shape=(jax.ShapeDtypeStruct((Mp, cout2), x_rows.dtype),
                   jax.ShapeDtypeStruct((G, 2, cout2), jnp.float32)),
        grid=(G,),
        in_specs=[pl.BlockSpec((tm, cin2), lambda i: (i, 0)),
                  pl.BlockSpec((cin2, cout2), lambda i: (0, 0))],
        out_specs=(pl.BlockSpec((tm, cout2), lambda i: (i, 0)),
                   pl.BlockSpec((None, 2, cout2), lambda i: (i, 0, 0))),
        compiler_params=_mosaic(("parallel",), vmem_limit),
    )(_pad_rows(x_rows, Mp), w_stack)
    return y[:M], st


def _unfold_row_tiles(x_rows, N, H, W, ph, pw, TR):
    """(N*H*W, C) -> (N, T, (TR+2ph)*W + 2pw, C): overlapping flat row-tile
    windows with halo.  Pad fill is irrelevant (kernels mask it via iota)."""
    C = x_rows.shape[-1]
    halo = ph * W + pw
    T = H // TR
    Lt = (TR + 2 * ph) * W + 2 * pw
    x = jnp.pad(x_rows.reshape(N, H * W, C), ((0, 0), (halo, halo), (0, 0)))
    tiles = [lax.slice_in_dim(x, j * TR * W, j * TR * W + Lt, axis=1)
             for j in range(T)]
    return jnp.stack(tiles, axis=1)


def complex_conv_kxk(x_rows, w_stack, in_scale, in_shift, N, H, W, kh, kw, *,
                     row_tile_target=512, vmem_limit=_VMEM_LIMIT):
    """'same' kh x kw complex conv with the input-side BN+ReLU fused in.

    x_rows: un-normalized 1x1 output rows (N*H*W, 2*Cin);
    w_stack: (kh*kw, 2*Cin, 2*Cout); in_scale/in_shift: (2*Cin,) f32.
    Returns (un-normalized conv rows (N*H*W, 2*Cout), per-tile stats)."""
    HW = H * W
    cin2 = x_rows.shape[-1]
    cout2 = w_stack.shape[-1]
    cdt = x_rows.dtype
    ph, pw = (kh - 1) // 2, (kw - 1) // 2
    TR = _pick_row_tile(H, W, row_tile_target)
    T = H // TR
    Lt = (TR + 2 * ph) * W + 2 * pw
    xt = _unfold_row_tiles(x_rows, N, H, W, ph, pw, TR)
    y, st = pl.pallas_call(
        functools.partial(_kxk_conv_kernel, H=H, W=W, TR=TR, kh=kh, kw=kw, cdt=cdt),
        out_shape=(jax.ShapeDtypeStruct((N, T, TR * W, cout2), cdt),
                   jax.ShapeDtypeStruct((N, T, 2, cout2), jnp.float32)),
        grid=(N, T),
        in_specs=[pl.BlockSpec((None, None, Lt, cin2), lambda n, j: (n, j, 0, 0)),
                  pl.BlockSpec((kh * kw, cin2, cout2), lambda n, j: (0, 0, 0)),
                  pl.BlockSpec((1, cin2), lambda n, j: (0, 0)),
                  pl.BlockSpec((1, cin2), lambda n, j: (0, 0))],
        out_specs=(pl.BlockSpec((None, None, TR * W, cout2),
                                lambda n, j: (n, j, 0, 0)),
                   pl.BlockSpec((None, None, 2, cout2),
                                lambda n, j: (n, j, 0, 0))),
        scratch_shapes=[pltpu.VMEM((Lt, cin2), jnp.float32)],
        compiler_params=_mosaic(("parallel", "parallel"), vmem_limit),
    )(xt, w_stack, in_scale[None, :].astype(jnp.float32),
      in_shift[None, :].astype(jnp.float32))
    return y.reshape(N * HW, cout2), st


def pool3x3_conv1x1(x_rows, w_stack, N, H, W, *, row_tile_target=512,
                    vmem_limit=_VMEM_LIMIT):
    """Branch 4: 3x3/s1/p1 max-pool + 1x1 complex conv, fused, row-tiled."""
    HW = H * W
    cin2 = x_rows.shape[-1]
    cout2 = w_stack.shape[-1]
    cdt = x_rows.dtype
    TR = _pick_row_tile(H, W, row_tile_target)
    T = H // TR
    Lt = (TR + 2) * W + 2
    xt = _unfold_row_tiles(x_rows, N, H, W, 1, 1, TR)
    y, st = pl.pallas_call(
        functools.partial(_pool_conv_kernel, H=H, W=W, TR=TR, cdt=cdt),
        out_shape=(jax.ShapeDtypeStruct((N, T, TR * W, cout2), cdt),
                   jax.ShapeDtypeStruct((N, T, 2, cout2), jnp.float32)),
        grid=(N, T),
        in_specs=[pl.BlockSpec((None, None, Lt, cin2), lambda n, j: (n, j, 0, 0)),
                  pl.BlockSpec((cin2, cout2), lambda n, j: (0, 0))],
        out_specs=(pl.BlockSpec((None, None, TR * W, cout2),
                                lambda n, j: (n, j, 0, 0)),
                   pl.BlockSpec((None, None, 2, cout2),
                                lambda n, j: (n, j, 0, 0))),
        scratch_shapes=[pltpu.VMEM((Lt, cin2), jnp.float32)],
        compiler_params=_mosaic(("parallel", "parallel"), vmem_limit),
    )(xt, w_stack)
    return y.reshape(N * HW, cout2), st


def bn_affine_relu(y_rows, scale, shift, *, tm_target=512, vmem_limit=_VMEM_LIMIT):
    """Gridded per-channel affine (precomputed BN scale/shift) + ReLU."""
    M, C = y_rows.shape
    tm, Mp = _row_tile(M, tm_target)
    out = pl.pallas_call(
        _affine_relu_kernel,
        out_shape=jax.ShapeDtypeStruct((Mp, C), jnp.float32),
        grid=(Mp // tm,),
        in_specs=[pl.BlockSpec((tm, C), lambda i: (i, 0)),
                  pl.BlockSpec((1, C), lambda i: (0, 0)),
                  pl.BlockSpec((1, C), lambda i: (0, 0))],
        out_specs=pl.BlockSpec((tm, C), lambda i: (i, 0)),
        compiler_params=_mosaic(("parallel",), vmem_limit),
    )(_pad_rows(y_rows, Mp), scale[None, :].astype(jnp.float32),
      shift[None, :].astype(jnp.float32))
    return out[:M]


def _bn_scale_shift(stats, gamma, beta, count):
    """Training-mode BatchNorm finalize (biased var, eps=1e-5) from fused
    per-tile (sum, sumsq) partials.  E[y^2]-E[y]^2 in f32 is fine at these
    scales; use a shifted two-pass for long-tailed real distributions."""
    C = stats.shape[-1]
    tot = stats.reshape(-1, 2, C).sum(axis=0)
    mean = tot[0] / count
    var = jnp.maximum(tot[1] / count - mean * mean, 0.0)
    scale = gamma * lax.rsqrt(var + _BN_EPS)
    shift = beta - mean * scale
    return scale, shift


# ----------------------------------------------------------------------------
# Parameter handling / glue
# ----------------------------------------------------------------------------

def _stack_complex_weight(wr, wi):
    """(Cout, Cin, kh, kw) x2 -> (kh*kw, 2*Cin, 2*Cout) so that
    [xr | xi] @ W_tap = [xr@wr - xi@wi | xr@wi + xi@wr]  (= CConv2d)."""
    cout, cin, kh, kw = wr.shape
    wr_t = wr.transpose(2, 3, 1, 0).reshape(kh * kw, cin, cout)
    wi_t = wi.transpose(2, 3, 1, 0).reshape(kh * kw, cin, cout)
    top = jnp.concatenate([wr_t, wi_t], axis=2)      # rows fed by x_real
    bot = jnp.concatenate([-wi_t, wr_t], axis=2)     # rows fed by x_imag
    return jnp.concatenate([top, bot], axis=1)


def _bn_gamma(p):
    return jnp.concatenate([p["gr"], p["gi"]])


def _bn_beta(p):
    return jnp.concatenate([p["betar"], p["betai"]])


def init_conv_block_params(key, cin, cout, kh, kw):
    ks = jax.random.split(key, 4)
    scale = 1.0 / np.sqrt(cin * kh * kw)
    return dict(
        wr=jax.random.normal(ks[0], (cout, cin, kh, kw), jnp.float32) * scale,
        wi=jax.random.normal(ks[1], (cout, cin, kh, kw), jnp.float32) * scale,
        br=jax.random.normal(ks[2], (cout,), jnp.float32) * scale,
        bi=jax.random.normal(ks[3], (cout,), jnp.float32) * scale,
        # PyTorch BatchNorm2d default affine init: weight=1, bias=0
        gr=jnp.ones((cout,), jnp.float32), betar=jnp.zeros((cout,), jnp.float32),
        gi=jnp.ones((cout,), jnp.float32), betai=jnp.zeros((cout,), jnp.float32),
    )


def init_inception_params(key, in_channels, out_1x1, red_3x3, out_3x3,
                          red_5x5, out_5x5, out_1x1pool):
    ks = jax.random.split(key, 6)
    return dict(
        b1=init_conv_block_params(ks[0], in_channels, out_1x1, 1, 1),
        b2a=init_conv_block_params(ks[1], in_channels, red_3x3, 1, 1),
        b2b=init_conv_block_params(ks[2], red_3x3, out_3x3, 3, 3),
        b3a=init_conv_block_params(ks[3], in_channels, red_5x5, 1, 1),
        b3b=init_conv_block_params(ks[4], red_5x5, out_5x5, 5, 5),
        b4=init_conv_block_params(ks[5], in_channels, out_1x1pool, 1, 1),
    )


def complex_inception_forward(x, params, *, compute_dtype=jnp.float32,
                              tm_target=512, row_tile_target=512,
                              vmem_limit_bytes=_VMEM_LIMIT):
    """x: (N, C_in, H, W, 2) -> (N, out_1x1+out_3x3+out_5x5+out_1x1pool, H, W, 2).

    compute_dtype: dtype of matmul operands / intermediate activations
    (bf16 recommended on v6e/v7x; all accumulation/BN stays f32)."""
    N, cin, H, W, _ = x.shape
    M = N * H * W
    cdt = compute_dtype

    # NCHW+complex -> stacked NHWC rows [real | imag] (channels on the lane axis).
    xr = x[..., 0].transpose(0, 2, 3, 1)
    xi = x[..., 1].transpose(0, 2, 3, 1)
    xs = jnp.concatenate([xr, xi], axis=-1).reshape(M, 2 * cin).astype(cdt)

    p1, p2a, p2b = params["b1"], params["b2a"], params["b2b"]
    p3a, p3b, p4 = params["b3a"], params["b3b"], params["b4"]
    o1, r3 = p1["wr"].shape[0], p2a["wr"].shape[0]
    o3, r5 = p2b["wr"].shape[0], p3a["wr"].shape[0]
    o5, op4 = p3b["wr"].shape[0], p4["wr"].shape[0]

    # NOTE: conv biases (br/bi) are NOT applied -- a per-channel constant added
    # before training-mode BatchNorm is exactly cancelled by the mean subtraction.

    # ---- fused 1x1 convs: branch1 / branch2-reduce / branch3-reduce ----------
    w_f = jnp.concatenate([_stack_complex_weight(p1["wr"], p1["wi"])[0],
                           _stack_complex_weight(p2a["wr"], p2a["wi"])[0],
                           _stack_complex_weight(p3a["wr"], p3a["wi"])[0]],
                          axis=1).astype(cdt)
    y_f, st_f = complex_conv1x1(xs, w_f, tm_target=tm_target,
                                vmem_limit=vmem_limit_bytes)
    sc_f, sh_f = _bn_scale_shift(
        st_f,
        jnp.concatenate([_bn_gamma(p1), _bn_gamma(p2a), _bn_gamma(p3a)]),
        jnp.concatenate([_bn_beta(p1), _bn_beta(p2a), _bn_beta(p3a)]), M)
    c1, c2 = 2 * o1, 2 * r3

    # branch 1: BN + ReLU of its own channel slice only (final output).
    b1 = bn_affine_relu(y_f[:, :c1], sc_f[:c1], sh_f[:c1],
                        tm_target=tm_target, vmem_limit=vmem_limit_bytes)

    # ---- branch 2: 3x3 conv, input BN+ReLU fused into the conv kernel --------
    y2, st2 = complex_conv_kxk(
        y_f[:, c1:c1 + c2],
        _stack_complex_weight(p2b["wr"], p2b["wi"]).astype(cdt),
        sc_f[c1:c1 + c2], sh_f[c1:c1 + c2], N, H, W, 3, 3,
        row_tile_target=row_tile_target, vmem_limit=vmem_limit_bytes)
    sc2, sh2 = _bn_scale_shift(st2, _bn_gamma(p2b), _bn_beta(p2b), M)
    b2 = bn_affine_relu(y2, sc2, sh2, tm_target=tm_target,
                        vmem_limit=vmem_limit_bytes)

    # ---- branch 3: 5x5 conv, input BN+ReLU fused into the conv kernel --------
    y3, st3 = complex_conv_kxk(
        y_f[:, c1 + c2:],
        _stack_complex_weight(p3b["wr"], p3b["wi"]).astype(cdt),
        sc_f[c1 + c2:], sh_f[c1 + c2:], N, H, W, 5, 5,
        row_tile_target=row_tile_target, vmem_limit=vmem_limit_bytes)
    sc3, sh3 = _bn_scale_shift(st3, _bn_gamma(p3b), _bn_beta(p3b), M)
    b3 = bn_affine_relu(y3, sc3, sh3, tm_target=tm_target,
                        vmem_limit=vmem_limit_bytes)

    # ---- branch 4: fused 3x3 max-pool + 1x1 conv -------------------------------
    y4, st4 = pool3x3_conv1x1(
        xs, _stack_complex_weight(p4["wr"], p4["wi"])[0].astype(cdt), N, H, W,
        row_tile_target=row_tile_target, vmem_limit=vmem_limit_bytes)
    sc4, sh4 = _bn_scale_shift(st4, _bn_gamma(p4), _bn_beta(p4), M)
    b4 = bn_affine_relu(y4, sc4, sh4, tm_target=tm_target,
                        vmem_limit=vmem_limit_bytes)

    # ---- assemble public NCHW + complex layout ---------------------------------
    parts = [(b1, o1), (b2, o3), (b3, o5), (b4, op4)]
    real = jnp.concatenate([b[:, :c] for b, c in parts], axis=1)
    imag = jnp.concatenate([b[:, c:] for b, c in parts], axis=1)
    ct = o1 + o3 + o5 + op4
    real = real.reshape(N, H, W, ct).transpose(0, 3, 1, 2)
    imag = imag.reshape(N, H, W, ct).transpose(0, 3, 1, 2)
    return jnp.stack([real, imag], axis=-1)


# ----------------------------------------------------------------------------
# Pure-JAX reference (correctness check only; keeps the redundant biases)
# ----------------------------------------------------------------------------

def _conv2d_ref(x, w, b, padding):
    y = lax.conv_general_dilated(
        x, w, window_strides=(1, 1),
        padding=((padding[0], padding[0]), (padding[1], padding[1])),
        dimension_numbers=("NCHW", "OIHW", "NCHW"))
    return y + b[None, :, None, None]


def _cconv_block_ref(xr, xi, p, padding):
    cr = _conv2d_ref(xr, p["wr"], p["br"], padding) - _conv2d_ref(xi, p["wi"], p["bi"], padding)
    ci = _conv2d_ref(xr, p["wi"], p["bi"], padding) + _conv2d_ref(xi, p["wr"], p["br"], padding)

    def bn(x, g, b):
        m = x.mean(axis=(0, 2, 3), keepdims=True)
        v = ((x - m) ** 2).mean(axis=(0, 2, 3), keepdims=True)
        return (x - m) / jnp.sqrt(v + 1e-5) * g[None, :, None, None] + b[None, :, None, None]

    return (jnp.maximum(bn(cr, p["gr"], p["betar"]), 0.0),
            jnp.maximum(bn(ci, p["gi"], p["betai"]), 0.0))


def _maxpool_ref(x):
    return lax.reduce_window(x, -jnp.inf, lax.max, (1, 1, 3, 3), (1, 1, 1, 1),
                             [(0, 0), (0, 0), (1, 1), (1, 1)])


def complex_inception_ref(x, params):
    xr, xi = x[..., 0], x[..., 1]
    b1r, b1i = _cconv_block_ref(xr, xi, params["b1"], (0, 0))
    tr, ti = _cconv_block_ref(xr, xi, params["b2a"], (0, 0))
    b2r, b2i = _cconv_block_ref(tr, ti, params["b2b"], (1, 1))
    tr, ti = _cconv_block_ref(xr, xi, params["b3a"], (0, 0))
    b3r, b3i = _cconv_block_ref(tr, ti, params["b3b"], (2, 2))
    pr, pi = _maxpool_ref(xr), _maxpool_ref(xi)
    b4r, b4i = _cconv_block_ref(pr, pi, params["b4"], (0, 0))
    outr = jnp.concatenate([b1r, b2r, b3r, b4r], axis=1)
    outi = jnp.concatenate([b1i, b2i, b3i, b4i], axis=1)
    return jnp.stack([outr, outi], axis=-1)


# ----------------------------------------------------------------------------

if __name__ == "__main__":
    key = jax.random.PRNGKey(0)
    kx, kp = jax.random.split(key)

    # Small shapes: batch=2, in_channels=4, spatial=16x16, complex last axis.
    N, C_in, H, W = 2, 4, 16, 16
    out_1x1, red_3x3, out_3x3, red_5x5, out_5x5, out_1x1pool = 4, 4, 8, 2, 4, 4

    x = jax.random.normal(kx, (N, C_in, H, W, 2), jnp.float32)
    params = init_inception_params(kp, C_in, out_1x1, red_3x3, out_3x3,
                                   red_5x5, out_5x5, out_1x1pool)

    expected_channels = out_1x1 + out_3x3 + out_5x5 + out_1x1pool
    ref = complex_inception_ref(x, params)

    # f32 run with small row tiles (4 spatial tiles per image) exercises the
    # row-tiled halo/mask path; checked against the reference at 1e-3.
    fwd32 = jax.jit(functools.partial(complex_inception_forward,
                                      compute_dtype=jnp.float32,
                                      row_tile_target=64))
    out32 = jax.block_until_ready(fwd32(x, params))
    assert out32.shape == (N, expected_channels, H, W, 2), out32.shape
    np.testing.assert_allclose(np.asarray(out32), np.asarray(ref),
                               rtol=1e-3, atol=1e-3)

    # bf16 matmul operands (f32 accumulation / stats / BN), default tiling.
    fwd16 = jax.jit(functools.partial(complex_inception_forward,
                                      compute_dtype=jnp.bfloat16))
    out16 = jax.block_until_ready(fwd16(x, params))
    assert out16.shape == (N, expected_channels, H, W, 2), out16.shape
    np.testing.assert_allclose(np.asarray(out16), np.asarray(ref),
                               rtol=1e-1, atol=1e-1)

    print("KERNEL_OK")
</pallas_src>

<mosaic_0001>
module attributes {stable_mosaic.version = 11 : i64} {
  func.func @_pool_conv_kernel(%arg0: i32, %arg1: i32, %arg2: memref<1x1x98x8xf32, #tpu.memory_space<vmem>>, %arg3: memref<8x8xf32, #tpu.memory_space<vmem>>, %arg4: memref<1x1x64x8xf32, #tpu.memory_space<vmem>>, %arg5: memref<1x1x2x8xf32, #tpu.memory_space<vmem>>, %arg6: memref<98x8xf32, #tpu.memory_space<vmem>>) attributes {dimension_semantics = [#tpu.dimension_semantics<parallel>, #tpu.dimension_semantics<parallel>], iteration_bounds = array<i64: 2, 4>, scalar_prefetch = 0 : i64, scratch_operands = 1 : i64, tpu.core_type = #tpu.core_type<tc>, window_params = [{transform_indices = @transform_0, window_bounds = array<i64: 1, 1, 98, 8>}, {pipeline_mode = #tpu.pipeline_mode<synchronous>, transform_indices = @transform_1, window_bounds = array<i64: 8, 8>}, {transform_indices = @transform_2, window_bounds = array<i64: 1, 1, 64, 8>}, {transform_indices = @transform_3, window_bounds = array<i64: 1, 1, 2, 8>}]} {
    %0 = tpu.iota {dimensions = array<i32: 0>} : vector<98x1xi32>
    %c64_i32 = arith.constant 64 : i32
    %1 = arith.muli %arg1, %c64_i32 : i32
    %2 = vector.broadcast %1 : i32 to vector<98x1xi32>
    %3 = arith.addi %2, %0 : vector<98x1xi32>
    %c17_i32 = arith.constant 17 : i32
    %4 = vector.broadcast %c17_i32 : i32 to vector<98x1xi32>
    %5 = arith.cmpi sge, %3, %4 : vector<98x1xi32>
    %c273_i32 = arith.constant 273 : i32
    %6 = vector.broadcast %c273_i32 : i32 to vector<98x1xi32>
    %7 = arith.cmpi slt, %3, %6 : vector<98x1xi32>
    %8 = arith.andi %5, %7 : vector<98x1xi1>
    %c0 = arith.constant 0 : index
    %c0_0 = arith.constant 0 : index
    %c0_1 = arith.constant 0 : index
    %c0_2 = arith.constant 0 : index
    %9 = vector.load %arg2[%c0, %c0_0, %c0_1, %c0_2] : memref<1x1x98x8xf32, #tpu.memory_space<vmem>>, vector<1x1x98x8xf32>
    %10 = vector.shape_cast %9 : vector<1x1x98x8xf32> to vector<98x8xf32>
    %cst = arith.constant 0xFF800000 : f32
    %11 = vector.shape_cast %8 : vector<98x1xi1> to vector<98x1xi1>
    %12 = vector.broadcast %11 : vector<98x1xi1> to vector<98x8xi1>
    %13 = vector.broadcast %cst : f32 to vector<98x8xf32>
    %14 = arith.select %12, %10, %13 : vector<98x8xi1>, vector<98x8xf32>
    %c0_3 = arith.constant 0 : index
    %c0_4 = arith.constant 0 : index
    %15 = vector.load %arg6[%c0_3, %c0_4] : memref<98x8xf32, #tpu.memory_space<vmem>>, vector<98x8xf32>
    tpu.vector_store %arg6[%c0_3, %c0_4], %14 {strides = array<i32>} : memref<98x8xf32, #tpu.memory_space<vmem>>, vector<98x8xf32>,
    %16 = tpu.iota {dimensions = array<i32: 0>} : vector<64x1xi32>
    %c16_i32 = arith.constant 16 : i32
    %c0_i32 = arith.constant 0 : i32
    %17 = arith.cmpi eq, %c16_i32, %c0_i32 : i32
    %c1_i32 = arith.constant 1 : i32
    %18 = arith.select %17, %c1_i32, %c16_i32 : i32
    %19 = vector.broadcast %18 : i32 to vector<64x1xi32>
    %20 = arith.remsi %16, %19 : vector<64x1xi32>
    %c0_i32_5 = arith.constant 0 : i32
    %21 = vector.broadcast %c0_i32_5 : i32 to vector<64x1xi32>
    %22 = arith.cmpi ne, %20, %21 : vector<64x1xi32>
    %c0_i32_6 = arith.constant 0 : i32
    %23 = vector.broadcast %c0_i32_6 : i32 to vector<64x1xi32>
    %24 = arith.cmpi slt, %20, %23 : vector<64x1xi32>
    %c0_i32_7 = arith.constant 0 : i32
    %25 = arith.cmpi slt, %18, %c0_i32_7 : i32
    %26 = vector.broadcast %25 : i1 to vector<64x1xi1>
    %27 = vector.broadcast %26 : vector<64x1xi1> to vector<64x1xi1>
    %28 = arith.xori %24, %27 : vector<64x1xi1>
    %29 = arith.andi %28, %22 : vector<64x1xi1>
    %30 = vector.broadcast %18 : i32 to vector<64x1xi32>
    %31 = arith.addi %20, %30 : vector<64x1xi32>
    %32 = arith.select %29, %31, %20 : vector<64x1xi1>, vector<64x1xi32>
    %c0_8 = arith.constant 0 : index
    %c0_9 = arith.constant 0 : index
    %33 = vector.load %arg6[%c0_8, %c0_9] : memref<98x8xf32, #tpu.memory_space<vmem>>, vector<64x8xf32>
    %c-1_i32 = arith.constant -1 : i32
    %34 = vector.broadcast %c-1_i32 : i32 to vector<64x1xi32>
    %35 = arith.addi %32, %34 : vector<64x1xi32>
    %c0_i32_10 = arith.constant 0 : i32
    %36 = vector.broadcast %c0_i32_10 : i32 to vector<64x1xi32>
    %37 = arith.cmpi sge, %35, %36 : vector<64x1xi32>
    %c16_i32_11 = arith.constant 16 : i32
    %38 = vector.broadcast %c16_i32_11 : i32 to vector<64x1xi32>
    %39 = arith.cmpi slt, %35, %38 : vector<64x1xi32>
    %40 = arith.andi %37, %39 : vector<64x1xi1>
    %cst_12 = arith.constant 0xFF800000 : f32
    %41 = vector.shape_cast %40 : vector<64x1xi1> to vector<64x1xi1>
    %42 = vector.broadcast %41 : vector<64x1xi1> to vector<64x8xi1>
    %43 = vector.broadcast %cst_12 : f32 to vector<64x8xf32>
    %44 = arith.select %42, %33, %43 : vector<64x8xi1>, vector<64x8xf32>
    %c1 = arith.constant 1 : index
    %c0_13 = arith.constant 0 : index
    %45 = vector.load %arg6[%c1, %c0_13] : memref<98x8xf32, #tpu.memory_space<vmem>>, vector<64x8xf32>
    %46 = arith.maximumf %44, %45 : vector<64x8xf32>
    %c2 = arith.constant 2 : index
    %c0_14 = arith.constant 0 : index
    %47 = vector.load %arg6[%c2, %c0_14] : memref<98x8xf32, #tpu.memory_space<vmem>>, vector<64x8xf32>
    %c1_i32_15 = arith.constant 1 : i32
    %48 = vector.broadcast %c1_i32_15 : i32 to vector<64x1xi32>
    %49 = arith.addi %32, %48 : vector<64x1xi32>
    %c0_i32_16 = arith.constant 0 : i32
    %50 = vector.broadcast %c0_i32_16 : i32 to vector<64x1xi32>
    %51 = arith.cmpi sge, %49, %50 : vector<64x1xi32>
    %c16_i32_17 = arith.constant 16 : i32
    %52 = vector.broadcast %c16_i32_17 : i32 to vector<64x1xi32>
    %53 = arith.cmpi slt, %49, %52 : vector<64x1xi32>
    %54 = arith.andi %51, %53 : vector<64x1xi1>
    %cst_18 = arith.constant 0xFF800000 : f32
    %55 = vector.shape_cast %54 : vector<64x1xi1> to vector<64x1xi1>
    %56 = vector.broadcast %55 : vector<64x1xi1> to vector<64x8xi1>
    %57 = vector.broadcast %cst_18 : f32 to vector<64x8xf32>
    %58 = arith.select %56, %47, %57 : vector<64x8xi1>, vector<64x8xf32>
    %59 = arith.maximumf %46, %58 : vector<64x8xf32>
    %c16 = arith.constant 16 : index
    %c0_19 = arith.constant 0 : index
    %60 = vector.load %arg6[%c16, %c0_19] : memref<98x8xf32, #tpu.memory_space<vmem>>, vector<64x8xf32>
    %c-1_i32_20 = arith.constant -1 : i32
    %61 = vector.broadcast %c-1_i32_20 : i32 to vector<64x1xi32>
    %62 = arith.addi %32, %61 : vector<64x1xi32>
    %c0_i32_21 = arith.constant 0 : i32
    %63 = vector.broadcast %c0_i32_21 : i32 to vector<64x1xi32>
    %64 = arith.cmpi sge, %62, %63 : vector<64x1xi32>
    %c16_i32_22 = arith.constant 16 : i32
    %65 = vector.broadcast %c16_i32_22 : i32 to vector<64x1xi32>
    %66 = arith.cmpi slt, %62, %65 : vector<64x1xi32>
    %67 = arith.andi %64, %66 : vector<64x1xi1>
    %cst_23 = arith.constant 0xFF800000 : f32
    %68 = vector.shape_cast %67 : vector<64x1xi1> to vector<64x1xi1>
    %69 = vector.broadcast %68 : vector<64x1xi1> to vector<64x8xi1>
    %70 = vector.broadcast %cst_23 : f32 to vector<64x8xf32>
    %71 = arith.select %69, %60, %70 : vector<64x8xi1>, vector<64x8xf32>
    %72 = arith.maximumf %59, %71 : vector<64x8xf32>
    %c17 = arith.constant 17 : index
    %c0_24 = arith.constant 0 : index
    %73 = vector.load %arg6[%c17, %c0_24] : memref<98x8xf32, #tpu.memory_space<vmem>>, vector<64x8xf32>
    %74 = arith.maximumf %72, %73 : vector<64x8xf32>
    %c18 = arith.constant 18 : index
    %c0_25 = arith.constant 0 : index
    %75 = vector.load %arg6[%c18, %c0_25] : memref<98x8xf32, #tpu.memory_space<vmem>>, vector<64x8xf32>
    %c1_i32_26 = arith.constant 1 : i32
    %76 = vector.broadcast %c1_i32_26 : i32 to vector<64x1xi32>
    %77 = arith.addi %32, %76 : vector<64x1xi32>
    %c0_i32_27 = arith.constant 0 : i32
    %78 = vector.broadcast %c0_i32_27 : i32 to vector<64x1xi32>
    %79 = arith.cmpi sge, %77, %78 : vector<64x1xi32>
    %c16_i32_28 = arith.constant 16 : i32
    %80 = vector.broadcast %c16_i32_28 : i32 to vector<64x1xi32>
    %81 = arith.cmpi slt, %77, %80 : vector<64x1xi32>
    %82 = arith.andi %79, %81 : vector<64x1xi1>
    %cst_29 = arith.constant 0xFF800000 : f32
    %83 = vector.shape_cast %82 : vector<64x1xi1> to vector<64x1xi1>
    %84 = vector.broadcast %83 : vector<64x1xi1> to vector<64x8xi1>
    %85 = vector.broadcast %cst_29 : f32 to vector<64x8xf32>
    %86 = arith.select %84, %75, %85 : vector<64x8xi1>, vector<64x8xf32>
    %87 = arith.maximumf %74, %86 : vector<64x8xf32>
    %c32 = arith.constant 32 : index
    %c0_30 = arith.constant 0 : index
    %88 = vector.load %arg6[%c32, %c0_30] : memref<98x8xf32, #tpu.memory_space<vmem>>, vector<64x8xf32>
    %c-1_i32_31 = arith.constant -1 : i32
    %89 = vector.broadcast %c-1_i32_31 : i32 to vector<64x1xi32>
    %90 = arith.addi %32, %89 : vector<64x1xi32>
    %c0_i32_32 = arith.constant 0 : i32
    %91 = vector.broadcast %c0_i32_32 : i32 to vector<64x1xi32>
    %92 = arith.cmpi sge, %90, %91 : vector<64x1xi32>
    %c16_i32_33 = arith.constant 16 : i32
    %93 = vector.broadcast %c16_i32_33 : i32 to vector<64x1xi32>
    %94 = arith.cmpi slt, %90, %93 : vector<64x1xi32>
    %95 = arith.andi %92, %94 : vector<64x1xi1>
    %cst_34 = arith.constant 0xFF800000 : f32
    %96 = vector.shape_cast %95 : vector<64x1xi1> to vector<64x1xi1>
    %97 = vector.broadcast %96 : vector<64x1xi1> to vector<64x8xi1>
    %98 = vector.broadcast %cst_34 : f32 to vector<64x8xf32>
    %99 = arith.select %97, %88, %98 : vector<64x8xi1>, vector<64x8xf32>
    %100 = arith.maximumf %87, %99 : vector<64x8xf32>
    %c33 = arith.constant 33 : index
    %c0_35 = arith.constant 0 : index
    %101 = vector.load %arg6[%c33, %c0_35] : memref<98x8xf32, #tpu.memory_space<vmem>>, vector<64x8xf32>
    %102 = arith.maximumf %100, %101 : vector<64x8xf32>
    %c34 = arith.constant 34 : index
    %c0_36 = arith.constant 0 : index
    %103 = vector.load %arg6[%c34, %c0_36] : memref<98x8xf32, #tpu.memory_space<vmem>>, vector<64x8xf32>
    %c1_i32_37 = arith.constant 1 : i32
    %104 = vector.broadcast %c1_i32_37 : i32 to vector<64x1xi32>
    %105 = arith.addi %32, %104 : vector<64x1xi32>
    %c0_i32_38 = arith.constant 0 : i32
    %106 = vector.broadcast %c0_i32_38 : i32 to vector<64x1xi32>
    %107 = arith.cmpi sge, %105, %106 : vector<64x1xi32>
    %c16_i32_39 = arith.constant 16 : i32
    %108 = vector.broadcast %c16_i32_39 : i32 to vector<64x1xi32>
    %109 = arith.cmpi slt, %105, %108 : vector<64x1xi32>
    %110 = arith.andi %107, %109 : vector<64x1xi1>
    %cst_40 = arith.constant 0xFF800000 : f32
    %111 = vector.shape_cast %110 : vector<64x1xi1> to vector<64x1xi1>
    %112 = vector.broadcast %111 : vector<64x1xi1> to vector<64x8xi1>
    %113 = vector.broadcast %cst_40 : f32 to vector<64x8xf32>
    %114 = arith.select %112, %103, %113 : vector<64x8xi1>, vector<64x8xf32>
    %115 = arith.maximumf %102, %114 : vector<64x8xf32>
    %c0_41 = arith.constant 0 : index
    %c0_42 = arith.constant 0 : index
    %116 = vector.load %arg3[%c0_41, %c0_42] : memref<8x8xf32, #tpu.memory_space<vmem>>, vector<8x8xf32>
    %cst_43 = arith.constant dense<0.000000e+00> : vector<64x8xf32>
    %117 = tpu.matmul %115, %116, %cst_43 {dimension_numbers = #tpu.dot_dimension_numbers<[1], [0], [0], [1], [0, 0, 1, 1], [], []>} : vector<64x8xf32>, vector<8x8xf32>, vector<64x8xf32> -> vector<64x8xf32>
    %c0_44 = arith.constant 0 : index
    %c0_45 = arith.constant 0 : index
    %c0_46 = arith.constant 0 : index
    %c0_47 = arith.constant 0 : index
    %118 = vector.load %arg4[%c0_44, %c0_45, %c0_46, %c0_47] : memref<1x1x64x8xf32, #tpu.memory_space<vmem>>, vector<1x1x64x8xf32>
    %119 = vector.shape_cast %118 : vector<1x1x64x8xf32> to vector<64x8xf32>
    %120 = vector.shape_cast %117 : vector<64x8xf32> to vector<1x1x64x8xf32>
    tpu.vector_store %arg4[%c0_44, %c0_45, %c0_46, %c0_47], %120 {strides = array<i32>} : memref<1x1x64x8xf32, #tpu.memory_space<vmem>>, vector<1x1x64x8xf32>,
    %cst_48 = arith.constant dense<0.000000e+00> : vector<8xf32>
    %121 = vector.multi_reduction <add>, %117, %cst_48 [0] : vector<64x8xf32> to vector<8xf32>
    %122 = vector.shape_cast %121 : vector<8xf32> to vector<1x8xf32>
    %123 = arith.mulf %117, %117 : vector<64x8xf32>
    %cst_49 = arith.constant dense<0.000000e+00> : vector<8xf32>
    %124 = vector.multi_reduction <add>, %123, %cst_49 [0] : vector<64x8xf32> to vector<8xf32>
    %125 = vector.shape_cast %124 : vector<8xf32> to vector<1x8xf32>
    %126 = tpu.concatenate %122, %125 in 0 : vector<1x8xf32>, vector<1x8xf32> -> vector<2x8xf32>
    %c0_50 = arith.constant 0 : index
    %c0_51 = arith.constant 0 : index
    %c0_52 = arith.constant 0 : index
    %c0_53 = arith.constant 0 : index
    %127 = vector.load %arg5[%c0_50, %c0_51, %c0_52, %c0_53] : memref<1x1x2x8xf32, #tpu.memory_space<vmem>>, vector<1x1x2x8xf32>
    %128 = vector.shape_cast %127 : vector<1x1x2x8xf32> to vector<2x8xf32>
    %129 = vector.shape_cast %126 : vector<2x8xf32> to vector<1x1x2x8xf32>
    tpu.vector_store %arg5[%c0_50, %c0_51, %c0_52, %c0_53], %129 {strides = array<i32>} : memref<1x1x2x8xf32, #tpu.memory_space<vmem>>, vector<1x1x2x8xf32>,
    return
  }
  func.func @transform_0(%arg0: i32, %arg1: i32) -> (i32, i32, i32, i32) {
    %c0_i32 = arith.constant 0 : i32
    %c0_i32_0 = arith.constant 0 : i32
    %c0_i32_1 = arith.constant 0 : i32
    return %arg0, %arg1, %c0_i32, %c0_i32_0 : i32, i32, i32, i32
  }
  func.func @transform_1(%arg0: i32, %arg1: i32) -> (i32, i32) {
    %c0_i32 = arith.constant 0 : i32
    %c0_i32_0 = arith.constant 0 : i32
    %c0_i32_1 = arith.constant 0 : i32
    return %c0_i32, %c0_i32_0 : i32, i32
  }
  func.func @transform_2(%arg0: i32, %arg1: i32) -> (i32, i32, i32, i32) {
    %c0_i32 = arith.constant 0 : i32
    %c0_i32_0 = arith.constant 0 : i32
    %c0_i32_1 = arith.constant 0 : i32
    return %arg0, %arg1, %c0_i32, %c0_i32_0 : i32, i32, i32, i32
  }
  func.func @transform_3(%arg0: i32, %arg1: i32) -> (i32, i32, i32, i32) {
    %c0_i32 = arith.constant 0 : i32
    %c0_i32_0 = arith.constant 0 : i32
    %c0_i32_1 = arith.constant 0 : i32
    return %arg0, %arg1, %c0_i32, %c0_i32_0 : i32, i32, i32, i32
  }
}

module attributes {stable_mosaic.version = 11 : i64} {
  func.func @_affine_relu_kernel(%arg0: i32, %arg1: memref<512x8xf32, #tpu.memory_space<vmem>>, %arg2: memref<1x8xf32, #tpu.memory_space<vmem>>, %arg3: memref<1x8xf32, #tpu.memory_space<vmem>>, %arg4: memref<512x8xf32, #tpu.memory_space<vmem>>) attributes {dimension_semantics = [#tpu.dimension_semantics<parallel>], iteration_bounds = array<i64: 1>, scalar_prefetch = 0 : i64, scratch_operands = 0 : i64, tpu.core_type = #tpu.core_type<tc>, window_params = [{transform_indices = @transform_0, window_bounds = array<i64: 512, 8>}, {pipeline_mode = #tpu.pipeline_mode<synchronous>, transform_indices = @transform_1, window_bounds = array<i64: 1, 8>}, {pipeline_mode = #tpu.pipeline_mode<synchronous>, transform_indices = @transform_2, window_bounds = array<i64: 1, 8>}, {transform_indices = @transform_3, window_bounds = array<i64: 512, 8>}]} {
    %c0 = arith.constant 0 : index
    %c0_0 = arith.constant 0 : index
    %0 = vector.load %arg1[%c0, %c0_0] : memref<512x8xf32, #tpu.memory_space<vmem>>, vector<512x8xf32>
    %c0_1 = arith.constant 0 : index
    %c0_2 = arith.constant 0 : index
    %1 = vector.load %arg2[%c0_1, %c0_2] : memref<1x8xf32, #tpu.memory_space<vmem>>, vector<1x8xf32>
    %2 = vector.broadcast %1 : vector<1x8xf32> to vector<512x8xf32>
    %3 = arith.mulf %0, %2 : vector<512x8xf32>
    %c0_3 = arith.constant 0 : index
    %c0_4 = arith.constant 0 : index
    %4 = vector.load %arg3[%c0_3, %c0_4] : memref<1x8xf32, #tpu.memory_space<vmem>>, vector<1x8xf32>
    %5 = vector.broadcast %4 : vector<1x8xf32> to vector<512x8xf32>
    %6 = arith.addf %3, %5 : vector<512x8xf32>
    %cst = arith.constant 0.000000e+00 : f32
    %7 = vector.broadcast %cst : f32 to vector<512x8xf32>
    %8 = arith.maximumf %6, %7 : vector<512x8xf32>
    %c0_5 = arith.constant 0 : index
    %c0_6 = arith.constant 0 : index
    %9 = vector.load %arg4[%c0_5, %c0_6] : memref<512x8xf32, #tpu.memory_space<vmem>>, vector<512x8xf32>
    tpu.vector_store %arg4[%c0_5, %c0_6], %8 {strides = array<i32>} : memref<512x8xf32, #tpu.memory_space<vmem>>, vector<512x8xf32>,
    return
  }
  func.func @transform_0(%arg0: i32) -> (i32, i32) {
    %c0_i32 = arith.constant 0 : i32
    %c0_i32_0 = arith.constant 0 : i32
    return %arg0, %c0_i32 : i32, i32
  }
  func.func @transform_1(%arg0: i32) -> (i32, i32) {
    %c0_i32 = arith.constant 0 : i32
    %c0_i32_0 = arith.constant 0 : i32
    %c0_i32_1 = arith.constant 0 : i32
    return %c0_i32, %c0_i32_0 : i32, i32
  }
  func.func @transform_2(%arg0: i32) -> (i32, i32) {
    %c0_i32 = arith.constant 0 : i32
    %c0_i32_0 = arith.constant 0 : i32
    %c0_i32_1 = arith.constant 0 : i32
    return %c0_i32, %c0_i32_0 : i32, i32
  }
  func.func @transform_3(%arg0: i32) -> (i32, i32) {
    %c0_i32 = arith.constant 0 : i32
    %c0_i32_0 = arith.constant 0 : i32
    return %arg0, %c0_i32 : i32, i32
  }
}

module attributes {stable_mosaic.version = 11 : i64} {
  func.func @_fused1x1_kernel(%arg0: i32, %arg1: memref<512x8xf32, #tpu.memory_space<vmem>>, %arg2: memref<8x20xf32, #tpu.memory_space<vmem>>, %arg3: memref<512x20xf32, #tpu.memory_space<vmem>>, %arg4: memref<1x2x20xf32, #tpu.memory_space<vmem>>) attributes {dimension_semantics = [#tpu.dimension_semantics<parallel>], iteration_bounds = array<i64: 1>, scalar_prefetch = 0 : i64, scratch_operands = 0 : i64, tpu.core_type = #tpu.core_type<tc>, window_params = [{transform_indices = @transform_0, window_bounds = array<i64: 512, 8>}, {pipeline_mode = #tpu.pipeline_mode<synchronous>, transform_indices = @transform_1, window_bounds = array<i64: 8, 20>}, {transform_indices = @transform_2, window_bounds = array<i64: 512, 20>}, {transform_indices = @transform_3, window_bounds = array<i64: 1, 2, 20>}]} {
    %c0 = arith.constant 0 : index
    %c0_0 = arith.constant 0 : index
    %0 = vector.load %arg1[%c0, %c0_0] : memref<512x8xf32, #tpu.memory_space<vmem>>, vector<512x8xf32>
    %c0_1 = arith.constant 0 : index
    %c0_2 = arith.constant 0 : index
    %1 = vector.load %arg2[%c0_1, %c0_2] : memref<8x20xf32, #tpu.memory_space<vmem>>, vector<8x20xf32>
    %cst = arith.constant dense<0.000000e+00> : vector<512x20xf32>
    %2 = tpu.matmul %0, %1, %cst {dimension_numbers = #tpu.dot_dimension_numbers<[1], [0], [0], [1], [0, 0, 1, 1], [], []>} : vector<512x8xf32>, vector<8x20xf32>, vector<512x20xf32> -> vector<512x20xf32>
    %c0_3 = arith.constant 0 : index
    %c0_4 = arith.constant 0 : index
    %3 = vector.load %arg3[%c0_3, %c0_4] : memref<512x20xf32, #tpu.memory_space<vmem>>, vector<512x20xf32>
    tpu.vector_store %arg3[%c0_3, %c0_4], %2 {strides = array<i32>} : memref<512x20xf32, #tpu.memory_space<vmem>>, vector<512x20xf32>,
    %cst_5 = arith.constant dense<0.000000e+00> : vector<20xf32>
    %4 = vector.multi_reduction <add>, %2, %cst_5 [0] : vector<512x20xf32> to vector<20xf32>
    %5 = vector.shape_cast %4 : vector<20xf32> to vector<1x20xf32>
    %6 = arith.mulf %2, %2 : vector<512x20xf32>
    %cst_6 = arith.constant dense<0.000000e+00> : vector<20xf32>
    %7 = vector.multi_reduction <add>, %6, %cst_6 [0] : vector<512x20xf32> to vector<20xf32>
    %8 = vector.shape_cast %7 : vector<20xf32> to vector<1x20xf32>
    %9 = tpu.concatenate %5, %8 in 0 : vector<1x20xf32>, vector<1x20xf32> -> vector<2x20xf32>
    %c0_7 = arith.constant 0 : index
    %c0_8 = arith.constant 0 : index
    %c0_9 = arith.constant 0 : index
    %10 = vector.load %arg4[%c0_7, %c0_8, %c0_9] : memref<1x2x20xf32, #tpu.memory_space<vmem>>, vector<1x2x20xf32>
    %11 = vector.shape_cast %10 : vector<1x2x20xf32> to vector<2x20xf32>
    %12 = vector.shape_cast %9 : vector<2x20xf32> to vector<1x2x20xf32>
    tpu.vector_store %arg4[%c0_7, %c0_8, %c0_9], %12 {strides = array<i32>} : memref<1x2x20xf32, #tpu.memory_space<vmem>>, vector<1x2x20xf32>,
    return
  }
  func.func @transform_0(%arg0: i32) -> (i32, i32) {
    %c0_i32 = arith.constant 0 : i32
    %c0_i32_0 = arith.constant 0 : i32
    return %arg0, %c0_i32 : i32, i32
  }
  func.func @transform_1(%arg0: i32) -> (i32, i32) {
    %c0_i32 = arith.constant 0 : i32
    %c0_i32_0 = arith.constant 0 : i32
    %c0_i32_1 = arith.constant 0 : i32
    return %c0_i32, %c0_i32_0 : i32, i32
  }
  func.func @transform_2(%arg0: i32) -> (i32, i32) {
    %c0_i32 = arith.constant 0 : i32
    %c0_i32_0 = arith.constant 0 : i32
    return %arg0, %c0_i32 : i32, i32
  }
  func.func @transform_3(%arg0: i32) -> (i32, i32, i32) {
    %c0_i32 = arith.constant 0 : i32
    %c0_i32_0 = arith.constant 0 : i32
    %c0_i32_1 = arith.constant 0 : i32
    return %arg0, %c0_i32, %c0_i32_0 : i32, i32, i32
  }
}

module attributes {stable_mosaic.version = 11 : i64} {
  func.func @_kxk_conv_kernel(%arg0: i32, %arg1: i32, %arg2: memref<1x1x132x4xf32, #tpu.memory_space<vmem>>, %arg3: memref<25x4x8xf32, #tpu.memory_space<vmem>>, %arg4: memref<1x4xf32, #tpu.memory_space<vmem>>, %arg5: memref<1x4xf32, #tpu.memory_space<vmem>>, %arg6: memref<1x1x64x8xf32, #tpu.memory_space<vmem>>, %arg7: memref<1x1x2x8xf32, #tpu.memory_space<vmem>>, %arg8: memref<132x4xf32, #tpu.memory_space<vmem>>) attributes {dimension_semantics = [#tpu.dimension_semantics<parallel>, #tpu.dimension_semantics<parallel>], iteration_bounds = array<i64: 2, 4>, scalar_prefetch = 0 : i64, scratch_operands = 1 : i64, tpu.core_type = #tpu.core_type<tc>, window_params = [{transform_indices = @transform_0, window_bounds = array<i64: 1, 1, 132, 4>}, {pipeline_mode = #tpu.pipeline_mode<synchronous>, transform_indices = @transform_1, window_bounds = array<i64: 25, 4, 8>}, {pipeline_mode = #tpu.pipeline_mode<synchronous>, transform_indices = @transform_2, window_bounds = array<i64: 1, 4>}, {pipeline_mode = #tpu.pipeline_mode<synchronous>, transform_indices = @transform_3, window_bounds = array<i64: 1, 4>}, {transform_indices = @transform_4, window_bounds = array<i64: 1, 1, 64, 8>}, {transform_indices = @transform_5, window_bounds = array<i64: 1, 1, 2, 8>}]} {
    %0 = tpu.iota {dimensions = array<i32: 0>} : vector<132x1xi32>
    %c64_i32 = arith.constant 64 : i32
    %1 = arith.muli %arg1, %c64_i32 : i32
    %2 = vector.broadcast %1 : i32 to vector<132x1xi32>
    %3 = arith.addi %2, %0 : vector<132x1xi32>
    %c34_i32 = arith.constant 34 : i32
    %4 = vector.broadcast %c34_i32 : i32 to vector<132x1xi32>
    %5 = arith.cmpi sge, %3, %4 : vector<132x1xi32>
    %c290_i32 = arith.constant 290 : i32
    %6 = vector.broadcast %c290_i32 : i32 to vector<132x1xi32>
    %7 = arith.cmpi slt, %3, %6 : vector<132x1xi32>
    %8 = arith.andi %5, %7 : vector<132x1xi1>
    %c0 = arith.constant 0 : index
    %c0_0 = arith.constant 0 : index
    %c0_1 = arith.constant 0 : index
    %c0_2 = arith.constant 0 : index
    %9 = vector.load %arg2[%c0, %c0_0, %c0_1, %c0_2] : memref<1x1x132x4xf32, #tpu.memory_space<vmem>>, vector<1x1x132x4xf32>
    %10 = vector.shape_cast %9 : vector<1x1x132x4xf32> to vector<132x4xf32>
    %c0_3 = arith.constant 0 : index
    %c0_4 = arith.constant 0 : index
    %11 = vector.load %arg4[%c0_3, %c0_4] : memref<1x4xf32, #tpu.memory_space<vmem>>, vector<1x4xf32>
    %12 = vector.broadcast %11 : vector<1x4xf32> to vector<132x4xf32>
    %13 = arith.mulf %10, %12 : vector<132x4xf32>
    %c0_5 = arith.constant 0 : index
    %c0_6 = arith.constant 0 : index
    %14 = vector.load %arg5[%c0_5, %c0_6] : memref<1x4xf32, #tpu.memory_space<vmem>>, vector<1x4xf32>
    %15 = vector.broadcast %14 : vector<1x4xf32> to vector<132x4xf32>
    %16 = arith.addf %13, %15 : vector<132x4xf32>
    %cst = arith.constant 0.000000e+00 : f32
    %17 = vector.broadcast %cst : f32 to vector<132x4xf32>
    %18 = arith.maximumf %16, %17 : vector<132x4xf32>
    %cst_7 = arith.constant 0.000000e+00 : f32
    %19 = vector.shape_cast %8 : vector<132x1xi1> to vector<132x1xi1>
    %20 = vector.broadcast %19 : vector<132x1xi1> to vector<132x4xi1>
    %21 = vector.broadcast %cst_7 : f32 to vector<132x4xf32>
    %22 = arith.select %20, %18, %21 : vector<132x4xi1>, vector<132x4xf32>
    %c0_8 = arith.constant 0 : index
    %c0_9 = arith.constant 0 : index
    %23 = vector.load %arg8[%c0_8, %c0_9] : memref<132x4xf32, #tpu.memory_space<vmem>>, vector<132x4xf32>
    tpu.vector_store %arg8[%c0_8, %c0_9], %22 {strides = array<i32>} : memref<132x4xf32, #tpu.memory_space<vmem>>, vector<132x4xf32>,
    %24 = tpu.iota {dimensions = array<i32: 0>} : vector<64x1xi32>
    %c16_i32 = arith.constant 16 : i32
    %c0_i32 = arith.constant 0 : i32
    %25 = arith.cmpi eq, %c16_i32, %c0_i32 : i32
    %c1_i32 = arith.constant 1 : i32
    %26 = arith.select %25, %c1_i32, %c16_i32 : i32
    %27 = vector.broadcast %26 : i32 to vector<64x1xi32>
    %28 = arith.remsi %24, %27 : vector<64x1xi32>
    %c0_i32_10 = arith.constant 0 : i32
    %29 = vector.broadcast %c0_i32_10 : i32 to vector<64x1xi32>
    %30 = arith.cmpi ne, %28, %29 : vector<64x1xi32>
    %c0_i32_11 = arith.constant 0 : i32
    %31 = vector.broadcast %c0_i32_11 : i32 to vector<64x1xi32>
    %32 = arith.cmpi slt, %28, %31 : vector<64x1xi32>
    %c0_i32_12 = arith.constant 0 : i32
    %33 = arith.cmpi slt, %26, %c0_i32_12 : i32
    %34 = vector.broadcast %33 : i1 to vector<64x1xi1>
    %35 = vector.broadcast %34 : vector<64x1xi1> to vector<64x1xi1>
    %36 = arith.xori %32, %35 : vector<64x1xi1>
    %37 = arith.andi %36, %30 : vector<64x1xi1>
    %38 = vector.broadcast %26 : i32 to vector<64x1xi32>
    %39 = arith.addi %28, %38 : vector<64x1xi32>
    %40 = arith.select %37, %39, %28 : vector<64x1xi1>, vector<64x1xi32>
    %cst_13 = arith.constant 0.000000e+00 : f32
    %41 = vector.broadcast %cst_13 : f32 to vector<64x8xf32>
    %c0_14 = arith.constant 0 : index
    %c0_15 = arith.constant 0 : index
    %42 = vector.load %arg8[%c0_14, %c0_15] : memref<132x4xf32, #tpu.memory_space<vmem>>, vector<64x4xf32>
    %c-2_i32 = arith.constant -2 : i32
    %43 = vector.broadcast %c-2_i32 : i32 to vector<64x1xi32>
    %44 = arith.addi %40, %43 : vector<64x1xi32>
    %c0_i32_16 = arith.constant 0 : i32
    %45 = vector.broadcast %c0_i32_16 : i32 to vector<64x1xi32>
    %46 = arith.cmpi sge, %44, %45 : vector<64x1xi32>
    %c16_i32_17 = arith.constant 16 : i32
    %47 = vector.broadcast %c16_i32_17 : i32 to vector<64x1xi32>
    %48 = arith.cmpi slt, %44, %47 : vector<64x1xi32>
    %49 = arith.andi %46, %48 : vector<64x1xi1>
    %cst_18 = arith.constant 0.000000e+00 : f32
    %50 = vector.shape_cast %49 : vector<64x1xi1> to vector<64x1xi1>
    %51 = vector.broadcast %50 : vector<64x1xi1> to vector<64x4xi1>
    %52 = vector.broadcast %cst_18 : f32 to vector<64x4xf32>
    %53 = arith.select %51, %42, %52 : vector<64x4xi1>, vector<64x4xf32>
    %c0_19 = arith.constant 0 : index
    %c0_20 = arith.constant 0 : index
    %c0_21 = arith.constant 0 : index
    %54 = vector.load %arg3[%c0_19, %c0_20, %c0_21] : memref<25x4x8xf32, #tpu.memory_space<vmem>>, vector<1x4x8xf32>
    %55 = vector.shape_cast %54 : vector<1x4x8xf32> to vector<4x8xf32>
    %cst_22 = arith.constant dense<0.000000e+00> : vector<64x8xf32>
    %56 = tpu.matmul %53, %55, %cst_22 {dimension_numbers = #tpu.dot_dimension_numbers<[1], [0], [0], [1], [0, 0, 1, 1], [], []>} : vector<64x4xf32>, vector<4x8xf32>, vector<64x8xf32> -> vector<64x8xf32>
    %57 = arith.addf %41, %56 : vector<64x8xf32>
    %c1 = arith.constant 1 : index
    %c0_23 = arith.constant 0 : index
    %58 = vector.load %arg8[%c1, %c0_23] : memref<132x4xf32, #tpu.memory_space<vmem>>, vector<64x4xf32>
    %c-1_i32 = arith.constant -1 : i32
    %59 = vector.broadcast %c-1_i32 : i32 to vector<64x1xi32>
    %60 = arith.addi %40, %59 : vector<64x1xi32>
    %c0_i32_24 = arith.constant 0 : i32
    %61 = vector.broadcast %c0_i32_24 : i32 to vector<64x1xi32>
    %62 = arith.cmpi sge, %60, %61 : vector<64x1xi32>
    %c16_i32_25 = arith.constant 16 : i32
    %63 = vector.broadcast %c16_i32_25 : i32 to vector<64x1xi32>
    %64 = arith.cmpi slt, %60, %63 : vector<64x1xi32>
    %65 = arith.andi %62, %64 : vector<64x1xi1>
    %cst_26 = arith.constant 0.000000e+00 : f32
    %66 = vector.shape_cast %65 : vector<64x1xi1> to vector<64x1xi1>
    %67 = vector.broadcast %66 : vector<64x1xi1> to vector<64x4xi1>
    %68 = vector.broadcast %cst_26 : f32 to vector<64x4xf32>
    %69 = arith.select %67, %58, %68 : vector<64x4xi1>, vector<64x4xf32>
    %c1_27 = arith.constant 1 : index
    %c0_28 = arith.constant 0 : index
    %c0_29 = arith.constant 0 : index
    %70 = vector.load %arg3[%c1_27, %c0_28, %c0_29] : memref<25x4x8xf32, #tpu.memory_space<vmem>>, vector<1x4x8xf32>
    %71 = vector.shape_cast %70 : vector<1x4x8xf32> to vector<4x8xf32>
    %cst_30 = arith.constant dense<0.000000e+00> : vector<64x8xf32>
    %72 = tpu.matmul %69, %71, %cst_30 {dimension_numbers = #tpu.dot_dimension_numbers<[1], [0], [0], [1], [0, 0, 1, 1], [], []>} : vector<64x4xf32>, vector<4x8xf32>, vector<64x8xf32> -> vector<64x8xf32>
    %73 = arith.addf %57, %72 : vector<64x8xf32>
    %c2 = arith.constant 2 : index
    %c0_31 = arith.constant 0 : index
    %74 = vector.load %arg8[%c2, %c0_31] : memref<132x4xf32, #tpu.memory_space<vmem>>, vector<64x4xf32>
    %c2_32 = arith.constant 2 : index
    %c0_33 = arith.constant 0 : index
    %c0_34 = arith.constant 0 : index
    %75 = vector.load %arg3[%c2_32, %c0_33, %c0_34] : memref<25x4x8xf32, #tpu.memory_space<vmem>>, vector<1x4x8xf32>
    %76 = vector.shape_cast %75 : vector<1x4x8xf32> to vector<4x8xf32>
    %cst_35 = arith.constant dense<0.000000e+00> : vector<64x8xf32>
    %77 = tpu.matmul %74, %76, %cst_35 {dimension_numbers = #tpu.dot_dimension_numbers<[1], [0], [0], [1], [0, 0, 1, 1], [], []>} : vector<64x4xf32>, vector<4x8xf32>, vector<64x8xf32> -> vector<64x8xf32>
    %78 = arith.addf %73, %77 : vector<64x8xf32>
    %c3 = arith.constant 3 : index
    %c0_36 = arith.constant 0 : index
    %79 = vector.load %arg8[%c3, %c0_36] : memref<132x4xf32, #tpu.memory_space<vmem>>, vector<64x4xf32>
    %c1_i32_37 = arith.constant 1 : i32
    %80 = vector.broadcast %c1_i32_37 : i32 to vector<64x1xi32>
    %81 = arith.addi %40, %80 : vector<64x1xi32>
    %c0_i32_38 = arith.constant 0 : i32
    %82 = vector.broadcast %c0_i32_38 : i32 to vector<64x1xi32>
    %83 = arith.cmpi sge, %81, %82 : vector<64x1xi32>
    %c16_i32_39 = arith.constant 16 : i32
    %84 = vector.broadcast %c16_i32_39 : i32 to vector<64x1xi32>
    %85 = arith.cmpi slt, %81, %84 : vector<64x1xi32>
    %86 = arith.andi %83, %85 : vector<64x1xi1>
    %cst_40 = arith.constant 0.000000e+00 : f32
    %87 = vector.shape_cast %86 : vector<64x1xi1> to vector<64x1xi1>
    %88 = vector.broadcast %87 : vector<64x1xi1> to vector<64x4xi1>
    %89 = vector.broadcast %cst_40 : f32 to vector<64x4xf32>
    %90 = arith.select %88, %79, %89 : vector<64x4xi1>, vector<64x4xf32>
    %c3_41 = arith.constant 3 : index
    %c0_42 = arith.constant 0 : index
    %c0_43 = arith.constant 0 : index
    %91 = vector.load %arg3[%c3_41, %c0_42, %c0_43] : memref<25x4x8xf32, #tpu.memory_space<vmem>>, vector<1x4x8xf32>
    %92 = vector.shape_cast %91 : vector<1x4x8xf32> to vector<4x8xf32>
    %cst_44 = arith.constant dense<0.000000e+00> : vector<64x8xf32>
    %93 = tpu.matmul %90, %92, %cst_44 {dimension_numbers = #tpu.dot_dimension_numbers<[1], [0], [0], [1], [0, 0, 1, 1], [], []>} : vector<64x4xf32>, vector<4x8xf32>, vector<64x8xf32> -> vector<64x8xf32>
    %94 = arith.addf %78, %93 : vector<64x8xf32>
    %c4 = arith.constant 4 : index
    %c0_45 = arith.constant 0 : index
    %95 = vector.load %arg8[%c4, %c0_45] : memref<132x4xf32, #tpu.memory_space<vmem>>, vector<64x4xf32>
    %c2_i32 = arith.constant 2 : i32
    %96 = vector.broadcast %c2_i32 : i32 to vector<64x1xi32>
    %97 = arith.addi %40, %96 : vector<64x1xi32>
    %c0_i32_46 = arith.constant 0 : i32
    %98 = vector.broadcast %c0_i32_46 : i32 to vector<64x1xi32>
    %99 = arith.cmpi sge, %97, %98 : vector<64x1xi32>
    %c16_i32_47 = arith.constant 16 : i32
    %100 = vector.broadcast %c16_i32_47 : i32 to vector<64x1xi32>
    %101 = arith.cmpi slt, %97, %100 : vector<64x1xi32>
    %102 = arith.andi %99, %101 : vector<64x1xi1>
    %cst_48 = arith.constant 0.000000e+00 : f32
    %103 = vector.shape_cast %102 : vector<64x1xi1> to vector<64x1xi1>
    %104 = vector.broadcast %103 : vector<64x1xi1> to vector<64x4xi1>
    %105 = vector.broadcast %cst_48 : f32 to vector<64x4xf32>
    %106 = arith.select %104, %95, %105 : vector<64x4xi1>, vector<64x4xf32>
    %c4_49 = arith.constant 4 : index
    %c0_50 = arith.constant 0 : index
    %c0_51 = arith.constant 0 : index
    %107 = vector.load %arg3[%c4_49, %c0_50, %c0_51] : memref<25x4x8xf32, #tpu.memory_space<vmem>>, vector<1x4x8xf32>
    %108 = vector.shape_cast %107 : vector<1x4x8xf32> to vector<4x8xf32>
    %cst_52 = arith.constant dense<0.000000e+00> : vector<64x8xf32>
    %109 = tpu.matmul %106, %108, %cst_52 {dimension_numbers = #tpu.dot_dimension_numbers<[1], [0], [0], [1], [0, 0, 1, 1], [], []>} : vector<64x4xf32>, vector<4x8xf32>, vector<64x8xf32> -> vector<64x8xf32>
    %110 = arith.addf %94, %109 : vector<64x8xf32>
    %c16 = arith.constant 16 : index
    %c0_53 = arith.constant 0 : index
    %111 = vector.load %arg8[%c16, %c0_53] : memref<132x4xf32, #tpu.memory_space<vmem>>, vector<64x4xf32>
    %c-2_i32_54 = arith.constant -2 : i32
    %112 = vector.broadcast %c-2_i32_54 : i32 to vector<64x1xi32>
    %113 = arith.addi %40, %112 : vector<64x1xi32>
    %c0_i32_55 = arith.constant 0 : i32
    %114 = vector.broadcast %c0_i32_55 : i32 to vector<64x1xi32>
    %115 = arith.cmpi sge, %113, %114 : vector<64x1xi32>
    %c16_i32_56 = arith.constant 16 : i32
    %116 = vector.broadcast %c16_i32_56 : i32 to vector<64x1xi32>
    %117 = arith.cmpi slt, %113, %116 : vector<64x1xi32>
    %118 = arith.andi %115, %117 : vector<64x1xi1>
    %cst_57 = arith.constant 0.000000e+00 : f32
    %119 = vector.shape_cast %118 : vector<64x1xi1> to vector<64x1xi1>
    %120 = vector.broadcast %119 : vector<64x1xi1> to vector<64x4xi1>
    %121 = vector.broadcast %cst_57 : f32 to vector<64x4xf32>
    %122 = arith.select %120, %111, %121 : vector<64x4xi1>, vector<64x4xf32>
    %c5 = arith.constant 5 : index
    %c0_58 = arith.constant 0 : index
    %c0_59 = arith.constant 0 : index
    %123 = vector.load %arg3[%c5, %c0_58, %c0_59] : memref<25x4x8xf32, #tpu.memory_space<vmem>>, vector<1x4x8xf32>
    %124 = vector.shape_cast %123 : vector<1x4x8xf32> to vector<4x8xf32>
    %cst_60 = arith.constant dense<0.000000e+00> : vector<64x8xf32>
    %125 = tpu.matmul %122, %124, %cst_60 {dimension_numbers = #tpu.dot_dimension_numbers<[1], [0], [0], [1], [0, 0, 1, 1], [], []>} : vector<64x4xf32>, vector<4x8xf32>, vector<64x8xf32> -> vector<64x8xf32>
    %126 = arith.addf %110, %125 : vector<64x8xf32>
    %c17 = arith.constant 17 : index
    %c0_61 = arith.constant 0 : index
    %127 = vector.load %arg8[%c17, %c0_61] : memref<132x4xf32, #tpu.memory_space<vmem>>, vector<64x4xf32>
    %c-1_i32_62 = arith.constant -1 : i32
    %128 = vector.broadcast %c-1_i32_62 : i32 to vector<64x1xi32>
    %129 = arith.addi %40, %128 : vector<64x1xi32>
    %c0_i32_63 = arith.constant 0 : i32
    %130 = vector.broadcast %c0_i32_63 : i32 to vector<64x1xi32>
    %131 = arith.cmpi sge, %129, %130 : vector<64x1xi32>
    %c16_i32_64 = arith.constant 16 : i32
    %132 = vector.broadcast %c16_i32_64 : i32 to vector<64x1xi32>
    %133 = arith.cmpi slt, %129, %132 : vector<64x1xi32>
    %134 = arith.andi %131, %133 : vector<64x1xi1>
    %cst_65 = arith.constant 0.000000e+00 : f32
    %135 = vector.shape_cast %134 : vector<64x1xi1> to vector<64x1xi1>
    %136 = vector.broadcast %135 : vector<64x1xi1> to vector<64x4xi1>
    %137 = vector.broadcast %cst_65 : f32 to vector<64x4xf32>
    %138 = arith.select %136, %127, %137 : vector<64x4xi1>, vector<64x4xf32>
    %c6 = arith.constant 6 : index
    %c0_66 = arith.constant 0 : index
    %c0_67 = arith.constant 0 : index
    %139 = vector.load %arg3[%c6, %c0_66, %c0_67] : memref<25x4x8xf32, #tpu.memory_space<vmem>>, vector<1x4x8xf32>
    %140 = vector.shape_cast %139 : vector<1x4x8xf32> to vector<4x8xf32>
    %cst_68 = arith.constant dense<0.000000e+00> : vector<64x8xf32>
    %141 = tpu.matmul %138, %140, %cst_68 {dimension_numbers = #tpu.dot_dimension_numbers<[1], [0], [0], [1], [0, 0, 1, 1], [], []>} : vector<64x4xf32>, vector<4x8xf32>, vector<64x8xf32> -> vector<64x8xf32>
    %142 = arith.addf %126, %141 : vector<64x8xf32>
    %c18 = arith.constant 18 : index
    %c0_69 = arith.constant 0 : index
    %143 = vector.load %arg8[%c18, %c0_69] : memref<132x4xf32, #tpu.memory_space<vmem>>, vector<64x4xf32>
    %c7 = arith.constant 7 : index
    %c0_70 = arith.constant 0 : index
    %c0_71 = arith.constant 0 : index
    %144 = vector.load %arg3[%c7, %c0_70, %c0_71] : memref<25x4x8xf32, #tpu.memory_space<vmem>>, vector<1x4x8xf32>
    %145 = vector.shape_cast %144 : vector<1x4x8xf32> to vector<4x8xf32>
    %cst_72 = arith.constant dense<0.000000e+00> : vector<64x8xf32>
    %146 = tpu.matmul %143, %145, %cst_72 {dimension_numbers = #tpu.dot_dimension_numbers<[1], [0], [0], [1], [0, 0, 1, 1], [], []>} : vector<64x4xf32>, vector<4x8xf32>, vector<64x8xf32> -> vector<64x8xf32>
    %147 = arith.addf %142, %146 : vector<64x8xf32>
    %c19 = arith.constant 19 : index
    %c0_73 = arith.constant 0 : index
    %148 = vector.load %arg8[%c19, %c0_73] : memref<132x4xf32, #tpu.memory_space<vmem>>, vector<64x4xf32>
    %c1_i32_74 = arith.constant 1 : i32
    %149 = vector.broadcast %c1_i32_74 : i32 to vector<64x1xi32>
    %150 = arith.addi %40, %149 : vector<64x1xi32>
    %c0_i32_75 = arith.constant 0 : i32
    %151 = vector.broadcast %c0_i32_75 : i32 to vector<64x1xi32>
    %152 = arith.cmpi sge, %150, %151 : vector<64x1xi32>
    %c16_i32_76 = arith.constant 16 : i32
    %153 = vector.broadcast %c16_i32_76 : i32 to vector<64x1xi32>
    %154 = arith.cmpi slt, %150, %153 : vector<64x1xi32>
    %155 = arith.andi %152, %154 : vector<64x1xi1>
    %cst_77 = arith.constant 0.000000e+00 : f32
    %156 = vector.shape_cast %155 : vector<64x1xi1> to vector<64x1xi1>
    %157 = vector.broadcast %156 : vector<64x1xi1> to vector<64x4xi1>
    %158 = vector.broadcast %cst_77 : f32 to vector<64x4xf32>
    %159 = arith.select %157, %148, %158 : vector<64x4xi1>, vector<64x4xf32>
    %c8 = arith.constant 8 : index
    %c0_78 = arith.constant 0 : index
    %c0_79 = arith.constant 0 : index
    %160 = vector.load %arg3[%c8, %c0_78, %c0_79] : memref<25x4x8xf32, #tpu.memory_space<vmem>>, vector<1x4x8xf32>
    %161 = vector.shape_cast %160 : vector<1x4x8xf32> to vector<4x8xf32>
    %cst_80 = arith.constant dense<0.000000e+00> : vector<64x8xf32>
    %162 = tpu.matmul %159, %161, %cst_80 {dimension_numbers = #tpu.dot_dimension_numbers<[1], [0], [0], [1], [0, 0, 1, 1], [], []>} : vector<64x4xf32>, vector<4x8xf32>, vector<64x8xf32> -> vector<64x8xf32>
    %163 = arith.addf %147, %162 : vector<64x8xf32>
    %c20 = arith.constant 20 : index
    %c0_81 = arith.constant 0 : index
    %164 = vector.load %arg8[%c20, %c0_81] : memref<132x4xf32, #tpu.memory_space<vmem>>, vector<64x4xf32>
    %c2_i32_82 = arith.constant 2 : i32
    %165 = vector.broadcast %c2_i32_82 : i32 to vector<64x1xi32>
    %166 = arith.addi %40, %165 : vector<64x1xi32>
    %c0_i32_83 = arith.constant 0 : i32
    %167 = vector.broadcast %c0_i32_83 : i32 to vector<64x1xi32>
    %168 = arith.cmpi sge, %166, %167 : vector<64x1xi32>
    %c16_i32_84 = arith.constant 16 : i32
    %169 = vector.broadcast %c16_i32_84 : i32 to vector<64x1xi32>
    %170 = arith.cmpi slt, %166, %169 : vector<64x1xi32>
    %171 = arith.andi %168, %170 : vector<64x1xi1>
    %cst_85 = arith.constant 0.000000e+00 : f32
    %172 = vector.shape_cast %171 : vector<64x1xi1> to vector<64x1xi1>
    %173 = vector.broadcast %172 : vector<64x1xi1> to vector<64x4xi1>
    %174 = vector.broadcast %cst_85 : f32 to vector<64x4xf32>
    %175 = arith.select %173, %164, %174 : vector<64x4xi1>, vector<64x4xf32>
    %c9 = arith.constant 9 : index
    %c0_86 = arith.constant 0 : index
    %c0_87 = arith.constant 0 : index
    %176 = vector.load %arg3[%c9, %c0_86, %c0_87] : memref<25x4x8xf32, #tpu.memory_space<vmem>>, vector<1x4x8xf32>
    %177 = vector.shape_cast %176 : vector<1x4x8xf32> to vector<4x8xf32>
    %cst_88 = arith.constant dense<0.000000e+00> : vector<64x8xf32>
    %178 = tpu.matmul %175, %177, %cst_88 {dimension_numbers = #tpu.dot_dimension_numbers<[1], [0], [0], [1], [0, 0, 1, 1], [], []>} : vector<64x4xf32>, vector<4x8xf32>, vector<64x8xf32> -> vector<64x8xf32>
    %179 = arith.addf %163, %178 : vector<64x8xf32>
    %c32 = arith.constant 32 : index
    %c0_89 = arith.constant 0 : index
    %180 = vector.load %arg8[%c32, %c0_89] : memref<132x4xf32, #tpu.memory_space<vmem>>, vector<64x4xf32>
    %c-2_i32_90 = arith.constant -2 : i32
    %181 = vector.broadcast %c-2_i32_90 : i32 to vector<64x1xi32>
    %182 = arith.addi %40, %181 : vector<64x1xi32>
    %c0_i32_91 = arith.constant 0 : i32
    %183 = vector.broadcast %c0_i32_91 : i32 to vector<64x1xi32>
    %184 = arith.cmpi sge, %182, %183 : vector<64x1xi32>
    %c16_i32_92 = arith.constant 16 : i32
    %185 = vector.broadcast %c16_i32_92 : i32 to vector<64x1xi32>
    %186 = arith.cmpi slt, %182, %185 : vector<64x1xi32>
    %187 = arith.andi %184, %186 : vector<64x1xi1>
    %cst_93 = arith.constant 0.000000e+00 : f32
    %188 = vector.shape_cast %187 : vector<64x1xi1> to vector<64x1xi1>
    %189 = vector.broadcast %188 : vector<64x1xi1> to vector<64x4xi1>
    %190 = vector.broadcast %cst_93 : f32 to vector<64x4xf32>
    %191 = arith.select %189, %180, %190 : vector<64x4xi1>, vector<64x4xf32>
    %c10 = arith.constant 10 : index
    %c0_94 = arith.constant 0 : index
    %c0_95 = arith.constant 0 : index
    %192 = vector.load %arg3[%c10, %c0_94, %c0_95] : memref<25x4x8xf32, #tpu.memory_space<vmem>>, vector<1x4x8xf32>
    %193 = vector.shape_cast %192 : vector<1x4x8xf32> to vector<4x8xf32>
    %cst_96 = arith.constant dense<0.000000e+00> : vector<64x8xf32>
    %194 = tpu.matmul %191, %193, %cst_96 {dimension_numbers = #tpu.dot_dimension_numbers<[1], [0], [0], [1], [0, 0, 1, 1], [], []>} : vector<64x4xf32>, vector<4x8xf32>, vector<64x8xf32> -> vector<64x8xf32>
    %195 = arith.addf %179, %194 : vector<64x8xf32>
    %c33 = arith.constant 33 : index
    %c0_97 = arith.constant 0 : index
    %196 = vector.load %arg8[%c33, %c0_97] : memref<132x4xf32, #tpu.memory_space<vmem>>, vector<64x4xf32>
    %c-1_i32_98 = arith.constant -1 : i32
    %197 = vector.broadcast %c-1_i32_98 : i32 to vector<64x1xi32>
    %198 = arith.addi %40, %197 : vector<64x1xi32>
    %c0_i32_99 = arith.constant 0 : i32
    %199 = vector.broadcast %c0_i32_99 : i32 to vector<64x1xi32>
    %200 = arith.cmpi sge, %198, %199 : vector<64x1xi32>
    %c16_i32_100 = arith.constant 16 : i32
    %201 = vector.broadcast %c16_i32_100 : i32 to vector<64x1xi32>
    %202 = arith.cmpi slt, %198, %201 : vector<64x1xi32>
    %203 = arith.andi %200, %202 : vector<64x1xi1>
    %cst_101 = arith.constant 0.000000e+00 : f32
    %204 = vector.shape_cast %203 : vector<64x1xi1> to vector<64x1xi1>
    %205 = vector.broadcast %204 : vector<64x1xi1> to vector<64x4xi1>
    %206 = vector.broadcast %cst_101 : f32 to vector<64x4xf32>
    %207 = arith.select %205, %196, %206 : vector<64x4xi1>, vector<64x4xf32>
    %c11 = arith.constant 11 : index
    %c0_102 = arith.constant 0 : index
    %c0_103 = arith.constant 0 : index
    %208 = vector.load %arg3[%c11, %c0_102, %c0_103] : memref<25x4x8xf32, #tpu.memory_space<vmem>>, vector<1x4x8xf32>
    %209 = vector.shape_cast %208 : vector<1x4x8xf32> to vector<4x8xf32>
    %cst_104 = arith.constant dense<0.000000e+00> : vector<64x8xf32>
    %210 = tpu.matmul %207, %209, %cst_104 {dimension_numbers = #tpu.dot_dimension_numbers<[1], [0], [0], [1], [0, 0, 1, 1], [], []>} : vector<64x4xf32>, vector<4x8xf32>, vector<64x8xf32> -> vector<64x8xf32>
    %211 = arith.addf %195, %210 : vector<64x8xf32>
    %c34 = arith.constant 34 : index
    %c0_105 = arith.constant 0 : index
    %212 = vector.load %arg8[%c34, %c0_105] : memref<132x4xf32, #tpu.memory_space<vmem>>, vector<64x4xf32>
    %c12 = arith.constant 12 : index
    %c0_106 = arith.constant 0 : index
    %c0_107 = arith.constant 0 : index
    %213 = vector.load %arg3[%c12, %c0_106, %c0_107] : memref<25x4x8xf32, #tpu.memory_space<vmem>>, vector<1x4x8xf32>
    %214 = vector.shape_cast %213 : vector<1x4x8xf32> to vector<4x8xf32>
    %cst_108 = arith.constant dense<0.000000e+00> : vector<64x8xf32>
    %215 = tpu.matmul %212, %214, %cst_108 {dimension_numbers = #tpu.dot_dimension_numbers<[1], [0], [0], [1], [0, 0, 1, 1], [], []>} : vector<64x4xf32>, vector<4x8xf32>, vector<64x8xf32> -> vector<64x8xf32>
    %216 = arith.addf %211, %215 : vector<64x8xf32>
    %c35 = arith.constant 35 : index
    %c0_109 = arith.constant 0 : index
    %217 = vector.load %arg8[%c35, %c0_109] : memref<132x4xf32, #tpu.memory_space<vmem>>, vector<64x4xf32>
    %c1_i32_110 = arith.constant 1 : i32
    %218 = vector.broadcast %c1_i32_110 : i32 to vector<64x1xi32>
    %219 = arith.addi %40, %218 : vector<64x1xi32>
    %c0_i32_111 = arith.constant 0 : i32
    %220 = vector.broadcast %c0_i32_111 : i32 to vector<64x1xi32>
    %221 = arith.cmpi sge, %219, %220 : vector<64x1xi32>
    %c16_i32_112 = arith.constant 16 : i32
    %222 = vector.broadcast %c16_i32_112 : i32 to vector<64x1xi32>
    %223 = arith.cmpi slt, %219, %222 : vector<64x1xi32>
    %224 = arith.andi %221, %223 : vector<64x1xi1>
    %cst_113 = arith.constant 0.000000e+00 : f32
    %225 = vector.shape_cast %224 : vector<64x1xi1> to vector<64x1xi1>
    %226 = vector.broadcast %225 : vector<64x1xi1> to vector<64x4xi1>
    %227 = vector.broadcast %cst_113 : f32 to vector<64x4xf32>
    %228 = arith.select %226, %217, %227 : vector<64x4xi1>, vector<64x4xf32>
    %c13 = arith.constant 13 : index
    %c0_114 = arith.constant 0 : index
    %c0_115 = arith.constant 0 : index
    %229 = vector.load %arg3[%c13, %c0_114, %c0_115] : memref<25x4x8xf32, #tpu.memory_space<vmem>>, vector<1x4x8xf32>
    %230 = vector.shape_cast %229 : vector<1x4x8xf32> to vector<4x8xf32>
    %cst_116 = arith.constant dense<0.000000e+00> : vector<64x8xf32>
    %231 = tpu.matmul %228, %230, %cst_116 {dimension_numbers = #tpu.dot_dimension_numbers<[1], [0], [0], [1], [0, 0, 1, 1], [], []>} : vector<64x4xf32>, vector<4x8xf32>, vector<64x8xf32> -> vector<64x8xf32>
    %232 = arith.addf %216, %231 : vector<64x8xf32>
    %c36 = arith.constant 36 : index
    %c0_117 = arith.constant 0 : index
    %233 = vector.load %arg8[%c36, %c0_117] : memref<132x4xf32, #tpu.memory_space<vmem>>, vector<64x4xf32>
    %c2_i32_118 = arith.constant 2 : i32
    %234 = vector.broadcast %c2_i32_118 : i32 to vector<64x1xi32>
    %235 = arith.addi %40, %234 : vector<64x1xi32>
    %c0_i32_119 = arith.constant 0 : i32
    %236 = vector.broadcast %c0_i32_119 : i32 to vector<64x1xi32>
    %237 = arith.cmpi sge, %235, %236 : vector<64x1xi32>
    %c16_i32_120 = arith.constant 16 : i32
    %238 = vector.broadcast %c16_i32_120 : i32 to vector<64x1xi32>
    %239 = arith.cmpi slt, %235, %238 : vector<64x1xi32>
    %240 = arith.andi %237, %239 : vector<64x1xi1>
    %cst_121 = arith.constant 0.000000e+00 : f32
    %241 = vector.shape_cast %240 : vector<64x1xi1> to vector<64x1xi1>
    %242 = vector.broadcast %241 : vector<64x1xi1> to vector<64x4xi1>
    %243 = vector.broadcast %cst_121 : f32 to vector<64x4xf32>
    %244 = arith.select %242, %233, %243 : vector<64x4xi1>, vector<64x4xf32>
    %c14 = arith.constant 14 : index
    %c0_122 = arith.constant 0 : index
    %c0_123 = arith.constant 0 : index
    %245 = vector.load %arg3[%c14, %c0_122, %c0_123] : memref<25x4x8xf32, #tpu.memory_space<vmem>>, vector<1x4x8xf32>
    %246 = vector.shape_cast %245 : vector<1x4x8xf32> to vector<4x8xf32>
    %cst_124 = arith.constant dense<0.000000e+00> : vector<64x8xf32>
    %247 = tpu.matmul %244, %246, %cst_124 {dimension_numbers = #tpu.dot_dimension_numbers<[1], [0], [0], [1], [0, 0, 1, 1], [], []>} : vector<64x4xf32>, vector<4x8xf32>, vector<64x8xf32> -> vector<64x8xf32>
    %248 = arith.addf %232, %247 : vector<64x8xf32>
    %c48 = arith.constant 48 : index
    %c0_125 = arith.constant 0 : index
    %249 = vector.load %arg8[%c48, %c0_125] : memref<132x4xf32, #tpu.memory_space<vmem>>, vector<64x4xf32>
    %c-2_i32_126 = arith.constant -2 : i32
    %250 = vector.broadcast %c-2_i32_126 : i32 to vector<64x1xi32>
    %251 = arith.addi %40, %250 : vector<64x1xi32>
    %c0_i32_127 = arith.constant 0 : i32
    %252 = vector.broadcast %c0_i32_127 : i32 to vector<64x1xi32>
    %253 = arith.cmpi sge, %251, %252 : vector<64x1xi32>
    %c16_i32_128 = arith.constant 16 : i32
    %254 = vector.broadcast %c16_i32_128 : i32 to vector<64x1xi32>
    %255 = arith.cmpi slt, %251, %254 : vector<64x1xi32>
    %256 = arith.andi %253, %255 : vector<64x1xi1>
    %cst_129 = arith.constant 0.000000e+00 : f32
    %257 = vector.shape_cast %256 : vector<64x1xi1> to vector<64x1xi1>
    %258 = vector.broadcast %257 : vector<64x1xi1> to vector<64x4xi1>
    %259 = vector.broadcast %cst_129 : f32 to vector<64x4xf32>
    %260 = arith.select %258, %249, %259 : vector<64x4xi1>, vector<64x4xf32>
    %c15 = arith.constant 15 : index
    %c0_130 = arith.constant 0 : index
    %c0_131 = arith.constant 0 : index
    %261 = vector.load %arg3[%c15, %c0_130, %c0_131] : memref<25x4x8xf32, #tpu.memory_space<vmem>>, vector<1x4x8xf32>
    %262 = vector.shape_cast %261 : vector<1x4x8xf32> to vector<4x8xf32>
    %cst_132 = arith.constant dense<0.000000e+00> : vector<64x8xf32>
    %263 = tpu.matmul %260, %262, %cst_132 {dimension_numbers = #tpu.dot_dimension_numbers<[1], [0], [0], [1], [0, 0, 1, 1], [], []>} : vector<64x4xf32>, vector<4x8xf32>, vector<64x8xf32> -> vector<64x8xf32>
    %264 = arith.addf %248, %263 : vector<64x8xf32>
    %c49 = arith.constant 49 : index
    %c0_133 = arith.constant 0 : index
    %265 = vector.load %arg8[%c49, %c0_133] : memref<132x4xf32, #tpu.memory_space<vmem>>, vector<64x4xf32>
    %c-1_i32_134 = arith.constant -1 : i32
    %266 = vector.broadcast %c-1_i32_134 : i32 to vector<64x1xi32>
    %267 = arith.addi %40, %266 : vector<64x1xi32>
    %c0_i32_135 = arith.constant 0 : i32
    %268 = vector.broadcast %c0_i32_135 : i32 to vector<64x1xi32>
    %269 = arith.cmpi sge, %267, %268 : vector<64x1xi32>
    %c16_i32_136 = arith.constant 16 : i32
    %270 = vector.broadcast %c16_i32_136 : i32 to vector<64x1xi32>
    %271 = arith.cmpi slt, %267, %270 : vector<64x1xi32>
    %272 = arith.andi %269, %271 : vector<64x1xi1>
    %cst_137 = arith.constant 0.000000e+00 : f32
    %273 = vector.shape_cast %272 : vector<64x1xi1> to vector<64x1xi1>
    %274 = vector.broadcast %273 : vector<64x1xi1> to vector<64x4xi1>
    %275 = vector.broadcast %cst_137 : f32 to vector<64x4xf32>
    %276 = arith.select %274, %265, %275 : vector<64x4xi1>, vector<64x4xf32>
    %c16_138 = arith.constant 16 : index
    %c0_139 = arith.constant 0 : index
    %c0_140 = arith.constant 0 : index
    %277 = vector.load %arg3[%c16_138, %c0_139, %c0_140] : memref<25x4x8xf32, #tpu.memory_space<vmem>>, vector<1x4x8xf32>
    %278 = vector.shape_cast %277 : vector<1x4x8xf32> to vector<4x8xf32>
    %cst_141 = arith.constant dense<0.000000e+00> : vector<64x8xf32>
    %279 = tpu.matmul %276, %278, %cst_141 {dimension_numbers = #tpu.dot_dimension_numbers<[1], [0], [0], [1], [0, 0, 1, 1], [], []>} : vector<64x4xf32>, vector<4x8xf32>, vector<64x8xf32> -> vector<64x8xf32>
    %280 = arith.addf %264, %279 : vector<64x8xf32>
    %c50 = arith.constant 50 : index
    %c0_142 = arith.constant 0 : index
    %281 = vector.load %arg8[%c50, %c0_142] : memref<132x4xf32, #tpu.memory_space<vmem>>, vector<64x4xf32>
    %c17_143 = arith.constant 17 : index
    %c0_144 = arith.constant 0 : index
    %c0_145 = arith.constant 0 : index
    %282 = vector.load %arg3[%c17_143, %c0_144, %c0_145] : memref<25x4x8xf32, #tpu.memory_space<vmem>>, vector<1x4x8xf32>
    %283 = vector.shape_cast %282 : vector<1x4x8xf32> to vector<4x8xf32>
    %cst_146 = arith.constant dense<0.000000e+00> : vector<64x8xf32>
    %284 = tpu.matmul %281, %283, %cst_146 {dimension_numbers = #tpu.dot_dimension_numbers<[1], [0], [0], [1], [0, 0, 1, 1], [], []>} : vector<64x4xf32>, vector<4x8xf32>, vector<64x8xf32> -> vector<64x8xf32>
    %285 = arith.addf %280, %284 : vector<64x8xf32>
    %c51 = arith.constant 51 : index
    %c0_147 = arith.constant 0 : index
    %286 = vector.load %arg8[%c51, %c0_147] : memref<132x4xf32, #tpu.memory_space<vmem>>, vector<64x4xf32>
    %c1_i32_148 = arith.constant 1 : i32
    %287 = vector.broadcast %c1_i32_148 : i32 to vector<64x1xi32>
    %288 = arith.addi %40, %287 : vector<64x1xi32>
    %c0_i32_149 = arith.constant 0 : i32
    %289 = vector.broadcast %c0_i32_149 : i32 to vector<64x1xi32>
    %290 = arith.cmpi sge, %288, %289 : vector<64x1xi32>
    %c16_i32_150 = arith.constant 16 : i32
    %291 = vector.broadcast %c16_i32_150 : i32 to vector<64x1xi32>
    %292 = arith.cmpi slt, %288, %291 : vector<64x1xi32>
    %293 = arith.andi %290, %292 : vector<64x1xi1>
    %cst_151 = arith.constant 0.000000e+00 : f32
    %294 = vector.shape_cast %293 : vector<64x1xi1> to vector<64x1xi1>
    %295 = vector.broadcast %294 : vector<64x1xi1> to vector<64x4xi1>
    %296 = vector.broadcast %cst_151 : f32 to vector<64x4xf32>
    %297 = arith.select %295, %286, %296 : vector<64x4xi1>, vector<64x4xf32>
    %c18_152 = arith.constant 18 : index
    %c0_153 = arith.constant 0 : index
    %c0_154 = arith.constant 0 : index
    %298 = vector.load %arg3[%c18_152, %c0_153, %c0_154] : memref<25x4x8xf32, #tpu.memory_space<vmem>>, vector<1x4x8xf32>
    %299 = vector.shape_cast %298 : vector<1x4x8xf32> to vector<4x8xf32>
    %cst_155 = arith.constant dense<0.000000e+00> : vector<64x8xf32>
    %300 = tpu.matmul %297, %299, %cst_155 {dimension_numbers = #tpu.dot_dimension_numbers<[1], [0], [0], [1], [0, 0, 1, 1], [], []>} : vector<64x4xf32>, vector<4x8xf32>, vector<64x8xf32> -> vector<64x8xf32>
    %301 = arith.addf %285, %300 : vector<64x8xf32>
    %c52 = arith.constant 52 : index
    %c0_156 = arith.constant 0 : index
    %302 = vector.load %arg8[%c52, %c0_156] : memref<132x4xf32, #tpu.memory_space<vmem>>, vector<64x4xf32>
    %c2_i32_157 = arith.constant 2 : i32
    %303 = vector.broadcast %c2_i32_157 : i32 to vector<64x1xi32>
    %304 = arith.addi %40, %303 : vector<64x1xi32>
    %c0_i32_158 = arith.constant 0 : i32
    %305 = vector.broadcast %c0_i32_158 : i32 to vector<64x1xi32>
    %306 = arith.cmpi sge, %304, %305 : vector<64x1xi32>
    %c16_i32_159 = arith.constant 16 : i32
    %307 = vector.broadcast %c16_i32_159 : i32 to vector<64x1xi32>
    %308 = arith.cmpi slt, %304, %307 : vector<64x1xi32>
    %309 = arith.andi %306, %308 : vector<64x1xi1>
    %cst_160 = arith.constant 0.000000e+00 : f32
    %310 = vector.shape_cast %309 : vector<64x1xi1> to vector<64x1xi1>
    %311 = vector.broadcast %310 : vector<64x1xi1> to vector<64x4xi1>
    %312 = vector.broadcast %cst_160 : f32 to vector<64x4xf32>
    %313 = arith.select %311, %302, %312 : vector<64x4xi1>, vector<64x4xf32>
    %c19_161 = arith.constant 19 : index
    %c0_162 = arith.constant 0 : index
    %c0_163 = arith.constant 0 : index
    %314 = vector.load %arg3[%c19_161, %c0_162, %c0_163] : memref<25x4x8xf32, #tpu.memory_space<vmem>>, vector<1x4x8xf32>
    %315 = vector.shape_cast %314 : vector<1x4x8xf32> to vector<4x8xf32>
    %cst_164 = arith.constant dense<0.000000e+00> : vector<64x8xf32>
    %316 = tpu.matmul %313, %315, %cst_164 {dimension_numbers = #tpu.dot_dimension_numbers<[1], [0], [0], [1], [0, 0, 1, 1], [], []>} : vector<64x4xf32>, vector<4x8xf32>, vector<64x8xf32> -> vector<64x8xf32>
    %317 = arith.addf %301, %316 : vector<64x8xf32>
    %c64 = arith.constant 64 : index
    %c0_165 = arith.constant 0 : index
    %318 = vector.load %arg8[%c64, %c0_165] : memref<132x4xf32, #tpu.memory_space<vmem>>, vector<64x4xf32>
    %c-2_i32_166 = arith.constant -2 : i32
    %319 = vector.broadcast %c-2_i32_166 : i32 to vector<64x1xi32>
    %320 = arith.addi %40, %319 : vector<64x1xi32>
    %c0_i32_167 = arith.constant 0 : i32
    %321 = vector.broadcast %c0_i32_167 : i32 to vector<64x1xi32>
    %322 = arith.cmpi sge, %320, %321 : vector<64x1xi32>
    %c16_i32_168 = arith.constant 16 : i32
    %323 = vector.broadcast %c16_i32_168 : i32 to vector<64x1xi32>
    %324 = arith.cmpi slt, %320, %323 : vector<64x1xi32>
    %325 = arith.andi %322, %324 : vector<64x1xi1>
    %cst_169 = arith.constant 0.000000e+00 : f32
    %326 = vector.shape_cast %325 : vector<64x1xi1> to vector<64x1xi1>
    %327 = vector.broadcast %326 : vector<64x1xi1> to vector<64x4xi1>
    %328 = vector.broadcast %cst_169 : f32 to vector<64x4xf32>
    %329 = arith.select %327, %318, %328 : vector<64x4xi1>, vector<64x4xf32>
    %c20_170 = arith.constant 20 : index
    %c0_171 = arith.constant 0 : index
    %c0_172 = arith.constant 0 : index
    %330 = vector.load %arg3[%c20_170, %c0_171, %c0_172] : memref<25x4x8xf32, #tpu.memory_space<vmem>>, vector<1x4x8xf32>
    %331 = vector.shape_cast %330 : vector<1x4x8xf32> to vector<4x8xf32>
    %cst_173 = arith.constant dense<0.000000e+00> : vector<64x8xf32>
    %332 = tpu.matmul %329, %331, %cst_173 {dimension_numbers = #tpu.dot_dimension_numbers<[1], [0], [0], [1], [0, 0, 1, 1], [], []>} : vector<64x4xf32>, vector<4x8xf32>, vector<64x8xf32> -> vector<64x8xf32>
    %333 = arith.addf %317, %332 : vector<64x8xf32>
    %c65 = arith.constant 65 : index
    %c0_174 = arith.constant 0 : index
    %334 = vector.load %arg8[%c65, %c0_174] : memref<132x4xf32, #tpu.memory_space<vmem>>, vector<64x4xf32>
    %c-1_i32_175 = arith.constant -1 : i32
    %335 = vector.broadcast %c-1_i32_175 : i32 to vector<64x1xi32>
    %336 = arith.addi %40, %335 : vector<64x1xi32>
    %c0_i32_176 = arith.constant 0 : i32
    %337 = vector.broadcast %c0_i32_176 : i32 to vector<64x1xi32>
    %338 = arith.cmpi sge, %336, %337 : vector<64x1xi32>
    %c16_i32_177 = arith.constant 16 : i32
    %339 = vector.broadcast %c16_i32_177 : i32 to vector<64x1xi32>
    %340 = arith.cmpi slt, %336, %339 : vector<64x1xi32>
    %341 = arith.andi %338, %340 : vector<64x1xi1>
    %cst_178 = arith.constant 0.000000e+00 : f32
    %342 = vector.shape_cast %341 : vector<64x1xi1> to vector<64x1xi1>
    %343 = vector.broadcast %342 : vector<64x1xi1> to vector<64x4xi1>
    %344 = vector.broadcast %cst_178 : f32 to vector<64x4xf32>
    %345 = arith.select %343, %334, %344 : vector<64x4xi1>, vector<64x4xf32>
    %c21 = arith.constant 21 : index
    %c0_179 = arith.constant 0 : index
    %c0_180 = arith.constant 0 : index
    %346 = vector.load %arg3[%c21, %c0_179, %c0_180] : memref<25x4x8xf32, #tpu.memory_space<vmem>>, vector<1x4x8xf32>
    %347 = vector.shape_cast %346 : vector<1x4x8xf32> to vector<4x8xf32>
    %cst_181 = arith.constant dense<0.000000e+00> : vector<64x8xf32>
    %348 = tpu.matmul %345, %347, %cst_181 {dimension_numbers = #tpu.dot_dimension_numbers<[1], [0], [0], [1], [0, 0, 1, 1], [], []>} : vector<64x4xf32>, vector<4x8xf32>, vector<64x8xf32> -> vector<64x8xf32>
    %349 = arith.addf %333, %348 : vector<64x8xf32>
    %c66 = arith.constant 66 : index
    %c0_182 = arith.constant 0 : index
    %350 = vector.load %arg8[%c66, %c0_182] : memref<132x4xf32, #tpu.memory_space<vmem>>, vector<64x4xf32>
    %c22 = arith.constant 22 : index
    %c0_183 = arith.constant 0 : index
    %c0_184 = arith.constant 0 : index
    %351 = vector.load %arg3[%c22, %c0_183, %c0_184] : memref<25x4x8xf32, #tpu.memory_space<vmem>>, vector<1x4x8xf32>
    %352 = vector.shape_cast %351 : vector<1x4x8xf32> to vector<4x8xf32>
    %cst_185 = arith.constant dense<0.000000e+00> : vector<64x8xf32>
    %353 = tpu.matmul %350, %352, %cst_185 {dimension_numbers = #tpu.dot_dimension_numbers<[1], [0], [0], [1], [0, 0, 1, 1], [], []>} : vector<64x4xf32>, vector<4x8xf32>, vector<64x8xf32> -> vector<64x8xf32>
    %354 = arith.addf %349, %353 : vector<64x8xf32>
    %c67 = arith.constant 67 : index
    %c0_186 = arith.constant 0 : index
    %355 = vector.load %arg8[%c67, %c0_186] : memref<132x4xf32, #tpu.memory_space<vmem>>, vector<64x4xf32>
    %c1_i32_187 = arith.constant 1 : i32
    %356 = vector.broadcast %c1_i32_187 : i32 to vector<64x1xi32>
    %357 = arith.addi %40, %356 : vector<64x1xi32>
    %c0_i32_188 = arith.constant 0 : i32
    %358 = vector.broadcast %c0_i32_188 : i32 to vector<64x1xi32>
    %359 = arith.cmpi sge, %357, %358 : vector<64x1xi32>
    %c16_i32_189 = arith.constant 16 : i32
    %360 = vector.broadcast %c16_i32_189 : i32 to vector<64x1xi32>
    %361 = arith.cmpi slt, %357, %360 : vector<64x1xi32>
    %362 = arith.andi %359, %361 : vector<64x1xi1>
    %cst_190 = arith.constant 0.000000e+00 : f32
    %363 = vector.shape_cast %362 : vector<64x1xi1> to vector<64x1xi1>
    %364 = vector.broadcast %363 : vector<64x1xi1> to vector<64x4xi1>
    %365 = vector.broadcast %cst_190 : f32 to vector<64x4xf32>
    %366 = arith.select %364, %355, %365 : vector<64x4xi1>, vector<64x4xf32>
    %c23 = arith.constant 23 : index
    %c0_191 = arith.constant 0 : index
    %c0_192 = arith.constant 0 : index
    %367 = vector.load %arg3[%c23, %c0_191, %c0_192] : memref<25x4x8xf32, #tpu.memory_space<vmem>>, vector<1x4x8xf32>
    %368 = vector.shape_cast %367 : vector<1x4x8xf32> to vector<4x8xf32>
    %cst_193 = arith.constant dense<0.000000e+00> : vector<64x8xf32>
    %369 = tpu.matmul %366, %368, %cst_193 {dimension_numbers = #tpu.dot_dimension_numbers<[1], [0], [0], [1], [0, 0, 1, 1], [], []>} : vector<64x4xf32>, vector<4x8xf32>, vector<64x8xf32> -> vector<64x8xf32>
    %370 = arith.addf %354, %369 : vector<64x8xf32>
    %c68 = arith.constant 68 : index
    %c0_194 = arith.constant 0 : index
    %371 = vector.load %arg8[%c68, %c0_194] : memref<132x4xf32, #tpu.memory_space<vmem>>, vector<64x4xf32>
    %c2_i32_195 = arith.constant 2 : i32
    %372 = vector.broadcast %c2_i32_195 : i32 to vector<64x1xi32>
    %373 = arith.addi %40, %372 : vector<64x1xi32>
    %c0_i32_196 = arith.constant 0 : i32
    %374 = vector.broadcast %c0_i32_196 : i32 to vector<64x1xi32>
    %375 = arith.cmpi sge, %373, %374 : vector<64x1xi32>
    %c16_i32_197 = arith.constant 16 : i32
    %376 = vector.broadcast %c16_i32_197 : i32 to vector<64x1xi32>
    %377 = arith.cmpi slt, %373, %376 : vector<64x1xi32>
    %378 = arith.andi %375, %377 : vector<64x1xi1>
    %cst_198 = arith.constant 0.000000e+00 : f32
    %379 = vector.shape_cast %378 : vector<64x1xi1> to vector<64x1xi1>
    %380 = vector.broadcast %379 : vector<64x1xi1> to vector<64x4xi1>
    %381 = vector.broadcast %cst_198 : f32 to vector<64x4xf32>
    %382 = arith.select %380, %371, %381 : vector<64x4xi1>, vector<64x4xf32>
    %c24 = arith.constant 24 : index
    %c0_199 = arith.constant 0 : index
    %c0_200 = arith.constant 0 : index
    %383 = vector.load %arg3[%c24, %c0_199, %c0_200] : memref<25x4x8xf32, #tpu.memory_space<vmem>>, vector<1x4x8xf32>
    %384 = vector.shape_cast %383 : vector<1x4x8xf32> to vector<4x8xf32>
    %cst_201 = arith.constant dense<0.000000e+00> : vector<64x8xf32>
    %385 = tpu.matmul %382, %384, %cst_201 {dimension_numbers = #tpu.dot_dimension_numbers<[1], [0], [0], [1], [0, 0, 1, 1], [], []>} : vector<64x4xf32>, vector<4x8xf32>, vector<64x8xf32> -> vector<64x8xf32>
    %386 = arith.addf %370, %385 : vector<64x8xf32>
    %c0_202 = arith.constant 0 : index
    %c0_203 = arith.constant 0 : index
    %c0_204 = arith.constant 0 : index
    %c0_205 = arith.constant 0 : index
    %387 = vector.load %arg6[%c0_202, %c0_203, %c0_204, %c0_205] : memref<1x1x64x8xf32, #tpu.memory_space<vmem>>, vector<1x1x64x8xf32>
    %388 = vector.shape_cast %387 : vector<1x1x64x8xf32> to vector<64x8xf32>
    %389 = vector.shape_cast %386 : vector<64x8xf32> to vector<1x1x64x8xf32>
    tpu.vector_store %arg6[%c0_202, %c0_203, %c0_204, %c0_205], %389 {strides = array<i32>} : memref<1x1x64x8xf32, #tpu.memory_space<vmem>>, vector<1x1x64x8xf32>,
    %cst_206 = arith.constant dense<0.000000e+00> : vector<8xf32>
    %390 = vector.multi_reduction <add>, %386, %cst_206 [0] : vector<64x8xf32> to vector<8xf32>
    %391 = vector.shape_cast %390 : vector<8xf32> to vector<1x8xf32>
    %392 = arith.mulf %386, %386 : vector<64x8xf32>
    %cst_207 = arith.constant dense<0.000000e+00> : vector<8xf32>
    %393 = vector.multi_reduction <add>, %392, %cst_207 [0] : vector<64x8xf32> to vector<8xf32>
    %394 = vector.shape_cast %393 : vector<8xf32> to vector<1x8xf32>
    %395 = tpu.concatenate %391, %394 in 0 : vector<1x8xf32>, vector<1x8xf32> -> vector<2x8xf32>
    %c0_208 = arith.constant 0 : index
    %c0_209 = arith.constant 0 : index
    %c0_210 = arith.constant 0 : index
    %c0_211 = arith.constant 0 : index
    %396 = vector.load %arg7[%c0_208, %c0_209, %c0_210, %c0_211] : memref<1x1x2x8xf32, #tpu.memory_space<vmem>>, vector<1x1x2x8xf32>
    %397 = vector.shape_cast %396 : vector<1x1x2x8xf32> to vector<2x8xf32>
    %398 = vector.shape_cast %395 : vector<2x8xf32> to vector<1x1x2x8xf32>
    tpu.vector_store %arg7[%c0_208, %c0_209, %c0_210, %c0_211], %398 {strides = array<i32>} : memref<1x1x2x8xf32, #tpu.memory_space<vmem>>, vector<1x1x2x8xf32>,
    return
  }
  func.func @transform_0(%arg0: i32, %arg1: i32) -> (i32, i32, i32, i32) {
    %c0_i32 = arith.constant 0 : i32
    %c0_i32_0 = arith.constant 0 : i32
    %c0_i32_1 = arith.constant 0 : i32
    return %arg0, %arg1, %c0_i32, %c0_i32_0 : i32, i32, i32, i32
  }
  func.func @transform_1(%arg0: i32, %arg1: i32) -> (i32, i32, i32) {
    %c0_i32 = arith.constant 0 : i32
    %c0_i32_0 = arith.constant 0 : i32
    %c0_i32_1 = arith.constant 0 : i32
    %c0_i32_2 = arith.constant 0 : i32
    return %c0_i32, %c0_i32_0, %c0_i32_1 : i32, i32, i32
  }
  func.func @transform_2(%arg0: i32, %arg1: i32) -> (i32, i32) {
    %c0_i32 = arith.constant 0 : i32
    %c0_i32_0 = arith.constant 0 : i32
    %c0_i32_1 = arith.constant 0 : i32
    return %c0_i32, %c0_i32_0 : i32, i32
  }
  func.func @transform_3(%arg0: i32, %arg1: i32) -> (i32, i32) {
    %c0_i32 = arith.constant 0 : i32
    %c0_i32_0 = arith.constant 0 : i32
    %c0_i32_1 = arith.constant 0 : i32
    return %c0_i32, %c0_i32_0 : i32, i32
  }
  func.func @transform_4(%arg0: i32, %arg1: i32) -> (i32, i32, i32, i32) {
    %c0_i32 = arith.constant 0 : i32
    %c0_i32_0 = arith.constant 0 : i32
    %c0_i32_1 = arith.constant 0 : i32
    return %arg0, %arg1, %c0_i32, %c0_i32_0 : i32, i32, i32, i32
  }
  func.func @transform_5(%arg0: i32, %arg1: i32) -> (i32, i32, i32, i32) {
    %c0_i32 = arith.constant 0 : i32
    %c0_i32_0 = arith.constant 0 : i32
    %c0_i32_1 = arith.constant 0 : i32
    return %arg0, %arg1, %c0_i32, %c0_i32_0 : i32, i32, i32, i32
  }
}

module attributes {stable_mosaic.version = 11 : i64} {
  func.func @_kxk_conv_kernel(%arg0: i32, %arg1: i32, %arg2: memref<1x1x98x8xf32, #tpu.memory_space<vmem>>, %arg3: memref<9x8x16xf32, #tpu.memory_space<vmem>>, %arg4: memref<1x8xf32, #tpu.memory_space<vmem>>, %arg5: memref<1x8xf32, #tpu.memory_space<vmem>>, %arg6: memref<1x1x64x16xf32, #tpu.memory_space<vmem>>, %arg7: memref<1x1x2x16xf32, #tpu.memory_space<vmem>>, %arg8: memref<98x8xf32, #tpu.memory_space<vmem>>) attributes {dimension_semantics = [#tpu.dimension_semantics<parallel>, #tpu.dimension_semantics<parallel>], iteration_bounds = array<i64: 2, 4>, scalar_prefetch = 0 : i64, scratch_operands = 1 : i64, tpu.core_type = #tpu.core_type<tc>, window_params = [{transform_indices = @transform_0, window_bounds = array<i64: 1, 1, 98, 8>}, {pipeline_mode = #tpu.pipeline_mode<synchronous>, transform_indices = @transform_1, window_bounds = array<i64: 9, 8, 16>}, {pipeline_mode = #tpu.pipeline_mode<synchronous>, transform_indices = @transform_2, window_bounds = array<i64: 1, 8>}, {pipeline_mode = #tpu.pipeline_mode<synchronous>, transform_indices = @transform_3, window_bounds = array<i64: 1, 8>}, {transform_indices = @transform_4, window_bounds = array<i64: 1, 1, 64, 16>}, {transform_indices = @transform_5, window_bounds = array<i64: 1, 1, 2, 16>}]} {
    %0 = tpu.iota {dimensions = array<i32: 0>} : vector<98x1xi32>
    %c64_i32 = arith.constant 64 : i32
    %1 = arith.muli %arg1, %c64_i32 : i32
    %2 = vector.broadcast %1 : i32 to vector<98x1xi32>
    %3 = arith.addi %2, %0 : vector<98x1xi32>
    %c17_i32 = arith.constant 17 : i32
    %4 = vector.broadcast %c17_i32 : i32 to vector<98x1xi32>
    %5 = arith.cmpi sge, %3, %4 : vector<98x1xi32>
    %c273_i32 = arith.constant 273 : i32
    %6 = vector.broadcast %c273_i32 : i32 to vector<98x1xi32>
    %7 = arith.cmpi slt, %3, %6 : vector<98x1xi32>
    %8 = arith.andi %5, %7 : vector<98x1xi1>
    %c0 = arith.constant 0 : index
    %c0_0 = arith.constant 0 : index
    %c0_1 = arith.constant 0 : index
    %c0_2 = arith.constant 0 : index
    %9 = vector.load %arg2[%c0, %c0_0, %c0_1, %c0_2] : memref<1x1x98x8xf32, #tpu.memory_space<vmem>>, vector<1x1x98x8xf32>
    %10 = vector.shape_cast %9 : vector<1x1x98x8xf32> to vector<98x8xf32>
    %c0_3 = arith.constant 0 : index
    %c0_4 = arith.constant 0 : index
    %11 = vector.load %arg4[%c0_3, %c0_4] : memref<1x8xf32, #tpu.memory_space<vmem>>, vector<1x8xf32>
    %12 = vector.broadcast %11 : vector<1x8xf32> to vector<98x8xf32>
    %13 = arith.mulf %10, %12 : vector<98x8xf32>
    %c0_5 = arith.constant 0 : index
    %c0_6 = arith.constant 0 : index
    %14 = vector.load %arg5[%c0_5, %c0_6] : memref<1x8xf32, #tpu.memory_space<vmem>>, vector<1x8xf32>
    %15 = vector.broadcast %14 : vector<1x8xf32> to vector<98x8xf32>
    %16 = arith.addf %13, %15 : vector<98x8xf32>
    %cst = arith.constant 0.000000e+00 : f32
    %17 = vector.broadcast %cst : f32 to vector<98x8xf32>
    %18 = arith.maximumf %16, %17 : vector<98x8xf32>
    %cst_7 = arith.constant 0.000000e+00 : f32
    %19 = vector.shape_cast %8 : vector<98x1xi1> to vector<98x1xi1>
    %20 = vector.broadcast %19 : vector<98x1xi1> to vector<98x8xi1>
    %21 = vector.broadcast %cst_7 : f32 to vector<98x8xf32>
    %22 = arith.select %20, %18, %21 : vector<98x8xi1>, vector<98x8xf32>
    %c0_8 = arith.constant 0 : index
    %c0_9 = arith.constant 0 : index
    %23 = vector.load %arg8[%c0_8, %c0_9] : memref<98x8xf32, #tpu.memory_space<vmem>>, vector<98x8xf32>
    tpu.vector_store %arg8[%c0_8, %c0_9], %22 {strides = array<i32>} : memref<98x8xf32, #tpu.memory_space<vmem>>, vector<98x8xf32>,
    %24 = tpu.iota {dimensions = array<i32: 0>} : vector<64x1xi32>
    %c16_i32 = arith.constant 16 : i32
    %c0_i32 = arith.constant 0 : i32
    %25 = arith.cmpi eq, %c16_i32, %c0_i32 : i32
    %c1_i32 = arith.constant 1 : i32
    %26 = arith.select %25, %c1_i32, %c16_i32 : i32
    %27 = vector.broadcast %26 : i32 to vector<64x1xi32>
    %28 = arith.remsi %24, %27 : vector<64x1xi32>
    %c0_i32_10 = arith.constant 0 : i32
    %29 = vector.broadcast %c0_i32_10 : i32 to vector<64x1xi32>
    %30 = arith.cmpi ne, %28, %29 : vector<64x1xi32>
    %c0_i32_11 = arith.constant 0 : i32
    %31 = vector.broadcast %c0_i32_11 : i32 to vector<64x1xi32>
    %32 = arith.cmpi slt, %28, %31 : vector<64x1xi32>
    %c0_i32_12 = arith.constant 0 : i32
    %33 = arith.cmpi slt, %26, %c0_i32_12 : i32
    %34 = vector.broadcast %33 : i1 to vector<64x1xi1>
    %35 = vector.broadcast %34 : vector<64x1xi1> to vector<64x1xi1>
    %36 = arith.xori %32, %35 : vector<64x1xi1>
    %37 = arith.andi %36, %30 : vector<64x1xi1>
    %38 = vector.broadcast %26 : i32 to vector<64x1xi32>
    %39 = arith.addi %28, %38 : vector<64x1xi32>
    %40 = arith.select %37, %39, %28 : vector<64x1xi1>, vector<64x1xi32>
    %cst_13 = arith.constant 0.000000e+00 : f32
    %41 = vector.broadcast %cst_13 : f32 to vector<64x16xf32>
    %c0_14 = arith.constant 0 : index
    %c0_15 = arith.constant 0 : index
    %42 = vector.load %arg8[%c0_14, %c0_15] : memref<98x8xf32, #tpu.memory_space<vmem>>, vector<64x8xf32>
    %c-1_i32 = arith.constant -1 : i32
    %43 = vector.broadcast %c-1_i32 : i32 to vector<64x1xi32>
    %44 = arith.addi %40, %43 : vector<64x1xi32>
    %c0_i32_16 = arith.constant 0 : i32
    %45 = vector.broadcast %c0_i32_16 : i32 to vector<64x1xi32>
    %46 = arith.cmpi sge, %44, %45 : vector<64x1xi32>
    %c16_i32_17 = arith.constant 16 : i32
    %47 = vector.broadcast %c16_i32_17 : i32 to vector<64x1xi32>
    %48 = arith.cmpi slt, %44, %47 : vector<64x1xi32>
    %49 = arith.andi %46, %48 : vector<64x1xi1>
    %cst_18 = arith.constant 0.000000e+00 : f32
    %50 = vector.shape_cast %49 : vector<64x1xi1> to vector<64x1xi1>
    %51 = vector.broadcast %50 : vector<64x1xi1> to vector<64x8xi1>
    %52 = vector.broadcast %cst_18 : f32 to vector<64x8xf32>
    %53 = arith.select %51, %42, %52 : vector<64x8xi1>, vector<64x8xf32>
    %c0_19 = arith.constant 0 : index
    %c0_20 = arith.constant 0 : index
    %c0_21 = arith.constant 0 : index
    %54 = vector.load %arg3[%c0_19, %c0_20, %c0_21] : memref<9x8x16xf32, #tpu.memory_space<vmem>>, vector<1x8x16xf32>
    %55 = vector.shape_cast %54 : vector<1x8x16xf32> to vector<8x16xf32>
    %cst_22 = arith.constant dense<0.000000e+00> : vector<64x16xf32>
    %56 = tpu.matmul %53, %55, %cst_22 {dimension_numbers = #tpu.dot_dimension_numbers<[1], [0], [0], [1], [0, 0, 1, 1], [], []>} : vector<64x8xf32>, vector<8x16xf32>, vector<64x16xf32> -> vector<64x16xf32>
    %57 = arith.addf %41, %56 : vector<64x16xf32>
    %c1 = arith.constant 1 : index
    %c0_23 = arith.constant 0 : index
    %58 = vector.load %arg8[%c1, %c0_23] : memref<98x8xf32, #tpu.memory_space<vmem>>, vector<64x8xf32>
    %c1_24 = arith.constant 1 : index
    %c0_25 = arith.constant 0 : index
    %c0_26 = arith.constant 0 : index
    %59 = vector.load %arg3[%c1_24, %c0_25, %c0_26] : memref<9x8x16xf32, #tpu.memory_space<vmem>>, vector<1x8x16xf32>
    %60 = vector.shape_cast %59 : vector<1x8x16xf32> to vector<8x16xf32>
    %cst_27 = arith.constant dense<0.000000e+00> : vector<64x16xf32>
    %61 = tpu.matmul %58, %60, %cst_27 {dimension_numbers = #tpu.dot_dimension_numbers<[1], [0], [0], [1], [0, 0, 1, 1], [], []>} : vector<64x8xf32>, vector<8x16xf32>, vector<64x16xf32> -> vector<64x16xf32>
    %62 = arith.addf %57, %61 : vector<64x16xf32>
    %c2 = arith.constant 2 : index
    %c0_28 = arith.constant 0 : index
    %63 = vector.load %arg8[%c2, %c0_28] : memref<98x8xf32, #tpu.memory_space<vmem>>, vector<64x8xf32>
    %c1_i32_29 = arith.constant 1 : i32
    %64 = vector.broadcast %c1_i32_29 : i32 to vector<64x1xi32>
    %65 = arith.addi %40, %64 : vector<64x1xi32>
    %c0_i32_30 = arith.constant 0 : i32
    %66 = vector.broadcast %c0_i32_30 : i32 to vector<64x1xi32>
    %67 = arith.cmpi sge, %65, %66 : vector<64x1xi32>
    %c16_i32_31 = arith.constant 16 : i32
    %68 = vector.broadcast %c16_i32_31 : i32 to vector<64x1xi32>
    %69 = arith.cmpi slt, %65, %68 : vector<64x1xi32>
    %70 = arith.andi %67, %69 : vector<64x1xi1>
    %cst_32 = arith.constant 0.000000e+00 : f32
    %71 = vector.shape_cast %70 : vector<64x1xi1> to vector<64x1xi1>
    %72 = vector.broadcast %71 : vector<64x1xi1> to vector<64x8xi1>
    %73 = vector.broadcast %cst_32 : f32 to vector<64x8xf32>
    %74 = arith.select %72, %63, %73 : vector<64x8xi1>, vector<64x8xf32>
    %c2_33 = arith.constant 2 : index
    %c0_34 = arith.constant 0 : index
    %c0_35 = arith.constant 0 : index
    %75 = vector.load %arg3[%c2_33, %c0_34, %c0_35] : memref<9x8x16xf32, #tpu.memory_space<vmem>>, vector<1x8x16xf32>
    %76 = vector.shape_cast %75 : vector<1x8x16xf32> to vector<8x16xf32>
    %cst_36 = arith.constant dense<0.000000e+00> : vector<64x16xf32>
    %77 = tpu.matmul %74, %76, %cst_36 {dimension_numbers = #tpu.dot_dimension_numbers<[1], [0], [0], [1], [0, 0, 1, 1], [], []>} : vector<64x8xf32>, vector<8x16xf32>, vector<64x16xf32> -> vector<64x16xf32>
    %78 = arith.addf %62, %77 : vector<64x16xf32>
    %c16 = arith.constant 16 : index
    %c0_37 = arith.constant 0 : index
    %79 = vector.load %arg8[%c16, %c0_37] : memref<98x8xf32, #tpu.memory_space<vmem>>, vector<64x8xf32>
    %c-1_i32_38 = arith.constant -1 : i32
    %80 = vector.broadcast %c-1_i32_38 : i32 to vector<64x1xi32>
    %81 = arith.addi %40, %80 : vector<64x1xi32>
    %c0_i32_39 = arith.constant 0 : i32
    %82 = vector.broadcast %c0_i32_39 : i32 to vector<64x1xi32>
    %83 = arith.cmpi sge, %81, %82 : vector<64x1xi32>
    %c16_i32_40 = arith.constant 16 : i32
    %84 = vector.broadcast %c16_i32_40 : i32 to vector<64x1xi32>
    %85 = arith.cmpi slt, %81, %84 : vector<64x1xi32>
    %86 = arith.andi %83, %85 : vector<64x1xi1>
    %cst_41 = arith.constant 0.000000e+00 : f32
    %87 = vector.shape_cast %86 : vector<64x1xi1> to vector<64x1xi1>
    %88 = vector.broadcast %87 : vector<64x1xi1> to vector<64x8xi1>
    %89 = vector.broadcast %cst_41 : f32 to vector<64x8xf32>
    %90 = arith.select %88, %79, %89 : vector<64x8xi1>, vector<64x8xf32>
    %c3 = arith.constant 3 : index
    %c0_42 = arith.constant 0 : index
    %c0_43 = arith.constant 0 : index
    %91 = vector.load %arg3[%c3, %c0_42, %c0_43] : memref<9x8x16xf32, #tpu.memory_space<vmem>>, vector<1x8x16xf32>
    %92 = vector.shape_cast %91 : vector<1x8x16xf32> to vector<8x16xf32>
    %cst_44 = arith.constant dense<0.000000e+00> : vector<64x16xf32>
    %93 = tpu.matmul %90, %92, %cst_44 {dimension_numbers = #tpu.dot_dimension_numbers<[1], [0], [0], [1], [0, 0, 1, 1], [], []>} : vector<64x8xf32>, vector<8x16xf32>, vector<64x16xf32> -> vector<64x16xf32>
    %94 = arith.addf %78, %93 : vector<64x16xf32>
    %c17 = arith.constant 17 : index
    %c0_45 = arith.constant 0 : index
    %95 = vector.load %arg8[%c17, %c0_45] : memref<98x8xf32, #tpu.memory_space<vmem>>, vector<64x8xf32>
    %c4 = arith.constant 4 : index
    %c0_46 = arith.constant 0 : index
    %c0_47 = arith.constant 0 : index
    %96 = vector.load %arg3[%c4, %c0_46, %c0_47] : memref<9x8x16xf32, #tpu.memory_space<vmem>>, vector<1x8x16xf32>
    %97 = vector.shape_cast %96 : vector<1x8x16xf32> to vector<8x16xf32>
    %cst_48 = arith.constant dense<0.000000e+00> : vector<64x16xf32>
    %98 = tpu.matmul %95, %97, %cst_48 {dimension_numbers = #tpu.dot_dimension_numbers<[1], [0], [0], [1], [0, 0, 1, 1], [], []>} : vector<64x8xf32>, vector<8x16xf32>, vector<64x16xf32> -> vector<64x16xf32>
    %99 = arith.addf %94, %98 : vector<64x16xf32>
    %c18 = arith.constant 18 : index
    %c0_49 = arith.constant 0 : index
    %100 = vector.load %arg8[%c18, %c0_49] : memref<98x8xf32, #tpu.memory_space<vmem>>, vector<64x8xf32>
    %c1_i32_50 = arith.constant 1 : i32
    %101 = vector.broadcast %c1_i32_50 : i32 to vector<64x1xi32>
    %102 = arith.addi %40, %101 : vector<64x1xi32>
    %c0_i32_51 = arith.constant 0 : i32
    %103 = vector.broadcast %c0_i32_51 : i32 to vector<64x1xi32>
    %104 = arith.cmpi sge, %102, %103 : vector<64x1xi32>
    %c16_i32_52 = arith.constant 16 : i32
    %105 = vector.broadcast %c16_i32_52 : i32 to vector<64x1xi32>
    %106 = arith.cmpi slt, %102, %105 : vector<64x1xi32>
    %107 = arith.andi %104, %106 : vector<64x1xi1>
    %cst_53 = arith.constant 0.000000e+00 : f32
    %108 = vector.shape_cast %107 : vector<64x1xi1> to vector<64x1xi1>
    %109 = vector.broadcast %108 : vector<64x1xi1> to vector<64x8xi1>
    %110 = vector.broadcast %cst_53 : f32 to vector<64x8xf32>
    %111 = arith.select %109, %100, %110 : vector<64x8xi1>, vector<64x8xf32>
    %c5 = arith.constant 5 : index
    %c0_54 = arith.constant 0 : index
    %c0_55 = arith.constant 0 : index
    %112 = vector.load %arg3[%c5, %c0_54, %c0_55] : memref<9x8x16xf32, #tpu.memory_space<vmem>>, vector<1x8x16xf32>
    %113 = vector.shape_cast %112 : vector<1x8x16xf32> to vector<8x16xf32>
    %cst_56 = arith.constant dense<0.000000e+00> : vector<64x16xf32>
    %114 = tpu.matmul %111, %113, %cst_56 {dimension_numbers = #tpu.dot_dimension_numbers<[1], [0], [0], [1], [0, 0, 1, 1], [], []>} : vector<64x8xf32>, vector<8x16xf32>, vector<64x16xf32> -> vector<64x16xf32>
    %115 = arith.addf %99, %114 : vector<64x16xf32>
    %c32 = arith.constant 32 : index
    %c0_57 = arith.constant 0 : index
    %116 = vector.load %arg8[%c32, %c0_57] : memref<98x8xf32, #tpu.memory_space<vmem>>, vector<64x8xf32>
    %c-1_i32_58 = arith.constant -1 : i32
    %117 = vector.broadcast %c-1_i32_58 : i32 to vector<64x1xi32>
    %118 = arith.addi %40, %117 : vector<64x1xi32>
    %c0_i32_59 = arith.constant 0 : i32
    %119 = vector.broadcast %c0_i32_59 : i32 to vector<64x1xi32>
    %120 = arith.cmpi sge, %118, %119 : vector<64x1xi32>
    %c16_i32_60 = arith.constant 16 : i32
    %121 = vector.broadcast %c16_i32_60 : i32 to vector<64x1xi32>
    %122 = arith.cmpi slt, %118, %121 : vector<64x1xi32>
    %123 = arith.andi %120, %122 : vector<64x1xi1>
    %cst_61 = arith.constant 0.000000e+00 : f32
    %124 = vector.shape_cast %123 : vector<64x1xi1> to vector<64x1xi1>
    %125 = vector.broadcast %124 : vector<64x1xi1> to vector<64x8xi1>
    %126 = vector.broadcast %cst_61 : f32 to vector<64x8xf32>
    %127 = arith.select %125, %116, %126 : vector<64x8xi1>, vector<64x8xf32>
    %c6 = arith.constant 6 : index
    %c0_62 = arith.constant 0 : index
    %c0_63 = arith.constant 0 : index
    %128 = vector.load %arg3[%c6, %c0_62, %c0_63] : memref<9x8x16xf32, #tpu.memory_space<vmem>>, vector<1x8x16xf32>
    %129 = vector.shape_cast %128 : vector<1x8x16xf32> to vector<8x16xf32>
    %cst_64 = arith.constant dense<0.000000e+00> : vector<64x16xf32>
    %130 = tpu.matmul %127, %129, %cst_64 {dimension_numbers = #tpu.dot_dimension_numbers<[1], [0], [0], [1], [0, 0, 1, 1], [], []>} : vector<64x8xf32>, vector<8x16xf32>, vector<64x16xf32> -> vector<64x16xf32>
    %131 = arith.addf %115, %130 : vector<64x16xf32>
    %c33 = arith.constant 33 : index
    %c0_65 = arith.constant 0 : index
    %132 = vector.load %arg8[%c33, %c0_65] : memref<98x8xf32, #tpu.memory_space<vmem>>, vector<64x8xf32>
    %c7 = arith.constant 7 : index
    %c0_66 = arith.constant 0 : index
    %c0_67 = arith.constant 0 : index
    %133 = vector.load %arg3[%c7, %c0_66, %c0_67] : memref<9x8x16xf32, #tpu.memory_space<vmem>>, vector<1x8x16xf32>
    %134 = vector.shape_cast %133 : vector<1x8x16xf32> to vector<8x16xf32>
    %cst_68 = arith.constant dense<0.000000e+00> : vector<64x16xf32>
    %135 = tpu.matmul %132, %134, %cst_68 {dimension_numbers = #tpu.dot_dimension_numbers<[1], [0], [0], [1], [0, 0, 1, 1], [], []>} : vector<64x8xf32>, vector<8x16xf32>, vector<64x16xf32> -> vector<64x16xf32>
    %136 = arith.addf %131, %135 : vector<64x16xf32>
    %c34 = arith.constant 34 : index
    %c0_69 = arith.constant 0 : index
    %137 = vector.load %arg8[%c34, %c0_69] : memref<98x8xf32, #tpu.memory_space<vmem>>, vector<64x8xf32>
    %c1_i32_70 = arith.constant 1 : i32
    %138 = vector.broadcast %c1_i32_70 : i32 to vector<64x1xi32>
    %139 = arith.addi %40, %138 : vector<64x1xi32>
    %c0_i32_71 = arith.constant 0 : i32
    %140 = vector.broadcast %c0_i32_71 : i32 to vector<64x1xi32>
    %141 = arith.cmpi sge, %139, %140 : vector<64x1xi32>
    %c16_i32_72 = arith.constant 16 : i32
    %142 = vector.broadcast %c16_i32_72 : i32 to vector<64x1xi32>
    %143 = arith.cmpi slt, %139, %142 : vector<64x1xi32>
    %144 = arith.andi %141, %143 : vector<64x1xi1>
    %cst_73 = arith.constant 0.000000e+00 : f32
    %145 = vector.shape_cast %144 : vector<64x1xi1> to vector<64x1xi1>
    %146 = vector.broadcast %145 : vector<64x1xi1> to vector<64x8xi1>
    %147 = vector.broadcast %cst_73 : f32 to vector<64x8xf32>
    %148 = arith.select %146, %137, %147 : vector<64x8xi1>, vector<64x8xf32>
    %c8 = arith.constant 8 : index
    %c0_74 = arith.constant 0 : index
    %c0_75 = arith.constant 0 : index
    %149 = vector.load %arg3[%c8, %c0_74, %c0_75] : memref<9x8x16xf32, #tpu.memory_space<vmem>>, vector<1x8x16xf32>
    %150 = vector.shape_cast %149 : vector<1x8x16xf32> to vector<8x16xf32>
    %cst_76 = arith.constant dense<0.000000e+00> : vector<64x16xf32>
    %151 = tpu.matmul %148, %150, %cst_76 {dimension_numbers = #tpu.dot_dimension_numbers<[1], [0], [0], [1], [0, 0, 1, 1], [], []>} : vector<64x8xf32>, vector<8x16xf32>, vector<64x16xf32> -> vector<64x16xf32>
    %152 = arith.addf %136, %151 : vector<64x16xf32>
    %c0_77 = arith.constant 0 : index
    %c0_78 = arith.constant 0 : index
    %c0_79 = arith.constant 0 : index
    %c0_80 = arith.constant 0 : index
    %153 = vector.load %arg6[%c0_77, %c0_78, %c0_79, %c0_80] : memref<1x1x64x16xf32, #tpu.memory_space<vmem>>, vector<1x1x64x16xf32>
    %154 = vector.shape_cast %153 : vector<1x1x64x16xf32> to vector<64x16xf32>
    %155 = vector.shape_cast %152 : vector<64x16xf32> to vector<1x1x64x16xf32>
    tpu.vector_store %arg6[%c0_77, %c0_78, %c0_79, %c0_80], %155 {strides = array<i32>} : memref<1x1x64x16xf32, #tpu.memory_space<vmem>>, vector<1x1x64x16xf32>,
    %cst_81 = arith.constant dense<0.000000e+00> : vector<16xf32>
    %156 = vector.multi_reduction <add>, %152, %cst_81 [0] : vector<64x16xf32> to vector<16xf32>
    %157 = vector.shape_cast %156 : vector<16xf32> to vector<1x16xf32>
    %158 = arith.mulf %152, %152 : vector<64x16xf32>
    %cst_82 = arith.constant dense<0.000000e+00> : vector<16xf32>
    %159 = vector.multi_reduction <add>, %158, %cst_82 [0] : vector<64x16xf32> to vector<16xf32>
    %160 = vector.shape_cast %159 : vector<16xf32> to vector<1x16xf32>
    %161 = tpu.concatenate %157, %160 in 0 : vector<1x16xf32>, vector<1x16xf32> -> vector<2x16xf32>
    %c0_83 = arith.constant 0 : index
    %c0_84 = arith.constant 0 : index
    %c0_85 = arith.constant 0 : index
    %c0_86 = arith.constant 0 : index
    %162 = vector.load %arg7[%c0_83, %c0_84, %c0_85, %c0_86] : memref<1x1x2x16xf32, #tpu.memory_space<vmem>>, vector<1x1x2x16xf32>
    %163 = vector.shape_cast %162 : vector<1x1x2x16xf32> to vector<2x16xf32>
    %164 = vector.shape_cast %161 : vector<2x16xf32> to vector<1x1x2x16xf32>
    tpu.vector_store %arg7[%c0_83, %c0_84, %c0_85, %c0_86], %164 {strides = array<i32>} : memref<1x1x2x16xf32, #tpu.memory_space<vmem>>, vector<1x1x2x16xf32>,
    return
  }
  func.func @transform_0(%arg0: i32, %arg1: i32) -> (i32, i32, i32, i32) {
    %c0_i32 = arith.constant 0 : i32
    %c0_i32_0 = arith.constant 0 : i32
    %c0_i32_1 = arith.constant 0 : i32
    return %arg0, %arg1, %c0_i32, %c0_i32_0 : i32, i32, i32, i32
  }
  func.func @transform_1(%arg0: i32, %arg1: i32) -> (i32, i32, i32) {
    %c0_i32 = arith.constant 0 : i32
    %c0_i32_0 = arith.constant 0 : i32
    %c0_i32_1 = arith.constant 0 : i32
    %c0_i32_2 = arith.constant 0 : i32
    return %c0_i32, %c0_i32_0, %c0_i32_1 : i32, i32, i32
  }
  func.func @transform_2(%arg0: i32, %arg1: i32) -> (i32, i32) {
    %c0_i32 = arith.constant 0 : i32
    %c0_i32_0 = arith.constant 0 : i32
    %c0_i32_1 = arith.constant 0 : i32
    return %c0_i32, %c0_i32_0 : i32, i32
  }
  func.func @transform_3(%arg0: i32, %arg1: i32) -> (i32, i32) {
    %c0_i32 = arith.constant 0 : i32
    %c0_i32_0 = arith.constant 0 : i32
    %c0_i32_1 = arith.constant 0 : i32
    return %c0_i32, %c0_i32_0 : i32, i32
  }
  func.func @transform_4(%arg0: i32, %arg1: i32) -> (i32, i32, i32, i32) {
    %c0_i32 = arith.constant 0 : i32
    %c0_i32_0 = arith.constant 0 : i32
    %c0_i32_1 = arith.constant 0 : i32
    return %arg0, %arg1, %c0_i32, %c0_i32_0 : i32, i32, i32, i32
  }
  func.func @transform_5(%arg0: i32, %arg1: i32) -> (i32, i32, i32, i32) {
    %c0_i32 = arith.constant 0 : i32
    %c0_i32_0 = arith.constant 0 : i32
    %c0_i32_1 = arith.constant 0 : i32
    return %arg0, %arg1, %c0_i32, %c0_i32_0 : i32, i32, i32, i32
  }
}

module attributes {stable_mosaic.version = 11 : i64} {
  func.func @_affine_relu_kernel(%arg0: i32, %arg1: memref<512x16xf32, #tpu.memory_space<vmem>>, %arg2: memref<1x16xf32, #tpu.memory_space<vmem>>, %arg3: memref<1x16xf32, #tpu.memory_space<vmem>>, %arg4: memref<512x16xf32, #tpu.memory_space<vmem>>) attributes {dimension_semantics = [#tpu.dimension_semantics<parallel>], iteration_bounds = array<i64: 1>, scalar_prefetch = 0 : i64, scratch_operands = 0 : i64, tpu.core_type = #tpu.core_type<tc>, window_params = [{transform_indices = @transform_0, window_bounds = array<i64: 512, 16>}, {pipeline_mode = #tpu.pipeline_mode<synchronous>, transform_indices = @transform_1, window_bounds = array<i64: 1, 16>}, {pipeline_mode = #tpu.pipeline_mode<synchronous>, transform_indices = @transform_2, window_bounds = array<i64: 1, 16>}, {transform_indices = @transform_3, window_bounds = array<i64: 512, 16>}]} {
    %c0 = arith.constant 0 : index
    %c0_0 = arith.constant 0 : index
    %0 = vector.load %arg1[%c0, %c0_0] : memref<512x16xf32, #tpu.memory_space<vmem>>, vector<512x16xf32>
    %c0_1 = arith.constant 0 : index
    %c0_2 = arith.constant 0 : index
    %1 = vector.load %arg2[%c0_1, %c0_2] : memref<1x16xf32, #tpu.memory_space<vmem>>, vector<1x16xf32>
    %2 = vector.broadcast %1 : vector<1x16xf32> to vector<512x16xf32>
    %3 = arith.mulf %0, %2 : vector<512x16xf32>
    %c0_3 = arith.constant 0 : index
    %c0_4 = arith.constant 0 : index
    %4 = vector.load %arg3[%c0_3, %c0_4] : memref<1x16xf32, #tpu.memory_space<vmem>>, vector<1x16xf32>
    %5 = vector.broadcast %4 : vector<1x16xf32> to vector<512x16xf32>
    %6 = arith.addf %3, %5 : vector<512x16xf32>
    %cst = arith.constant 0.000000e+00 : f32
    %7 = vector.broadcast %cst : f32 to vector<512x16xf32>
    %8 = arith.maximumf %6, %7 : vector<512x16xf32>
    %c0_5 = arith.constant 0 : index
    %c0_6 = arith.constant 0 : index
    %9 = vector.load %arg4[%c0_5, %c0_6] : memref<512x16xf32, #tpu.memory_space<vmem>>, vector<512x16xf32>
    tpu.vector_store %arg4[%c0_5, %c0_6], %8 {strides = array<i32>} : memref<512x16xf32, #tpu.memory_space<vmem>>, vector<512x16xf32>,
    return
  }
  func.func @transform_0(%arg0: i32) -> (i32, i32) {
    %c0_i32 = arith.constant 0 : i32
    %c0_i32_0 = arith.constant 0 : i32
    return %arg0, %c0_i32 : i32, i32
  }
  func.func @transform_1(%arg0: i32) -> (i32, i32) {
    %c0_i32 = arith.constant 0 : i32
    %c0_i32_0 = arith.constant 0 : i32
    %c0_i32_1 = arith.constant 0 : i32
    return %c0_i32, %c0_i32_0 : i32, i32
  }
  func.func @transform_2(%arg0: i32) -> (i32, i32) {
    %c0_i32 = arith.constant 0 : i32
    %c0_i32_0 = arith.constant 0 : i32
    %c0_i32_1 = arith.constant 0 : i32
    return %c0_i32, %c0_i32_0 : i32, i32
  }
  func.func @transform_3(%arg0: i32) -> (i32, i32) {
    %c0_i32 = arith.constant 0 : i32
    %c0_i32_0 = arith.constant 0 : i32
    return %arg0, %c0_i32 : i32, i32
  }
}

</mosaic_0001>

<llo_original>
// kernel: neg.36
$region0: #{neg.36}
  #allocation0 [shape = 's32[1]{0}', space=sflag, size = 0x4, scoped, tag = 'scoped memory for neg.36']
  %s0 = inlined_call_operand.vmem [shape: f32[1,4,2], index: 0, kind: input, shape index: {}]
  %s1 = inlined_call_operand.vmem [shape: f32[1,4,2], index: 1, kind: output, shape index: {}]
  %v2 = vld [vmem:[%s0] sm:$0x3]
  %3 = xla_tuple %v2
  %4 = xla_tuple %3
  %v5 = vxor.u32 %v2, 2147483648
  %6 = xla_tuple %v5
  %7 = vst [vmem:[%s1] sm:$0x3] %v5

// kernel: complex_inception_forward.15
$region0: #{complex_inception_forward.15}
  #allocation0 [shape = 'u32[]', space=smem, size = 0x4, offset = 0x4, fixed_abs, tag = 'smem constant byte address 0x4 - core index']
  #allocation1 [shape = 'u32[144,128]{1,0:T(1,128)}', space=vmem, size = 0x12000, scoped, tag = 'internal scratch']
  %s0 = inlined_call_operand.vmem [shape: f32[512,8], index: 0, kind: input, shape index: {}]
  %s1 = inlined_call_operand.vmem [shape: f32[1,8], index: 1, kind: input, shape index: {}]
  %s2 = inlined_call_operand.vmem [shape: f32[1,8], index: 2, kind: input, shape index: {}]
  %s3 = inlined_call_operand.vmem [shape: f32[512,8], index: 3, kind: output, shape index: {}]
  %s4 = sld [smem:[#allocation0]]
  $region22: #{complex_inception_forward.15} parent=0
    _
  %s6 = ssub.s32 1, %s4
  %s7 = scalar_select 0, %s6, %s4
  // Predicated region
  $region2: #{complex_inception_forward.15} parent=0 // pred_check
    _
  $region3: #{complex_inception_forward.15} parent=0 // pred_check_branch
    %9 = sbr.rel (0) target = $region5
  $region4: #{complex_inception_forward.15} parent=0 // pred_region
    _
  $region5: #{complex_inception_forward.15} parent=0 // pred_fallthru
    _
  // Predicated region
  $region6: #{complex_inception_forward.15} parent=0 // pred_check
    _
  $region7: #{complex_inception_forward.15} parent=0 // pred_check_branch
    %11 = sbr.rel (0) target = $region9
  $region8: #{complex_inception_forward.15} parent=0 // pred_region
    _
  $region9: #{complex_inception_forward.15} parent=0 // pred_fallthru
    _
  // Predicated region
  $region10: #{complex_inception_forward.15} parent=0 // pred_check
    _
  $region11: #{complex_inception_forward.15} parent=0 // pred_check_branch
    %13 = sbr.rel (0) target = $region13
  $region12: #{complex_inception_forward.15} parent=0 // pred_region
    _
  $region13: #{complex_inception_forward.15} parent=0 // pred_fallthru
    _
  %v14 = vld [vmem:[%s0] sm:$0xff]
  %v15 = vld [vmem:[%s0 + $0x8] sm:$0xff]
  %v16 = vld [vmem:[%s0 + $0x10] sm:$0xff]
  %v17 = vld [vmem:[%s0 + $0x18] sm:$0xff]
  %v18 = vld [vmem:[%s0 + $0x20] sm:$0xff]
  %v19 = vld [vmem:[%s0 + $0x28] sm:$0xff]
  %v20 = vld [vmem:[%s0 + $0x30] sm:$0xff]
  %v21 = vld [vmem:[%s0 + $0x38] sm:$0xff]
  %v22 = vld [vmem:[%s0 + $0x40] sm:$0xff]
  %v23 = vld [vmem:[%s0 + $0x48] sm:$0xff]
  %v24 = vld [vmem:[%s0 + $0x50] sm:$0xff]
  %v25 = vld [vmem:[%s0 + $0x58] sm:$0xff]
  %v26 = vld [vmem:[%s0 + $0x60] sm:$0xff]
  %v27 = vld [vmem:[%s0 + $0x68] sm:$0xff]
  %v28 = vld [vmem:[%s0 + $0x70] sm:$0xff]
  %v29 = vld [vmem:[%s0 + $0x78] sm:$0xff]
  %v30 = vld [vmem:[%s0 + $0x80] sm:$0xff]
  %v31 = vld [vmem:[%s0 + $0x88] sm:$0xff]
  %v32 = vld [vmem:[%s0 + $0x90] sm:$0xff]
  %v33 = vld [vmem:[%s0 + $0x98] sm:$0xff]
  %v34 = vld [vmem:[%s0 + $0xa0] sm:$0xff]
  %v35 = vld [vmem:[%s0 + $0xa8] sm:$0xff]
  %v36 = vld [vmem:[%s0 + $0xb0] sm:$0xff]
  %v37 = vld [vmem:[%s0 + $0xb8] sm:$0xff]
  %v38 = vld [vmem:[%s0 + $0xc0] sm:$0xff]
  %v39 = vld [vmem:[%s0 + $0xc8] sm:$0xff]
  %v40 = vld [vmem:[%s0 + $0xd0] sm:$0xff]
  %v41 = vld [vmem:[%s0 + $0xd8] sm:$0xff]
  %v42 = vld [vmem:[%s0 + $0xe0] sm:$0xff]
  %v43 = vld [vmem:[%s0 + $0xe8] sm:$0xff]
  %v44 = vld [vmem:[%s0 + $0xf0] sm:$0xff]
  %v45 = vld [vmem:[%s0 + $0xf8] sm:$0xff]
  %v46 = vld [vmem:[%s0 + $0x100] sm:$0xff]
  %v47 = vld [vmem:[%s0 + $0x108] sm:$0xff]
  %v48 = vld [vmem:[%s0 + $0x110] sm:$0xff]
  %v49 = vld [vmem:[%s0 + $0x118] sm:$0xff]
  %v50 = vld [vmem:[%s0 + $0x120] sm:$0xff]
  %v51 = vld [vmem:[%s0 + $0x128] sm:$0xff]
  %v52 = vld [vmem:[%s0 + $0x130] sm:$0xff]
  %v53 = vld [vmem:[%s0 + $0x138] sm:$0xff]
  %v54 = vld [vmem:[%s0 + $0x140] sm:$0xff]
  %v55 = vld [vmem:[%s0 + $0x148] sm:$0xff]
  %v56 = vld [vmem:[%s0 + $0x150] sm:$0xff]
  %v57 = vld [vmem:[%s0 + $0x158] sm:$0xff]
  %v58 = vld [vmem:[%s0 + $0x160] sm:$0xff]
  %v59 = vld [vmem:[%s0 + $0x168] sm:$0xff]
  %v60 = vld [vmem:[%s0 + $0x170] sm:$0xff]
  %v61 = vld [vmem:[%s0 + $0x178] sm:$0xff]
  %v62 = vld [vmem:[%s0 + $0x180] sm:$0xff]
  %v63 = vld [vmem:[%s0 + $0x188] sm:$0xff]
  %v64 = vld [vmem:[%s0 + $0x190] sm:$0xff]
  %v65 = vld [vmem:[%s0 + $0x198] sm:$0xff]
  %v66 = vld [vmem:[%s0 + $0x1a0] sm:$0xff]
  %v67 = vld [vmem:[%s0 + $0x1a8] sm:$0xff]
  %v68 = vld [vmem:[%s0 + $0x1b0] sm:$0xff]
  %v69 = vld [vmem:[%s0 + $0x1b8] sm:$0xff]
  %v70 = vld [vmem:[%s0 + $0x1c0] sm:$0xff]
  %v71 = vld [vmem:[%s0 + $0x1c8] sm:$0xff]
  %v72 = vld [vmem:[%s0 + $0x1d0] sm:$0xff]
  %v73 = vld [vmem:[%s0 + $0x1d8] sm:$0xff]
  %v74 = vld [vmem:[%s0 + $0x1e0] sm:$0xff]
  %v75 = vld [vmem:[%s0 + $0x1e8] sm:$0xff]
  %v76 = vld [vmem:[%s0 + $0x1f0] sm:$0xff]
  %v77 = vld [vmem:[%s0 + $0x1f8] sm:$0xff]
  %v78 = vld [vmem:[%s1] sm:$0x1]
  %v80 = vlaneseq
  %v81 = vshrl.u32 %v80, 7
  %v82 = vsub.s32 0, %v81
  %v83 = vrot.slane %v78, %v82
  %v85 = vmul.f32 %v14, %v83
  %v86 = vmul.f32 %v15, %v83
  %v87 = vmul.f32 %v16, %v83
  %v88 = vmul.f32 %v17, %v83
  %v89 = vmul.f32 %v18, %v83
  %v90 = vmul.f32 %v19, %v83
  %v91 = vmul.f32 %v20, %v83
  %v92 = vmul.f32 %v21, %v83
  %v93 = vmul.f32 %v22, %v83
  %v94 = vmul.f32 %v23, %v83
  %v95 = vmul.f32 %v24, %v83
  %v96 = vmul.f32 %v25, %v83
  %v97 = vmul.f32 %v26, %v83
  %v98 = vmul.f32 %v27, %v83
  %v99 = vmul.f32 %v28, %v83
  %v100 = vmul.f32 %v29, %v83
  %v101 = vmul.f32 %v30, %v83
  %v102 = vmul.f32 %v31, %v83
  %v103 = vmul.f32 %v32, %v83
  %v104 = vmul.f32 %v33, %v83
  %v105 = vmul.f32 %v34, %v83
  %v106 = vmul.f32 %v35, %v83
  %v107 = vmul.f32 %v36, %v83
  %v108 = vmul.f32 %v37, %v83
  %v109 = vmul.f32 %v38, %v83
  %v110 = vmul.f32 %v39, %v83
  %v111 = vmul.f32 %v40, %v83
  %v112 = vmul.f32 %v41, %v83
  %v113 = vmul.f32 %v42, %v83
  %v114 = vmul.f32 %v43, %v83
  %v115 = vmul.f32 %v44, %v83
  %v116 = vmul.f32 %v45, %v83
  %v117 = vmul.f32 %v46, %v83
  %v118 = vmul.f32 %v47, %v83
  %v119 = vmul.f32 %v48, %v83
  %v120 = vmul.f32 %v49, %v83
  %v121 = vmul.f32 %v50, %v83
  %v122 = vmul.f32 %v51, %v83
  %v123 = vmul.f32 %v52, %v83
  %v124 = vmul.f32 %v53, %v83
  %v125 = vmul.f32 %v54, %v83
  %v126 = vmul.f32 %v55, %v83
  %v127 = vmul.f32 %v56, %v83
  %v128 = vmul.f32 %v57, %v83
  %v129 = vmul.f32 %v58, %v83
  %v130 = vmul.f32 %v59, %v83
  %v131 = vmul.f32 %v60, %v83
  %v132 = vmul.f32 %v61, %v83
  %v133 = vmul.f32 %v62, %v83
  %v134 = vmul.f32 %v63, %v83
  %v135 = vmul.f32 %v64, %v83
  %v136 = vmul.f32 %v65, %v83
  %v137 = vmul.f32 %v66, %v83
  %v138 = vmul.f32 %v67, %v83
  %v139 = vmul.f32 %v68, %v83
  %v140 = vmul.f32 %v69, %v83
  %v141 = vmul.f32 %v70, %v83
  %v142 = vmul.f32 %v71, %v83
  %v143 = vmul.f32 %v72, %v83
  %v144 = vmul.f32 %v73, %v83
  %v145 = vmul.f32 %v74, %v83
  %v146 = vmul.f32 %v75, %v83
  %v147 = vmul.f32 %v76, %v83
  %v148 = vmul.f32 %v77, %v83
  %v149 = vld [vmem:[%s2] sm:$0x1]
  %v151 = vlaneseq
  %v152 = vshrl.u32 %v151, 7
  %v153 = vsub.s32 0, %v152
  %v154 = vrot.slane %v149, %v153
  %v156 = vadd.f32 %v85, %v154
  %v157 = vadd.f32 %v86, %v154
  %v158 = vadd.f32 %v87, %v154
  %v159 = vadd.f32 %v88, %v154
  %v160 = vadd.f32 %v89, %v154
  %v161 = vadd.f32 %v90, %v154
  %v162 = vadd.f32 %v91, %v154
  %v163 = vadd.f32 %v92, %v154
  %v164 = vadd.f32 %v93, %v154
  %v165 = vadd.f32 %v94, %v154
  %v166 = vadd.f32 %v95, %v154
  %v167 = vadd.f32 %v96, %v154
  %v168 = vadd.f32 %v97, %v154
  %v169 = vadd.f32 %v98, %v154
  %v170 = vadd.f32 %v99, %v154
  %v171 = vadd.f32 %v100, %v154
  %v172 = vadd.f32 %v101, %v154
  %v173 = vadd.f32 %v102, %v154
  %v174 = vadd.f32 %v103, %v154
  %v175 = vadd.f32 %v104, %v154
  %v176 = vadd.f32 %v105, %v154
  %v177 = vadd.f32 %v106, %v154
  %v178 = vadd.f32 %v107, %v154
  %v179 = vadd.f32 %v108, %v154
  %v180 = vadd.f32 %v109, %v154
  %v181 = vadd.f32 %v110, %v154
  %v182 = vadd.f32 %v111, %v154
  %v183 = vadd.f32 %v112, %v154
  %v184 = vadd.f32 %v113, %v154
  %v185 = vadd.f32 %v114, %v154
  %v186 = vadd.f32 %v115, %v154
  %v187 = vadd.f32 %v116, %v154
  %v188 = vadd.f32 %v117, %v154
  %v189 = vadd.f32 %v118, %v154
  %v190 = vadd.f32 %v119, %v154
  %v191 = vadd.f32 %v120, %v154
  %v192 = vadd.f32 %v121, %v154
  %v193 = vadd.f32 %v122, %v154
  %v194 = vadd.f32 %v123, %v154
  %v195 = vadd.f32 %v124, %v154
  %v196 = vadd.f32 %v125, %v154
  %v197 = vadd.f32 %v126, %v154
  %v198 = vadd.f32 %v127, %v154
  %v199 = vadd.f32 %v128, %v154
  %v200 = vadd.f32 %v129, %v154
  %v201 = vadd.f32 %v130, %v154
  %v202 = vadd.f32 %v131, %v154
  %v203 = vadd.f32 %v132, %v154
  %v204 = vadd.f32 %v133, %v154
  %v205 = vadd.f32 %v134, %v154
  %v206 = vadd.f32 %v135, %v154
  %v207 = vadd.f32 %v136, %v154
  %v208 = vadd.f32 %v137, %v154
  %v209 = vadd.f32 %v138, %v154
  %v210 = vadd.f32 %v139, %v154
  %v211 = vadd.f32 %v140, %v154
  %v212 = vadd.f32 %v141, %v154
  %v213 = vadd.f32 %v142, %v154
  %v214 = vadd.f32 %v143, %v154
  %v215 = vadd.f32 %v144, %v154
  %v216 = vadd.f32 %v145, %v154
  %v217 = vadd.f32 %v146, %v154
  %v218 = vadd.f32 %v147, %v154
  %v219 = vadd.f32 %v148, %v154
  %v220 = vmax.f32 %v156, 0.0
  %v221 = vmax.f32 %v157, 0.0
  %v222 = vmax.f32 %v158, 0.0
  %v223 = vmax.f32 %v159, 0.0
  %v224 = vmax.f32 %v160, 0.0
  %v225 = vmax.f32 %v161, 0.0
  %v226 = vmax.f32 %v162, 0.0
  %v227 = vmax.f32 %v163, 0.0
  %v228 = vmax.f32 %v164, 0.0
  %v229 = vmax.f32 %v165, 0.0
  %v230 = vmax.f32 %v166, 0.0
  %v231 = vmax.f32 %v167, 0.0
  %v232 = vmax.f32 %v168, 0.0
  %v233 = vmax.f32 %v169, 0.0
  %v234 = vmax.f32 %v170, 0.0
  %v235 = vmax.f32 %v171, 0.0
  %v236 = vmax.f32 %v172, 0.0
  %v237 = vmax.f32 %v173, 0.0
  %v238 = vmax.f32 %v174, 0.0
  %v239 = vmax.f32 %v175, 0.0
  %v240 = vmax.f32 %v176, 0.0
  %v241 = vmax.f32 %v177, 0.0
  %v242 = vmax.f32 %v178, 0.0
  %v243 = vmax.f32 %v179, 0.0
  %v244 = vmax.f32 %v180, 0.0
  %v245 = vmax.f32 %v181, 0.0
  %v246 = vmax.f32 %v182, 0.0
  %v247 = vmax.f32 %v183, 0.0
  %v248 = vmax.f32 %v184, 0.0
  %v249 = vmax.f32 %v185, 0.0
  %v250 = vmax.f32 %v186, 0.0
  %v251 = vmax.f32 %v187, 0.0
  %v252 = vmax.f32 %v188, 0.0
  %v253 = vmax.f32 %v189, 0.0
  %v254 = vmax.f32 %v190, 0.0
  %v255 = vmax.f32 %v191, 0.0
  %v256 = vmax.f32 %v192, 0.0
  %v257 = vmax.f32 %v193, 0.0
  %v258 = vmax.f32 %v194, 0.0
  %v259 = vmax.f32 %v195, 0.0
  %v260 = vmax.f32 %v196, 0.0
  %v261 = vmax.f32 %v197, 0.0
  %v262 = vmax.f32 %v198, 0.0
  %v263 = vmax.f32 %v199, 0.0
  %v264 = vmax.f32 %v200, 0.0
  %v265 = vmax.f32 %v201, 0.0
  %v266 = vmax.f32 %v202, 0.0
  %v267 = vmax.f32 %v203, 0.0
  %v268 = vmax.f32 %v204, 0.0
  %v269 = vmax.f32 %v205, 0.0
  %v270 = vmax.f32 %v206, 0.0
  %v271 = vmax.f32 %v207, 0.0
  %v272 = vmax.f32 %v208, 0.0
  %v273 = vmax.f32 %v209, 0.0
  %v274 = vmax.f32 %v210, 0.0
  %v275 = vmax.f32 %v211, 0.0
  %v276 = vmax.f32 %v212, 0.0
  %v277 = vmax.f32 %v213, 0.0
  %v278 = vmax.f32 %v214, 0.0
  %v279 = vmax.f32 %v215, 0.0
  %v280 = vmax.f32 %v216, 0.0
  %v281 = vmax.f32 %v217, 0.0
  %v282 = vmax.f32 %v218, 0.0
  %v283 = vmax.f32 %v219, 0.0
  %vm284 = vcmask 64512
  %285 = vst.msk [vmem:[%s3] sm:$0xff] %vm284, %v220
  %286 = vst.msk [vmem:[%s3 + $0x8] sm:$0xff] %vm284, %v221
  %287 = vst.msk [vmem:[%s3 + $0x10] sm:$0xff] %vm284, %v222
  %288 = vst.msk [vmem:[%s3 + $0x18] sm:$0xff] %vm284, %v223
  %289 = vst.msk [vmem:[%s3 + $0x20] sm:$0xff] %vm284, %v224
  %290 = vst.msk [vmem:[%s3 + $0x28] sm:$0xff] %vm284, %v225
  %291 = vst.msk [vmem:[%s3 + $0x30] sm:$0xff] %vm284, %v226
  %292 = vst.msk [vmem:[%s3 + $0x38] sm:$0xff] %vm284, %v227
  %293 = vst.msk [vmem:[%s3 + $0x40] sm:$0xff] %vm284, %v228
  %294 = vst.msk [vmem:[%s3 + $0x48] sm:$0xff] %vm284, %v229
  %295 = vst.msk [vmem:[%s3 + $0x50] sm:$0xff] %vm284, %v230
  %296 = vst.msk [vmem:[%s3 + $0x58] sm:$0xff] %vm284, %v231
  %297 = vst.msk [vmem:[%s3 + $0x60] sm:$0xff] %vm284, %v232
  %298 = vst.msk [vmem:[%s3 + $0x68] sm:$0xff] %vm284, %v233
  %299 = vst.msk [vmem:[%s3 + $0x70] sm:$0xff] %vm284, %v234
  %300 = vst.msk [vmem:[%s3 + $0x78] sm:$0xff] %vm284, %v235
  %301 = vst.msk [vmem:[%s3 + $0x80] sm:$0xff] %vm284, %v236
  %302 = vst.msk [vmem:[%s3 + $0x88] sm:$0xff] %vm284, %v237
  %303 = vst.msk [vmem:[%s3 + $0x90] sm:$0xff] %vm284, %v238
  %304 = vst.msk [vmem:[%s3 + $0x98] sm:$0xff] %vm284, %v239
  %305 = vst.msk [vmem:[%s3 + $0xa0] sm:$0xff] %vm284, %v240
  %306 = vst.msk [vmem:[%s3 + $0xa8] sm:$0xff] %vm284, %v241
  %307 = vst.msk [vmem:[%s3 + $0xb0] sm:$0xff] %vm284, %v242
  %308 = vst.msk [vmem:[%s3 + $0xb8] sm:$0xff] %vm284, %v243
  %309 = vst.msk [vmem:[%s3 + $0xc0] sm:$0xff] %vm284, %v244
  %310 = vst.msk [vmem:[%s3 + $0xc8] sm:$0xff] %vm284, %v245
  %311 = vst.msk [vmem:[%s3 + $0xd0] sm:$0xff] %vm284, %v246
  %312 = vst.msk [vmem:[%s3 + $0xd8] sm:$0xff] %vm284, %v247
  %313 = vst.msk [vmem:[%s3 + $0xe0] sm:$0xff] %vm284, %v248
  %314 = vst.msk [vmem:[%s3 + $0xe8] sm:$0xff] %vm284, %v249
  %315 = vst.msk [vmem:[%s3 + $0xf0] sm:$0xff] %vm284, %v250
  %316 = vst.msk [vmem:[%s3 + $0xf8] sm:$0xff] %vm284, %v251
  %317 = vst.msk [vmem:[%s3 + $0x100] sm:$0xff] %vm284, %v252
  %318 = vst.msk [vmem:[%s3 + $0x108] sm:$0xff] %vm284, %v253
  %319 = vst.msk [vmem:[%s3 + $0x110] sm:$0xff] %vm284, %v254
  %320 = vst.msk [vmem:[%s3 + $0x118] sm:$0xff] %vm284, %v255
  %321 = vst.msk [vmem:[%s3 + $0x120] sm:$0xff] %vm284, %v256
  %322 = vst.msk [vmem:[%s3 + $0x128] sm:$0xff] %vm284, %v257
  %323 = vst.msk [vmem:[%s3 + $0x130] sm:$0xff] %vm284, %v258
  %324 = vst.msk [vmem:[%s3 + $0x138] sm:$0xff] %vm284, %v259
  %325 = vst.msk [vmem:[%s3 + $0x140] sm:$0xff] %vm284, %v260
  %326 = vst.msk [vmem:[%s3 + $0x148] sm:$0xff] %vm284, %v261
  %327 = vst.msk [vmem:[%s3 + $0x150] sm:$0xff] %vm284, %v262
  %328 = vst.msk [vmem:[%s3 + $0x158] sm:$0xff] %vm284, %v263
  %329 = vst.msk [vmem:[%s3 + $0x160] sm:$0xff] %vm284, %v264
  %330 = vst.msk [vmem:[%s3 + $0x168] sm:$0xff] %vm284, %v265
  %331 = vst.msk [vmem:[%s3 + $0x170] sm:$0xff] %vm284, %v266
  %332 = vst.msk [vmem:[%s3 + $0x178] sm:$0xff] %vm284, %v267
  %333 = vst.msk [vmem:[%s3 + $0x180] sm:$0xff] %vm284, %v268
  %334 = vst.msk [vmem:[%s3 + $0x188] sm:$0xff] %vm284, %v269
  %335 = vst.msk [vmem:[%s3 + $0x190] sm:$0xff] %vm284, %v270
  %336 = vst.msk [vmem:[%s3 + $0x198] sm:$0xff] %vm284, %v271
  %337 = vst.msk [vmem:[%s3 + $0x1a0] sm:$0xff] %vm284, %v272
  %338 = vst.msk [vmem:[%s3 + $0x1a8] sm:$0xff] %vm284, %v273
  %339 = vst.msk [vmem:[%s3 + $0x1b0] sm:$0xff] %vm284, %v274
  %340 = vst.msk [vmem:[%s3 + $0x1b8] sm:$0xff] %vm284, %v275
  %341 = vst.msk [vmem:[%s3 + $0x1c0] sm:$0xff] %vm284, %v276
  %342 = vst.msk [vmem:[%s3 + $0x1c8] sm:$0xff] %vm284, %v277
  %343 = vst.msk [vmem:[%s3 + $0x1d0] sm:$0xff] %vm284, %v278
  %344 = vst.msk [vmem:[%s3 + $0x1d8] sm:$0xff] %vm284, %v279
  %345 = vst.msk [vmem:[%s3 + $0x1e0] sm:$0xff] %vm284, %v280
  %346 = vst.msk [vmem:[%s3 + $0x1e8] sm:$0xff] %vm284, %v281
  %347 = vst.msk [vmem:[%s3 + $0x1f0] sm:$0xff] %vm284, %v282
  %348 = vst.msk [vmem:[%s3 + $0x1f8] sm:$0xff] %vm284, %v283
  // Predicated region
  $region14: #{complex_inception_forward.15} parent=0 // pred_check
    _
  $region15: #{complex_inception_forward.15} parent=0 // pred_check_branch
    %350 = sbr.rel (0) target = $region17
  $region16: #{complex_inception_forward.15} parent=0 // pred_region
    _
  $region17: #{complex_inception_forward.15} parent=0 // pred_fallthru
    _
  // Predicated region
  $region18: #{complex_inception_forward.15} parent=0 // pred_check
    _
  $region19: #{complex_inception_forward.15} parent=0 // pred_check_branch
    %352 = sbr.rel (0) target = $region21
  $region20: #{complex_inception_forward.15} parent=0 // pred_region
    _
  $region21: #{complex_inception_forward.15} parent=0 // pred_fallthru
    _

// kernel: complex_inception_forward.14
$region0: #{complex_inception_forward.14}
  #allocation0 [shape = 'u32[]', space=smem, size = 0x4, offset = 0x4, fixed_abs, tag = 'smem constant byte address 0x4 - core index']
  #allocation1 [shape = 'u32[144,128]{1,0:T(1,128)}', space=vmem, size = 0x12000, scoped, tag = 'internal scratch']
  #allocation2 [shape = 'f32[98,8]{1,0:T(8,128)}', space=vmem, size = 0xd000, scoped, tag = 'scratch operand']
  %s0 = inlined_call_operand.vmem [shape: f32[2,4,98,8], index: 0, kind: input, shape index: {}]
  %s1 = inlined_call_operand.vmem [shape: f32[8,8], index: 1, kind: input, shape index: {}]
  %s2 = inlined_call_operand.vmem [shape: f32[2,4,64,8], index: 2, kind: output, shape index: {0}]
  %s3 = inlined_call_operand.vmem [shape: f32[2,4,2,8], index: 3, kind: output, shape index: {1}]
  %4 = xla_tuple %s2, %s3
  %s5 = sld [smem:[#allocation0]]
  $region49: #{complex_inception_forward.14} parent=0
    _
  %s7 = ssub.s32 1, %s5
  %s8 = scalar_select 0, %s7, %s5
  loop: start=0, step=1, limit=10
  $region2: #{complex_inception_forward.14} parent=0 // loop_pre_header
    _
  $region3: #{complex_inception_forward.14} parent=0 // loop_header
    %s10 = sphi 0, %s14
    %p11 = scmp.ge.s32.totalorder %s10, 10
    %s17 = sphi 0, %s29
    %s18 = sphi 0, %s25
    %s19 = sphi 0, %s17
    %s20 = sphi 0, %s18
    %s21 = sphi 0, %s19
    %s22 = sphi 0, %s20
    %s34 = sphi 0, %s36
    %s37 = sphi 0, %s34
    %s38 = sphi 0, %s37
    %s54 = sphi 0, %s38
    %s58 = sphi 0, %s58
    %s60 = sphi 0, %s58
    %s61 = sphi 0, %s60
    %s75 = sphi 0, %s61
    %s83 = sphi 0, %s85
    %s86 = sphi 0, %s83
    %s87 = sphi 0, %s86
    %s103 = sphi 0, %s87
    %s111 = sphi 0, %s113
    %s114 = sphi 0, %s111
    %s115 = sphi 0, %s114
    %s131 = sphi 0, %s115
  $region4: #{complex_inception_forward.14} parent=0 // loop_header_branch
    %13 = sbr.rel (%p11) target = $region8
  $region5: #{complex_inception_forward.14} parent=0 // loop_body
    %s15 = ssub.s32 %s10, 1
    %s16 = ssub.s32 %s10, 2
    %s23 = sadd.s32 1, %s18
    %p24 = scmp.ge.s32.totalorder %s23, 4
    %s25 = scalar_select %p24, 0, %s23
    %s26 = sadd.s32 1, %s17
    %s27 = scalar_select %p24, %s26, %s17
    %p28 = scmp.ge.s32.totalorder %s27, 2
    %s29 = scalar_select %p28, 0, %s27
    %s30 = ssub.s32 %s17, %s29
    %s31 = ssub.s32 %s18, %s25
    %s32 = sor.u32 %s30, %s31
    %p33 = scmp.eq.s32.totalorder %s32, 0
    %s35 = sadd.s32 %s34, 1
    %s36 = scalar_select %p33, %s34, %s35
    %p39 = pneg %p33
    %p40 = scmp.eq.s32.totalorder %s10, 7
    %p41 = por %p39, %p40
    %p42 = scmp.ne.s32.totalorder %s34, %s37
    %p43 = scmp.eq.s32.totalorder %s10, 0
    %p44 = por %p42, %p43
    %p45 = scmp.ne.s32.totalorder %s34, %s37
    %p46 = scmp.eq.s32.totalorder %s15, 7
    %p47 = por %p45, %p46
    %p48 = scmp.ne.s32.totalorder %s37, %s38
    %p49 = scmp.eq.s32.totalorder %s15, 0
    %p50 = por %p48, %p49
    %p51 = scmp.ne.s32.totalorder %s37, %s38
    %p52 = scmp.eq.s32.totalorder %s16, 7
    %p53 = por %p51, %p52
    %p55 = scmp.ne.s32.totalorder %s38, %s54
    %p56 = scmp.eq.s32.totalorder %s16, 0
    %p57 = por %p55, %p56
    %s59 = sadd.s32 %s58, 1
    %p62 = scmp.eq.s32.totalorder %s10, 7
    %p63 = scmp.ne.s32.totalorder %s58, %s60
    %p64 = scmp.eq.s32.totalorder %s10, 0
    %p65 = por %p63, %p64
    %p66 = scmp.ne.s32.totalorder %s58, %s60
    %p67 = scmp.eq.s32.totalorder %s15, 7
    %p68 = por %p66, %p67
    %p69 = scmp.ne.s32.totalorder %s60, %s61
    %p70 = scmp.eq.s32.totalorder %s15, 0
    %p71 = por %p69, %p70
    %p72 = scmp.ne.s32.totalorder %s60, %s61
    %p73 = scmp.eq.s32.totalorder %s16, 7
    %p74 = por %p72, %p73
    %p76 = scmp.ne.s32.totalorder %s61, %s75
    %p77 = scmp.eq.s32.totalorder %s16, 0
    %p78 = por %p76, %p77
    %s79 = ssub.s32 %s17, %s29
    %s80 = ssub.s32 %s18, %s25
    %s81 = sor.u32 %s79, %s80
    %p82 = scmp.eq.s32.totalorder %s81, 0
    %s84 = sadd.s32 %s83, 1
    %s85 = scalar_select %p82, %s83, %s84
    %p88 = pneg %p82
    %p89 = scmp.eq.s32.totalorder %s10, 7
    %p90 = por %p88, %p89
    %p91 = scmp.ne.s32.totalorder %s83, %s86
    %p92 = scmp.eq.s32.totalorder %s10, 0
    %p93 = por %p91, %p92
    %p94 = scmp.ne.s32.totalorder %s83, %s86
    %p95 = scmp.eq.s32.totalorder %s15, 7
    %p96 = por %p94, %p95
    %p97 = scmp.ne.s32.totalorder %s86, %s87
    %p98 = scmp.eq.s32.totalorder %s15, 0
    %p99 = por %p97, %p98
    %p100 = scmp.ne.s32.totalorder %s86, %s87
    %p101 = scmp.eq.s32.totalorder %s16, 7
    %p102 = por %p100, %p101
    %p104 = scmp.ne.s32.totalorder %s87, %s103
    %p105 = scmp.eq.s32.totalorder %s16, 0
    %p106 = por %p104, %p105
    %s107 = ssub.s32 %s17, %s29
    %s108 = ssub.s32 %s18, %s25
    %s109 = sor.u32 %s107, %s108
    %p110 = scmp.eq.s32.totalorder %s109, 0
    %s112 = sadd.s32 %s111, 1
    %s113 = scalar_select %p110, %s111, %s112
    %p116 = pneg %p110
    %p117 = scmp.eq.s32.totalorder %s10, 7
    %p118 = por %p116, %p117
    %p119 = scmp.ne.s32.totalorder %s111, %s114
    %p120 = scmp.eq.s32.totalorder %s10, 0
    %p121 = por %p119, %p120
    %p122 = scmp.ne.s32.totalorder %s111, %s114
    %p123 = scmp.eq.s32.totalorder %s15, 7
    %p124 = por %p122, %p123
    %p125 = scmp.ne.s32.totalorder %s114, %s115
    %p126 = scmp.eq.s32.totalorder %s15, 0
    %p127 = por %p125, %p126
    %p128 = scmp.ne.s32.totalorder %s114, %s115
    %p129 = scmp.eq.s32.totalorder %s16, 7
    %p130 = por %p128, %p129
    %p132 = scmp.ne.s32.totalorder %s115, %s131
    %p133 = scmp.eq.s32.totalorder %s16, 0
    %p134 = por %p132, %p133
    %p135 = scmp.le.s32.totalorder 1, %s10
    %p136 = scmp.lt.s32.totalorder %s10, 9
    %p137 = pnand %p135, %p136
    %p138 = pneg %p137
    // Predicated region
    $region9: #{complex_inception_forward.14} parent=5 // pred_check
      _
    $region10: #{complex_inception_forward.14} parent=5 // pred_check_branch
      %140 = sbr.rel (%p137) target = $region12
    $region11: #{complex_inception_forward.14} parent=5 // pred_region
      %s141 = ssub.s32 %s10, 1
      // Predicated region
      $region13: #{complex_inception_forward.14} parent=11 // pred_check
        %p142 = pneg %p71
      $region14: #{complex_inception_forward.14} parent=11 // pred_check_branch
        %144 = sbr.rel (%p142) target = $region16
      $region15: #{complex_inception_forward.14} parent=11 // pred_region
        _
      $region16: #{complex_inception_forward.14} parent=11 // pred_fallthru
        _
    $region12: #{complex_inception_forward.14} parent=5 // pred_fallthru
      _
    %p145 = scmp.lt.s32.totalorder %s10, 8
    // Predicated region
    $region17: #{complex_inception_forward.14} parent=5 // pred_check
      %p146 = pneg %p145
    $region18: #{complex_inception_forward.14} parent=5 // pred_check_branch
      %148 = sbr.rel (%p146) target = $region20
    $region19: #{complex_inception_forward.14} parent=5 // pred_region
      // Predicated region
      $region21: #{complex_inception_forward.14} parent=19 // pred_check
        %p149 = pneg %p44
      $region22: #{complex_inception_forward.14} parent=19 // pred_check_branch
        %151 = sbr.rel (%p149) target = $region24
      $region23: #{complex_inception_forward.14} parent=19 // pred_region
        %p152 = scmp.lt.s32.totalorder %s17, 1
        %s153 = scalar_select %p152, %s17, 1
        %p154 = scmp.lt.s32.totalorder %s18, 3
        %s155 = scalar_select %p154, %s18, 3
        %s156 = smul.addr %s155, 13
        %s157 = smul.addr %s153, 52
        %s158 = sadd.s32 %s156, %s157
        %s159 = smul.addr %s158, 8
        %s160 = scalar_lea.vmem %s0, %s159
      $region24: #{complex_inception_forward.14} parent=19 // pred_fallthru
        _
    $region20: #{complex_inception_forward.14} parent=5 // pred_fallthru
      _
    %p161 = scmp.le.s32.totalorder 1, %s10
    %p162 = scmp.lt.s32.totalorder %s10, 9
    %p163 = pnand %p161, %p162
    %p164 = pneg %p163
    // Predicated region
    $region25: #{complex_inception_forward.14} parent=5 // pred_check
      _
    $region26: #{complex_inception_forward.14} parent=5 // pred_check_branch
      %166 = sbr.rel (%p163) target = $region28
    $region27: #{complex_inception_forward.14} parent=5 // pred_region
      %s167 = ssub.s32 %s10, 1
      %p168 = scmp.lt.s32.totalorder %s19, 1
      %s169 = scalar_select %p168, %s19, 1
      %p170 = scmp.lt.s32.totalorder %s20, 3
      %s171 = scalar_select %p170, %s20, 3
      %s172 = smul.addr %s171, 13
      %s173 = smul.addr %s169, 52
      %s174 = sadd.s32 %s172, %s173
      %s175 = smul.addr %s174, 8
      %s176 = scalar_lea.vmem %s0, %s175
      %p177 = pneg %p50
      %p178 = pneg %p47
      %p179 = pneg %p71
      %p180 = pneg %p68
      %p181 = pneg %p99
      %p182 = pneg %p96
      %p183 = scmp.lt.s32.totalorder %s19, 1
      %s184 = scalar_select %p183, %s19, 1
      %p185 = scmp.lt.s32.totalorder %s20, 3
      %s186 = scalar_select %p185, %s20, 3
      %s187 = smul.addr %s186, 8
      %s188 = smul.addr %s184, 32
      %s189 = sadd.s32 %s187, %s188
      %s190 = smul.addr %s189, 8
      %s191 = scalar_lea.vmem %s2, %s190
      %p192 = pneg %p127
      %p193 = pneg %p124
      %p194 = scmp.lt.s32.totalorder %s19, 1
      %s195 = scalar_select %p194, %s19, 1
      %p196 = scmp.lt.s32.totalorder %s20, 3
      %s197 = scalar_select %p196, %s20, 3
      %s198 = smul.addr %s195, 4
      %s199 = sadd.s32 %s197, %s198
      %s200 = smul.addr %s199, 2
      %s201 = scalar_lea.vmem %s3, %s200
      %p202 = scmp.lt.s32.totalorder %s19, 1
      %s203 = scalar_select %p202, %s19, 1
      %p204 = scmp.lt.s32.totalorder %s20, 3
      %s205 = scalar_select %p204, %s20, 3
      %s206 = smul.addr %s205, 13
      %s207 = smul.addr %s203, 52
      %s208 = sadd.s32 %s206, %s207
      %s209 = smul.addr %s208, 8
      %s210 = scalar_lea.vmem %s0, %s209
      %p211 = scmp.lt.s32.totalorder %s19, 1
      %s212 = scalar_select %p211, %s19, 1
      %p213 = scmp.lt.s32.totalorder %s20, 3
      %s214 = scalar_select %p213, %s20, 3
      %s215 = smul.addr %s214, 8
      %s216 = smul.addr %s212, 32
      %s217 = sadd.s32 %s215, %s216
      %s218 = smul.addr %s217, 8
      %s219 = scalar_lea.vmem %s2, %s218
      %p220 = scmp.lt.s32.totalorder %s19, 1
      %s221 = scalar_select %p220, %s19, 1
      %p222 = scmp.lt.s32.totalorder %s20, 3
      %s223 = scalar_select %p222, %s20, 3
      %s224 = smul.addr %s221, 4
      %s225 = sadd.s32 %s223, %s224
      %s226 = smul.addr %s225, 2
      %s227 = scalar_lea.vmem %s3, %s226
      %v228 = vlaneseq
      %v229 = vshrl.u32 %v228, 7
      %v230 = vadd.s32 %v229, 8
      %v231 = vadd.s32 %v229, 16
      %v232 = vadd.s32 %v229, 24
      %v233 = vadd.s32 %v229, 32
      %v234 = vadd.s32 %v229, 40
      %v235 = vadd.s32 %v229, 48
      %v236 = vadd.s32 %v229, 56
      %v237 = vadd.s32 %v229, 64
      %v238 = vadd.s32 %v229, 72
      %v239 = vadd.s32 %v229, 80
      %v240 = vadd.s32 %v229, 88
      %v241 = vadd.s32 %v229, 96
      %s242 = smul.u32 %s20, 64
      %v243 = vstv %s242
      %v244 = vadd.s32 %v243, %v229
      %v245 = vadd.s32 %v243, %v230
      %v246 = vadd.s32 %v243, %v231
      %v247 = vadd.s32 %v243, %v232
      %v248 = vadd.s32 %v243, %v233
      %v249 = vadd.s32 %v243, %v234
      %v250 = vadd.s32 %v243, %v235
      %v251 = vadd.s32 %v243, %v236
      %v252 = vadd.s32 %v243, %v237
      %v253 = vadd.s32 %v243, %v238
      %v254 = vadd.s32 %v243, %v239
      %v255 = vadd.s32 %v243, %v240
      %v256 = vadd.s32 %v243, %v241
      %vm257 = vcmp.ge.s32.totalorder %v244, 17
      %vm258 = vcmp.ge.s32.totalorder %v245, 17
      %vm259 = vcmp.ge.s32.totalorder %v246, 17
      %vm260 = vcmp.ge.s32.totalorder %v247, 17
      %vm261 = vcmp.ge.s32.totalorder %v248, 17
      %vm262 = vcmp.ge.s32.totalorder %v249, 17
      %vm263 = vcmp.ge.s32.totalorder %v250, 17
      %vm264 = vcmp.ge.s32.totalorder %v251, 17
      %vm265 = vcmp.ge.s32.totalorder %v252, 17
      %vm266 = vcmp.ge.s32.totalorder %v253, 17
      %vm267 = vcmp.ge.s32.totalorder %v254, 17
      %vm268 = vcmp.ge.s32.totalorder %v255, 17
      %vm269 = vcmp.ge.s32.totalorder %v256, 17
      %vm270 = vcmp.lt.s32.totalorder %v244, 273
      %vm271 = vcmp.lt.s32.totalorder %v245, 273
      %vm272 = vcmp.lt.s32.totalorder %v246, 273
      %vm273 = vcmp.lt.s32.totalorder %v247, 273
      %vm274 = vcmp.lt.s32.totalorder %v248, 273
      %vm275 = vcmp.lt.s32.totalorder %v249, 273
      %vm276 = vcmp.lt.s32.totalorder %v250, 273
      %vm277 = vcmp.lt.s32.totalorder %v251, 273
      %vm278 = vcmp.lt.s32.totalorder %v252, 273
      %vm279 = vcmp.lt.s32.totalorder %v253, 273
      %vm280 = vcmp.lt.s32.totalorder %v254, 273
      %vm281 = vcmp.lt.s32.totalorder %v255, 273
      %vm282 = vcmp.lt.s32.totalorder %v256, 273
      %vm283 = vmand %vm257, %vm270
      %vm284 = vmand %vm258, %vm271
      %vm285 = vmand %vm259, %vm272
      %vm286 = vmand %vm260, %vm273
      %vm287 = vmand %vm261, %vm274
      %vm288 = vmand %vm262, %vm275
      %vm289 = vmand %vm263, %vm276
      %vm290 = vmand %vm264, %vm277
      %vm291 = vmand %vm265, %vm278
      %vm292 = vmand %vm266, %vm279
      %vm293 = vmand %vm267, %vm280
      %vm294 = vmand %vm268, %vm281
      %vm295 = vmand %vm269, %vm282
      %v296 = vld [vmem:[%s210] sm:$0xff]
      %v297 = vld [vmem:[%s210 + $0x8] sm:$0xff]
      %v298 = vld [vmem:[%s210 + $0x10] sm:$0xff]
      %v299 = vld [vmem:[%s210 + $0x18] sm:$0xff]
      %v300 = vld [vmem:[%s210 + $0x20] sm:$0xff]
      %v301 = vld [vmem:[%s210 + $0x28] sm:$0xff]
      %v302 = vld [vmem:[%s210 + $0x30] sm:$0xff]
      %v303 = vld [vmem:[%s210 + $0x38] sm:$0xff]
      %v304 = vld [vmem:[%s210 + $0x40] sm:$0xff]
      %v305 = vld [vmem:[%s210 + $0x48] sm:$0xff]
      %v306 = vld [vmem:[%s210 + $0x50] sm:$0xff]
      %v307 = vld [vmem:[%s210 + $0x58] sm:$0xff]
      %v308 = vld [vmem:[%s210 + $0x60] sm:$0x3]
      %v309 = vsel %vm283, 1, 0
      %v310 = vsel %vm284, 1, 0
      %v311 = vsel %vm285, 1, 0
      %v312 = vsel %vm286, 1, 0
      %v313 = vsel %vm287, 1, 0
      %v314 = vsel %vm288, 1, 0
      %v315 = vsel %vm289, 1, 0
      %v316 = vsel %vm290, 1, 0
      %v317 = vsel %vm291, 1, 0
      %v318 = vsel %vm292, 1, 0
      %v319 = vsel %vm293, 1, 0
      %v320 = vsel %vm294, 1, 0
      %v321 = vsel %vm295, 1, 0
      %vm322 = vcmp.eq.s32.totalorder %v309, 1
      %vm323 = vcmp.eq.s32.totalorder %v310, 1
      %vm324 = vcmp.eq.s32.totalorder %v311, 1
      %vm325 = vcmp.eq.s32.totalorder %v312, 1
      %vm326 = vcmp.eq.s32.totalorder %v313, 1
      %vm327 = vcmp.eq.s32.totalorder %v314, 1
      %vm328 = vcmp.eq.s32.totalorder %v315, 1
      %vm329 = vcmp.eq.s32.totalorder %v316, 1
      %vm330 = vcmp.eq.s32.totalorder %v317, 1
      %vm331 = vcmp.eq.s32.totalorder %v318, 1
      %vm332 = vcmp.eq.s32.totalorder %v319, 1
      %vm333 = vcmp.eq.s32.totalorder %v320, 1
      %vm334 = vcmp.eq.s32.totalorder %v321, 1
      %v335 = vsel %vm322, %v296, -inf
      %v336 = vsel %vm323, %v297, -inf
      %v337 = vsel %vm324, %v298, -inf
      %v338 = vsel %vm325, %v299, -inf
      %v339 = vsel %vm326, %v300, -inf
      %v340 = vsel %vm327, %v301, -inf
      %v341 = vsel %vm328, %v302, -inf
      %v342 = vsel %vm329, %v303, -inf
      %v343 = vsel %vm330, %v304, -inf
      %v344 = vsel %vm331, %v305, -inf
      %v345 = vsel %vm332, %v306, -inf
      %v346 = vsel %vm333, %v307, -inf
      %v347 = vsel %vm334, %v308, -inf
      %vm348 = vcmask 64512
      %349 = vst.msk [vmem:[#allocation2] sm:$0xff] %vm348, %v335
      %350 = vst.msk [vmem:[#allocation2 + $0x8] sm:$0xff] %vm348, %v336
      %351 = vst.msk [vmem:[#allocation2 + $0x10] sm:$0xff] %vm348, %v337
      %352 = vst.msk [vmem:[#allocation2 + $0x18] sm:$0xff] %vm348, %v338
      %353 = vst.msk [vmem:[#allocation2 + $0x20] sm:$0xff] %vm348, %v339
      %354 = vst.msk [vmem:[#allocation2 + $0x28] sm:$0xff] %vm348, %v340
      %355 = vst.msk [vmem:[#allocation2 + $0x30] sm:$0xff] %vm348, %v341
      %356 = vst.msk [vmem:[#allocation2 + $0x38] sm:$0xff] %vm348, %v342
      %357 = vst.msk [vmem:[#allocation2 + $0x40] sm:$0xff] %vm348, %v343
      %358 = vst.msk [vmem:[#allocation2 + $0x48] sm:$0xff] %vm348, %v344
      %359 = vst.msk [vmem:[#allocation2 + $0x50] sm:$0xff] %vm348, %v345
      %360 = vst.msk [vmem:[#allocation2 + $0x58] sm:$0xff] %vm348, %v346
      %vm361 = vcmask 58368
      %362 = vst.msk [vmem:[#allocation2 + $0x60] sm:$0x3] %vm361, %v347
      %vm363 = vcmp.lt.s32.totalorder %v229, 0
      %v364 = vsub.s32 0, %v229
      %v365 = vsel %vm363, %v364, %v229
      %v366 = vshrl.u32 %v365, 4
      %v367 = vand.u32 %v365, 15
      %v368 = vsub.s32 0, %v367
      %v369 = vsel %vm363, %v368, %v367
      %vm370 = vcmp.lt.s32.totalorder %v230, 0
      %v371 = vsub.s32 0, %v230
      %v372 = vsel %vm370, %v371, %v230
      %v373 = vshrl.u32 %v372, 4
      %v374 = vand.u32 %v372, 15
      %v375 = vsub.s32 0, %v374
      %v376 = vsel %vm370, %v375, %v374
      %vm377 = vcmp.lt.s32.totalorder %v231, 0
      %v378 = vsub.s32 0, %v231
      %v379 = vsel %vm377, %v378, %v231
      %v380 = vshrl.u32 %v379, 4
      %v381 = vand.u32 %v379, 15
      %v382 = vsub.s32 0, %v381
      %v383 = vsel %vm377, %v382, %v381
      %vm384 = vcmp.lt.s32.totalorder %v232, 0
      %v385 = vsub.s32 0, %v232
      %v386 = vsel %vm384, %v385, %v232
      %v387 = vshrl.u32 %v386, 4
      %v388 = vand.u32 %v386, 15
      %v389 = vsub.s32 0, %v388
      %v390 = vsel %vm384, %v389, %v388
      %vm391 = vcmp.lt.s32.totalorder %v233, 0
      %v392 = vsub.s32 0, %v233
      %v393 = vsel %vm391, %v392, %v233
      %v394 = vshrl.u32 %v393, 4
      %v395 = vand.u32 %v393, 15
      %v396 = vsub.s32 0, %v395
      %v397 = vsel %vm391, %v396, %v395
      %vm398 = vcmp.lt.s32.totalorder %v234, 0
      %v399 = vsub.s32 0, %v234
      %v400 = vsel %vm398, %v399, %v234
      %v401 = vshrl.u32 %v400, 4
      %v402 = vand.u32 %v400, 15
      %v403 = vsub.s32 0, %v402
      %v404 = vsel %vm398, %v403, %v402
      %vm405 = vcmp.lt.s32.totalorder %v235, 0
      %v406 = vsub.s32 0, %v235
      %v407 = vsel %vm405, %v406, %v235
      %v408 = vshrl.u32 %v407, 4
      %v409 = vand.u32 %v407, 15
      %v410 = vsub.s32 0, %v409
      %v411 = vsel %vm405, %v410, %v409
      %vm412 = vcmp.lt.s32.totalorder %v236, 0
      %v413 = vsub.s32 0, %v236
      %v414 = vsel %vm412, %v413, %v236
      %v415 = vshrl.u32 %v414, 4
      %v416 = vand.u32 %v414, 15
      %v417 = vsub.s32 0, %v416
      %v418 = vsel %vm412, %v417, %v416
      %vm419 = vcmp.ne.s32.totalorder %v369, 0
      %vm420 = vcmp.ne.s32.totalorder %v376, 0
      %vm421 = vcmp.ne.s32.totalorder %v383, 0
      %vm422 = vcmp.ne.s32.totalorder %v390, 0
      %vm423 = vcmp.ne.s32.totalorder %v397, 0
      %vm424 = vcmp.ne.s32.totalorder %v404, 0
      %vm425 = vcmp.ne.s32.totalorder %v411, 0
      %vm426 = vcmp.ne.s32.totalorder %v418, 0
      %vm427 = vcmp.lt.s32.totalorder %v369, 0
      %vm428 = vcmp.lt.s32.totalorder %v376, 0
      %vm429 = vcmp.lt.s32.totalorder %v383, 0
      %vm430 = vcmp.lt.s32.totalorder %v390, 0
      %vm431 = vcmp.lt.s32.totalorder %v397, 0
      %vm432 = vcmp.lt.s32.totalorder %v404, 0
      %vm433 = vcmp.lt.s32.totalorder %v411, 0
      %vm434 = vcmp.lt.s32.totalorder %v418, 0
      %vm435 = vmand %vm427, %vm419
      %vm436 = vmand %vm428, %vm420
      %vm437 = vmand %vm429, %vm421
      %vm438 = vmand %vm430, %vm422
      %vm439 = vmand %vm431, %vm423
      %vm440 = vmand %vm432, %vm424
      %vm441 = vmand %vm433, %vm425
      %vm442 = vmand %vm434, %vm426
      %v443 = vadd.s32 %v369, 16
      %v444 = vadd.s32 %v376, 16
      %v445 = vadd.s32 %v383, 16
      %v446 = vadd.s32 %v390, 16
      %v447 = vadd.s32 %v397, 16
      %v448 = vadd.s32 %v404, 16
      %v449 = vadd.s32 %v411, 16
      %v450 = vadd.s32 %v418, 16
      %v451 = vsel %vm435, %v443, %v369
      %v452 = vsel %vm436, %v444, %v376
      %v453 = vsel %vm437, %v445, %v383
      %v454 = vsel %vm438, %v446, %v390
      %v455 = vsel %vm439, %v447, %v397
      %v456 = vsel %vm440, %v448, %v404
      %v457 = vsel %vm441, %v449, %v411
      %v458 = vsel %vm442, %v450, %v418
      %v459 = vld [vmem:[#allocation2] sm:$0xff]
      %v460 = vld [vmem:[#allocation2 + $0x8] sm:$0xff]
      %v461 = vld [vmem:[#allocation2 + $0x10] sm:$0xff]
      %v462 = vld [vmem:[#allocation2 + $0x18] sm:$0xff]
      %v463 = vld [vmem:[#allocation2 + $0x20] sm:$0xff]
      %v464 = vld [vmem:[#allocation2 + $0x28] sm:$0xff]
      %v465 = vld [vmem:[#allocation2 + $0x30] sm:$0xff]
      %v466 = vld [vmem:[#allocation2 + $0x38] sm:$0xff]
      %v467 = vadd.s32 %v451, 4294967295
      %v468 = vadd.s32 %v452, 4294967295
      %v469 = vadd.s32 %v453, 4294967295
      %v470 = vadd.s32 %v454, 4294967295
      %v471 = vadd.s32 %v455, 4294967295
      %v472 = vadd.s32 %v456, 4294967295
      %v473 = vadd.s32 %v457, 4294967295
      %v474 = vadd.s32 %v458, 4294967295
      %vm475 = vcmp.ge.s32.totalorder %v467, 0
      %vm476 = vcmp.ge.s32.totalorder %v468, 0
      %vm477 = vcmp.ge.s32.totalorder %v469, 0
      %vm478 = vcmp.ge.s32.totalorder %v470, 0
      %vm479 = vcmp.ge.s32.totalorder %v471, 0
      %vm480 = vcmp.ge.s32.totalorder %v472, 0
      %vm481 = vcmp.ge.s32.totalorder %v473, 0
      %vm482 = vcmp.ge.s32.totalorder %v474, 0
      %vm483 = vcmp.lt.s32.totalorder %v467, 16
      %vm484 = vcmp.lt.s32.totalorder %v468, 16
      %vm485 = vcmp.lt.s32.totalorder %v469, 16
      %vm486 = vcmp.lt.s32.totalorder %v470, 16
      %vm487 = vcmp.lt.s32.totalorder %v471, 16
      %vm488 = vcmp.lt.s32.totalorder %v472, 16
      %vm489 = vcmp.lt.s32.totalorder %v473, 16
      %vm490 = vcmp.lt.s32.totalorder %v474, 16
      %vm491 = vmand %vm475, %vm483
      %vm492 = vmand %vm476, %vm484
      %vm493 = vmand %vm477, %vm485
      %vm494 = vmand %vm478, %vm486
      %vm495 = vmand %vm479, %vm487
      %vm496 = vmand %vm480, %vm488
      %vm497 = vmand %vm481, %vm489
      %vm498 = vmand %vm482, %vm490
      %v499 = vsel %vm491, 1, 0
      %v500 = vsel %vm492, 1, 0
      %v501 = vsel %vm493, 1, 0
      %v502 = vsel %vm494, 1, 0
      %v503 = vsel %vm495, 1, 0
      %v504 = vsel %vm496, 1, 0
      %v505 = vsel %vm497, 1, 0
      %v506 = vsel %vm498, 1, 0
      %vm507 = vcmp.eq.s32.totalorder %v499, 1
      %vm508 = vcmp.eq.s32.totalorder %v500, 1
      %vm509 = vcmp.eq.s32.totalorder %v501, 1
      %vm510 = vcmp.eq.s32.totalorder %v502, 1
      %vm511 = vcmp.eq.s32.totalorder %v503, 1
      %vm512 = vcmp.eq.s32.totalorder %v504, 1
      %vm513 = vcmp.eq.s32.totalorder %v505, 1
      %vm514 = vcmp.eq.s32.totalorder %v506, 1
      %v515 = vsel %vm507, %v459, -inf
      %v516 = vsel %vm508, %v460, -inf
      %v517 = vsel %vm509, %v461, -inf
      %v518 = vsel %vm510, %v462, -inf
      %v519 = vsel %vm511, %v463, -inf
      %v520 = vsel %vm512, %v464, -inf
      %v521 = vsel %vm513, %v465, -inf
      %v522 = vsel %vm514, %v466, -inf
      %v523 = vld [vmem:[#allocation2 + $0x1] sm:$0xff]
      %v524 = vld [vmem:[#allocation2 + $0x9] sm:$0xff]
      %v525 = vld [vmem:[#allocation2 + $0x11] sm:$0xff]
      %v526 = vld [vmem:[#allocation2 + $0x19] sm:$0xff]
      %v527 = vld [vmem:[#allocation2 + $0x21] sm:$0xff]
      %v528 = vld [vmem:[#allocation2 + $0x29] sm:$0xff]
      %v529 = vld [vmem:[#allocation2 + $0x31] sm:$0xff]
      %v530 = vld [vmem:[#allocation2 + $0x39] sm:$0xff]
      %v531 = vmax.f32 %v515, %v523
      %v532 = vmax.f32 %v516, %v524
      %v533 = vmax.f32 %v517, %v525
      %v534 = vmax.f32 %v518, %v526
      %v535 = vmax.f32 %v519, %v527
      %v536 = vmax.f32 %v520, %v528
      %v537 = vmax.f32 %v521, %v529
      %v538 = vmax.f32 %v522, %v530
      %v539 = vld [vmem:[#allocation2 + $0x2] sm:$0xff]
      %v540 = vld [vmem:[#allocation2 + $0xa] sm:$0xff]
      %v541 = vld [vmem:[#allocation2 + $0x12] sm:$0xff]
      %v542 = vld [vmem:[#allocation2 + $0x1a] sm:$0xff]
      %v543 = vld [vmem:[#allocation2 + $0x22] sm:$0xff]
      %v544 = vld [vmem:[#allocation2 + $0x2a] sm:$0xff]
      %v545 = vld [vmem:[#allocation2 + $0x32] sm:$0xff]
      %v546 = vld [vmem:[#allocation2 + $0x3a] sm:$0xff]
      %v547 = vadd.s32 %v451, 1
      %v548 = vadd.s32 %v452, 1
      %v549 = vadd.s32 %v453, 1
      %v550 = vadd.s32 %v454, 1
      %v551 = vadd.s32 %v455, 1
      %v552 = vadd.s32 %v456, 1
      %v553 = vadd.s32 %v457, 1
      %v554 = vadd.s32 %v458, 1
      %vm555 = vcmp.ge.s32.totalorder %v547, 0
      %vm556 = vcmp.ge.s32.totalorder %v548, 0
      %vm557 = vcmp.ge.s32.totalorder %v549, 0
      %vm558 = vcmp.ge.s32.totalorder %v550, 0
      %vm559 = vcmp.ge.s32.totalorder %v551, 0
      %vm560 = vcmp.ge.s32.totalorder %v552, 0
      %vm561 = vcmp.ge.s32.totalorder %v553, 0
      %vm562 = vcmp.ge.s32.totalorder %v554, 0
      %vm563 = vcmp.lt.s32.totalorder %v547, 16
      %vm564 = vcmp.lt.s32.totalorder %v548, 16
      %vm565 = vcmp.lt.s32.totalorder %v549, 16
      %vm566 = vcmp.lt.s32.totalorder %v550, 16
      %vm567 = vcmp.lt.s32.totalorder %v551, 16
      %vm568 = vcmp.lt.s32.totalorder %v552, 16
      %vm569 = vcmp.lt.s32.totalorder %v553, 16
      %vm570 = vcmp.lt.s32.totalorder %v554, 16
      %vm571 = vmand %vm555, %vm563
      %vm572 = vmand %vm556, %vm564
      %vm573 = vmand %vm557, %vm565
      %vm574 = vmand %vm558, %vm566
      %vm575 = vmand %vm559, %vm567
      %vm576 = vmand %vm560, %vm568
      %vm577 = vmand %vm561, %vm569
      %vm578 = vmand %vm562, %vm570
      %v579 = vsel %vm571, 1, 0
      %v580 = vsel %vm572, 1, 0
      %v581 = vsel %vm573, 1, 0
      %v582 = vsel %vm574, 1, 0
      %v583 = vsel %vm575, 1, 0
      %v584 = vsel %vm576, 1, 0
      %v585 = vsel %vm577, 1, 0
      %v586 = vsel %vm578, 1, 0
      %vm587 = vcmp.eq.s32.totalorder %v579, 1
      %vm588 = vcmp.eq.s32.totalorder %v580, 1
      %vm589 = vcmp.eq.s32.totalorder %v581, 1
      %vm590 = vcmp.eq.s32.totalorder %v582, 1
      %vm591 = vcmp.eq.s32.totalorder %v583, 1
      %vm592 = vcmp.eq.s32.totalorder %v584, 1
      %vm593 = vcmp.eq.s32.totalorder %v585, 1
      %vm594 = vcmp.eq.s32.totalorder %v586, 1
      %v595 = vsel %vm587, %v539, -inf
      %v596 = vsel %vm588, %v540, -inf
      %v597 = vsel %vm589, %v541, -inf
      %v598 = vsel %vm590, %v542, -inf
      %v599 = vsel %vm591, %v543, -inf
      %v600 = vsel %vm592, %v544, -inf
      %v601 = vsel %vm593, %v545, -inf
      %v602 = vsel %vm594, %v546, -inf
      %v603 = vmax.f32 %v531, %v595
      %v604 = vmax.f32 %v532, %v596
      %v605 = vmax.f32 %v533, %v597
      %v606 = vmax.f32 %v534, %v598
      %v607 = vmax.f32 %v535, %v599
      %v608 = vmax.f32 %v536, %v600
      %v609 = vmax.f32 %v537, %v601
      %v610 = vmax.f32 %v538, %v602
      %v611 = vld [vmem:[#allocation2 + $0x40] sm:$0xff]
      %v612 = vld [vmem:[#allocation2 + $0x48] sm:$0xff]
      %v613 = vsel %vm507, %v461, -inf
      %v614 = vsel %vm508, %v462, -inf
      %v615 = vsel %vm509, %v463, -inf
      %v616 = vsel %vm510, %v464, -inf
      %v617 = vsel %vm511, %v465, -inf
      %v618 = vsel %vm512, %v466, -inf
      %v619 = vsel %vm513, %v611, -inf
      %v620 = vsel %vm514, %v612, -inf
      %v621 = vmax.f32 %v603, %v613
      %v622 = vmax.f32 %v604, %v614
      %v623 = vmax.f32 %v605, %v615
      %v624 = vmax.f32 %v606, %v616
      %v625 = vmax.f32 %v607, %v617
      %v626 = vmax.f32 %v608, %v618
      %v627 = vmax.f32 %v609, %v619
      %v628 = vmax.f32 %v610, %v620
      %v629 = vld [vmem:[#allocation2 + $0x41] sm:$0xff]
      %v630 = vld [vmem:[#allocation2 + $0x49] sm:$0xff]
      %v631 = vmax.f32 %v621, %v525
      %v632 = vmax.f32 %v622, %v526
      %v633 = vmax.f32 %v623, %v527
      %v634 = vmax.f32 %v624, %v528
      %v635 = vmax.f32 %v625, %v529
      %v636 = vmax.f32 %v626, %v530
      %v637 = vmax.f32 %v627, %v629
      %v638 = vmax.f32 %v628, %v630
      %v639 = vld [vmem:[#allocation2 + $0x42] sm:$0xff]
      %v640 = vld [vmem:[#allocation2 + $0x4a] sm:$0xff]
      %v641 = vsel %vm587, %v541, -inf
      %v642 = vsel %vm588, %v542, -inf
      %v643 = vsel %vm589, %v543, -inf
      %v644 = vsel %vm590, %v544, -inf
      %v645 = vsel %vm591, %v545, -inf
      %v646 = vsel %vm592, %v546, -inf
      %v647 = vsel %vm593, %v639, -inf
      %v648 = vsel %vm594, %v640, -inf
      %v649 = vmax.f32 %v631, %v641
      %v650 = vmax.f32 %v632, %v642
      %v651 = vmax.f32 %v633, %v643
      %v652 = vmax.f32 %v634, %v644
      %v653 = vmax.f32 %v635, %v645
      %v654 = vmax.f32 %v636, %v646
      %v655 = vmax.f32 %v637, %v647
      %v656 = vmax.f32 %v638, %v648
      %v657 = vld [vmem:[#allocation2 + $0x50] sm:$0xff]
      %v658 = vld [vmem:[#allocation2 + $0x58] sm:$0xff]
      %v659 = vsel %vm507, %v463, -inf
      %v660 = vsel %vm508, %v464, -inf
      %v661 = vsel %vm509, %v465, -inf
      %v662 = vsel %vm510, %v466, -inf
      %v663 = vsel %vm511, %v611, -inf
      %v664 = vsel %vm512, %v612, -inf
      %v665 = vsel %vm513, %v657, -inf
      %v666 = vsel %vm514, %v658, -inf
      %v667 = vmax.f32 %v649, %v659
      %v668 = vmax.f32 %v650, %v660
      %v669 = vmax.f32 %v651, %v661
      %v670 = vmax.f32 %v652, %v662
      %v671 = vmax.f32 %v653, %v663
      %v672 = vmax.f32 %v654, %v664
      %v673 = vmax.f32 %v655, %v665
      %v674 = vmax.f32 %v656, %v666
      %v675 = vld [vmem:[#allocation2 + $0x51] sm:$0xff]
      %v676 = vld [vmem:[#allocation2 + $0x59] sm:$0xff]
      %v677 = vmax.f32 %v667, %v527
      %v678 = vmax.f32 %v668, %v528
      %v679 = vmax.f32 %v669, %v529
      %v680 = vmax.f32 %v670, %v530
      %v681 = vmax.f32 %v671, %v629
      %v682 = vmax.f32 %v672, %v630
      %v683 = vmax.f32 %v673, %v675
      %v684 = vmax.f32 %v674, %v676
      %v685 = vld [vmem:[#allocation2 + $0x52] sm:$0xff]
      %v686 = vld [vmem:[#allocation2 + $0x5a] sm:$0xff]
      %v687 = vsel %vm587, %v543, -inf
      %v688 = vsel %vm588, %v544, -inf
      %v689 = vsel %vm589, %v545, -inf
      %v690 = vsel %vm590, %v546, -inf
      %v691 = vsel %vm591, %v639, -inf
      %v692 = vsel %vm592, %v640, -inf
      %v693 = vsel %vm593, %v685, -inf
      %v694 = vsel %vm594, %v686, -inf
      %v695 = vmax.f32 %v677, %v687
      %v696 = vmax.f32 %v678, %v688
      %v697 = vmax.f32 %v679, %v689
      %v698 = vmax.f32 %v680, %v690
      %v699 = vmax.f32 %v681, %v691
      %v700 = vmax.f32 %v682, %v692
      %v701 = vmax.f32 %v683, %v693
      %v702 = vmax.f32 %v684, %v694
      %v703 = vld [vmem:[%s1] sm:$0xff]
      %v705 = vsel %vm348, %v695, 0
      %v708 = vsel %vm348, %v696, 0
      %v711 = vsel %vm348, %v697, 0
      %v714 = vsel %vm348, %v698, 0
      %v717 = vsel %vm348, %v699, 0
      %v720 = vsel %vm348, %v700, 0
      %v723 = vsel %vm348, %v701, 0
      %v726 = vsel %vm348, %v702, 0
      %728 = vmatprep.subr.mxu0 0.0
      %729 = vmatpush1.msra.mxu0 0.0
      %730 = vmatprep.subr.mxu0 0.0
      %731 = vmatpush1.msra.mxu0 0.0
      %732 = vmatprep.subr.mxu0 0.0
      %733 = vmatpush1.msra.mxu0 0.0
      %734 = vmatprep.subr.mxu0 0.0
      %735 = vmatpush1.msra.mxu0 0.0
      %736 = vmatprep.subr.mxu0 0.0
      %737 = vmatpush1.msra.mxu0 0.0
      %738 = vmatprep.subr.mxu0 0.0
      %739 = vmatpush1.msra.mxu0 0.0
      %740 = vmatprep.subr.mxu0 0.0
      %741 = vmatpush1.msra.mxu0 0.0
      %742 = vmatprep.subr.mxu0 0.0
      %743 = vmatpush1.msra.mxu0 0.0
      %744 = vmatprep.subr.mxu0 0.0
      %745 = vmatpush1.msra.mxu0 0.0
      %746 = vmatprep.subr.mxu0 0.0
      %747 = vmatpush1.msra.mxu0 0.0
      %748 = vmatprep.subr.mxu0 0.0
      %749 = vmatpush1.msra.mxu0 0.0
      %750 = vmatprep.subr.mxu0 0.0
      %751 = vmatpush1.msra.mxu0 0.0
      %752 = vmatprep.subr.mxu0 0.0
      %753 = vmatpush1.msra.mxu0 0.0
      %754 = vmatprep.subr.mxu0 0.0
      %755 = vmatpush1.msra.mxu0 0.0
      %756 = vmatprep.subr.mxu0 0.0
      %757 = vmatpush1.msra.mxu0 0.0
      %758 = vmatprep.subr.mxu0 0.0
      %759 = vmatpush1.msra.mxu0 %v703
      %760 = vmatprep.subr.mxu0 0.0
      %761 = vmatpush2.msra.mxu0 0.0
      %762 = vmatprep.subr.mxu0 0.0
      %763 = vmatpush2.msra.mxu0 0.0
      %764 = vmatprep.subr.mxu0 0.0
      %765 = vmatpush2.msra.mxu0 0.0
      %766 = vmatprep.subr.mxu0 0.0
      %767 = vmatpush2.msra.mxu0 0.0
      %768 = vmatprep.subr.mxu0 0.0
      %769 = vmatpush2.msra.mxu0 0.0
      %770 = vmatprep.subr.mxu0 0.0
      %771 = vmatpush2.msra.mxu0 0.0
      %772 = vmatprep.subr.mxu0 0.0
      %773 = vmatpush2.msra.mxu0 0.0
      %774 = vmatprep.subr.mxu0 0.0
      %775 = vmatpush2.msra.mxu0 0.0
      %776 = vmatprep.subr.mxu0 0.0
      %777 = vmatpush2.msra.mxu0 0.0
      %778 = vmatprep.subr.mxu0 0.0
      %779 = vmatpush2.msra.mxu0 0.0
      %780 = vmatprep.subr.mxu0 0.0
      %781 = vmatpush2.msra.mxu0 0.0
      %782 = vmatprep.subr.mxu0 0.0
      %783 = vmatpush2.msra.mxu0 0.0
      %784 = vmatprep.subr.mxu0 0.0
      %785 = vmatpush2.msra.mxu0 0.0
      %786 = vmatprep.subr.mxu0 0.0
      %787 = vmatpush2.msra.mxu0 0.0
      %788 = vmatprep.subr.mxu0 0.0
      %789 = vmatpush2.msra.mxu0 0.0
      %790 = vmatprep.subr.mxu0 0.0
      %791 = vmatpush2.msra.mxu0 0.0
      %792 = vmatprep.mubr.f32.mxu0 0.0
      %793 = vmatmul.mubr.f32.gmra.mxu0 %v705
      %v794 = vpop.f32.mrf.mxu0
      %v795 = vadd.f32 0.0, %v794
      %v796 = vpop.f32.mrf.mxu0
      %797 = vmatprep.mubr.f32.mxu0 0.0
      %798 = vmatmul.mubr.f32.gmra.mxu0 %v708
      %v799 = vpop.f32.mrf.mxu0
      %v800 = vadd.f32 0.0, %v799
      %v801 = vpop.f32.mrf.mxu0
      %802 = vmatprep.mubr.f32.mxu0 0.0
      %803 = vmatmul.mubr.f32.gmra.mxu0 %v711
      %v804 = vpop.f32.mrf.mxu0
      %v805 = vadd.f32 0.0, %v804
      %v806 = vpop.f32.mrf.mxu0
      %807 = vmatprep.mubr.f32.mxu0 0.0
      %808 = vmatmul.mubr.f32.gmra.mxu0 %v714
      %v809 = vpop.f32.mrf.mxu0
      %v810 = vadd.f32 0.0, %v809
      %v811 = vpop.f32.mrf.mxu0
      %812 = vmatprep.mubr.f32.mxu0 0.0
      %813 = vmatmul.mubr.f32.gmra.mxu0 %v717
      %v814 = vpop.f32.mrf.mxu0
      %v815 = vadd.f32 0.0, %v814
      %v816 = vpop.f32.mrf.mxu0
      %817 = vmatprep.mubr.f32.mxu0 0.0
      %818 = vmatmul.mubr.f32.gmra.mxu0 %v720
      %v819 = vpop.f32.mrf.mxu0
      %v820 = vadd.f32 0.0, %v819
      %v821 = vpop.f32.mrf.mxu0
      %822 = vmatprep.mubr.f32.mxu0 0.0
      %823 = vmatmul.mubr.f32.gmra.mxu0 %v723
      %v824 = vpop.f32.mrf.mxu0
      %v825 = vadd.f32 0.0, %v824
      %v826 = vpop.f32.mrf.mxu0
      %827 = vmatprep.mubr.f32.mxu0 0.0
      %828 = vmatmul.mubr.f32.gmra.mxu0 %v726
      %v829 = vpop.f32.mrf.mxu0
      %v830 = vadd.f32 0.0, %v829
      %v831 = vpop.f32.mrf.mxu0
      %832 = vdwg.mxu0
      %833 = vst.msk [vmem:[%s219] sm:$0xff] %vm348, %v795
      %834 = vst.msk [vmem:[%s219 + $0x8] sm:$0xff] %vm348, %v800
      %835 = vst.msk [vmem:[%s219 + $0x10] sm:$0xff] %vm348, %v805
      %836 = vst.msk [vmem:[%s219 + $0x18] sm:$0xff] %vm348, %v810
      %837 = vst.msk [vmem:[%s219 + $0x20] sm:$0xff] %vm348, %v815
      %838 = vst.msk [vmem:[%s219 + $0x28] sm:$0xff] %vm348, %v820
      %839 = vst.msk [vmem:[%s219 + $0x30] sm:$0xff] %vm348, %v825
      %840 = vst.msk [vmem:[%s219 + $0x38] sm:$0xff] %vm348, %v830
      %v841 = vsel %vm348, %v795, 0.0
      %v842 = vsel %vm348, %v800, 0.0
      %v843 = vadd.f32 %v841, %v842
      %v844 = vsel %vm348, %v805, 0.0
      %v845 = vadd.f32 %v843, %v844
      %v846 = vsel %vm348, %v810, 0.0
      %v847 = vadd.f32 %v845, %v846
      %v848 = vsel %vm348, %v815, 0.0
      %v849 = vadd.f32 %v847, %v848
      %v850 = vsel %vm348, %v820, 0.0
      %v851 = vadd.f32 %v849, %v850
      %v852 = vsel %vm348, %v825, 0.0
      %v853 = vadd.f32 %v851, %v852
      %v854 = vsel %vm348, %v830, 0.0
      %v855 = vadd.f32 %v853, %v854
      %v856 = vrot.slane %v855, 4
      %v857 = vadd.f32 %v855, %v856
      %v858 = vrot.slane %v857, 2
      %v859 = vadd.f32 %v857, %v858
      %v860 = vrot.slane %v859, 1
      %v861 = vadd.f32 %v859, %v860
      %v862 = vmul.f32 %v795, %v795
      %v863 = vmul.f32 %v800, %v800
      %v864 = vmul.f32 %v805, %v805
      %v865 = vmul.f32 %v810, %v810
      %v866 = vmul.f32 %v815, %v815
      %v867 = vmul.f32 %v820, %v820
      %v868 = vmul.f32 %v825, %v825
      %v869 = vmul.f32 %v830, %v830
      %v870 = vsel %vm348, %v862, 0.0
      %v871 = vsel %vm348, %v863, 0.0
      %v872 = vadd.f32 %v870, %v871
      %v873 = vsel %vm348, %v864, 0.0
      %v874 = vadd.f32 %v872, %v873
      %v875 = vsel %vm348, %v865, 0.0
      %v876 = vadd.f32 %v874, %v875
      %v877 = vsel %vm348, %v866, 0.0
      %v878 = vadd.f32 %v876, %v877
      %v879 = vsel %vm348, %v867, 0.0
      %v880 = vadd.f32 %v878, %v879
      %v881 = vsel %vm348, %v868, 0.0
      %v882 = vadd.f32 %v880, %v881
      %v883 = vsel %vm348, %v869, 0.0
      %v884 = vadd.f32 %v882, %v883
      %v885 = vrot.slane %v884, 4
      %v886 = vadd.f32 %v884, %v885
      %v887 = vrot.slane %v886, 2
      %v888 = vadd.f32 %v886, %v887
      %v889 = vrot.slane %v888, 1
      %v890 = vadd.f32 %v888, %v889
      %vm891 = vcmask 1040384
      %v892 = vsel %vm891, %v861, %v890
      %893 = vst.msk [vmem:[%s227] sm:$0x3] %vm361, %v892
      %p894 = scmp.lt.s32.totalorder %s19, 1
      %s895 = scalar_select %p894, %s19, 1
      %p896 = scmp.lt.s32.totalorder %s20, 3
      %s897 = scalar_select %p896, %s20, 3
      %s898 = smul.addr %s897, 8
      %s899 = smul.addr %s895, 32
      %s900 = sadd.s32 %s898, %s899
      %s901 = smul.addr %s900, 8
      %s902 = scalar_lea.vmem %s2, %s901
      %p903 = scmp.lt.s32.totalorder %s19, 1
      %s904 = scalar_select %p903, %s19, 1
      %p905 = scmp.lt.s32.totalorder %s20, 3
      %s906 = scalar_select %p905, %s20, 3
      %s907 = smul.addr %s904, 4
      %s908 = sadd.s32 %s906, %s907
      %s909 = smul.addr %s908, 2
      %s910 = scalar_lea.vmem %s3, %s909
      // Predicated region
      $region29: #{complex_inception_forward.14} parent=27 // pred_check
        %p911 = pneg %p96
      $region30: #{complex_inception_forward.14} parent=27 // pred_check_branch
        %913 = sbr.rel (%p911) target = $region32
      $region31: #{complex_inception_forward.14} parent=27 // pred_region
        _
      $region32: #{complex_inception_forward.14} parent=27 // pred_fallthru
        _
      // Predicated region
      $region33: #{complex_inception_forward.14} parent=27 // pred_check
        %p914 = pneg %p124
      $region34: #{complex_inception_forward.14} parent=27 // pred_check_branch
        %916 = sbr.rel (%p914) target = $region36
      $region35: #{complex_inception_forward.14} parent=27 // pred_region
        _
      $region36: #{complex_inception_forward.14} parent=27 // pred_fallthru
        _
    $region28: #{complex_inception_forward.14} parent=5 // pred_fallthru
      _
    %p917 = scmp.le.s32.totalorder 2, %s10
    // Predicated region
    $region37: #{complex_inception_forward.14} parent=5 // pred_check
      %p918 = pneg %p917
    $region38: #{complex_inception_forward.14} parent=5 // pred_check_branch
      %920 = sbr.rel (%p918) target = $region40
    $region39: #{complex_inception_forward.14} parent=5 // pred_region
      %s921 = ssub.s32 %s10, 2
      // Predicated region
      $region41: #{complex_inception_forward.14} parent=39 // pred_check
        %p922 = pneg %p102
      $region42: #{complex_inception_forward.14} parent=39 // pred_check_branch
        %924 = sbr.rel (%p922) target = $region44
      $region43: #{complex_inception_forward.14} parent=39 // pred_region
        %p925 = scmp.lt.s32.totalorder %s21, 1
        %s926 = scalar_select %p925, %s21, 1
        %p927 = scmp.lt.s32.totalorder %s22, 3
        %s928 = scalar_select %p927, %s22, 3
        %s929 = smul.addr %s928, 8
        %s930 = smul.addr %s926, 32
        %s931 = sadd.s32 %s929, %s930
        %s932 = smul.addr %s931, 8
        %s933 = scalar_lea.vmem %s2, %s932
      $region44: #{complex_inception_forward.14} parent=39 // pred_fallthru
        _
      // Predicated region
      $region45: #{complex_inception_forward.14} parent=39 // pred_check
        %p934 = pneg %p130
      $region46: #{complex_inception_forward.14} parent=39 // pred_check_branch
        %936 = sbr.rel (%p934) target = $region48
      $region47: #{complex_inception_forward.14} parent=39 // pred_region
        %p937 = scmp.lt.s32.totalorder %s21, 1
        %s938 = scalar_select %p937, %s21, 1
        %p939 = scmp.lt.s32.totalorder %s22, 3
        %s940 = scalar_select %p939, %s22, 3
        %s941 = smul.addr %s938, 4
        %s942 = sadd.s32 %s940, %s941
        %s943 = smul.addr %s942, 2
        %s944 = scalar_lea.vmem %s3, %s943
      $region48: #{complex_inception_forward.14} parent=39 // pred_fallthru
        _
    $region40: #{complex_inception_forward.14} parent=5 // pred_fallthru
      _
  $region6: #{complex_inception_forward.14} parent=0 // loop_footer
    %s14 = sadd.s32 1, %s10
  $region7: #{complex_inception_forward.14} parent=0 // loop_footer_branch
    %9 = sbr.rel target = $region3
  $region8: #{complex_inception_forward.14} parent=0 // loop_exit
    _

// kernel: neg.10
$region0: #{neg.10}
  #allocation0 [shape = 's32[1]{0}', space=sflag, size = 0x4, scoped, tag = 'scoped memory for neg.10']
  %s0 = inlined_call_operand.vmem [shape: f32[25,2,4], index: 0, kind: input, shape index: {}]
  %s1 = inlined_call_operand.vmem [shape: f32[25,2,4], index: 1, kind: output, shape index: {}]
  %v2 = vld [vmem:[%s0] sm:$0xf]
  %3 = xla_tuple %v2
  %4 = xla_tuple %3
  %v5 = vxor.u32 %v2, 2147483648
  %6 = xla_tuple %v5
  %7 = vst [vmem:[%s1] sm:$0xf] %v5
  %s8 = scalar_lea.vmem %s0, 4
  %v9 = vld [vmem:[%s8] sm:$0xf]
  %10 = xla_tuple %v9
  %11 = xla_tuple %10
  %v12 = vxor.u32 %v9, 2147483648
  %13 = xla_tuple %v12
  %s14 = scalar_lea.vmem %s1, 4
  %15 = vst [vmem:[%s14] sm:$0xf] %v12

// kernel: neg.9
$region0: #{neg.9}
  #allocation0 [shape = 's32[1]{0}', space=sflag, size = 0x4, scoped, tag = 'scoped memory for neg.9']
  %s0 = inlined_call_operand.vmem [shape: f32[9,4,8], index: 0, kind: input, shape index: {}]
  %s1 = inlined_call_operand.vmem [shape: f32[9,4,8], index: 1, kind: output, shape index: {}]
  %v2 = vld [vmem:[%s0] sm:$0xf]
  %3 = xla_tuple %v2
  %4 = xla_tuple %3
  %v5 = vxor.u32 %v2, 2147483648
  %6 = xla_tuple %v5
  %7 = vst [vmem:[%s1] sm:$0xf] %v5
  %s8 = scalar_lea.vmem %s0, 4
  %v9 = vld [vmem:[%s8] sm:$0xf]
  %10 = xla_tuple %v9
  %11 = xla_tuple %10
  %v12 = vxor.u32 %v9, 2147483648
  %13 = xla_tuple %v12
  %s14 = scalar_lea.vmem %s1, 4
  %15 = vst [vmem:[%s14] sm:$0xf] %v12
  %s16 = scalar_lea.vmem %s0, 8
  %v17 = vld [vmem:[%s16] sm:$0xf]
  %18 = xla_tuple %v17
  %19 = xla_tuple %18
  %v20 = vxor.u32 %v17, 2147483648
  %21 = xla_tuple %v20
  %s22 = scalar_lea.vmem %s1, 8
  %23 = vst [vmem:[%s22] sm:$0xf] %v20
  %s24 = scalar_lea.vmem %s0, 12
  %v25 = vld [vmem:[%s24] sm:$0xf]
  %26 = xla_tuple %v25
  %27 = xla_tuple %26
  %v28 = vxor.u32 %v25, 2147483648
  %29 = xla_tuple %v28
  %s30 = scalar_lea.vmem %s1, 12
  %31 = vst [vmem:[%s30] sm:$0xf] %v28
  %s32 = scalar_lea.vmem %s0, 16
  %v33 = vld [vmem:[%s32] sm:$0xf]
  %34 = xla_tuple %v33
  %35 = xla_tuple %34
  %v36 = vxor.u32 %v33, 2147483648
  %37 = xla_tuple %v36
  %s38 = scalar_lea.vmem %s1, 16
  %39 = vst [vmem:[%s38] sm:$0xf] %v36
  %s40 = scalar_lea.vmem %s0, 20
  %v41 = vld [vmem:[%s40] sm:$0xf]
  %42 = xla_tuple %v41
  %43 = xla_tuple %42
  %v44 = vxor.u32 %v41, 2147483648
  %45 = xla_tuple %v44
  %s46 = scalar_lea.vmem %s1, 20
  %47 = vst [vmem:[%s46] sm:$0xf] %v44
  %s48 = scalar_lea.vmem %s0, 24
  %v49 = vld [vmem:[%s48] sm:$0xf]
  %50 = xla_tuple %v49
  %51 = xla_tuple %50
  %v52 = vxor.u32 %v49, 2147483648
  %53 = xla_tuple %v52
  %s54 = scalar_lea.vmem %s1, 24
  %55 = vst [vmem:[%s54] sm:$0xf] %v52
  %s56 = scalar_lea.vmem %s0, 28
  %v57 = vld [vmem:[%s56] sm:$0xf]
  %58 = xla_tuple %v57
  %59 = xla_tuple %58
  %v60 = vxor.u32 %v57, 2147483648
  %61 = xla_tuple %v60
  %s62 = scalar_lea.vmem %s1, 28
  %63 = vst [vmem:[%s62] sm:$0xf] %v60
  %s64 = scalar_lea.vmem %s0, 32
  %v65 = vld [vmem:[%s64] sm:$0xf]
  %66 = xla_tuple %v65
  %67 = xla_tuple %66
  %v68 = vxor.u32 %v65, 2147483648
  %69 = xla_tuple %v68
  %s70 = scalar_lea.vmem %s1, 32
  %71 = vst [vmem:[%s70] sm:$0xf] %v68

// kernel: complex_inception_forward.8
$region0: #{complex_inception_forward.8}
  #allocation0 [shape = 'u32[]', space=smem, size = 0x4, offset = 0x4, fixed_abs, tag = 'smem constant byte address 0x4 - core index']
  #allocation1 [shape = 'u32[144,128]{1,0:T(1,128)}', space=vmem, size = 0x12000, scoped, tag = 'internal scratch']
  %s0 = inlined_call_operand.vmem [shape: f32[512,8], index: 0, kind: input, shape index: {}]
  %s1 = inlined_call_operand.vmem [shape: f32[8,20], index: 1, kind: input, shape index: {}]
  %s2 = inlined_call_operand.vmem [shape: f32[512,20], index: 2, kind: output, shape index: {0}]
  %s3 = inlined_call_operand.vmem [shape: f32[1,2,20], index: 3, kind: output, shape index: {1}]
  %4 = xla_tuple %s2, %s3
  %s5 = sld [smem:[#allocation0]]
  $region26: #{complex_inception_forward.8} parent=0
    _
  %s7 = ssub.s32 1, %s5
  %s8 = scalar_select 0, %s7, %s5
  // Predicated region
  $region2: #{complex_inception_forward.8} parent=0 // pred_check
    _
  $region3: #{complex_inception_forward.8} parent=0 // pred_check_branch
    %10 = sbr.rel (0) target = $region5
  $region4: #{complex_inception_forward.8} parent=0 // pred_region
    _
  $region5: #{complex_inception_forward.8} parent=0 // pred_fallthru
    _
  // Predicated region
  $region6: #{complex_inception_forward.8} parent=0 // pred_check
    _
  $region7: #{complex_inception_forward.8} parent=0 // pred_check_branch
    %12 = sbr.rel (0) target = $region9
  $region8: #{complex_inception_forward.8} parent=0 // pred_region
    _
  $region9: #{complex_inception_forward.8} parent=0 // pred_fallthru
    _
  %v13 = vld [vmem:[%s0] sm:$0xff]
  %v14 = vld [vmem:[%s0 + $0x8] sm:$0xff]
  %v15 = vld [vmem:[%s0 + $0x10] sm:$0xff]
  %v16 = vld [vmem:[%s0 + $0x18] sm:$0xff]
  %v17 = vld [vmem:[%s0 + $0x20] sm:$0xff]
  %v18 = vld [vmem:[%s0 + $0x28] sm:$0xff]
  %v19 = vld [vmem:[%s0 + $0x30] sm:$0xff]
  %v20 = vld [vmem:[%s0 + $0x38] sm:$0xff]
  %v21 = vld [vmem:[%s0 + $0x40] sm:$0xff]
  %v22 = vld [vmem:[%s0 + $0x48] sm:$0xff]
  %v23 = vld [vmem:[%s0 + $0x50] sm:$0xff]
  %v24 = vld [vmem:[%s0 + $0x58] sm:$0xff]
  %v25 = vld [vmem:[%s0 + $0x60] sm:$0xff]
  %v26 = vld [vmem:[%s0 + $0x68] sm:$0xff]
  %v27 = vld [vmem:[%s0 + $0x70] sm:$0xff]
  %v28 = vld [vmem:[%s0 + $0x78] sm:$0xff]
  %v29 = vld [vmem:[%s0 + $0x80] sm:$0xff]
  %v30 = vld [vmem:[%s0 + $0x88] sm:$0xff]
  %v31 = vld [vmem:[%s0 + $0x90] sm:$0xff]
  %v32 = vld [vmem:[%s0 + $0x98] sm:$0xff]
  %v33 = vld [vmem:[%s0 + $0xa0] sm:$0xff]
  %v34 = vld [vmem:[%s0 + $0xa8] sm:$0xff]
  %v35 = vld [vmem:[%s0 + $0xb0] sm:$0xff]
  %v36 = vld [vmem:[%s0 + $0xb8] sm:$0xff]
  %v37 = vld [vmem:[%s0 + $0xc0] sm:$0xff]
  %v38 = vld [vmem:[%s0 + $0xc8] sm:$0xff]
  %v39 = vld [vmem:[%s0 + $0xd0] sm:$0xff]
  %v40 = vld [vmem:[%s0 + $0xd8] sm:$0xff]
  %v41 = vld [vmem:[%s0 + $0xe0] sm:$0xff]
  %v42 = vld [vmem:[%s0 + $0xe8] sm:$0xff]
  %v43 = vld [vmem:[%s0 + $0xf0] sm:$0xff]
  %v44 = vld [vmem:[%s0 + $0xf8] sm:$0xff]
  %v45 = vld [vmem:[%s0 + $0x100] sm:$0xff]
  %v46 = vld [vmem:[%s0 + $0x108] sm:$0xff]
  %v47 = vld [vmem:[%s0 + $0x110] sm:$0xff]
  %v48 = vld [vmem:[%s0 + $0x118] sm:$0xff]
  %v49 = vld [vmem:[%s0 + $0x120] sm:$0xff]
  %v50 = vld [vmem:[%s0 + $0x128] sm:$0xff]
  %v51 = vld [vmem:[%s0 + $0x130] sm:$0xff]
  %v52 = vld [vmem:[%s0 + $0x138] sm:$0xff]
  %v53 = vld [vmem:[%s0 + $0x140] sm:$0xff]
  %v54 = vld [vmem:[%s0 + $0x148] sm:$0xff]
  %v55 = vld [vmem:[%s0 + $0x150] sm:$0xff]
  %v56 = vld [vmem:[%s0 + $0x158] sm:$0xff]
  %v57 = vld [vmem:[%s0 + $0x160] sm:$0xff]
  %v58 = vld [vmem:[%s0 + $0x168] sm:$0xff]
  %v59 = vld [vmem:[%s0 + $0x170] sm:$0xff]
  %v60 = vld [vmem:[%s0 + $0x178] sm:$0xff]
  %v61 = vld [vmem:[%s0 + $0x180] sm:$0xff]
  %v62 = vld [vmem:[%s0 + $0x188] sm:$0xff]
  %v63 = vld [vmem:[%s0 + $0x190] sm:$0xff]
  %v64 = vld [vmem:[%s0 + $0x198] sm:$0xff]
  %v65 = vld [vmem:[%s0 + $0x1a0] sm:$0xff]
  %v66 = vld [vmem:[%s0 + $0x1a8] sm:$0xff]
  %v67 = vld [vmem:[%s0 + $0x1b0] sm:$0xff]
  %v68 = vld [vmem:[%s0 + $0x1b8] sm:$0xff]
  %v69 = vld [vmem:[%s0 + $0x1c0] sm:$0xff]
  %v70 = vld [vmem:[%s0 + $0x1c8] sm:$0xff]
  %v71 = vld [vmem:[%s0 + $0x1d0] sm:$0xff]
  %v72 = vld [vmem:[%s0 + $0x1d8] sm:$0xff]
  %v73 = vld [vmem:[%s0 + $0x1e0] sm:$0xff]
  %v74 = vld [vmem:[%s0 + $0x1e8] sm:$0xff]
  %v75 = vld [vmem:[%s0 + $0x1f0] sm:$0xff]
  %v76 = vld [vmem:[%s0 + $0x1f8] sm:$0xff]
  %v77 = vld [vmem:[%s1] sm:$0xff]
  %vm78 = vcmask 64512
  %v80 = vsel %vm78, %v13, 0
  %v83 = vsel %vm78, %v14, 0
  %v86 = vsel %vm78, %v15, 0
  %v89 = vsel %vm78, %v16, 0
  %v92 = vsel %vm78, %v17, 0
  %v95 = vsel %vm78, %v18, 0
  %v98 = vsel %vm78, %v19, 0
  %v101 = vsel %vm78, %v20, 0
  %v104 = vsel %vm78, %v21, 0
  %v107 = vsel %vm78, %v22, 0
  %v110 = vsel %vm78, %v23, 0
  %v113 = vsel %vm78, %v24, 0
  %v116 = vsel %vm78, %v25, 0
  %v119 = vsel %vm78, %v26, 0
  %v122 = vsel %vm78, %v27, 0
  %v125 = vsel %vm78, %v28, 0
  %v128 = vsel %vm78, %v29, 0
  %v131 = vsel %vm78, %v30, 0
  %v134 = vsel %vm78, %v31, 0
  %v137 = vsel %vm78, %v32, 0
  %v140 = vsel %vm78, %v33, 0
  %v143 = vsel %vm78, %v34, 0
  %v146 = vsel %vm78, %v35, 0
  %v149 = vsel %vm78, %v36, 0
  %v152 = vsel %vm78, %v37, 0
  %v155 = vsel %vm78, %v38, 0
  %v158 = vsel %vm78, %v39, 0
  %v161 = vsel %vm78, %v40, 0
  %v164 = vsel %vm78, %v41, 0
  %v167 = vsel %vm78, %v42, 0
  %v170 = vsel %vm78, %v43, 0
  %v173 = vsel %vm78, %v44, 0
  %v176 = vsel %vm78, %v45, 0
  %v179 = vsel %vm78, %v46, 0
  %v182 = vsel %vm78, %v47, 0
  %v185 = vsel %vm78, %v48, 0
  %v188 = vsel %vm78, %v49, 0
  %v191 = vsel %vm78, %v50, 0
  %v194 = vsel %vm78, %v51, 0
  %v197 = vsel %vm78, %v52, 0
  %v200 = vsel %vm78, %v53, 0
  %v203 = vsel %vm78, %v54, 0
  %v206 = vsel %vm78, %v55, 0
  %v209 = vsel %vm78, %v56, 0
  %v212 = vsel %vm78, %v57, 0
  %v215 = vsel %vm78, %v58, 0
  %v218 = vsel %vm78, %v59, 0
  %v221 = vsel %vm78, %v60, 0
  %v224 = vsel %vm78, %v61, 0
  %v227 = vsel %vm78, %v62, 0
  %v230 = vsel %vm78, %v63, 0
  %v233 = vsel %vm78, %v64, 0
  %v236 = vsel %vm78, %v65, 0
  %v239 = vsel %vm78, %v66, 0
  %v242 = vsel %vm78, %v67, 0
  %v245 = vsel %vm78, %v68, 0
  %v248 = vsel %vm78, %v69, 0
  %v251 = vsel %vm78, %v70, 0
  %v254 = vsel %vm78, %v71, 0
  %v257 = vsel %vm78, %v72, 0
  %v260 = vsel %vm78, %v73, 0
  %v263 = vsel %vm78, %v74, 0
  %v266 = vsel %vm78, %v75, 0
  %v269 = vsel %vm78, %v76, 0
  %271 = vmatprep.subr.mxu0 0.0
  %272 = vmatpush1.msra.mxu0 0.0
  %273 = vmatprep.subr.mxu0 0.0
  %274 = vmatpush1.msra.mxu0 0.0
  %275 = vmatprep.subr.mxu0 0.0
  %276 = vmatpush1.msra.mxu0 0.0
  %277 = vmatprep.subr.mxu0 0.0
  %278 = vmatpush1.msra.mxu0 0.0
  %279 = vmatprep.subr.mxu0 0.0
  %280 = vmatpush1.msra.mxu0 0.0
  %281 = vmatprep.subr.mxu0 0.0
  %282 = vmatpush1.msra.mxu0 0.0
  %283 = vmatprep.subr.mxu0 0.0
  %284 = vmatpush1.msra.mxu0 0.0
  %285 = vmatprep.subr.mxu0 0.0
  %286 = vmatpush1.msra.mxu0 0.0
  %287 = vmatprep.subr.mxu0 0.0
  %288 = vmatpush1.msra.mxu0 0.0
  %289 = vmatprep.subr.mxu0 0.0
  %290 = vmatpush1.msra.mxu0 0.0
  %291 = vmatprep.subr.mxu0 0.0
  %292 = vmatpush1.msra.mxu0 0.0
  %293 = vmatprep.subr.mxu0 0.0
  %294 = vmatpush1.msra.mxu0 0.0
  %295 = vmatprep.subr.mxu0 0.0
  %296 = vmatpush1.msra.mxu0 0.0
  %297 = vmatprep.subr.mxu0 0.0
  %298 = vmatpush1.msra.mxu0 0.0
  %299 = vmatprep.subr.mxu0 0.0
  %300 = vmatpush1.msra.mxu0 0.0
  %301 = vmatprep.subr.mxu0 0.0
  %302 = vmatpush1.msra.mxu0 %v77
  %303 = vmatprep.subr.mxu0 0.0
  %304 = vmatpush2.msra.mxu0 0.0
  %305 = vmatprep.subr.mxu0 0.0
  %306 = vmatpush2.msra.mxu0 0.0
  %307 = vmatprep.subr.mxu0 0.0
  %308 = vmatpush2.msra.mxu0 0.0
  %309 = vmatprep.subr.mxu0 0.0
  %310 = vmatpush2.msra.mxu0 0.0
  %311 = vmatprep.subr.mxu0 0.0
  %312 = vmatpush2.msra.mxu0 0.0
  %313 = vmatprep.subr.mxu0 0.0
  %314 = vmatpush2.msra.mxu0 0.0
  %315 = vmatprep.subr.mxu0 0.0
  %316 = vmatpush2.msra.mxu0 0.0
  %317 = vmatprep.subr.mxu0 0.0
  %318 = vmatpush2.msra.mxu0 0.0
  %319 = vmatprep.subr.mxu0 0.0
  %320 = vmatpush2.msra.mxu0 0.0
  %321 = vmatprep.subr.mxu0 0.0
  %322 = vmatpush2.msra.mxu0 0.0
  %323 = vmatprep.subr.mxu0 0.0
  %324 = vmatpush2.msra.mxu0 0.0
  %325 = vmatprep.subr.mxu0 0.0
  %326 = vmatpush2.msra.mxu0 0.0
  %327 = vmatprep.subr.mxu0 0.0
  %328 = vmatpush2.msra.mxu0 0.0
  %329 = vmatprep.subr.mxu0 0.0
  %330 = vmatpush2.msra.mxu0 0.0
  %331 = vmatprep.subr.mxu0 0.0
  %332 = vmatpush2.msra.mxu0 0.0
  %333 = vmatprep.subr.mxu0 0.0
  %334 = vmatpush2.msra.mxu0 0.0
  %335 = vmatprep.mubr.f32.mxu0 0.0
  %336 = vmatmul.mubr.f32.gmra.mxu0 %v80
  %v337 = vpop.f32.mrf.mxu0
  %v338 = vadd.f32 0.0, %v337
  %v339 = vpop.f32.mrf.mxu0
  %340 = vmatprep.mubr.f32.mxu0 0.0
  %341 = vmatmul.mubr.f32.gmra.mxu0 %v83
  %v342 = vpop.f32.mrf.mxu0
  %v343 = vadd.f32 0.0, %v342
  %v344 = vpop.f32.mrf.mxu0
  %345 = vmatprep.mubr.f32.mxu0 0.0
  %346 = vmatmul.mubr.f32.gmra.mxu0 %v86
  %v347 = vpop.f32.mrf.mxu0
  %v348 = vadd.f32 0.0, %v347
  %v349 = vpop.f32.mrf.mxu0
  %350 = vmatprep.mubr.f32.mxu0 0.0
  %351 = vmatmul.mubr.f32.gmra.mxu0 %v89
  %v352 = vpop.f32.mrf.mxu0
  %v353 = vadd.f32 0.0, %v352
  %v354 = vpop.f32.mrf.mxu0
  %355 = vmatprep.mubr.f32.mxu0 0.0
  %356 = vmatmul.mubr.f32.gmra.mxu0 %v92
  %v357 = vpop.f32.mrf.mxu0
  %v358 = vadd.f32 0.0, %v357
  %v359 = vpop.f32.mrf.mxu0
  %360 = vmatprep.mubr.f32.mxu0 0.0
  %361 = vmatmul.mubr.f32.gmra.mxu0 %v95
  %v362 = vpop.f32.mrf.mxu0
  %v363 = vadd.f32 0.0, %v362
  %v364 = vpop.f32.mrf.mxu0
  %365 = vmatprep.mubr.f32.mxu0 0.0
  %366 = vmatmul.mubr.f32.gmra.mxu0 %v98
  %v367 = vpop.f32.mrf.mxu0
  %v368 = vadd.f32 0.0, %v367
  %v369 = vpop.f32.mrf.mxu0
  %370 = vmatprep.mubr.f32.mxu0 0.0
  %371 = vmatmul.mubr.f32.gmra.mxu0 %v101
  %v372 = vpop.f32.mrf.mxu0
  %v373 = vadd.f32 0.0, %v372
  %v374 = vpop.f32.mrf.mxu0
  %375 = vmatprep.mubr.f32.mxu0 0.0
  %376 = vmatmul.mubr.f32.gmra.mxu0 %v104
  %v377 = vpop.f32.mrf.mxu0
  %v378 = vadd.f32 0.0, %v377
  %v379 = vpop.f32.mrf.mxu0
  %380 = vmatprep.mubr.f32.mxu0 0.0
  %381 = vmatmul.mubr.f32.gmra.mxu0 %v107
  %v382 = vpop.f32.mrf.mxu0
  %v383 = vadd.f32 0.0, %v382
  %v384 = vpop.f32.mrf.mxu0
  %385 = vmatprep.mubr.f32.mxu0 0.0
  %386 = vmatmul.mubr.f32.gmra.mxu0 %v110
  %v387 = vpop.f32.mrf.mxu0
  %v388 = vadd.f32 0.0, %v387
  %v389 = vpop.f32.mrf.mxu0
  %390 = vmatprep.mubr.f32.mxu0 0.0
  %391 = vmatmul.mubr.f32.gmra.mxu0 %v113
  %v392 = vpop.f32.mrf.mxu0
  %v393 = vadd.f32 0.0, %v392
  %v394 = vpop.f32.mrf.mxu0
  %395 = vmatprep.mubr.f32.mxu0 0.0
  %396 = vmatmul.mubr.f32.gmra.mxu0 %v116
  %v397 = vpop.f32.mrf.mxu0
  %v398 = vadd.f32 0.0, %v397
  %v399 = vpop.f32.mrf.mxu0
  %400 = vmatprep.mubr.f32.mxu0 0.0
  %401 = vmatmul.mubr.f32.gmra.mxu0 %v119
  %v402 = vpop.f32.mrf.mxu0
  %v403 = vadd.f32 0.0, %v402
  %v404 = vpop.f32.mrf.mxu0
  %405 = vmatprep.mubr.f32.mxu0 0.0
  %406 = vmatmul.mubr.f32.gmra.mxu0 %v122
  %v407 = vpop.f32.mrf.mxu0
  %v408 = vadd.f32 0.0, %v407
  %v409 = vpop.f32.mrf.mxu0
  %410 = vmatprep.mubr.f32.mxu0 0.0
  %411 = vmatmul.mubr.f32.gmra.mxu0 %v125
  %v412 = vpop.f32.mrf.mxu0
  %v413 = vadd.f32 0.0, %v412
  %v414 = vpop.f32.mrf.mxu0
  %415 = vmatprep.mubr.f32.mxu0 0.0
  %416 = vmatmul.mubr.f32.gmra.mxu0 %v128
  %v417 = vpop.f32.mrf.mxu0
  %v418 = vadd.f32 0.0, %v417
  %v419 = vpop.f32.mrf.mxu0
  %420 = vmatprep.mubr.f32.mxu0 0.0
  %421 = vmatmul.mubr.f32.gmra.mxu0 %v131
  %v422 = vpop.f32.mrf.mxu0
  %v423 = vadd.f32 0.0, %v422
  %v424 = vpop.f32.mrf.mxu0
  %425 = vmatprep.mubr.f32.mxu0 0.0
  %426 = vmatmul.mubr.f32.gmra.mxu0 %v134
  %v427 = vpop.f32.mrf.mxu0
  %v428 = vadd.f32 0.0, %v427
  %v429 = vpop.f32.mrf.mxu0
  %430 = vmatprep.mubr.f32.mxu0 0.0
  %431 = vmatmul.mubr.f32.gmra.mxu0 %v137
  %v432 = vpop.f32.mrf.mxu0
  %v433 = vadd.f32 0.0, %v432
  %v434 = vpop.f32.mrf.mxu0
  %435 = vmatprep.mubr.f32.mxu0 0.0
  %436 = vmatmul.mubr.f32.gmra.mxu0 %v140
  %v437 = vpop.f32.mrf.mxu0
  %v438 = vadd.f32 0.0, %v437
  %v439 = vpop.f32.mrf.mxu0
  %440 = vmatprep.mubr.f32.mxu0 0.0
  %441 = vmatmul.mubr.f32.gmra.mxu0 %v143
  %v442 = vpop.f32.mrf.mxu0
  %v443 = vadd.f32 0.0, %v442
  %v444 = vpop.f32.mrf.mxu0
  %445 = vmatprep.mubr.f32.mxu0 0.0
  %446 = vmatmul.mubr.f32.gmra.mxu0 %v146
  %v447 = vpop.f32.mrf.mxu0
  %v448 = vadd.f32 0.0, %v447
  %v449 = vpop.f32.mrf.mxu0
  %450 = vmatprep.mubr.f32.mxu0 0.0
  %451 = vmatmul.mubr.f32.gmra.mxu0 %v149
  %v452 = vpop.f32.mrf.mxu0
  %v453 = vadd.f32 0.0, %v452
  %v454 = vpop.f32.mrf.mxu0
  %455 = vmatprep.mubr.f32.mxu0 0.0
  %456 = vmatmul.mubr.f32.gmra.mxu0 %v152
  %v457 = vpop.f32.mrf.mxu0
  %v458 = vadd.f32 0.0, %v457
  %v459 = vpop.f32.mrf.mxu0
  %460 = vmatprep.mubr.f32.mxu0 0.0
  %461 = vmatmul.mubr.f32.gmra.mxu0 %v155
  %v462 = vpop.f32.mrf.mxu0
  %v463 = vadd.f32 0.0, %v462
  %v464 = vpop.f32.mrf.mxu0
  %465 = vmatprep.mubr.f32.mxu0 0.0
  %466 = vmatmul.mubr.f32.gmra.mxu0 %v158
  %v467 = vpop.f32.mrf.mxu0
  %v468 = vadd.f32 0.0, %v467
  %v469 = vpop.f32.mrf.mxu0
  %470 = vmatprep.mubr.f32.mxu0 0.0
  %471 = vmatmul.mubr.f32.gmra.mxu0 %v161
  %v472 = vpop.f32.mrf.mxu0
  %v473 = vadd.f32 0.0, %v472
  %v474 = vpop.f32.mrf.mxu0
  %475 = vmatprep.mubr.f32.mxu0 0.0
  %476 = vmatmul.mubr.f32.gmra.mxu0 %v164
  %v477 = vpop.f32.mrf.mxu0
  %v478 = vadd.f32 0.0, %v477
  %v479 = vpop.f32.mrf.mxu0
  %480 = vmatprep.mubr.f32.mxu0 0.0
  %481 = vmatmul.mubr.f32.gmra.mxu0 %v167
  %v482 = vpop.f32.mrf.mxu0
  %v483 = vadd.f32 0.0, %v482
  %v484 = vpop.f32.mrf.mxu0
  %485 = vmatprep.mubr.f32.mxu0 0.0
  %486 = vmatmul.mubr.f32.gmra.mxu0 %v170
  %v487 = vpop.f32.mrf.mxu0
  %v488 = vadd.f32 0.0, %v487
  %v489 = vpop.f32.mrf.mxu0
  %490 = vmatprep.mubr.f32.mxu0 0.0
  %491 = vmatmul.mubr.f32.gmra.mxu0 %v173
  %v492 = vpop.f32.mrf.mxu0
  %v493 = vadd.f32 0.0, %v492
  %v494 = vpop.f32.mrf.mxu0
  %495 = vmatprep.mubr.f32.mxu0 0.0
  %496 = vmatmul.mubr.f32.gmra.mxu0 %v176
  %v497 = vpop.f32.mrf.mxu0
  %v498 = vadd.f32 0.0, %v497
  %v499 = vpop.f32.mrf.mxu0
  %500 = vmatprep.mubr.f32.mxu0 0.0
  %501 = vmatmul.mubr.f32.gmra.mxu0 %v179
  %v502 = vpop.f32.mrf.mxu0
  %v503 = vadd.f32 0.0, %v502
  %v504 = vpop.f32.mrf.mxu0
  %505 = vmatprep.mubr.f32.mxu0 0.0
  %506 = vmatmul.mubr.f32.gmra.mxu0 %v182
  %v507 = vpop.f32.mrf.mxu0
  %v508 = vadd.f32 0.0, %v507
  %v509 = vpop.f32.mrf.mxu0
  %510 = vmatprep.mubr.f32.mxu0 0.0
  %511 = vmatmul.mubr.f32.gmra.mxu0 %v185
  %v512 = vpop.f32.mrf.mxu0
  %v513 = vadd.f32 0.0, %v512
  %v514 = vpop.f32.mrf.mxu0
  %515 = vmatprep.mubr.f32.mxu0 0.0
  %516 = vmatmul.mubr.f32.gmra.mxu0 %v188
  %v517 = vpop.f32.mrf.mxu0
  %v518 = vadd.f32 0.0, %v517
  %v519 = vpop.f32.mrf.mxu0
  %520 = vmatprep.mubr.f32.mxu0 0.0
  %521 = vmatmul.mubr.f32.gmra.mxu0 %v191
  %v522 = vpop.f32.mrf.mxu0
  %v523 = vadd.f32 0.0, %v522
  %v524 = vpop.f32.mrf.mxu0
  %525 = vmatprep.mubr.f32.mxu0 0.0
  %526 = vmatmul.mubr.f32.gmra.mxu0 %v194
  %v527 = vpop.f32.mrf.mxu0
  %v528 = vadd.f32 0.0, %v527
  %v529 = vpop.f32.mrf.mxu0
  %530 = vmatprep.mubr.f32.mxu0 0.0
  %531 = vmatmul.mubr.f32.gmra.mxu0 %v197
  %v532 = vpop.f32.mrf.mxu0
  %v533 = vadd.f32 0.0, %v532
  %v534 = vpop.f32.mrf.mxu0
  %535 = vmatprep.mubr.f32.mxu0 0.0
  %536 = vmatmul.mubr.f32.gmra.mxu0 %v200
  %v537 = vpop.f32.mrf.mxu0
  %v538 = vadd.f32 0.0, %v537
  %v539 = vpop.f32.mrf.mxu0
  %540 = vmatprep.mubr.f32.mxu0 0.0
  %541 = vmatmul.mubr.f32.gmra.mxu0 %v203
  %v542 = vpop.f32.mrf.mxu0
  %v543 = vadd.f32 0.0, %v542
  %v544 = vpop.f32.mrf.mxu0
  %545 = vmatprep.mubr.f32.mxu0 0.0
  %546 = vmatmul.mubr.f32.gmra.mxu0 %v206
  %v547 = vpop.f32.mrf.mxu0
  %v548 = vadd.f32 0.0, %v547
  %v549 = vpop.f32.mrf.mxu0
  %550 = vmatprep.mubr.f32.mxu0 0.0
  %551 = vmatmul.mubr.f32.gmra.mxu0 %v209
  %v552 = vpop.f32.mrf.mxu0
  %v553 = vadd.f32 0.0, %v552
  %v554 = vpop.f32.mrf.mxu0
  %555 = vmatprep.mubr.f32.mxu0 0.0
  %556 = vmatmul.mubr.f32.gmra.mxu0 %v212
  %v557 = vpop.f32.mrf.mxu0
  %v558 = vadd.f32 0.0, %v557
  %v559 = vpop.f32.mrf.mxu0
  %560 = vmatprep.mubr.f32.mxu0 0.0
  %561 = vmatmul.mubr.f32.gmra.mxu0 %v215
  %v562 = vpop.f32.mrf.mxu0
  %v563 = vadd.f32 0.0, %v562
  %v564 = vpop.f32.mrf.mxu0
  %565 = vmatprep.mubr.f32.mxu0 0.0
  %566 = vmatmul.mubr.f32.gmra.mxu0 %v218
  %v567 = vpop.f32.mrf.mxu0
  %v568 = vadd.f32 0.0, %v567
  %v569 = vpop.f32.mrf.mxu0
  %570 = vmatprep.mubr.f32.mxu0 0.0
  %571 = vmatmul.mubr.f32.gmra.mxu0 %v221
  %v572 = vpop.f32.mrf.mxu0
  %v573 = vadd.f32 0.0, %v572
  %v574 = vpop.f32.mrf.mxu0
  %575 = vmatprep.mubr.f32.mxu0 0.0
  %576 = vmatmul.mubr.f32.gmra.mxu0 %v224
  %v577 = vpop.f32.mrf.mxu0
  %v578 = vadd.f32 0.0, %v577
  %v579 = vpop.f32.mrf.mxu0
  %580 = vmatprep.mubr.f32.mxu0 0.0
  %581 = vmatmul.mubr.f32.gmra.mxu0 %v227
  %v582 = vpop.f32.mrf.mxu0
  %v583 = vadd.f32 0.0, %v582
  %v584 = vpop.f32.mrf.mxu0
  %585 = vmatprep.mubr.f32.mxu0 0.0
  %586 = vmatmul.mubr.f32.gmra.mxu0 %v230
  %v587 = vpop.f32.mrf.mxu0
  %v588 = vadd.f32 0.0, %v587
  %v589 = vpop.f32.mrf.mxu0
  %590 = vmatprep.mubr.f32.mxu0 0.0
  %591 = vmatmul.mubr.f32.gmra.mxu0 %v233
  %v592 = vpop.f32.mrf.mxu0
  %v593 = vadd.f32 0.0, %v592
  %v594 = vpop.f32.mrf.mxu0
  %595 = vmatprep.mubr.f32.mxu0 0.0
  %596 = vmatmul.mubr.f32.gmra.mxu0 %v236
  %v597 = vpop.f32.mrf.mxu0
  %v598 = vadd.f32 0.0, %v597
  %v599 = vpop.f32.mrf.mxu0
  %600 = vmatprep.mubr.f32.mxu0 0.0
  %601 = vmatmul.mubr.f32.gmra.mxu0 %v239
  %v602 = vpop.f32.mrf.mxu0
  %v603 = vadd.f32 0.0, %v602
  %v604 = vpop.f32.mrf.mxu0
  %605 = vmatprep.mubr.f32.mxu0 0.0
  %606 = vmatmul.mubr.f32.gmra.mxu0 %v242
  %v607 = vpop.f32.mrf.mxu0
  %v608 = vadd.f32 0.0, %v607
  %v609 = vpop.f32.mrf.mxu0
  %610 = vmatprep.mubr.f32.mxu0 0.0
  %611 = vmatmul.mubr.f32.gmra.mxu0 %v245
  %v612 = vpop.f32.mrf.mxu0
  %v613 = vadd.f32 0.0, %v612
  %v614 = vpop.f32.mrf.mxu0
  %615 = vmatprep.mubr.f32.mxu0 0.0
  %616 = vmatmul.mubr.f32.gmra.mxu0 %v248
  %v617 = vpop.f32.mrf.mxu0
  %v618 = vadd.f32 0.0, %v617
  %v619 = vpop.f32.mrf.mxu0
  %620 = vmatprep.mubr.f32.mxu0 0.0
  %621 = vmatmul.mubr.f32.gmra.mxu0 %v251
  %v622 = vpop.f32.mrf.mxu0
  %v623 = vadd.f32 0.0, %v622
  %v624 = vpop.f32.mrf.mxu0
  %625 = vmatprep.mubr.f32.mxu0 0.0
  %626 = vmatmul.mubr.f32.gmra.mxu0 %v254
  %v627 = vpop.f32.mrf.mxu0
  %v628 = vadd.f32 0.0, %v627
  %v629 = vpop.f32.mrf.mxu0
  %630 = vmatprep.mubr.f32.mxu0 0.0
  %631 = vmatmul.mubr.f32.gmra.mxu0 %v257
  %v632 = vpop.f32.mrf.mxu0
  %v633 = vadd.f32 0.0, %v632
  %v634 = vpop.f32.mrf.mxu0
  %635 = vmatprep.mubr.f32.mxu0 0.0
  %636 = vmatmul.mubr.f32.gmra.mxu0 %v260
  %v637 = vpop.f32.mrf.mxu0
  %v638 = vadd.f32 0.0, %v637
  %v639 = vpop.f32.mrf.mxu0
  %640 = vmatprep.mubr.f32.mxu0 0.0
  %641 = vmatmul.mubr.f32.gmra.mxu0 %v263
  %v642 = vpop.f32.mrf.mxu0
  %v643 = vadd.f32 0.0, %v642
  %v644 = vpop.f32.mrf.mxu0
  %645 = vmatprep.mubr.f32.mxu0 0.0
  %646 = vmatmul.mubr.f32.gmra.mxu0 %v266
  %v647 = vpop.f32.mrf.mxu0
  %v648 = vadd.f32 0.0, %v647
  %v649 = vpop.f32.mrf.mxu0
  %650 = vmatprep.mubr.f32.mxu0 0.0
  %651 = vmatmul.mubr.f32.gmra.mxu0 %v269
  %v652 = vpop.f32.mrf.mxu0
  %v653 = vadd.f32 0.0, %v652
  %v654 = vpop.f32.mrf.mxu0
  %655 = vdwg.mxu0
  %vm656 = vcmask 162816
  %657 = vst.msk [vmem:[%s2] sm:$0xff] %vm656, %v338
  %658 = vst.msk [vmem:[%s2 + $0x8] sm:$0xff] %vm656, %v343
  %659 = vst.msk [vmem:[%s2 + $0x10] sm:$0xff] %vm656, %v348
  %660 = vst.msk [vmem:[%s2 + $0x18] sm:$0xff] %vm656, %v353
  %661 = vst.msk [vmem:[%s2 + $0x20] sm:$0xff] %vm656, %v358
  %662 = vst.msk [vmem:[%s2 + $0x28] sm:$0xff] %vm656, %v363
  %663 = vst.msk [vmem:[%s2 + $0x30] sm:$0xff] %vm656, %v368
  %664 = vst.msk [vmem:[%s2 + $0x38] sm:$0xff] %vm656, %v373
  %665 = vst.msk [vmem:[%s2 + $0x40] sm:$0xff] %vm656, %v378
  %666 = vst.msk [vmem:[%s2 + $0x48] sm:$0xff] %vm656, %v383
  %667 = vst.msk [vmem:[%s2 + $0x50] sm:$0xff] %vm656, %v388
  %668 = vst.msk [vmem:[%s2 + $0x58] sm:$0xff] %vm656, %v393
  %669 = vst.msk [vmem:[%s2 + $0x60] sm:$0xff] %vm656, %v398
  %670 = vst.msk [vmem:[%s2 + $0x68] sm:$0xff] %vm656, %v403
  %671 = vst.msk [vmem:[%s2 + $0x70] sm:$0xff] %vm656, %v408
  %672 = vst.msk [vmem:[%s2 + $0x78] sm:$0xff] %vm656, %v413
  %673 = vst.msk [vmem:[%s2 + $0x80] sm:$0xff] %vm656, %v418
  %674 = vst.msk [vmem:[%s2 + $0x88] sm:$0xff] %vm656, %v423
  %675 = vst.msk [vmem:[%s2 + $0x90] sm:$0xff] %vm656, %v428
  %676 = vst.msk [vmem:[%s2 + $0x98] sm:$0xff] %vm656, %v433
  %677 = vst.msk [vmem:[%s2 + $0xa0] sm:$0xff] %vm656, %v438
  %678 = vst.msk [vmem:[%s2 + $0xa8] sm:$0xff] %vm656, %v443
  %679 = vst.msk [vmem:[%s2 + $0xb0] sm:$0xff] %vm656, %v448
  %680 = vst.msk [vmem:[%s2 + $0xb8] sm:$0xff] %vm656, %v453
  %681 = vst.msk [vmem:[%s2 + $0xc0] sm:$0xff] %vm656, %v458
  %682 = vst.msk [vmem:[%s2 + $0xc8] sm:$0xff] %vm656, %v463
  %683 = vst.msk [vmem:[%s2 + $0xd0] sm:$0xff] %vm656, %v468
  %684 = vst.msk [vmem:[%s2 + $0xd8] sm:$0xff] %vm656, %v473
  %685 = vst.msk [vmem:[%s2 + $0xe0] sm:$0xff] %vm656, %v478
  %686 = vst.msk [vmem:[%s2 + $0xe8] sm:$0xff] %vm656, %v483
  %687 = vst.msk [vmem:[%s2 + $0xf0] sm:$0xff] %vm656, %v488
  %688 = vst.msk [vmem:[%s2 + $0xf8] sm:$0xff] %vm656, %v493
  %689 = vst.msk [vmem:[%s2 + $0x100] sm:$0xff] %vm656, %v498
  %690 = vst.msk [vmem:[%s2 + $0x108] sm:$0xff] %vm656, %v503
  %691 = vst.msk [vmem:[%s2 + $0x110] sm:$0xff] %vm656, %v508
  %692 = vst.msk [vmem:[%s2 + $0x118] sm:$0xff] %vm656, %v513
  %693 = vst.msk [vmem:[%s2 + $0x120] sm:$0xff] %vm656, %v518
  %694 = vst.msk [vmem:[%s2 + $0x128] sm:$0xff] %vm656, %v523
  %695 = vst.msk [vmem:[%s2 + $0x130] sm:$0xff] %vm656, %v528
  %696 = vst.msk [vmem:[%s2 + $0x138] sm:$0xff] %vm656, %v533
  %697 = vst.msk [vmem:[%s2 + $0x140] sm:$0xff] %vm656, %v538
  %698 = vst.msk [vmem:[%s2 + $0x148] sm:$0xff] %vm656, %v543
  %699 = vst.msk [vmem:[%s2 + $0x150] sm:$0xff] %vm656, %v548
  %700 = vst.msk [vmem:[%s2 + $0x158] sm:$0xff] %vm656, %v553
  %701 = vst.msk [vmem:[%s2 + $0x160] sm:$0xff] %vm656, %v558
  %702 = vst.msk [vmem:[%s2 + $0x168] sm:$0xff] %vm656, %v563
  %703 = vst.msk [vmem:[%s2 + $0x170] sm:$0xff] %vm656, %v568
  %704 = vst.msk [vmem:[%s2 + $0x178] sm:$0xff] %vm656, %v573
  %705 = vst.msk [vmem:[%s2 + $0x180] sm:$0xff] %vm656, %v578
  %706 = vst.msk [vmem:[%s2 + $0x188] sm:$0xff] %vm656, %v583
  %707 = vst.msk [vmem:[%s2 + $0x190] sm:$0xff] %vm656, %v588
  %708 = vst.msk [vmem:[%s2 + $0x198] sm:$0xff] %vm656, %v593
  %709 = vst.msk [vmem:[%s2 + $0x1a0] sm:$0xff] %vm656, %v598
  %710 = vst.msk [vmem:[%s2 + $0x1a8] sm:$0xff] %vm656, %v603
  %711 = vst.msk [vmem:[%s2 + $0x1b0] sm:$0xff] %vm656, %v608
  %712 = vst.msk [vmem:[%s2 + $0x1b8] sm:$0xff] %vm656, %v613
  %713 = vst.msk [vmem:[%s2 + $0x1c0] sm:$0xff] %vm656, %v618
  %714 = vst.msk [vmem:[%s2 + $0x1c8] sm:$0xff] %vm656, %v623
  %715 = vst.msk [vmem:[%s2 + $0x1d0] sm:$0xff] %vm656, %v628
  %716 = vst.msk [vmem:[%s2 + $0x1d8] sm:$0xff] %vm656, %v633
  %717 = vst.msk [vmem:[%s2 + $0x1e0] sm:$0xff] %vm656, %v638
  %718 = vst.msk [vmem:[%s2 + $0x1e8] sm:$0xff] %vm656, %v643
  %719 = vst.msk [vmem:[%s2 + $0x1f0] sm:$0xff] %vm656, %v648
  %720 = vst.msk [vmem:[%s2 + $0x1f8] sm:$0xff] %vm656, %v653
  %v721 = vsel %vm656, %v338, 0.0
  %v722 = vsel %vm656, %v343, 0.0
  %v723 = vadd.f32 %v721, %v722
  %v724 = vsel %vm656, %v348, 0.0
  %v725 = vadd.f32 %v723, %v724
  %v726 = vsel %vm656, %v353, 0.0
  %v727 = vadd.f32 %v725, %v726
  %v728 = vsel %vm656, %v358, 0.0
  %v729 = vadd.f32 %v727, %v728
  %v730 = vsel %vm656, %v363, 0.0
  %v731 = vadd.f32 %v729, %v730
  %v732 = vsel %vm656, %v368, 0.0
  %v733 = vadd.f32 %v731, %v732
  %v734 = vsel %vm656, %v373, 0.0
  %v735 = vadd.f32 %v733, %v734
  %v736 = vsel %vm656, %v378, 0.0
  %v737 = vadd.f32 %v735, %v736
  %v738 = vsel %vm656, %v383, 0.0
  %v739 = vadd.f32 %v737, %v738
  %v740 = vsel %vm656, %v388, 0.0
  %v741 = vadd.f32 %v739, %v740
  %v742 = vsel %vm656, %v393, 0.0
  %v743 = vadd.f32 %v741, %v742
  %v744 = vsel %vm656, %v398, 0.0
  %v745 = vadd.f32 %v743, %v744
  %v746 = vsel %vm656, %v403, 0.0
  %v747 = vadd.f32 %v745, %v746
  %v748 = vsel %vm656, %v408, 0.0
  %v749 = vadd.f32 %v747, %v748
  %v750 = vsel %vm656, %v413, 0.0
  %v751 = vadd.f32 %v749, %v750
  %v752 = vsel %vm656, %v418, 0.0
  %v753 = vadd.f32 %v751, %v752
  %v754 = vsel %vm656, %v423, 0.0
  %v755 = vadd.f32 %v753, %v754
  %v756 = vsel %vm656, %v428, 0.0
  %v757 = vadd.f32 %v755, %v756
  %v758 = vsel %vm656, %v433, 0.0
  %v759 = vadd.f32 %v757, %v758
  %v760 = vsel %vm656, %v438, 0.0
  %v761 = vadd.f32 %v759, %v760
  %v762 = vsel %vm656, %v443, 0.0
  %v763 = vadd.f32 %v761, %v762
  %v764 = vsel %vm656, %v448, 0.0
  %v765 = vadd.f32 %v763, %v764
  %v766 = vsel %vm656, %v453, 0.0
  %v767 = vadd.f32 %v765, %v766
  %v768 = vsel %vm656, %v458, 0.0
  %v769 = vadd.f32 %v767, %v768
  %v770 = vsel %vm656, %v463, 0.0
  %v771 = vadd.f32 %v769, %v770
  %v772 = vsel %vm656, %v468, 0.0
  %v773 = vadd.f32 %v771, %v772
  %v774 = vsel %vm656, %v473, 0.0
  %v775 = vadd.f32 %v773, %v774
  %v776 = vsel %vm656, %v478, 0.0
  %v777 = vadd.f32 %v775, %v776
  %v778 = vsel %vm656, %v483, 0.0
  %v779 = vadd.f32 %v777, %v778
  %v780 = vsel %vm656, %v488, 0.0
  %v781 = vadd.f32 %v779, %v780
  %v782 = vsel %vm656, %v493, 0.0
  %v783 = vadd.f32 %v781, %v782
  %v784 = vsel %vm656, %v498, 0.0
  %v785 = vadd.f32 %v783, %v784
  %v786 = vsel %vm656, %v503, 0.0
  %v787 = vadd.f32 %v785, %v786
  %v788 = vsel %vm656, %v508, 0.0
  %v789 = vadd.f32 %v787, %v788
  %v790 = vsel %vm656, %v513, 0.0
  %v791 = vadd.f32 %v789, %v790
  %v792 = vsel %vm656, %v518, 0.0
  %v793 = vadd.f32 %v791, %v792
  %v794 = vsel %vm656, %v523, 0.0
  %v795 = vadd.f32 %v793, %v794
  %v796 = vsel %vm656, %v528, 0.0
  %v797 = vadd.f32 %v795, %v796
  %v798 = vsel %vm656, %v533, 0.0
  %v799 = vadd.f32 %v797, %v798
  %v800 = vsel %vm656, %v538, 0.0
  %v801 = vadd.f32 %v799, %v800
  %v802 = vsel %vm656, %v543, 0.0
  %v803 = vadd.f32 %v801, %v802
  %v804 = vsel %vm656, %v548, 0.0
  %v805 = vadd.f32 %v803, %v804
  %v806 = vsel %vm656, %v553, 0.0
  %v807 = vadd.f32 %v805, %v806
  %v808 = vsel %vm656, %v558, 0.0
  %v809 = vadd.f32 %v807, %v808
  %v810 = vsel %vm656, %v563, 0.0
  %v811 = vadd.f32 %v809, %v810
  %v812 = vsel %vm656, %v568, 0.0
  %v813 = vadd.f32 %v811, %v812
  %v814 = vsel %vm656, %v573, 0.0
  %v815 = vadd.f32 %v813, %v814
  %v816 = vsel %vm656, %v578, 0.0
  %v817 = vadd.f32 %v815, %v816
  %v818 = vsel %vm656, %v583, 0.0
  %v819 = vadd.f32 %v817, %v818
  %v820 = vsel %vm656, %v588, 0.0
  %v821 = vadd.f32 %v819, %v820
  %v822 = vsel %vm656, %v593, 0.0
  %v823 = vadd.f32 %v821, %v822
  %v824 = vsel %vm656, %v598, 0.0
  %v825 = vadd.f32 %v823, %v824
  %v826 = vsel %vm656, %v603, 0.0
  %v827 = vadd.f32 %v825, %v826
  %v828 = vsel %vm656, %v608, 0.0
  %v829 = vadd.f32 %v827, %v828
  %v830 = vsel %vm656, %v613, 0.0
  %v831 = vadd.f32 %v829, %v830
  %v832 = vsel %vm656, %v618, 0.0
  %v833 = vadd.f32 %v831, %v832
  %v834 = vsel %vm656, %v623, 0.0
  %v835 = vadd.f32 %v833, %v834
  %v836 = vsel %vm656, %v628, 0.0
  %v837 = vadd.f32 %v835, %v836
  %v838 = vsel %vm656, %v633, 0.0
  %v839 = vadd.f32 %v837, %v838
  %v840 = vsel %vm656, %v638, 0.0
  %v841 = vadd.f32 %v839, %v840
  %v842 = vsel %vm656, %v643, 0.0
  %v843 = vadd.f32 %v841, %v842
  %v844 = vsel %vm656, %v648, 0.0
  %v845 = vadd.f32 %v843, %v844
  %v846 = vsel %vm656, %v653, 0.0
  %v847 = vadd.f32 %v845, %v846
  %v848 = vrot.slane %v847, 4
  %v849 = vadd.f32 %v847, %v848
  %v850 = vrot.slane %v849, 2
  %v851 = vadd.f32 %v849, %v850
  %v852 = vrot.slane %v851, 1
  %v853 = vadd.f32 %v851, %v852
  %v854 = vmul.f32 %v338, %v338
  %v855 = vmul.f32 %v343, %v343
  %v856 = vmul.f32 %v348, %v348
  %v857 = vmul.f32 %v353, %v353
  %v858 = vmul.f32 %v358, %v358
  %v859 = vmul.f32 %v363, %v363
  %v860 = vmul.f32 %v368, %v368
  %v861 = vmul.f32 %v373, %v373
  %v862 = vmul.f32 %v378, %v378
  %v863 = vmul.f32 %v383, %v383
  %v864 = vmul.f32 %v388, %v388
  %v865 = vmul.f32 %v393, %v393
  %v866 = vmul.f32 %v398, %v398
  %v867 = vmul.f32 %v403, %v403
  %v868 = vmul.f32 %v408, %v408
  %v869 = vmul.f32 %v413, %v413
  %v870 = vmul.f32 %v418, %v418
  %v871 = vmul.f32 %v423, %v423
  %v872 = vmul.f32 %v428, %v428
  %v873 = vmul.f32 %v433, %v433
  %v874 = vmul.f32 %v438, %v438
  %v875 = vmul.f32 %v443, %v443
  %v876 = vmul.f32 %v448, %v448
  %v877 = vmul.f32 %v453, %v453
  %v878 = vmul.f32 %v458, %v458
  %v879 = vmul.f32 %v463, %v463
  %v880 = vmul.f32 %v468, %v468
  %v881 = vmul.f32 %v473, %v473
  %v882 = vmul.f32 %v478, %v478
  %v883 = vmul.f32 %v483, %v483
  %v884 = vmul.f32 %v488, %v488
  %v885 = vmul.f32 %v493, %v493
  %v886 = vmul.f32 %v498, %v498
  %v887 = vmul.f32 %v503, %v503
  %v888 = vmul.f32 %v508, %v508
  %v889 = vmul.f32 %v513, %v513
  %v890 = vmul.f32 %v518, %v518
  %v891 = vmul.f32 %v523, %v523
  %v892 = vmul.f32 %v528, %v528
  %v893 = vmul.f32 %v533, %v533
  %v894 = vmul.f32 %v538, %v538
  %v895 = vmul.f32 %v543, %v543
  %v896 = vmul.f32 %v548, %v548
  %v897 = vmul.f32 %v553, %v553
  %v898 = vmul.f32 %v558, %v558
  %v899 = vmul.f32 %v563, %v563
  %v900 = vmul.f32 %v568, %v568
  %v901 = vmul.f32 %v573, %v573
  %v902 = vmul.f32 %v578, %v578
  %v903 = vmul.f32 %v583, %v583
  %v904 = vmul.f32 %v588, %v588
  %v905 = vmul.f32 %v593, %v593
  %v906 = vmul.f32 %v598, %v598
  %v907 = vmul.f32 %v603, %v603
  %v908 = vmul.f32 %v608, %v608
  %v909 = vmul.f32 %v613, %v613
  %v910 = vmul.f32 %v618, %v618
  %v911 = vmul.f32 %v623, %v623
  %v912 = vmul.f32 %v628, %v628
  %v913 = vmul.f32 %v633, %v633
  %v914 = vmul.f32 %v638, %v638
  %v915 = vmul.f32 %v643, %v643
  %v916 = vmul.f32 %v648, %v648
  %v917 = vmul.f32 %v653, %v653
  %v918 = vsel %vm656, %v854, 0.0
  %v919 = vsel %vm656, %v855, 0.0
  %v920 = vadd.f32 %v918, %v919
  %v921 = vsel %vm656, %v856, 0.0
  %v922 = vadd.f32 %v920, %v921
  %v923 = vsel %vm656, %v857, 0.0
  %v924 = vadd.f32 %v922, %v923
  %v925 = vsel %vm656, %v858, 0.0
  %v926 = vadd.f32 %v924, %v925
  %v927 = vsel %vm656, %v859, 0.0
  %v928 = vadd.f32 %v926, %v927
  %v929 = vsel %vm656, %v860, 0.0
  %v930 = vadd.f32 %v928, %v929
  %v931 = vsel %vm656, %v861, 0.0
  %v932 = vadd.f32 %v930, %v931
  %v933 = vsel %vm656, %v862, 0.0
  %v934 = vadd.f32 %v932, %v933
  %v935 = vsel %vm656, %v863, 0.0
  %v936 = vadd.f32 %v934, %v935
  %v937 = vsel %vm656, %v864, 0.0
  %v938 = vadd.f32 %v936, %v937
  %v939 = vsel %vm656, %v865, 0.0
  %v940 = vadd.f32 %v938, %v939
  %v941 = vsel %vm656, %v866, 0.0
  %v942 = vadd.f32 %v940, %v941
  %v943 = vsel %vm656, %v867, 0.0
  %v944 = vadd.f32 %v942, %v943
  %v945 = vsel %vm656, %v868, 0.0
  %v946 = vadd.f32 %v944, %v945
  %v947 = vsel %vm656, %v869, 0.0
  %v948 = vadd.f32 %v946, %v947
  %v949 = vsel %vm656, %v870, 0.0
  %v950 = vadd.f32 %v948, %v949
  %v951 = vsel %vm656, %v871, 0.0
  %v952 = vadd.f32 %v950, %v951
  %v953 = vsel %vm656, %v872, 0.0
  %v954 = vadd.f32 %v952, %v953
  %v955 = vsel %vm656, %v873, 0.0
  %v956 = vadd.f32 %v954, %v955
  %v957 = vsel %vm656, %v874, 0.0
  %v958 = vadd.f32 %v956, %v957
  %v959 = vsel %vm656, %v875, 0.0
  %v960 = vadd.f32 %v958, %v959
  %v961 = vsel %vm656, %v876, 0.0
  %v962 = vadd.f32 %v960, %v961
  %v963 = vsel %vm656, %v877, 0.0
  %v964 = vadd.f32 %v962, %v963
  %v965 = vsel %vm656, %v878, 0.0
  %v966 = vadd.f32 %v964, %v965
  %v967 = vsel %vm656, %v879, 0.0
  %v968 = vadd.f32 %v966, %v967
  %v969 = vsel %vm656, %v880, 0.0
  %v970 = vadd.f32 %v968, %v969
  %v971 = vsel %vm656, %v881, 0.0
  %v972 = vadd.f32 %v970, %v971
  %v973 = vsel %vm656, %v882, 0.0
  %v974 = vadd.f32 %v972, %v973
  %v975 = vsel %vm656, %v883, 0.0
  %v976 = vadd.f32 %v974, %v975
  %v977 = vsel %vm656, %v884, 0.0
  %v978 = vadd.f32 %v976, %v977
  %v979 = vsel %vm656, %v885, 0.0
  %v980 = vadd.f32 %v978, %v979
  %v981 = vsel %vm656, %v886, 0.0
  %v982 = vadd.f32 %v980, %v981
  %v983 = vsel %vm656, %v887, 0.0
  %v984 = vadd.f32 %v982, %v983
  %v985 = vsel %vm656, %v888, 0.0
  %v986 = vadd.f32 %v984, %v985
  %v987 = vsel %vm656, %v889, 0.0
  %v988 = vadd.f32 %v986, %v987
  %v989 = vsel %vm656, %v890, 0.0
  %v990 = vadd.f32 %v988, %v989
  %v991 = vsel %vm656, %v891, 0.0
  %v992 = vadd.f32 %v990, %v991
  %v993 = vsel %vm656, %v892, 0.0
  %v994 = vadd.f32 %v992, %v993
  %v995 = vsel %vm656, %v893, 0.0
  %v996 = vadd.f32 %v994, %v995
  %v997 = vsel %vm656, %v894, 0.0
  %v998 = vadd.f32 %v996, %v997
  %v999 = vsel %vm656, %v895, 0.0
  %v1000 = vadd.f32 %v998, %v999
  %v1001 = vsel %vm656, %v896, 0.0
  %v1002 = vadd.f32 %v1000, %v1001
  %v1003 = vsel %vm656, %v897, 0.0
  %v1004 = vadd.f32 %v1002, %v1003
  %v1005 = vsel %vm656, %v898, 0.0
  %v1006 = vadd.f32 %v1004, %v1005
  %v1007 = vsel %vm656, %v899, 0.0
  %v1008 = vadd.f32 %v1006, %v1007
  %v1009 = vsel %vm656, %v900, 0.0
  %v1010 = vadd.f32 %v1008, %v1009
  %v1011 = vsel %vm656, %v901, 0.0
  %v1012 = vadd.f32 %v1010, %v1011
  %v1013 = vsel %vm656, %v902, 0.0
  %v1014 = vadd.f32 %v1012, %v1013
  %v1015 = vsel %vm656, %v903, 0.0
  %v1016 = vadd.f32 %v1014, %v1015
  %v1017 = vsel %vm656, %v904, 0.0
  %v1018 = vadd.f32 %v1016, %v1017
  %v1019 = vsel %vm656, %v905, 0.0
  %v1020 = vadd.f32 %v1018, %v1019
  %v1021 = vsel %vm656, %v906, 0.0
  %v1022 = vadd.f32 %v1020, %v1021
  %v1023 = vsel %vm656, %v907, 0.0
  %v1024 = vadd.f32 %v1022, %v1023
  %v1025 = vsel %vm656, %v908, 0.0
  %v1026 = vadd.f32 %v1024, %v1025
  %v1027 = vsel %vm656, %v909, 0.0
  %v1028 = vadd.f32 %v1026, %v1027
  %v1029 = vsel %vm656, %v910, 0.0
  %v1030 = vadd.f32 %v1028, %v1029
  %v1031 = vsel %vm656, %v911, 0.0
  %v1032 = vadd.f32 %v1030, %v1031
  %v1033 = vsel %vm656, %v912, 0.0
  %v1034 = vadd.f32 %v1032, %v1033
  %v1035 = vsel %vm656, %v913, 0.0
  %v1036 = vadd.f32 %v1034, %v1035
  %v1037 = vsel %vm656, %v914, 0.0
  %v1038 = vadd.f32 %v1036, %v1037
  %v1039 = vsel %vm656, %v915, 0.0
  %v1040 = vadd.f32 %v1038, %v1039
  %v1041 = vsel %vm656, %v916, 0.0
  %v1042 = vadd.f32 %v1040, %v1041
  %v1043 = vsel %vm656, %v917, 0.0
  %v1044 = vadd.f32 %v1042, %v1043
  %v1045 = vrot.slane %v1044, 4
  %v1046 = vadd.f32 %v1044, %v1045
  %v1047 = vrot.slane %v1046, 2
  %v1048 = vadd.f32 %v1046, %v1047
  %v1049 = vrot.slane %v1048, 1
  %v1050 = vadd.f32 %v1048, %v1049
  %vm1051 = vcmask 1040384
  %v1052 = vsel %vm1051, %v853, %v1050
  %vm1053 = vcmask 156672
  %1054 = vst.msk [vmem:[%s3] sm:$0x3] %vm1053, %v1052
  // Predicated region
  $region10: #{complex_inception_forward.8} parent=0 // pred_check
    _
  $region11: #{complex_inception_forward.8} parent=0 // pred_check_branch
    %1056 = sbr.rel (0) target = $region13
  $region12: #{complex_inception_forward.8} parent=0 // pred_region
    _
  $region13: #{complex_inception_forward.8} parent=0 // pred_fallthru
    _
  // Predicated region
  $region14: #{complex_inception_forward.8} parent=0 // pred_check
    _
  $region15: #{complex_inception_forward.8} parent=0 // pred_check_branch
    %1058 = sbr.rel (0) target = $region17
  $region16: #{complex_inception_forward.8} parent=0 // pred_region
    _
  $region17: #{complex_inception_forward.8} parent=0 // pred_fallthru
    _
  // Predicated region
  $region18: #{complex_inception_forward.8} parent=0 // pred_check
    _
  $region19: #{complex_inception_forward.8} parent=0 // pred_check_branch
    %1060 = sbr.rel (0) target = $region21
  $region20: #{complex_inception_forward.8} parent=0 // pred_region
    _
  $region21: #{complex_inception_forward.8} parent=0 // pred_fallthru
    _
  // Predicated region
  $region22: #{complex_inception_forward.8} parent=0 // pred_check
    _
  $region23: #{complex_inception_forward.8} parent=0 // pred_check_branch
    %1062 = sbr.rel (0) target = $region25
  $region24: #{complex_inception_forward.8} parent=0 // pred_region
    _
  $region25: #{complex_inception_forward.8} parent=0 // pred_fallthru
    _

// kernel: complex_inception_forward.11
$region0: #{complex_inception_forward.11}
  #allocation0 [shape = 'u32[]', space=smem, size = 0x4, offset = 0x4, fixed_abs, tag = 'smem constant byte address 0x4 - core index']
  #allocation1 [shape = 'u32[144,128]{1,0:T(1,128)}', space=vmem, size = 0x12000, scoped, tag = 'internal scratch']
  %s0 = inlined_call_operand.vmem [shape: f32[512,16], index: 0, kind: input, shape index: {}]
  %s1 = inlined_call_operand.vmem [shape: f32[1,16], index: 1, kind: input, shape index: {}]
  %s2 = inlined_call_operand.vmem [shape: f32[1,16], index: 2, kind: input, shape index: {}]
  %s3 = inlined_call_operand.vmem [shape: f32[512,16], index: 3, kind: output, shape index: {}]
  %s4 = sld [smem:[#allocation0]]
  $region22: #{complex_inception_forward.11} parent=0
    _
  %s6 = ssub.s32 1, %s4
  %s7 = scalar_select 0, %s6, %s4
  // Predicated region
  $region2: #{complex_inception_forward.11} parent=0 // pred_check
    _
  $region3: #{complex_inception_forward.11} parent=0 // pred_check_branch
    %9 = sbr.rel (0) target = $region5
  $region4: #{complex_inception_forward.11} parent=0 // pred_region
    _
  $region5: #{complex_inception_forward.11} parent=0 // pred_fallthru
    _
  // Predicated region
  $region6: #{complex_inception_forward.11} parent=0 // pred_check
    _
  $region7: #{complex_inception_forward.11} parent=0 // pred_check_branch
    %11 = sbr.rel (0) target = $region9
  $region8: #{complex_inception_forward.11} parent=0 // pred_region
    _
  $region9: #{complex_inception_forward.11} parent=0 // pred_fallthru
    _
  // Predicated region
  $region10: #{complex_inception_forward.11} parent=0 // pred_check
    _
  $region11: #{complex_inception_forward.11} parent=0 // pred_check_branch
    %13 = sbr.rel (0) target = $region13
  $region12: #{complex_inception_forward.11} parent=0 // pred_region
    _
  $region13: #{complex_inception_forward.11} parent=0 // pred_fallthru
    _
  %v14 = vld [vmem:[%s0] sm:$0xff]
  %v15 = vld [vmem:[%s0 + $0x8] sm:$0xff]
  %v16 = vld [vmem:[%s0 + $0x10] sm:$0xff]
  %v17 = vld [vmem:[%s0 + $0x18] sm:$0xff]
  %v18 = vld [vmem:[%s0 + $0x20] sm:$0xff]
  %v19 = vld [vmem:[%s0 + $0x28] sm:$0xff]
  %v20 = vld [vmem:[%s0 + $0x30] sm:$0xff]
  %v21 = vld [vmem:[%s0 + $0x38] sm:$0xff]
  %v22 = vld [vmem:[%s0 + $0x40] sm:$0xff]
  %v23 = vld [vmem:[%s0 + $0x48] sm:$0xff]
  %v24 = vld [vmem:[%s0 + $0x50] sm:$0xff]
  %v25 = vld [vmem:[%s0 + $0x58] sm:$0xff]
  %v26 = vld [vmem:[%s0 + $0x60] sm:$0xff]
  %v27 = vld [vmem:[%s0 + $0x68] sm:$0xff]
  %v28 = vld [vmem:[%s0 + $0x70] sm:$0xff]
  %v29 = vld [vmem:[%s0 + $0x78] sm:$0xff]
  %v30 = vld [vmem:[%s0 + $0x80] sm:$0xff]
  %v31 = vld [vmem:[%s0 + $0x88] sm:$0xff]
  %v32 = vld [vmem:[%s0 + $0x90] sm:$0xff]
  %v33 = vld [vmem:[%s0 + $0x98] sm:$0xff]
  %v34 = vld [vmem:[%s0 + $0xa0] sm:$0xff]
  %v35 = vld [vmem:[%s0 + $0xa8] sm:$0xff]
  %v36 = vld [vmem:[%s0 + $0xb0] sm:$0xff]
  %v37 = vld [vmem:[%s0 + $0xb8] sm:$0xff]
  %v38 = vld [vmem:[%s0 + $0xc0] sm:$0xff]
  %v39 = vld [vmem:[%s0 + $0xc8] sm:$0xff]
  %v40 = vld [vmem:[%s0 + $0xd0] sm:$0xff]
  %v41 = vld [vmem:[%s0 + $0xd8] sm:$0xff]
  %v42 = vld [vmem:[%s0 + $0xe0] sm:$0xff]
  %v43 = vld [vmem:[%s0 + $0xe8] sm:$0xff]
  %v44 = vld [vmem:[%s0 + $0xf0] sm:$0xff]
  %v45 = vld [vmem:[%s0 + $0xf8] sm:$0xff]
  %v46 = vld [vmem:[%s0 + $0x100] sm:$0xff]
  %v47 = vld [vmem:[%s0 + $0x108] sm:$0xff]
  %v48 = vld [vmem:[%s0 + $0x110] sm:$0xff]
  %v49 = vld [vmem:[%s0 + $0x118] sm:$0xff]
  %v50 = vld [vmem:[%s0 + $0x120] sm:$0xff]
  %v51 = vld [vmem:[%s0 + $0x128] sm:$0xff]
  %v52 = vld [vmem:[%s0 + $0x130] sm:$0xff]
  %v53 = vld [vmem:[%s0 + $0x138] sm:$0xff]
  %v54 = vld [vmem:[%s0 + $0x140] sm:$0xff]
  %v55 = vld [vmem:[%s0 + $0x148] sm:$0xff]
  %v56 = vld [vmem:[%s0 + $0x150] sm:$0xff]
  %v57 = vld [vmem:[%s0 + $0x158] sm:$0xff]
  %v58 = vld [vmem:[%s0 + $0x160] sm:$0xff]
  %v59 = vld [vmem:[%s0 + $0x168] sm:$0xff]
  %v60 = vld [vmem:[%s0 + $0x170] sm:$0xff]
  %v61 = vld [vmem:[%s0 + $0x178] sm:$0xff]
  %v62 = vld [vmem:[%s0 + $0x180] sm:$0xff]
  %v63 = vld [vmem:[%s0 + $0x188] sm:$0xff]
  %v64 = vld [vmem:[%s0 + $0x190] sm:$0xff]
  %v65 = vld [vmem:[%s0 + $0x198] sm:$0xff]
  %v66 = vld [vmem:[%s0 + $0x1a0] sm:$0xff]
  %v67 = vld [vmem:[%s0 + $0x1a8] sm:$0xff]
  %v68 = vld [vmem:[%s0 + $0x1b0] sm:$0xff]
  %v69 = vld [vmem:[%s0 + $0x1b8] sm:$0xff]
  %v70 = vld [vmem:[%s0 + $0x1c0] sm:$0xff]
  %v71 = vld [vmem:[%s0 + $0x1c8] sm:$0xff]
  %v72 = vld [vmem:[%s0 + $0x1d0] sm:$0xff]
  %v73 = vld [vmem:[%s0 + $0x1d8] sm:$0xff]
  %v74 = vld [vmem:[%s0 + $0x1e0] sm:$0xff]
  %v75 = vld [vmem:[%s0 + $0x1e8] sm:$0xff]
  %v76 = vld [vmem:[%s0 + $0x1f0] sm:$0xff]
  %v77 = vld [vmem:[%s0 + $0x1f8] sm:$0xff]
  %v78 = vld [vmem:[%s1] sm:$0x1]
  %v80 = vlaneseq
  %v81 = vshrl.u32 %v80, 7
  %v82 = vsub.s32 0, %v81
  %v83 = vrot.slane %v78, %v82
  %v85 = vmul.f32 %v14, %v83
  %v86 = vmul.f32 %v15, %v83
  %v87 = vmul.f32 %v16, %v83
  %v88 = vmul.f32 %v17, %v83
  %v89 = vmul.f32 %v18, %v83
  %v90 = vmul.f32 %v19, %v83
  %v91 = vmul.f32 %v20, %v83
  %v92 = vmul.f32 %v21, %v83
  %v93 = vmul.f32 %v22, %v83
  %v94 = vmul.f32 %v23, %v83
  %v95 = vmul.f32 %v24, %v83
  %v96 = vmul.f32 %v25, %v83
  %v97 = vmul.f32 %v26, %v83
  %v98 = vmul.f32 %v27, %v83
  %v99 = vmul.f32 %v28, %v83
  %v100 = vmul.f32 %v29, %v83
  %v101 = vmul.f32 %v30, %v83
  %v102 = vmul.f32 %v31, %v83
  %v103 = vmul.f32 %v32, %v83
  %v104 = vmul.f32 %v33, %v83
  %v105 = vmul.f32 %v34, %v83
  %v106 = vmul.f32 %v35, %v83
  %v107 = vmul.f32 %v36, %v83
  %v108 = vmul.f32 %v37, %v83
  %v109 = vmul.f32 %v38, %v83
  %v110 = vmul.f32 %v39, %v83
  %v111 = vmul.f32 %v40, %v83
  %v112 = vmul.f32 %v41, %v83
  %v113 = vmul.f32 %v42, %v83
  %v114 = vmul.f32 %v43, %v83
  %v115 = vmul.f32 %v44, %v83
  %v116 = vmul.f32 %v45, %v83
  %v117 = vmul.f32 %v46, %v83
  %v118 = vmul.f32 %v47, %v83
  %v119 = vmul.f32 %v48, %v83
  %v120 = vmul.f32 %v49, %v83
  %v121 = vmul.f32 %v50, %v83
  %v122 = vmul.f32 %v51, %v83
  %v123 = vmul.f32 %v52, %v83
  %v124 = vmul.f32 %v53, %v83
  %v125 = vmul.f32 %v54, %v83
  %v126 = vmul.f32 %v55, %v83
  %v127 = vmul.f32 %v56, %v83
  %v128 = vmul.f32 %v57, %v83
  %v129 = vmul.f32 %v58, %v83
  %v130 = vmul.f32 %v59, %v83
  %v131 = vmul.f32 %v60, %v83
  %v132 = vmul.f32 %v61, %v83
  %v133 = vmul.f32 %v62, %v83
  %v134 = vmul.f32 %v63, %v83
  %v135 = vmul.f32 %v64, %v83
  %v136 = vmul.f32 %v65, %v83
  %v137 = vmul.f32 %v66, %v83
  %v138 = vmul.f32 %v67, %v83
  %v139 = vmul.f32 %v68, %v83
  %v140 = vmul.f32 %v69, %v83
  %v141 = vmul.f32 %v70, %v83
  %v142 = vmul.f32 %v71, %v83
  %v143 = vmul.f32 %v72, %v83
  %v144 = vmul.f32 %v73, %v83
  %v145 = vmul.f32 %v74, %v83
  %v146 = vmul.f32 %v75, %v83
  %v147 = vmul.f32 %v76, %v83
  %v148 = vmul.f32 %v77, %v83
  %v149 = vld [vmem:[%s2] sm:$0x1]
  %v151 = vlaneseq
  %v152 = vshrl.u32 %v151, 7
  %v153 = vsub.s32 0, %v152
  %v154 = vrot.slane %v149, %v153
  %v156 = vadd.f32 %v85, %v154
  %v157 = vadd.f32 %v86, %v154
  %v158 = vadd.f32 %v87, %v154
  %v159 = vadd.f32 %v88, %v154
  %v160 = vadd.f32 %v89, %v154
  %v161 = vadd.f32 %v90, %v154
  %v162 = vadd.f32 %v91, %v154
  %v163 = vadd.f32 %v92, %v154
  %v164 = vadd.f32 %v93, %v154
  %v165 = vadd.f32 %v94, %v154
  %v166 = vadd.f32 %v95, %v154
  %v167 = vadd.f32 %v96, %v154
  %v168 = vadd.f32 %v97, %v154
  %v169 = vadd.f32 %v98, %v154
  %v170 = vadd.f32 %v99, %v154
  %v171 = vadd.f32 %v100, %v154
  %v172 = vadd.f32 %v101, %v154
  %v173 = vadd.f32 %v102, %v154
  %v174 = vadd.f32 %v103, %v154
  %v175 = vadd.f32 %v104, %v154
  %v176 = vadd.f32 %v105, %v154
  %v177 = vadd.f32 %v106, %v154
  %v178 = vadd.f32 %v107, %v154
  %v179 = vadd.f32 %v108, %v154
  %v180 = vadd.f32 %v109, %v154
  %v181 = vadd.f32 %v110, %v154
  %v182 = vadd.f32 %v111, %v154
  %v183 = vadd.f32 %v112, %v154
  %v184 = vadd.f32 %v113, %v154
  %v185 = vadd.f32 %v114, %v154
  %v186 = vadd.f32 %v115, %v154
  %v187 = vadd.f32 %v116, %v154
  %v188 = vadd.f32 %v117, %v154
  %v189 = vadd.f32 %v118, %v154
  %v190 = vadd.f32 %v119, %v154
  %v191 = vadd.f32 %v120, %v154
  %v192 = vadd.f32 %v121, %v154
  %v193 = vadd.f32 %v122, %v154
  %v194 = vadd.f32 %v123, %v154
  %v195 = vadd.f32 %v124, %v154
  %v196 = vadd.f32 %v125, %v154
  %v197 = vadd.f32 %v126, %v154
  %v198 = vadd.f32 %v127, %v154
  %v199 = vadd.f32 %v128, %v154
  %v200 = vadd.f32 %v129, %v154
  %v201 = vadd.f32 %v130, %v154
  %v202 = vadd.f32 %v131, %v154
  %v203 = vadd.f32 %v132, %v154
  %v204 = vadd.f32 %v133, %v154
  %v205 = vadd.f32 %v134, %v154
  %v206 = vadd.f32 %v135, %v154
  %v207 = vadd.f32 %v136, %v154
  %v208 = vadd.f32 %v137, %v154
  %v209 = vadd.f32 %v138, %v154
  %v210 = vadd.f32 %v139, %v154
  %v211 = vadd.f32 %v140, %v154
  %v212 = vadd.f32 %v141, %v154
  %v213 = vadd.f32 %v142, %v154
  %v214 = vadd.f32 %v143, %v154
  %v215 = vadd.f32 %v144, %v154
  %v216 = vadd.f32 %v145, %v154
  %v217 = vadd.f32 %v146, %v154
  %v218 = vadd.f32 %v147, %v154
  %v219 = vadd.f32 %v148, %v154
  %v220 = vmax.f32 %v156, 0.0
  %v221 = vmax.f32 %v157, 0.0
  %v222 = vmax.f32 %v158, 0.0
  %v223 = vmax.f32 %v159, 0.0
  %v224 = vmax.f32 %v160, 0.0
  %v225 = vmax.f32 %v161, 0.0
  %v226 = vmax.f32 %v162, 0.0
  %v227 = vmax.f32 %v163, 0.0
  %v228 = vmax.f32 %v164, 0.0
  %v229 = vmax.f32 %v165, 0.0
  %v230 = vmax.f32 %v166, 0.0
  %v231 = vmax.f32 %v167, 0.0
  %v232 = vmax.f32 %v168, 0.0
  %v233 = vmax.f32 %v169, 0.0
  %v234 = vmax.f32 %v170, 0.0
  %v235 = vmax.f32 %v171, 0.0
  %v236 = vmax.f32 %v172, 0.0
  %v237 = vmax.f32 %v173, 0.0
  %v238 = vmax.f32 %v174, 0.0
  %v239 = vmax.f32 %v175, 0.0
  %v240 = vmax.f32 %v176, 0.0
  %v241 = vmax.f32 %v177, 0.0
  %v242 = vmax.f32 %v178, 0.0
  %v243 = vmax.f32 %v179, 0.0
  %v244 = vmax.f32 %v180, 0.0
  %v245 = vmax.f32 %v181, 0.0
  %v246 = vmax.f32 %v182, 0.0
  %v247 = vmax.f32 %v183, 0.0
  %v248 = vmax.f32 %v184, 0.0
  %v249 = vmax.f32 %v185, 0.0
  %v250 = vmax.f32 %v186, 0.0
  %v251 = vmax.f32 %v187, 0.0
  %v252 = vmax.f32 %v188, 0.0
  %v253 = vmax.f32 %v189, 0.0
  %v254 = vmax.f32 %v190, 0.0
  %v255 = vmax.f32 %v191, 0.0
  %v256 = vmax.f32 %v192, 0.0
  %v257 = vmax.f32 %v193, 0.0
  %v258 = vmax.f32 %v194, 0.0
  %v259 = vmax.f32 %v195, 0.0
  %v260 = vmax.f32 %v196, 0.0
  %v261 = vmax.f32 %v197, 0.0
  %v262 = vmax.f32 %v198, 0.0
  %v263 = vmax.f32 %v199, 0.0
  %v264 = vmax.f32 %v200, 0.0
  %v265 = vmax.f32 %v201, 0.0
  %v266 = vmax.f32 %v202, 0.0
  %v267 = vmax.f32 %v203, 0.0
  %v268 = vmax.f32 %v204, 0.0
  %v269 = vmax.f32 %v205, 0.0
  %v270 = vmax.f32 %v206, 0.0
  %v271 = vmax.f32 %v207, 0.0
  %v272 = vmax.f32 %v208, 0.0
  %v273 = vmax.f32 %v209, 0.0
  %v274 = vmax.f32 %v210, 0.0
  %v275 = vmax.f32 %v211, 0.0
  %v276 = vmax.f32 %v212, 0.0
  %v277 = vmax.f32 %v213, 0.0
  %v278 = vmax.f32 %v214, 0.0
  %v279 = vmax.f32 %v215, 0.0
  %v280 = vmax.f32 %v216, 0.0
  %v281 = vmax.f32 %v217, 0.0
  %v282 = vmax.f32 %v218, 0.0
  %v283 = vmax.f32 %v219, 0.0
  %vm284 = vcmask 130048
  %285 = vst.msk [vmem:[%s3] sm:$0xff] %vm284, %v220
  %286 = vst.msk [vmem:[%s3 + $0x8] sm:$0xff] %vm284, %v221
  %287 = vst.msk [vmem:[%s3 + $0x10] sm:$0xff] %vm284, %v222
  %288 = vst.msk [vmem:[%s3 + $0x18] sm:$0xff] %vm284, %v223
  %289 = vst.msk [vmem:[%s3 + $0x20] sm:$0xff] %vm284, %v224
  %290 = vst.msk [vmem:[%s3 + $0x28] sm:$0xff] %vm284, %v225
  %291 = vst.msk [vmem:[%s3 + $0x30] sm:$0xff] %vm284, %v226
  %292 = vst.msk [vmem:[%s3 + $0x38] sm:$0xff] %vm284, %v227
  %293 = vst.msk [vmem:[%s3 + $0x40] sm:$0xff] %vm284, %v228
  %294 = vst.msk [vmem:[%s3 + $0x48] sm:$0xff] %vm284, %v229
  %295 = vst.msk [vmem:[%s3 + $0x50] sm:$0xff] %vm284, %v230
  %296 = vst.msk [vmem:[%s3 + $0x58] sm:$0xff] %vm284, %v231
  %297 = vst.msk [vmem:[%s3 + $0x60] sm:$0xff] %vm284, %v232
  %298 = vst.msk [vmem:[%s3 + $0x68] sm:$0xff] %vm284, %v233
  %299 = vst.msk [vmem:[%s3 + $0x70] sm:$0xff] %vm284, %v234
  %300 = vst.msk [vmem:[%s3 + $0x78] sm:$0xff] %vm284, %v235
  %301 = vst.msk [vmem:[%s3 + $0x80] sm:$0xff] %vm284, %v236
  %302 = vst.msk [vmem:[%s3 + $0x88] sm:$0xff] %vm284, %v237
  %303 = vst.msk [vmem:[%s3 + $0x90] sm:$0xff] %vm284, %v238
  %304 = vst.msk [vmem:[%s3 + $0x98] sm:$0xff] %vm284, %v239
  %305 = vst.msk [vmem:[%s3 + $0xa0] sm:$0xff] %vm284, %v240
  %306 = vst.msk [vmem:[%s3 + $0xa8] sm:$0xff] %vm284, %v241
  %307 = vst.msk [vmem:[%s3 + $0xb0] sm:$0xff] %vm284, %v242
  %308 = vst.msk [vmem:[%s3 + $0xb8] sm:$0xff] %vm284, %v243
  %309 = vst.msk [vmem:[%s3 + $0xc0] sm:$0xff] %vm284, %v244
  %310 = vst.msk [vmem:[%s3 + $0xc8] sm:$0xff] %vm284, %v245
  %311 = vst.msk [vmem:[%s3 + $0xd0] sm:$0xff] %vm284, %v246
  %312 = vst.msk [vmem:[%s3 + $0xd8] sm:$0xff] %vm284, %v247
  %313 = vst.msk [vmem:[%s3 + $0xe0] sm:$0xff] %vm284, %v248
  %314 = vst.msk [vmem:[%s3 + $0xe8] sm:$0xff] %vm284, %v249
  %315 = vst.msk [vmem:[%s3 + $0xf0] sm:$0xff] %vm284, %v250
  %316 = vst.msk [vmem:[%s3 + $0xf8] sm:$0xff] %vm284, %v251
  %317 = vst.msk [vmem:[%s3 + $0x100] sm:$0xff] %vm284, %v252
  %318 = vst.msk [vmem:[%s3 + $0x108] sm:$0xff] %vm284, %v253
  %319 = vst.msk [vmem:[%s3 + $0x110] sm:$0xff] %vm284, %v254
  %320 = vst.msk [vmem:[%s3 + $0x118] sm:$0xff] %vm284, %v255
  %321 = vst.msk [vmem:[%s3 + $0x120] sm:$0xff] %vm284, %v256
  %322 = vst.msk [vmem:[%s3 + $0x128] sm:$0xff] %vm284, %v257
  %323 = vst.msk [vmem:[%s3 + $0x130] sm:$0xff] %vm284, %v258
  %324 = vst.msk [vmem:[%s3 + $0x138] sm:$0xff] %vm284, %v259
  %325 = vst.msk [vmem:[%s3 + $0x140] sm:$0xff] %vm284, %v260
  %326 = vst.msk [vmem:[%s3 + $0x148] sm:$0xff] %vm284, %v261
  %327 = vst.msk [vmem:[%s3 + $0x150] sm:$0xff] %vm284, %v262
  %328 = vst.msk [vmem:[%s3 + $0x158] sm:$0xff] %vm284, %v263
  %329 = vst.msk [vmem:[%s3 + $0x160] sm:$0xff] %vm284, %v264
  %330 = vst.msk [vmem:[%s3 + $0x168] sm:$0xff] %vm284, %v265
  %331 = vst.msk [vmem:[%s3 + $0x170] sm:$0xff] %vm284, %v266
  %332 = vst.msk [vmem:[%s3 + $0x178] sm:$0xff] %vm284, %v267
  %333 = vst.msk [vmem:[%s3 + $0x180] sm:$0xff] %vm284, %v268
  %334 = vst.msk [vmem:[%s3 + $0x188] sm:$0xff] %vm284, %v269
  %335 = vst.msk [vmem:[%s3 + $0x190] sm:$0xff] %vm284, %v270
  %336 = vst.msk [vmem:[%s3 + $0x198] sm:$0xff] %vm284, %v271
  %337 = vst.msk [vmem:[%s3 + $0x1a0] sm:$0xff] %vm284, %v272
  %338 = vst.msk [vmem:[%s3 + $0x1a8] sm:$0xff] %vm284, %v273
  %339 = vst.msk [vmem:[%s3 + $0x1b0] sm:$0xff] %vm284, %v274
  %340 = vst.msk [vmem:[%s3 + $0x1b8] sm:$0xff] %vm284, %v275
  %341 = vst.msk [vmem:[%s3 + $0x1c0] sm:$0xff] %vm284, %v276
  %342 = vst.msk [vmem:[%s3 + $0x1c8] sm:$0xff] %vm284, %v277
  %343 = vst.msk [vmem:[%s3 + $0x1d0] sm:$0xff] %vm284, %v278
  %344 = vst.msk [vmem:[%s3 + $0x1d8] sm:$0xff] %vm284, %v279
  %345 = vst.msk [vmem:[%s3 + $0x1e0] sm:$0xff] %vm284, %v280
  %346 = vst.msk [vmem:[%s3 + $0x1e8] sm:$0xff] %vm284, %v281
  %347 = vst.msk [vmem:[%s3 + $0x1f0] sm:$0xff] %vm284, %v282
  %348 = vst.msk [vmem:[%s3 + $0x1f8] sm:$0xff] %vm284, %v283
  // Predicated region
  $region14: #{complex_inception_forward.11} parent=0 // pred_check
    _
  $region15: #{complex_inception_forward.11} parent=0 // pred_check_branch
    %350 = sbr.rel (0) target = $region17
  $region16: #{complex_inception_forward.11} parent=0 // pred_region
    _
  $region17: #{complex_inception_forward.11} parent=0 // pred_fallthru
    _
  // Predicated region
  $region18: #{complex_inception_forward.11} parent=0 // pred_check
    _
  $region19: #{complex_inception_forward.11} parent=0 // pred_check_branch
    %352 = sbr.rel (0) target = $region21
  $region20: #{complex_inception_forward.11} parent=0 // pred_region
    _
  $region21: #{complex_inception_forward.11} parent=0 // pred_fallthru
    _

// kernel: complex_inception_forward.10
$region0: #{complex_inception_forward.10}
  #allocation0 [shape = 'u32[]', space=smem, size = 0x4, offset = 0x4, fixed_abs, tag = 'smem constant byte address 0x4 - core index']
  #allocation1 [shape = 'u32[144,128]{1,0:T(1,128)}', space=vmem, size = 0x12000, scoped, tag = 'internal scratch']
  #allocation2 [shape = 'f32[98,8]{1,0:T(8,128)}', space=vmem, size = 0xd000, scoped, tag = 'scratch operand']
  %s0 = inlined_call_operand.vmem [shape: f32[2,4,98,8], index: 0, kind: input, shape index: {}]
  %s1 = inlined_call_operand.vmem [shape: f32[9,8,16], index: 1, kind: input, shape index: {}]
  %s2 = inlined_call_operand.vmem [shape: f32[1,8], index: 2, kind: input, shape index: {}]
  %s3 = inlined_call_operand.vmem [shape: f32[1,8], index: 3, kind: input, shape index: {}]
  %s4 = inlined_call_operand.vmem [shape: f32[2,4,64,16], index: 4, kind: output, shape index: {0}]
  %s5 = inlined_call_operand.vmem [shape: f32[2,4,2,16], index: 5, kind: output, shape index: {1}]
  %6 = xla_tuple %s4, %s5
  %s7 = sld [smem:[#allocation0]]
  $region57: #{complex_inception_forward.10} parent=0
    _
  %s9 = ssub.s32 1, %s7
  %s10 = scalar_select 0, %s9, %s7
  loop: start=0, step=1, limit=10
  $region2: #{complex_inception_forward.10} parent=0 // loop_pre_header
    _
  $region3: #{complex_inception_forward.10} parent=0 // loop_header
    %s12 = sphi 0, %s16
    %p13 = scmp.ge.s32.totalorder %s12, 10
    %s19 = sphi 0, %s31
    %s20 = sphi 0, %s27
    %s21 = sphi 0, %s19
    %s22 = sphi 0, %s20
    %s23 = sphi 0, %s21
    %s24 = sphi 0, %s22
    %s36 = sphi 0, %s38
    %s39 = sphi 0, %s36
    %s40 = sphi 0, %s39
    %s56 = sphi 0, %s40
    %s60 = sphi 0, %s60
    %s62 = sphi 0, %s60
    %s63 = sphi 0, %s62
    %s77 = sphi 0, %s63
    %s81 = sphi 0, %s81
    %s83 = sphi 0, %s81
    %s84 = sphi 0, %s83
    %s98 = sphi 0, %s84
    %s102 = sphi 0, %s102
    %s104 = sphi 0, %s102
    %s105 = sphi 0, %s104
    %s119 = sphi 0, %s105
    %s127 = sphi 0, %s129
    %s130 = sphi 0, %s127
    %s131 = sphi 0, %s130
    %s147 = sphi 0, %s131
    %s155 = sphi 0, %s157
    %s158 = sphi 0, %s155
    %s159 = sphi 0, %s158
    %s175 = sphi 0, %s159
  $region4: #{complex_inception_forward.10} parent=0 // loop_header_branch
    %15 = sbr.rel (%p13) target = $region8
  $region5: #{complex_inception_forward.10} parent=0 // loop_body
    %s17 = ssub.s32 %s12, 1
    %s18 = ssub.s32 %s12, 2
    %s25 = sadd.s32 1, %s20
    %p26 = scmp.ge.s32.totalorder %s25, 4
    %s27 = scalar_select %p26, 0, %s25
    %s28 = sadd.s32 1, %s19
    %s29 = scalar_select %p26, %s28, %s19
    %p30 = scmp.ge.s32.totalorder %s29, 2
    %s31 = scalar_select %p30, 0, %s29
    %s32 = ssub.s32 %s19, %s31
    %s33 = ssub.s32 %s20, %s27
    %s34 = sor.u32 %s32, %s33
    %p35 = scmp.eq.s32.totalorder %s34, 0
    %s37 = sadd.s32 %s36, 1
    %s38 = scalar_select %p35, %s36, %s37
    %p41 = pneg %p35
    %p42 = scmp.eq.s32.totalorder %s12, 7
    %p43 = por %p41, %p42
    %p44 = scmp.ne.s32.totalorder %s36, %s39
    %p45 = scmp.eq.s32.totalorder %s12, 0
    %p46 = por %p44, %p45
    %p47 = scmp.ne.s32.totalorder %s36, %s39
    %p48 = scmp.eq.s32.totalorder %s17, 7
    %p49 = por %p47, %p48
    %p50 = scmp.ne.s32.totalorder %s39, %s40
    %p51 = scmp.eq.s32.totalorder %s17, 0
    %p52 = por %p50, %p51
    %p53 = scmp.ne.s32.totalorder %s39, %s40
    %p54 = scmp.eq.s32.totalorder %s18, 7
    %p55 = por %p53, %p54
    %p57 = scmp.ne.s32.totalorder %s40, %s56
    %p58 = scmp.eq.s32.totalorder %s18, 0
    %p59 = por %p57, %p58
    %s61 = sadd.s32 %s60, 1
    %p64 = scmp.eq.s32.totalorder %s12, 7
    %p65 = scmp.ne.s32.totalorder %s60, %s62
    %p66 = scmp.eq.s32.totalorder %s12, 0
    %p67 = por %p65, %p66
    %p68 = scmp.ne.s32.totalorder %s60, %s62
    %p69 = scmp.eq.s32.totalorder %s17, 7
    %p70 = por %p68, %p69
    %p71 = scmp.ne.s32.totalorder %s62, %s63
    %p72 = scmp.eq.s32.totalorder %s17, 0
    %p73 = por %p71, %p72
    %p74 = scmp.ne.s32.totalorder %s62, %s63
    %p75 = scmp.eq.s32.totalorder %s18, 7
    %p76 = por %p74, %p75
    %p78 = scmp.ne.s32.totalorder %s63, %s77
    %p79 = scmp.eq.s32.totalorder %s18, 0
    %p80 = por %p78, %p79
    %s82 = sadd.s32 %s81, 1
    %p85 = scmp.eq.s32.totalorder %s12, 7
    %p86 = scmp.ne.s32.totalorder %s81, %s83
    %p87 = scmp.eq.s32.totalorder %s12, 0
    %p88 = por %p86, %p87
    %p89 = scmp.ne.s32.totalorder %s81, %s83
    %p90 = scmp.eq.s32.totalorder %s17, 7
    %p91 = por %p89, %p90
    %p92 = scmp.ne.s32.totalorder %s83, %s84
    %p93 = scmp.eq.s32.totalorder %s17, 0
    %p94 = por %p92, %p93
    %p95 = scmp.ne.s32.totalorder %s83, %s84
    %p96 = scmp.eq.s32.totalorder %s18, 7
    %p97 = por %p95, %p96
    %p99 = scmp.ne.s32.totalorder %s84, %s98
    %p100 = scmp.eq.s32.totalorder %s18, 0
    %p101 = por %p99, %p100
    %s103 = sadd.s32 %s102, 1
    %p106 = scmp.eq.s32.totalorder %s12, 7
    %p107 = scmp.ne.s32.totalorder %s102, %s104
    %p108 = scmp.eq.s32.totalorder %s12, 0
    %p109 = por %p107, %p108
    %p110 = scmp.ne.s32.totalorder %s102, %s104
    %p111 = scmp.eq.s32.totalorder %s17, 7
    %p112 = por %p110, %p111
    %p113 = scmp.ne.s32.totalorder %s104, %s105
    %p114 = scmp.eq.s32.totalorder %s17, 0
    %p115 = por %p113, %p114
    %p116 = scmp.ne.s32.totalorder %s104, %s105
    %p117 = scmp.eq.s32.totalorder %s18, 7
    %p118 = por %p116, %p117
    %p120 = scmp.ne.s32.totalorder %s105, %s119
    %p121 = scmp.eq.s32.totalorder %s18, 0
    %p122 = por %p120, %p121
    %s123 = ssub.s32 %s19, %s31
    %s124 = ssub.s32 %s20, %s27
    %s125 = sor.u32 %s123, %s124
    %p126 = scmp.eq.s32.totalorder %s125, 0
    %s128 = sadd.s32 %s127, 1
    %s129 = scalar_select %p126, %s127, %s128
    %p132 = pneg %p126
    %p133 = scmp.eq.s32.totalorder %s12, 7
    %p134 = por %p132, %p133
    %p135 = scmp.ne.s32.totalorder %s127, %s130
    %p136 = scmp.eq.s32.totalorder %s12, 0
    %p137 = por %p135, %p136
    %p138 = scmp.ne.s32.totalorder %s127, %s130
    %p139 = scmp.eq.s32.totalorder %s17, 7
    %p140 = por %p138, %p139
    %p141 = scmp.ne.s32.totalorder %s130, %s131
    %p142 = scmp.eq.s32.totalorder %s17, 0
    %p143 = por %p141, %p142
    %p144 = scmp.ne.s32.totalorder %s130, %s131
    %p145 = scmp.eq.s32.totalorder %s18, 7
    %p146 = por %p144, %p145
    %p148 = scmp.ne.s32.totalorder %s131, %s147
    %p149 = scmp.eq.s32.totalorder %s18, 0
    %p150 = por %p148, %p149
    %s151 = ssub.s32 %s19, %s31
    %s152 = ssub.s32 %s20, %s27
    %s153 = sor.u32 %s151, %s152
    %p154 = scmp.eq.s32.totalorder %s153, 0
    %s156 = sadd.s32 %s155, 1
    %s157 = scalar_select %p154, %s155, %s156
    %p160 = pneg %p154
    %p161 = scmp.eq.s32.totalorder %s12, 7
    %p162 = por %p160, %p161
    %p163 = scmp.ne.s32.totalorder %s155, %s158
    %p164 = scmp.eq.s32.totalorder %s12, 0
    %p165 = por %p163, %p164
    %p166 = scmp.ne.s32.totalorder %s155, %s158
    %p167 = scmp.eq.s32.totalorder %s17, 7
    %p168 = por %p166, %p167
    %p169 = scmp.ne.s32.totalorder %s158, %s159
    %p170 = scmp.eq.s32.totalorder %s17, 0
    %p171 = por %p169, %p170
    %p172 = scmp.ne.s32.totalorder %s158, %s159
    %p173 = scmp.eq.s32.totalorder %s18, 7
    %p174 = por %p172, %p173
    %p176 = scmp.ne.s32.totalorder %s159, %s175
    %p177 = scmp.eq.s32.totalorder %s18, 0
    %p178 = por %p176, %p177
    %p179 = scmp.le.s32.totalorder 1, %s12
    %p180 = scmp.lt.s32.totalorder %s12, 9
    %p181 = pnand %p179, %p180
    %p182 = pneg %p181
    // Predicated region
    $region9: #{complex_inception_forward.10} parent=5 // pred_check
      _
    $region10: #{complex_inception_forward.10} parent=5 // pred_check_branch
      %184 = sbr.rel (%p181) target = $region12
    $region11: #{complex_inception_forward.10} parent=5 // pred_region
      %s185 = ssub.s32 %s12, 1
      // Predicated region
      $region13: #{complex_inception_forward.10} parent=11 // pred_check
        %p186 = pneg %p73
      $region14: #{complex_inception_forward.10} parent=11 // pred_check_branch
        %188 = sbr.rel (%p186) target = $region16
      $region15: #{complex_inception_forward.10} parent=11 // pred_region
        _
      $region16: #{complex_inception_forward.10} parent=11 // pred_fallthru
        _
      // Predicated region
      $region17: #{complex_inception_forward.10} parent=11 // pred_check
        %p189 = pneg %p94
      $region18: #{complex_inception_forward.10} parent=11 // pred_check_branch
        %191 = sbr.rel (%p189) target = $region20
      $region19: #{complex_inception_forward.10} parent=11 // pred_region
        _
      $region20: #{complex_inception_forward.10} parent=11 // pred_fallthru
        _
      // Predicated region
      $region21: #{complex_inception_forward.10} parent=11 // pred_check
        %p192 = pneg %p115
      $region22: #{complex_inception_forward.10} parent=11 // pred_check_branch
        %194 = sbr.rel (%p192) target = $region24
      $region23: #{complex_inception_forward.10} parent=11 // pred_region
        _
      $region24: #{complex_inception_forward.10} parent=11 // pred_fallthru
        _
    $region12: #{complex_inception_forward.10} parent=5 // pred_fallthru
      _
    %p195 = scmp.lt.s32.totalorder %s12, 8
    // Predicated region
    $region25: #{complex_inception_forward.10} parent=5 // pred_check
      %p196 = pneg %p195
    $region26: #{complex_inception_forward.10} parent=5 // pred_check_branch
      %198 = sbr.rel (%p196) target = $region28
    $region27: #{complex_inception_forward.10} parent=5 // pred_region
      // Predicated region
      $region29: #{complex_inception_forward.10} parent=27 // pred_check
        %p199 = pneg %p46
      $region30: #{complex_inception_forward.10} parent=27 // pred_check_branch
        %201 = sbr.rel (%p199) target = $region32
      $region31: #{complex_inception_forward.10} parent=27 // pred_region
        %p202 = scmp.lt.s32.totalorder %s19, 1
        %s203 = scalar_select %p202, %s19, 1
        %p204 = scmp.lt.s32.totalorder %s20, 3
        %s205 = scalar_select %p204, %s20, 3
        %s206 = smul.addr %s205, 13
        %s207 = smul.addr %s203, 52
        %s208 = sadd.s32 %s206, %s207
        %s209 = smul.addr %s208, 8
        %s210 = scalar_lea.vmem %s0, %s209
      $region32: #{complex_inception_forward.10} parent=27 // pred_fallthru
        _
    $region28: #{complex_inception_forward.10} parent=5 // pred_fallthru
      _
    %p211 = scmp.le.s32.totalorder 1, %s12
    %p212 = scmp.lt.s32.totalorder %s12, 9
    %p213 = pnand %p211, %p212
    %p214 = pneg %p213
    // Predicated region
    $region33: #{complex_inception_forward.10} parent=5 // pred_check
      _
    $region34: #{complex_inception_forward.10} parent=5 // pred_check_branch
      %216 = sbr.rel (%p213) target = $region36
    $region35: #{complex_inception_forward.10} parent=5 // pred_region
      %s217 = ssub.s32 %s12, 1
      %p218 = scmp.lt.s32.totalorder %s21, 1
      %s219 = scalar_select %p218, %s21, 1
      %p220 = scmp.lt.s32.totalorder %s22, 3
      %s221 = scalar_select %p220, %s22, 3
      %s222 = smul.addr %s221, 13
      %s223 = smul.addr %s219, 52
      %s224 = sadd.s32 %s222, %s223
      %s225 = smul.addr %s224, 8
      %s226 = scalar_lea.vmem %s0, %s225
      %p227 = pneg %p52
      %p228 = pneg %p49
      %p229 = pneg %p73
      %p230 = pneg %p70
      %p231 = pneg %p94
      %p232 = pneg %p91
      %p233 = pneg %p115
      %p234 = pneg %p112
      %p235 = pneg %p143
      %p236 = pneg %p140
      %p237 = scmp.lt.s32.totalorder %s21, 1
      %s238 = scalar_select %p237, %s21, 1
      %p239 = scmp.lt.s32.totalorder %s22, 3
      %s240 = scalar_select %p239, %s22, 3
      %s241 = smul.addr %s240, 8
      %s242 = smul.addr %s238, 32
      %s243 = sadd.s32 %s241, %s242
      %s244 = smul.addr %s243, 8
      %s245 = scalar_lea.vmem %s4, %s244
      %p246 = pneg %p171
      %p247 = pneg %p168
      %p248 = scmp.lt.s32.totalorder %s21, 1
      %s249 = scalar_select %p248, %s21, 1
      %p250 = scmp.lt.s32.totalorder %s22, 3
      %s251 = scalar_select %p250, %s22, 3
      %s252 = smul.addr %s249, 4
      %s253 = sadd.s32 %s251, %s252
      %s254 = smul.addr %s253, 2
      %s255 = scalar_lea.vmem %s5, %s254
      %p256 = scmp.lt.s32.totalorder %s21, 1
      %s257 = scalar_select %p256, %s21, 1
      %p258 = scmp.lt.s32.totalorder %s22, 3
      %s259 = scalar_select %p258, %s22, 3
      %s260 = smul.addr %s259, 13
      %s261 = smul.addr %s257, 52
      %s262 = sadd.s32 %s260, %s261
      %s263 = smul.addr %s262, 8
      %s264 = scalar_lea.vmem %s0, %s263
      %p265 = scmp.lt.s32.totalorder %s21, 1
      %s266 = scalar_select %p265, %s21, 1
      %p267 = scmp.lt.s32.totalorder %s22, 3
      %s268 = scalar_select %p267, %s22, 3
      %s269 = smul.addr %s268, 8
      %s270 = smul.addr %s266, 32
      %s271 = sadd.s32 %s269, %s270
      %s272 = smul.addr %s271, 8
      %s273 = scalar_lea.vmem %s4, %s272
      %p274 = scmp.lt.s32.totalorder %s21, 1
      %s275 = scalar_select %p274, %s21, 1
      %p276 = scmp.lt.s32.totalorder %s22, 3
      %s277 = scalar_select %p276, %s22, 3
      %s278 = smul.addr %s275, 4
      %s279 = sadd.s32 %s277, %s278
      %s280 = smul.addr %s279, 2
      %s281 = scalar_lea.vmem %s5, %s280
      %v282 = vlaneseq
      %v283 = vshrl.u32 %v282, 7
      %v284 = vadd.s32 %v283, 8
      %v285 = vadd.s32 %v283, 16
      %v286 = vadd.s32 %v283, 24
      %v287 = vadd.s32 %v283, 32
      %v288 = vadd.s32 %v283, 40
      %v289 = vadd.s32 %v283, 48
      %v290 = vadd.s32 %v283, 56
      %v291 = vadd.s32 %v283, 64
      %v292 = vadd.s32 %v283, 72
      %v293 = vadd.s32 %v283, 80
      %v294 = vadd.s32 %v283, 88
      %v295 = vadd.s32 %v283, 96
      %s296 = smul.u32 %s22, 64
      %v297 = vstv %s296
      %v298 = vadd.s32 %v297, %v283
      %v299 = vadd.s32 %v297, %v284
      %v300 = vadd.s32 %v297, %v285
      %v301 = vadd.s32 %v297, %v286
      %v302 = vadd.s32 %v297, %v287
      %v303 = vadd.s32 %v297, %v288
      %v304 = vadd.s32 %v297, %v289
      %v305 = vadd.s32 %v297, %v290
      %v306 = vadd.s32 %v297, %v291
      %v307 = vadd.s32 %v297, %v292
      %v308 = vadd.s32 %v297, %v293
      %v309 = vadd.s32 %v297, %v294
      %v310 = vadd.s32 %v297, %v295
      %vm311 = vcmp.ge.s32.totalorder %v298, 17
      %vm312 = vcmp.ge.s32.totalorder %v299, 17
      %vm313 = vcmp.ge.s32.totalorder %v300, 17
      %vm314 = vcmp.ge.s32.totalorder %v301, 17
      %vm315 = vcmp.ge.s32.totalorder %v302, 17
      %vm316 = vcmp.ge.s32.totalorder %v303, 17
      %vm317 = vcmp.ge.s32.totalorder %v304, 17
      %vm318 = vcmp.ge.s32.totalorder %v305, 17
      %vm319 = vcmp.ge.s32.totalorder %v306, 17
      %vm320 = vcmp.ge.s32.totalorder %v307, 17
      %vm321 = vcmp.ge.s32.totalorder %v308, 17
      %vm322 = vcmp.ge.s32.totalorder %v309, 17
      %vm323 = vcmp.ge.s32.totalorder %v310, 17
      %vm324 = vcmp.lt.s32.totalorder %v298, 273
      %vm325 = vcmp.lt.s32.totalorder %v299, 273
      %vm326 = vcmp.lt.s32.totalorder %v300, 273
      %vm327 = vcmp.lt.s32.totalorder %v301, 273
      %vm328 = vcmp.lt.s32.totalorder %v302, 273
      %vm329 = vcmp.lt.s32.totalorder %v303, 273
      %vm330 = vcmp.lt.s32.totalorder %v304, 273
      %vm331 = vcmp.lt.s32.totalorder %v305, 273
      %vm332 = vcmp.lt.s32.totalorder %v306, 273
      %vm333 = vcmp.lt.s32.totalorder %v307, 273
      %vm334 = vcmp.lt.s32.totalorder %v308, 273
      %vm335 = vcmp.lt.s32.totalorder %v309, 273
      %vm336 = vcmp.lt.s32.totalorder %v310, 273
      %vm337 = vmand %vm311, %vm324
      %vm338 = vmand %vm312, %vm325
      %vm339 = vmand %vm313, %vm326
      %vm340 = vmand %vm314, %vm327
      %vm341 = vmand %vm315, %vm328
      %vm342 = vmand %vm316, %vm329
      %vm343 = vmand %vm317, %vm330
      %vm344 = vmand %vm318, %vm331
      %vm345 = vmand %vm319, %vm332
      %vm346 = vmand %vm320, %vm333
      %vm347 = vmand %vm321, %vm334
      %vm348 = vmand %vm322, %vm335
      %vm349 = vmand %vm323, %vm336
      %v350 = vld [vmem:[%s264] sm:$0xff]
      %v351 = vld [vmem:[%s264 + $0x8] sm:$0xff]
      %v352 = vld [vmem:[%s264 + $0x10] sm:$0xff]
      %v353 = vld [vmem:[%s264 + $0x18] sm:$0xff]
      %v354 = vld [vmem:[%s264 + $0x20] sm:$0xff]
      %v355 = vld [vmem:[%s264 + $0x28] sm:$0xff]
      %v356 = vld [vmem:[%s264 + $0x30] sm:$0xff]
      %v357 = vld [vmem:[%s264 + $0x38] sm:$0xff]
      %v358 = vld [vmem:[%s264 + $0x40] sm:$0xff]
      %v359 = vld [vmem:[%s264 + $0x48] sm:$0xff]
      %v360 = vld [vmem:[%s264 + $0x50] sm:$0xff]
      %v361 = vld [vmem:[%s264 + $0x58] sm:$0xff]
      %v362 = vld [vmem:[%s264 + $0x60] sm:$0x3]
      %v363 = vld [vmem:[%s2] sm:$0x1]
      %v365 = vlaneseq
      %v366 = vshrl.u32 %v365, 7
      %v367 = vsub.s32 0, %v366
      %v368 = vrot.slane %v363, %v367
      %v370 = vmul.f32 %v350, %v368
      %v371 = vmul.f32 %v351, %v368
      %v372 = vmul.f32 %v352, %v368
      %v373 = vmul.f32 %v353, %v368
      %v374 = vmul.f32 %v354, %v368
      %v375 = vmul.f32 %v355, %v368
      %v376 = vmul.f32 %v356, %v368
      %v377 = vmul.f32 %v357, %v368
      %v378 = vmul.f32 %v358, %v368
      %v379 = vmul.f32 %v359, %v368
      %v380 = vmul.f32 %v360, %v368
      %v381 = vmul.f32 %v361, %v368
      %v382 = vmul.f32 %v362, %v368
      %v383 = vld [vmem:[%s3] sm:$0x1]
      %v385 = vlaneseq
      %v386 = vshrl.u32 %v385, 7
      %v387 = vsub.s32 0, %v386
      %v388 = vrot.slane %v383, %v387
      %v390 = vadd.f32 %v370, %v388
      %v391 = vadd.f32 %v371, %v388
      %v392 = vadd.f32 %v372, %v388
      %v393 = vadd.f32 %v373, %v388
      %v394 = vadd.f32 %v374, %v388
      %v395 = vadd.f32 %v375, %v388
      %v396 = vadd.f32 %v376, %v388
      %v397 = vadd.f32 %v377, %v388
      %v398 = vadd.f32 %v378, %v388
      %v399 = vadd.f32 %v379, %v388
      %v400 = vadd.f32 %v380, %v388
      %v401 = vadd.f32 %v381, %v388
      %v402 = vadd.f32 %v382, %v388
      %v403 = vmax.f32 %v390, 0.0
      %v404 = vmax.f32 %v391, 0.0
      %v405 = vmax.f32 %v392, 0.0
      %v406 = vmax.f32 %v393, 0.0
      %v407 = vmax.f32 %v394, 0.0
      %v408 = vmax.f32 %v395, 0.0
      %v409 = vmax.f32 %v396, 0.0
      %v410 = vmax.f32 %v397, 0.0
      %v411 = vmax.f32 %v398, 0.0
      %v412 = vmax.f32 %v399, 0.0
      %v413 = vmax.f32 %v400, 0.0
      %v414 = vmax.f32 %v401, 0.0
      %v415 = vmax.f32 %v402, 0.0
      %v416 = vsel %vm337, 1, 0
      %v417 = vsel %vm338, 1, 0
      %v418 = vsel %vm339, 1, 0
      %v419 = vsel %vm340, 1, 0
      %v420 = vsel %vm341, 1, 0
      %v421 = vsel %vm342, 1, 0
      %v422 = vsel %vm343, 1, 0
      %v423 = vsel %vm344, 1, 0
      %v424 = vsel %vm345, 1, 0
      %v425 = vsel %vm346, 1, 0
      %v426 = vsel %vm347, 1, 0
      %v427 = vsel %vm348, 1, 0
      %v428 = vsel %vm349, 1, 0
      %vm429 = vcmp.eq.s32.totalorder %v416, 1
      %vm430 = vcmp.eq.s32.totalorder %v417, 1
      %vm431 = vcmp.eq.s32.totalorder %v418, 1
      %vm432 = vcmp.eq.s32.totalorder %v419, 1
      %vm433 = vcmp.eq.s32.totalorder %v420, 1
      %vm434 = vcmp.eq.s32.totalorder %v421, 1
      %vm435 = vcmp.eq.s32.totalorder %v422, 1
      %vm436 = vcmp.eq.s32.totalorder %v423, 1
      %vm437 = vcmp.eq.s32.totalorder %v424, 1
      %vm438 = vcmp.eq.s32.totalorder %v425, 1
      %vm439 = vcmp.eq.s32.totalorder %v426, 1
      %vm440 = vcmp.eq.s32.totalorder %v427, 1
      %vm441 = vcmp.eq.s32.totalorder %v428, 1
      %v442 = vsel %vm429, %v403, 0.0
      %v443 = vsel %vm430, %v404, 0.0
      %v444 = vsel %vm431, %v405, 0.0
      %v445 = vsel %vm432, %v406, 0.0
      %v446 = vsel %vm433, %v407, 0.0
      %v447 = vsel %vm434, %v408, 0.0
      %v448 = vsel %vm435, %v409, 0.0
      %v449 = vsel %vm436, %v410, 0.0
      %v450 = vsel %vm437, %v411, 0.0
      %v451 = vsel %vm438, %v412, 0.0
      %v452 = vsel %vm439, %v413, 0.0
      %v453 = vsel %vm440, %v414, 0.0
      %v454 = vsel %vm441, %v415, 0.0
      %vm455 = vcmask 64512
      %456 = vst.msk [vmem:[#allocation2] sm:$0xff] %vm455, %v442
      %457 = vst.msk [vmem:[#allocation2 + $0x8] sm:$0xff] %vm455, %v443
      %458 = vst.msk [vmem:[#allocation2 + $0x10] sm:$0xff] %vm455, %v444
      %459 = vst.msk [vmem:[#allocation2 + $0x18] sm:$0xff] %vm455, %v445
      %460 = vst.msk [vmem:[#allocation2 + $0x20] sm:$0xff] %vm455, %v446
      %461 = vst.msk [vmem:[#allocation2 + $0x28] sm:$0xff] %vm455, %v447
      %462 = vst.msk [vmem:[#allocation2 + $0x30] sm:$0xff] %vm455, %v448
      %463 = vst.msk [vmem:[#allocation2 + $0x38] sm:$0xff] %vm455, %v449
      %464 = vst.msk [vmem:[#allocation2 + $0x40] sm:$0xff] %vm455, %v450
      %465 = vst.msk [vmem:[#allocation2 + $0x48] sm:$0xff] %vm455, %v451
      %466 = vst.msk [vmem:[#allocation2 + $0x50] sm:$0xff] %vm455, %v452
      %467 = vst.msk [vmem:[#allocation2 + $0x58] sm:$0xff] %vm455, %v453
      %vm468 = vcmask 58368
      %469 = vst.msk [vmem:[#allocation2 + $0x60] sm:$0x3] %vm468, %v454
      %vm470 = vcmp.lt.s32.totalorder %v283, 0
      %v471 = vsub.s32 0, %v283
      %v472 = vsel %vm470, %v471, %v283
      %v473 = vshrl.u32 %v472, 4
      %v474 = vand.u32 %v472, 15
      %v475 = vsub.s32 0, %v474
      %v476 = vsel %vm470, %v475, %v474
      %vm477 = vcmp.lt.s32.totalorder %v284, 0
      %v478 = vsub.s32 0, %v284
      %v479 = vsel %vm477, %v478, %v284
      %v480 = vshrl.u32 %v479, 4
      %v481 = vand.u32 %v479, 15
      %v482 = vsub.s32 0, %v481
      %v483 = vsel %vm477, %v482, %v481
      %vm484 = vcmp.lt.s32.totalorder %v285, 0
      %v485 = vsub.s32 0, %v285
      %v486 = vsel %vm484, %v485, %v285
      %v487 = vshrl.u32 %v486, 4
      %v488 = vand.u32 %v486, 15
      %v489 = vsub.s32 0, %v488
      %v490 = vsel %vm484, %v489, %v488
      %vm491 = vcmp.lt.s32.totalorder %v286, 0
      %v492 = vsub.s32 0, %v286
      %v493 = vsel %vm491, %v492, %v286
      %v494 = vshrl.u32 %v493, 4
      %v495 = vand.u32 %v493, 15
      %v496 = vsub.s32 0, %v495
      %v497 = vsel %vm491, %v496, %v495
      %vm498 = vcmp.lt.s32.totalorder %v287, 0
      %v499 = vsub.s32 0, %v287
      %v500 = vsel %vm498, %v499, %v287
      %v501 = vshrl.u32 %v500, 4
      %v502 = vand.u32 %v500, 15
      %v503 = vsub.s32 0, %v502
      %v504 = vsel %vm498, %v503, %v502
      %vm505 = vcmp.lt.s32.totalorder %v288, 0
      %v506 = vsub.s32 0, %v288
      %v507 = vsel %vm505, %v506, %v288
      %v508 = vshrl.u32 %v507, 4
      %v509 = vand.u32 %v507, 15
      %v510 = vsub.s32 0, %v509
      %v511 = vsel %vm505, %v510, %v509
      %vm512 = vcmp.lt.s32.totalorder %v289, 0
      %v513 = vsub.s32 0, %v289
      %v514 = vsel %vm512, %v513, %v289
      %v515 = vshrl.u32 %v514, 4
      %v516 = vand.u32 %v514, 15
      %v517 = vsub.s32 0, %v516
      %v518 = vsel %vm512, %v517, %v516
      %vm519 = vcmp.lt.s32.totalorder %v290, 0
      %v520 = vsub.s32 0, %v290
      %v521 = vsel %vm519, %v520, %v290
      %v522 = vshrl.u32 %v521, 4
      %v523 = vand.u32 %v521, 15
      %v524 = vsub.s32 0, %v523
      %v525 = vsel %vm519, %v524, %v523
      %vm526 = vcmp.ne.s32.totalorder %v476, 0
      %vm527 = vcmp.ne.s32.totalorder %v483, 0
      %vm528 = vcmp.ne.s32.totalorder %v490, 0
      %vm529 = vcmp.ne.s32.totalorder %v497, 0
      %vm530 = vcmp.ne.s32.totalorder %v504, 0
      %vm531 = vcmp.ne.s32.totalorder %v511, 0
      %vm532 = vcmp.ne.s32.totalorder %v518, 0
      %vm533 = vcmp.ne.s32.totalorder %v525, 0
      %vm534 = vcmp.lt.s32.totalorder %v476, 0
      %vm535 = vcmp.lt.s32.totalorder %v483, 0
      %vm536 = vcmp.lt.s32.totalorder %v490, 0
      %vm537 = vcmp.lt.s32.totalorder %v497, 0
      %vm538 = vcmp.lt.s32.totalorder %v504, 0
      %vm539 = vcmp.lt.s32.totalorder %v511, 0
      %vm540 = vcmp.lt.s32.totalorder %v518, 0
      %vm541 = vcmp.lt.s32.totalorder %v525, 0
      %vm542 = vmand %vm534, %vm526
      %vm543 = vmand %vm535, %vm527
      %vm544 = vmand %vm536, %vm528
      %vm545 = vmand %vm537, %vm529
      %vm546 = vmand %vm538, %vm530
      %vm547 = vmand %vm539, %vm531
      %vm548 = vmand %vm540, %vm532
      %vm549 = vmand %vm541, %vm533
      %v550 = vadd.s32 %v476, 16
      %v551 = vadd.s32 %v483, 16
      %v552 = vadd.s32 %v490, 16
      %v553 = vadd.s32 %v497, 16
      %v554 = vadd.s32 %v504, 16
      %v555 = vadd.s32 %v511, 16
      %v556 = vadd.s32 %v518, 16
      %v557 = vadd.s32 %v525, 16
      %v558 = vsel %vm542, %v550, %v476
      %v559 = vsel %vm543, %v551, %v483
      %v560 = vsel %vm544, %v552, %v490
      %v561 = vsel %vm545, %v553, %v497
      %v562 = vsel %vm546, %v554, %v504
      %v563 = vsel %vm547, %v555, %v511
      %v564 = vsel %vm548, %v556, %v518
      %v565 = vsel %vm549, %v557, %v525
      %v566 = vld [vmem:[#allocation2] sm:$0xff]
      %v567 = vld [vmem:[#allocation2 + $0x8] sm:$0xff]
      %v568 = vld [vmem:[#allocation2 + $0x10] sm:$0xff]
      %v569 = vld [vmem:[#allocation2 + $0x18] sm:$0xff]
      %v570 = vld [vmem:[#allocation2 + $0x20] sm:$0xff]
      %v571 = vld [vmem:[#allocation2 + $0x28] sm:$0xff]
      %v572 = vld [vmem:[#allocation2 + $0x30] sm:$0xff]
      %v573 = vld [vmem:[#allocation2 + $0x38] sm:$0xff]
      %v574 = vadd.s32 %v558, 4294967295
      %v575 = vadd.s32 %v559, 4294967295
      %v576 = vadd.s32 %v560, 4294967295
      %v577 = vadd.s32 %v561, 4294967295
      %v578 = vadd.s32 %v562, 4294967295
      %v579 = vadd.s32 %v563, 4294967295
      %v580 = vadd.s32 %v564, 4294967295
      %v581 = vadd.s32 %v565, 4294967295
      %vm582 = vcmp.ge.s32.totalorder %v574, 0
      %vm583 = vcmp.ge.s32.totalorder %v575, 0
      %vm584 = vcmp.ge.s32.totalorder %v576, 0
      %vm585 = vcmp.ge.s32.totalorder %v577, 0
      %vm586 = vcmp.ge.s32.totalorder %v578, 0
      %vm587 = vcmp.ge.s32.totalorder %v579, 0
      %vm588 = vcmp.ge.s32.totalorder %v580, 0
      %vm589 = vcmp.ge.s32.totalorder %v581, 0
      %vm590 = vcmp.lt.s32.totalorder %v574, 16
      %vm591 = vcmp.lt.s32.totalorder %v575, 16
      %vm592 = vcmp.lt.s32.totalorder %v576, 16
      %vm593 = vcmp.lt.s32.totalorder %v577, 16
      %vm594 = vcmp.lt.s32.totalorder %v578, 16
      %vm595 = vcmp.lt.s32.totalorder %v579, 16
      %vm596 = vcmp.lt.s32.totalorder %v580, 16
      %vm597 = vcmp.lt.s32.totalorder %v581, 16
      %vm598 = vmand %vm582, %vm590
      %vm599 = vmand %vm583, %vm591
      %vm600 = vmand %vm584, %vm592
      %vm601 = vmand %vm585, %vm593
      %vm602 = vmand %vm586, %vm594
      %vm603 = vmand %vm587, %vm595
      %vm604 = vmand %vm588, %vm596
      %vm605 = vmand %vm589, %vm597
      %v606 = vsel %vm598, 1, 0
      %v607 = vsel %vm599, 1, 0
      %v608 = vsel %vm600, 1, 0
      %v609 = vsel %vm601, 1, 0
      %v610 = vsel %vm602, 1, 0
      %v611 = vsel %vm603, 1, 0
      %v612 = vsel %vm604, 1, 0
      %v613 = vsel %vm605, 1, 0
      %vm614 = vcmp.eq.s32.totalorder %v606, 1
      %vm615 = vcmp.eq.s32.totalorder %v607, 1
      %vm616 = vcmp.eq.s32.totalorder %v608, 1
      %vm617 = vcmp.eq.s32.totalorder %v609, 1
      %vm618 = vcmp.eq.s32.totalorder %v610, 1
      %vm619 = vcmp.eq.s32.totalorder %v611, 1
      %vm620 = vcmp.eq.s32.totalorder %v612, 1
      %vm621 = vcmp.eq.s32.totalorder %v613, 1
      %v622 = vsel %vm614, %v566, 0.0
      %v623 = vsel %vm615, %v567, 0.0
      %v624 = vsel %vm616, %v568, 0.0
      %v625 = vsel %vm617, %v569, 0.0
      %v626 = vsel %vm618, %v570, 0.0
      %v627 = vsel %vm619, %v571, 0.0
      %v628 = vsel %vm620, %v572, 0.0
      %v629 = vsel %vm621, %v573, 0.0
      %v630 = vld [vmem:[%s1] sm:$0xff]
      %v631 = vld [vmem:[#allocation2 + $0x1] sm:$0xff]
      %v632 = vld [vmem:[#allocation2 + $0x9] sm:$0xff]
      %v633 = vld [vmem:[#allocation2 + $0x11] sm:$0xff]
      %v634 = vld [vmem:[#allocation2 + $0x19] sm:$0xff]
      %v635 = vld [vmem:[#allocation2 + $0x21] sm:$0xff]
      %v636 = vld [vmem:[#allocation2 + $0x29] sm:$0xff]
      %v637 = vld [vmem:[#allocation2 + $0x31] sm:$0xff]
      %v638 = vld [vmem:[#allocation2 + $0x39] sm:$0xff]
      %s639 = scalar_lea.vmem %s1, 8
      %v640 = vld [vmem:[%s639] sm:$0xff]
      %v642 = vsel %vm455, %v631, 0
      %v645 = vsel %vm455, %v632, 0
      %v648 = vsel %vm455, %v633, 0
      %v651 = vsel %vm455, %v634, 0
      %v654 = vsel %vm455, %v635, 0
      %v657 = vsel %vm455, %v636, 0
      %v660 = vsel %vm455, %v637, 0
      %v663 = vsel %vm455, %v638, 0
      %665 = vmatprep.subr.mxu0 0.0
      %666 = vmatpush1.msra.mxu0 0.0
      %667 = vmatprep.subr.mxu0 0.0
      %668 = vmatpush1.msra.mxu0 0.0
      %669 = vmatprep.subr.mxu0 0.0
      %670 = vmatpush1.msra.mxu0 0.0
      %671 = vmatprep.subr.mxu0 0.0
      %672 = vmatpush1.msra.mxu0 0.0
      %673 = vmatprep.subr.mxu0 0.0
      %674 = vmatpush1.msra.mxu0 0.0
      %675 = vmatprep.subr.mxu0 0.0
      %676 = vmatpush1.msra.mxu0 0.0
      %677 = vmatprep.subr.mxu0 0.0
      %678 = vmatpush1.msra.mxu0 0.0
      %679 = vmatprep.subr.mxu0 0.0
      %680 = vmatpush1.msra.mxu0 0.0
      %681 = vmatprep.subr.mxu0 0.0
      %682 = vmatpush1.msra.mxu0 0.0
      %683 = vmatprep.subr.mxu0 0.0
      %684 = vmatpush1.msra.mxu0 0.0
      %685 = vmatprep.subr.mxu0 0.0
      %686 = vmatpush1.msra.mxu0 0.0
      %687 = vmatprep.subr.mxu0 0.0
      %688 = vmatpush1.msra.mxu0 0.0
      %689 = vmatprep.subr.mxu0 0.0
      %690 = vmatpush1.msra.mxu0 0.0
      %691 = vmatprep.subr.mxu0 0.0
      %692 = vmatpush1.msra.mxu0 0.0
      %693 = vmatprep.subr.mxu0 0.0
      %694 = vmatpush1.msra.mxu0 0.0
      %695 = vmatprep.subr.mxu0 0.0
      %696 = vmatpush1.msra.mxu0 %v640
      %697 = vmatprep.subr.mxu0 0.0
      %698 = vmatpush2.msra.mxu0 0.0
      %699 = vmatprep.subr.mxu0 0.0
      %700 = vmatpush2.msra.mxu0 0.0
      %701 = vmatprep.subr.mxu0 0.0
      %702 = vmatpush2.msra.mxu0 0.0
      %703 = vmatprep.subr.mxu0 0.0
      %704 = vmatpush2.msra.mxu0 0.0
      %705 = vmatprep.subr.mxu0 0.0
      %706 = vmatpush2.msra.mxu0 0.0
      %707 = vmatprep.subr.mxu0 0.0
      %708 = vmatpush2.msra.mxu0 0.0
      %709 = vmatprep.subr.mxu0 0.0
      %710 = vmatpush2.msra.mxu0 0.0
      %711 = vmatprep.subr.mxu0 0.0
      %712 = vmatpush2.msra.mxu0 0.0
      %713 = vmatprep.subr.mxu0 0.0
      %714 = vmatpush2.msra.mxu0 0.0
      %715 = vmatprep.subr.mxu0 0.0
      %716 = vmatpush2.msra.mxu0 0.0
      %717 = vmatprep.subr.mxu0 0.0
      %718 = vmatpush2.msra.mxu0 0.0
      %719 = vmatprep.subr.mxu0 0.0
      %720 = vmatpush2.msra.mxu0 0.0
      %721 = vmatprep.subr.mxu0 0.0
      %722 = vmatpush2.msra.mxu0 0.0
      %723 = vmatprep.subr.mxu0 0.0
      %724 = vmatpush2.msra.mxu0 0.0
      %725 = vmatprep.subr.mxu0 0.0
      %726 = vmatpush2.msra.mxu0 0.0
      %727 = vmatprep.subr.mxu0 0.0
      %728 = vmatpush2.msra.mxu0 0.0
      %729 = vmatprep.mubr.f32.mxu0 0.0
      %730 = vmatmul.mubr.f32.gmra.mxu0 %v642
      %v731 = vpop.f32.mrf.mxu0
      %v732 = vadd.f32 0.0, %v731
      %v733 = vpop.f32.mrf.mxu0
      %734 = vmatprep.mubr.f32.mxu0 0.0
      %735 = vmatmul.mubr.f32.gmra.mxu0 %v645
      %v736 = vpop.f32.mrf.mxu0
      %v737 = vadd.f32 0.0, %v736
      %v738 = vpop.f32.mrf.mxu0
      %739 = vmatprep.mubr.f32.mxu0 0.0
      %740 = vmatmul.mubr.f32.gmra.mxu0 %v648
      %v741 = vpop.f32.mrf.mxu0
      %v742 = vadd.f32 0.0, %v741
      %v743 = vpop.f32.mrf.mxu0
      %744 = vmatprep.mubr.f32.mxu0 0.0
      %745 = vmatmul.mubr.f32.gmra.mxu0 %v651
      %v746 = vpop.f32.mrf.mxu0
      %v747 = vadd.f32 0.0, %v746
      %v748 = vpop.f32.mrf.mxu0
      %749 = vmatprep.mubr.f32.mxu0 0.0
      %750 = vmatmul.mubr.f32.gmra.mxu0 %v654
      %v751 = vpop.f32.mrf.mxu0
      %v752 = vadd.f32 0.0, %v751
      %v753 = vpop.f32.mrf.mxu0
      %754 = vmatprep.mubr.f32.mxu0 0.0
      %755 = vmatmul.mubr.f32.gmra.mxu0 %v657
      %v756 = vpop.f32.mrf.mxu0
      %v757 = vadd.f32 0.0, %v756
      %v758 = vpop.f32.mrf.mxu0
      %759 = vmatprep.mubr.f32.mxu0 0.0
      %760 = vmatmul.mubr.f32.gmra.mxu0 %v660
      %v761 = vpop.f32.mrf.mxu0
      %v762 = vadd.f32 0.0, %v761
      %v763 = vpop.f32.mrf.mxu0
      %764 = vmatprep.mubr.f32.mxu0 0.0
      %765 = vmatmul.mubr.f32.gmra.mxu0 %v663
      %v766 = vpop.f32.mrf.mxu0
      %v767 = vadd.f32 0.0, %v766
      %v768 = vpop.f32.mrf.mxu0
      %769 = vdwg.mxu0
      %v771 = vsel %vm455, %v622, 0
      %v774 = vsel %vm455, %v623, 0
      %v777 = vsel %vm455, %v624, 0
      %v780 = vsel %vm455, %v625, 0
      %v783 = vsel %vm455, %v626, 0
      %v786 = vsel %vm455, %v627, 0
      %v789 = vsel %vm455, %v628, 0
      %v792 = vsel %vm455, %v629, 0
      %794 = vmatprep.subr.mxu0 0.0
      %795 = vmatpush1.msra.mxu0 0.0
      %796 = vmatprep.subr.mxu0 0.0
      %797 = vmatpush1.msra.mxu0 0.0
      %798 = vmatprep.subr.mxu0 0.0
      %799 = vmatpush1.msra.mxu0 0.0
      %800 = vmatprep.subr.mxu0 0.0
      %801 = vmatpush1.msra.mxu0 0.0
      %802 = vmatprep.subr.mxu0 0.0
      %803 = vmatpush1.msra.mxu0 0.0
      %804 = vmatprep.subr.mxu0 0.0
      %805 = vmatpush1.msra.mxu0 0.0
      %806 = vmatprep.subr.mxu0 0.0
      %807 = vmatpush1.msra.mxu0 0.0
      %808 = vmatprep.subr.mxu0 0.0
      %809 = vmatpush1.msra.mxu0 0.0
      %810 = vmatprep.subr.mxu0 0.0
      %811 = vmatpush1.msra.mxu0 0.0
      %812 = vmatprep.subr.mxu0 0.0
      %813 = vmatpush1.msra.mxu0 0.0
      %814 = vmatprep.subr.mxu0 0.0
      %815 = vmatpush1.msra.mxu0 0.0
      %816 = vmatprep.subr.mxu0 0.0
      %817 = vmatpush1.msra.mxu0 0.0
      %818 = vmatprep.subr.mxu0 0.0
      %819 = vmatpush1.msra.mxu0 0.0
      %820 = vmatprep.subr.mxu0 0.0
      %821 = vmatpush1.msra.mxu0 0.0
      %822 = vmatprep.subr.mxu0 0.0
      %823 = vmatpush1.msra.mxu0 0.0
      %824 = vmatprep.subr.mxu0 0.0
      %825 = vmatpush1.msra.mxu0 %v630
      %826 = vmatprep.subr.mxu0 0.0
      %827 = vmatpush2.msra.mxu0 0.0
      %828 = vmatprep.subr.mxu0 0.0
      %829 = vmatpush2.msra.mxu0 0.0
      %830 = vmatprep.subr.mxu0 0.0
      %831 = vmatpush2.msra.mxu0 0.0
      %832 = vmatprep.subr.mxu0 0.0
      %833 = vmatpush2.msra.mxu0 0.0
      %834 = vmatprep.subr.mxu0 0.0
      %835 = vmatpush2.msra.mxu0 0.0
      %836 = vmatprep.subr.mxu0 0.0
      %837 = vmatpush2.msra.mxu0 0.0
      %838 = vmatprep.subr.mxu0 0.0
      %839 = vmatpush2.msra.mxu0 0.0
      %840 = vmatprep.subr.mxu0 0.0
      %841 = vmatpush2.msra.mxu0 0.0
      %842 = vmatprep.subr.mxu0 0.0
      %843 = vmatpush2.msra.mxu0 0.0
      %844 = vmatprep.subr.mxu0 0.0
      %845 = vmatpush2.msra.mxu0 0.0
      %846 = vmatprep.subr.mxu0 0.0
      %847 = vmatpush2.msra.mxu0 0.0
      %848 = vmatprep.subr.mxu0 0.0
      %849 = vmatpush2.msra.mxu0 0.0
      %850 = vmatprep.subr.mxu0 0.0
      %851 = vmatpush2.msra.mxu0 0.0
      %852 = vmatprep.subr.mxu0 0.0
      %853 = vmatpush2.msra.mxu0 0.0
      %854 = vmatprep.subr.mxu0 0.0
      %855 = vmatpush2.msra.mxu0 0.0
      %856 = vmatprep.subr.mxu0 0.0
      %857 = vmatpush2.msra.mxu0 0.0
      %858 = vmatprep.mubr.f32.mxu0 0.0
      %859 = vmatmul.mubr.f32.gmra.mxu0 %v771
      %v860 = vpop.f32.mrf.mxu0
      %v861 = vadd.f32 %v732, %v860
      %v862 = vpop.f32.mrf.mxu0
      %863 = vmatprep.mubr.f32.mxu0 0.0
      %864 = vmatmul.mubr.f32.gmra.mxu0 %v774
      %v865 = vpop.f32.mrf.mxu0
      %v866 = vadd.f32 %v737, %v865
      %v867 = vpop.f32.mrf.mxu0
      %868 = vmatprep.mubr.f32.mxu0 0.0
      %869 = vmatmul.mubr.f32.gmra.mxu0 %v777
      %v870 = vpop.f32.mrf.mxu0
      %v871 = vadd.f32 %v742, %v870
      %v872 = vpop.f32.mrf.mxu0
      %873 = vmatprep.mubr.f32.mxu0 0.0
      %874 = vmatmul.mubr.f32.gmra.mxu0 %v780
      %v875 = vpop.f32.mrf.mxu0
      %v876 = vadd.f32 %v747, %v875
      %v877 = vpop.f32.mrf.mxu0
      %878 = vmatprep.mubr.f32.mxu0 0.0
      %879 = vmatmul.mubr.f32.gmra.mxu0 %v783
      %v880 = vpop.f32.mrf.mxu0
      %v881 = vadd.f32 %v752, %v880
      %v882 = vpop.f32.mrf.mxu0
      %883 = vmatprep.mubr.f32.mxu0 0.0
      %884 = vmatmul.mubr.f32.gmra.mxu0 %v786
      %v885 = vpop.f32.mrf.mxu0
      %v886 = vadd.f32 %v757, %v885
      %v887 = vpop.f32.mrf.mxu0
      %888 = vmatprep.mubr.f32.mxu0 0.0
      %889 = vmatmul.mubr.f32.gmra.mxu0 %v789
      %v890 = vpop.f32.mrf.mxu0
      %v891 = vadd.f32 %v762, %v890
      %v892 = vpop.f32.mrf.mxu0
      %893 = vmatprep.mubr.f32.mxu0 0.0
      %894 = vmatmul.mubr.f32.gmra.mxu0 %v792
      %v895 = vpop.f32.mrf.mxu0
      %v896 = vadd.f32 %v767, %v895
      %v897 = vpop.f32.mrf.mxu0
      %898 = vdwg.mxu0
      %v899 = vld [vmem:[#allocation2 + $0x2] sm:$0xff]
      %v900 = vld [vmem:[#allocation2 + $0xa] sm:$0xff]
      %v901 = vld [vmem:[#allocation2 + $0x12] sm:$0xff]
      %v902 = vld [vmem:[#allocation2 + $0x1a] sm:$0xff]
      %v903 = vld [vmem:[#allocation2 + $0x22] sm:$0xff]
      %v904 = vld [vmem:[#allocation2 + $0x2a] sm:$0xff]
      %v905 = vld [vmem:[#allocation2 + $0x32] sm:$0xff]
      %v906 = vld [vmem:[#allocation2 + $0x3a] sm:$0xff]
      %v907 = vadd.s32 %v558, 1
      %v908 = vadd.s32 %v559, 1
      %v909 = vadd.s32 %v560, 1
      %v910 = vadd.s32 %v561, 1
      %v911 = vadd.s32 %v562, 1
      %v912 = vadd.s32 %v563, 1
      %v913 = vadd.s32 %v564, 1
      %v914 = vadd.s32 %v565, 1
      %vm915 = vcmp.ge.s32.totalorder %v907, 0
      %vm916 = vcmp.ge.s32.totalorder %v908, 0
      %vm917 = vcmp.ge.s32.totalorder %v909, 0
      %vm918 = vcmp.ge.s32.totalorder %v910, 0
      %vm919 = vcmp.ge.s32.totalorder %v911, 0
      %vm920 = vcmp.ge.s32.totalorder %v912, 0
      %vm921 = vcmp.ge.s32.totalorder %v913, 0
      %vm922 = vcmp.ge.s32.totalorder %v914, 0
      %vm923 = vcmp.lt.s32.totalorder %v907, 16
      %vm924 = vcmp.lt.s32.totalorder %v908, 16
      %vm925 = vcmp.lt.s32.totalorder %v909, 16
      %vm926 = vcmp.lt.s32.totalorder %v910, 16
      %vm927 = vcmp.lt.s32.totalorder %v911, 16
      %vm928 = vcmp.lt.s32.totalorder %v912, 16
      %vm929 = vcmp.lt.s32.totalorder %v913, 16
      %vm930 = vcmp.lt.s32.totalorder %v914, 16
      %vm931 = vmand %vm915, %vm923
      %vm932 = vmand %vm916, %vm924
      %vm933 = vmand %vm917, %vm925
      %vm934 = vmand %vm918, %vm926
      %vm935 = vmand %vm919, %vm927
      %vm936 = vmand %vm920, %vm928
      %vm937 = vmand %vm921, %vm929
      %vm938 = vmand %vm922, %vm930
      %v939 = vsel %vm931, 1, 0
      %v940 = vsel %vm932, 1, 0
      %v941 = vsel %vm933, 1, 0
      %v942 = vsel %vm934, 1, 0
      %v943 = vsel %vm935, 1, 0
      %v944 = vsel %vm936, 1, 0
      %v945 = vsel %vm937, 1, 0
      %v946 = vsel %vm938, 1, 0
      %vm947 = vcmp.eq.s32.totalorder %v939, 1
      %vm948 = vcmp.eq.s32.totalorder %v940, 1
      %vm949 = vcmp.eq.s32.totalorder %v941, 1
      %vm950 = vcmp.eq.s32.totalorder %v942, 1
      %vm951 = vcmp.eq.s32.totalorder %v943, 1
      %vm952 = vcmp.eq.s32.totalorder %v944, 1
      %vm953 = vcmp.eq.s32.totalorder %v945, 1
      %vm954 = vcmp.eq.s32.totalorder %v946, 1
      %v955 = vsel %vm947, %v899, 0.0
      %v956 = vsel %vm948, %v900, 0.0
      %v957 = vsel %vm949, %v901, 0.0
      %v958 = vsel %vm950, %v902, 0.0
      %v959 = vsel %vm951, %v903, 0.0
      %v960 = vsel %vm952, %v904, 0.0
      %v961 = vsel %vm953, %v905, 0.0
      %v962 = vsel %vm954, %v906, 0.0
      %s963 = scalar_lea.vmem %s1, 16
      %v964 = vld [vmem:[%s963] sm:$0xff]
      %v966 = vsel %vm455, %v955, 0
      %v969 = vsel %vm455, %v956, 0
      %v972 = vsel %vm455, %v957, 0
      %v975 = vsel %vm455, %v958, 0
      %v978 = vsel %vm455, %v959, 0
      %v981 = vsel %vm455, %v960, 0
      %v984 = vsel %vm455, %v961, 0
      %v987 = vsel %vm455, %v962, 0
      %989 = vmatprep.subr.mxu0 0.0
      %990 = vmatpush1.msra.mxu0 0.0
      %991 = vmatprep.subr.mxu0 0.0
      %992 = vmatpush1.msra.mxu0 0.0
      %993 = vmatprep.subr.mxu0 0.0
      %994 = vmatpush1.msra.mxu0 0.0
      %995 = vmatprep.subr.mxu0 0.0
      %996 = vmatpush1.msra.mxu0 0.0
      %997 = vmatprep.subr.mxu0 0.0
      %998 = vmatpush1.msra.mxu0 0.0
      %999 = vmatprep.subr.mxu0 0.0
      %1000 = vmatpush1.msra.mxu0 0.0
      %1001 = vmatprep.subr.mxu0 0.0
      %1002 = vmatpush1.msra.mxu0 0.0
      %1003 = vmatprep.subr.mxu0 0.0
      %1004 = vmatpush1.msra.mxu0 0.0
      %1005 = vmatprep.subr.mxu0 0.0
      %1006 = vmatpush1.msra.mxu0 0.0
      %1007 = vmatprep.subr.mxu0 0.0
      %1008 = vmatpush1.msra.mxu0 0.0
      %1009 = vmatprep.subr.mxu0 0.0
      %1010 = vmatpush1.msra.mxu0 0.0
      %1011 = vmatprep.subr.mxu0 0.0
      %1012 = vmatpush1.msra.mxu0 0.0
      %1013 = vmatprep.subr.mxu0 0.0
      %1014 = vmatpush1.msra.mxu0 0.0
      %1015 = vmatprep.subr.mxu0 0.0
      %1016 = vmatpush1.msra.mxu0 0.0
      %1017 = vmatprep.subr.mxu0 0.0
      %1018 = vmatpush1.msra.mxu0 0.0
      %1019 = vmatprep.subr.mxu0 0.0
      %1020 = vmatpush1.msra.mxu0 %v964
      %1021 = vmatprep.subr.mxu0 0.0
      %1022 = vmatpush2.msra.mxu0 0.0
      %1023 = vmatprep.subr.mxu0 0.0
      %1024 = vmatpush2.msra.mxu0 0.0
      %1025 = vmatprep.subr.mxu0 0.0
      %1026 = vmatpush2.msra.mxu0 0.0
      %1027 = vmatprep.subr.mxu0 0.0
      %1028 = vmatpush2.msra.mxu0 0.0
      %1029 = vmatprep.subr.mxu0 0.0
      %1030 = vmatpush2.msra.mxu0 0.0
      %1031 = vmatprep.subr.mxu0 0.0
      %1032 = vmatpush2.msra.mxu0 0.0
      %1033 = vmatprep.subr.mxu0 0.0
      %1034 = vmatpush2.msra.mxu0 0.0
      %1035 = vmatprep.subr.mxu0 0.0
      %1036 = vmatpush2.msra.mxu0 0.0
      %1037 = vmatprep.subr.mxu0 0.0
      %1038 = vmatpush2.msra.mxu0 0.0
      %1039 = vmatprep.subr.mxu0 0.0
      %1040 = vmatpush2.msra.mxu0 0.0
      %1041 = vmatprep.subr.mxu0 0.0
      %1042 = vmatpush2.msra.mxu0 0.0
      %1043 = vmatprep.subr.mxu0 0.0
      %1044 = vmatpush2.msra.mxu0 0.0
      %1045 = vmatprep.subr.mxu0 0.0
      %1046 = vmatpush2.msra.mxu0 0.0
      %1047 = vmatprep.subr.mxu0 0.0
      %1048 = vmatpush2.msra.mxu0 0.0
      %1049 = vmatprep.subr.mxu0 0.0
      %1050 = vmatpush2.msra.mxu0 0.0
      %1051 = vmatprep.subr.mxu0 0.0
      %1052 = vmatpush2.msra.mxu0 0.0
      %1053 = vmatprep.mubr.f32.mxu0 0.0
      %1054 = vmatmul.mubr.f32.gmra.mxu0 %v966
      %v1055 = vpop.f32.mrf.mxu0
      %v1056 = vadd.f32 0.0, %v1055
      %v1057 = vpop.f32.mrf.mxu0
      %1058 = vmatprep.mubr.f32.mxu0 0.0
      %1059 = vmatmul.mubr.f32.gmra.mxu0 %v969
      %v1060 = vpop.f32.mrf.mxu0
      %v1061 = vadd.f32 0.0, %v1060
      %v1062 = vpop.f32.mrf.mxu0
      %1063 = vmatprep.mubr.f32.mxu0 0.0
      %1064 = vmatmul.mubr.f32.gmra.mxu0 %v972
      %v1065 = vpop.f32.mrf.mxu0
      %v1066 = vadd.f32 0.0, %v1065
      %v1067 = vpop.f32.mrf.mxu0
      %1068 = vmatprep.mubr.f32.mxu0 0.0
      %1069 = vmatmul.mubr.f32.gmra.mxu0 %v975
      %v1070 = vpop.f32.mrf.mxu0
      %v1071 = vadd.f32 0.0, %v1070
      %v1072 = vpop.f32.mrf.mxu0
      %1073 = vmatprep.mubr.f32.mxu0 0.0
      %1074 = vmatmul.mubr.f32.gmra.mxu0 %v978
      %v1075 = vpop.f32.mrf.mxu0
      %v1076 = vadd.f32 0.0, %v1075
      %v1077 = vpop.f32.mrf.mxu0
      %1078 = vmatprep.mubr.f32.mxu0 0.0
      %1079 = vmatmul.mubr.f32.gmra.mxu0 %v981
      %v1080 = vpop.f32.mrf.mxu0
      %v1081 = vadd.f32 0.0, %v1080
      %v1082 = vpop.f32.mrf.mxu0
      %1083 = vmatprep.mubr.f32.mxu0 0.0
      %1084 = vmatmul.mubr.f32.gmra.mxu0 %v984
      %v1085 = vpop.f32.mrf.mxu0
      %v1086 = vadd.f32 0.0, %v1085
      %v1087 = vpop.f32.mrf.mxu0
      %1088 = vmatprep.mubr.f32.mxu0 0.0
      %1089 = vmatmul.mubr.f32.gmra.mxu0 %v987
      %v1090 = vpop.f32.mrf.mxu0
      %v1091 = vadd.f32 0.0, %v1090
      %v1092 = vpop.f32.mrf.mxu0
      %1093 = vdwg.mxu0
      %v1094 = vadd.f32 %v861, %v1056
      %v1095 = vadd.f32 %v866, %v1061
      %v1096 = vadd.f32 %v871, %v1066
      %v1097 = vadd.f32 %v876, %v1071
      %v1098 = vadd.f32 %v881, %v1076
      %v1099 = vadd.f32 %v886, %v1081
      %v1100 = vadd.f32 %v891, %v1086
      %v1101 = vadd.f32 %v896, %v1091
      %v1102 = vld [vmem:[#allocation2 + $0x10] sm:$0xff]
      %v1103 = vld [vmem:[#allocation2 + $0x18] sm:$0xff]
      %v1104 = vld [vmem:[#allocation2 + $0x20] sm:$0xff]
      %v1105 = vld [vmem:[#allocation2 + $0x28] sm:$0xff]
      %v1106 = vld [vmem:[#allocation2 + $0x30] sm:$0xff]
      %v1107 = vld [vmem:[#allocation2 + $0x38] sm:$0xff]
      %v1108 = vld [vmem:[#allocation2 + $0x40] sm:$0xff]
      %v1109 = vld [vmem:[#allocation2 + $0x48] sm:$0xff]
      %v1110 = vsel %vm614, %v1102, 0.0
      %v1111 = vsel %vm615, %v1103, 0.0
      %v1112 = vsel %vm616, %v1104, 0.0
      %v1113 = vsel %vm617, %v1105, 0.0
      %v1114 = vsel %vm618, %v1106, 0.0
      %v1115 = vsel %vm619, %v1107, 0.0
      %v1116 = vsel %vm620, %v1108, 0.0
      %v1117 = vsel %vm621, %v1109, 0.0
      %s1118 = scalar_lea.vmem %s1, 24
      %v1119 = vld [vmem:[%s1118] sm:$0xff]
      %v1121 = vsel %vm455, %v1110, 0
      %v1124 = vsel %vm455, %v1111, 0
      %v1127 = vsel %vm455, %v1112, 0
      %v1130 = vsel %vm455, %v1113, 0
      %v1133 = vsel %vm455, %v1114, 0
      %v1136 = vsel %vm455, %v1115, 0
      %v1139 = vsel %vm455, %v1116, 0
      %v1142 = vsel %vm455, %v1117, 0
      %1144 = vmatprep.subr.mxu0 0.0
      %1145 = vmatpush1.msra.mxu0 0.0
      %1146 = vmatprep.subr.mxu0 0.0
      %1147 = vmatpush1.msra.mxu0 0.0
      %1148 = vmatprep.subr.mxu0 0.0
      %1149 = vmatpush1.msra.mxu0 0.0
      %1150 = vmatprep.subr.mxu0 0.0
      %1151 = vmatpush1.msra.mxu0 0.0
      %1152 = vmatprep.subr.mxu0 0.0
      %1153 = vmatpush1.msra.mxu0 0.0
      %1154 = vmatprep.subr.mxu0 0.0
      %1155 = vmatpush1.msra.mxu0 0.0
      %1156 = vmatprep.subr.mxu0 0.0
      %1157 = vmatpush1.msra.mxu0 0.0
      %1158 = vmatprep.subr.mxu0 0.0
      %1159 = vmatpush1.msra.mxu0 0.0
      %1160 = vmatprep.subr.mxu0 0.0
      %1161 = vmatpush1.msra.mxu0 0.0
      %1162 = vmatprep.subr.mxu0 0.0
      %1163 = vmatpush1.msra.mxu0 0.0
      %1164 = vmatprep.subr.mxu0 0.0
      %1165 = vmatpush1.msra.mxu0 0.0
      %1166 = vmatprep.subr.mxu0 0.0
      %1167 = vmatpush1.msra.mxu0 0.0
      %1168 = vmatprep.subr.mxu0 0.0
      %1169 = vmatpush1.msra.mxu0 0.0
      %1170 = vmatprep.subr.mxu0 0.0
      %1171 = vmatpush1.msra.mxu0 0.0
      %1172 = vmatprep.subr.mxu0 0.0
      %1173 = vmatpush1.msra.mxu0 0.0
      %1174 = vmatprep.subr.mxu0 0.0
      %1175 = vmatpush1.msra.mxu0 %v1119
      %1176 = vmatprep.subr.mxu0 0.0
      %1177 = vmatpush2.msra.mxu0 0.0
      %1178 = vmatprep.subr.mxu0 0.0
      %1179 = vmatpush2.msra.mxu0 0.0
      %1180 = vmatprep.subr.mxu0 0.0
      %1181 = vmatpush2.msra.mxu0 0.0
      %1182 = vmatprep.subr.mxu0 0.0
      %1183 = vmatpush2.msra.mxu0 0.0
      %1184 = vmatprep.subr.mxu0 0.0
      %1185 = vmatpush2.msra.mxu0 0.0
      %1186 = vmatprep.subr.mxu0 0.0
      %1187 = vmatpush2.msra.mxu0 0.0
      %1188 = vmatprep.subr.mxu0 0.0
      %1189 = vmatpush2.msra.mxu0 0.0
      %1190 = vmatprep.subr.mxu0 0.0
      %1191 = vmatpush2.msra.mxu0 0.0
      %1192 = vmatprep.subr.mxu0 0.0
      %1193 = vmatpush2.msra.mxu0 0.0
      %1194 = vmatprep.subr.mxu0 0.0
      %1195 = vmatpush2.msra.mxu0 0.0
      %1196 = vmatprep.subr.mxu0 0.0
      %1197 = vmatpush2.msra.mxu0 0.0
      %1198 = vmatprep.subr.mxu0 0.0
      %1199 = vmatpush2.msra.mxu0 0.0
      %1200 = vmatprep.subr.mxu0 0.0
      %1201 = vmatpush2.msra.mxu0 0.0
      %1202 = vmatprep.subr.mxu0 0.0
      %1203 = vmatpush2.msra.mxu0 0.0
      %1204 = vmatprep.subr.mxu0 0.0
      %1205 = vmatpush2.msra.mxu0 0.0
      %1206 = vmatprep.subr.mxu0 0.0
      %1207 = vmatpush2.msra.mxu0 0.0
      %1208 = vmatprep.mubr.f32.mxu0 0.0
      %1209 = vmatmul.mubr.f32.gmra.mxu0 %v1121
      %v1210 = vpop.f32.mrf.mxu0
      %v1211 = vadd.f32 0.0, %v1210
      %v1212 = vpop.f32.mrf.mxu0
      %1213 = vmatprep.mubr.f32.mxu0 0.0
      %1214 = vmatmul.mubr.f32.gmra.mxu0 %v1124
      %v1215 = vpop.f32.mrf.mxu0
      %v1216 = vadd.f32 0.0, %v1215
      %v1217 = vpop.f32.mrf.mxu0
      %1218 = vmatprep.mubr.f32.mxu0 0.0
      %1219 = vmatmul.mubr.f32.gmra.mxu0 %v1127
      %v1220 = vpop.f32.mrf.mxu0
      %v1221 = vadd.f32 0.0, %v1220
      %v1222 = vpop.f32.mrf.mxu0
      %1223 = vmatprep.mubr.f32.mxu0 0.0
      %1224 = vmatmul.mubr.f32.gmra.mxu0 %v1130
      %v1225 = vpop.f32.mrf.mxu0
      %v1226 = vadd.f32 0.0, %v1225
      %v1227 = vpop.f32.mrf.mxu0
      %1228 = vmatprep.mubr.f32.mxu0 0.0
      %1229 = vmatmul.mubr.f32.gmra.mxu0 %v1133
      %v1230 = vpop.f32.mrf.mxu0
      %v1231 = vadd.f32 0.0, %v1230
      %v1232 = vpop.f32.mrf.mxu0
      %1233 = vmatprep.mubr.f32.mxu0 0.0
      %1234 = vmatmul.mubr.f32.gmra.mxu0 %v1136
      %v1235 = vpop.f32.mrf.mxu0
      %v1236 = vadd.f32 0.0, %v1235
      %v1237 = vpop.f32.mrf.mxu0
      %1238 = vmatprep.mubr.f32.mxu0 0.0
      %1239 = vmatmul.mubr.f32.gmra.mxu0 %v1139
      %v1240 = vpop.f32.mrf.mxu0
      %v1241 = vadd.f32 0.0, %v1240
      %v1242 = vpop.f32.mrf.mxu0
      %1243 = vmatprep.mubr.f32.mxu0 0.0
      %1244 = vmatmul.mubr.f32.gmra.mxu0 %v1142
      %v1245 = vpop.f32.mrf.mxu0
      %v1246 = vadd.f32 0.0, %v1245
      %v1247 = vpop.f32.mrf.mxu0
      %1248 = vdwg.mxu0
      %v1249 = vadd.f32 %v1094, %v1211
      %v1250 = vadd.f32 %v1095, %v1216
      %v1251 = vadd.f32 %v1096, %v1221
      %v1252 = vadd.f32 %v1097, %v1226
      %v1253 = vadd.f32 %v1098, %v1231
      %v1254 = vadd.f32 %v1099, %v1236
      %v1255 = vadd.f32 %v1100, %v1241
      %v1256 = vadd.f32 %v1101, %v1246
      %v1257 = vld [vmem:[#allocation2 + $0x11] sm:$0xff]
      %v1258 = vld [vmem:[#allocation2 + $0x19] sm:$0xff]
      %v1259 = vld [vmem:[#allocation2 + $0x21] sm:$0xff]
      %v1260 = vld [vmem:[#allocation2 + $0x29] sm:$0xff]
      %v1261 = vld [vmem:[#allocation2 + $0x31] sm:$0xff]
      %v1262 = vld [vmem:[#allocation2 + $0x39] sm:$0xff]
      %v1263 = vld [vmem:[#allocation2 + $0x41] sm:$0xff]
      %v1264 = vld [vmem:[#allocation2 + $0x49] sm:$0xff]
      %s1265 = scalar_lea.vmem %s1, 32
      %v1266 = vld [vmem:[%s1265] sm:$0xff]
      %v1268 = vsel %vm455, %v1257, 0
      %v1271 = vsel %vm455, %v1258, 0
      %v1274 = vsel %vm455, %v1259, 0
      %v1277 = vsel %vm455, %v1260, 0
      %v1280 = vsel %vm455, %v1261, 0
      %v1283 = vsel %vm455, %v1262, 0
      %v1286 = vsel %vm455, %v1263, 0
      %v1289 = vsel %vm455, %v1264, 0
      %1291 = vmatprep.subr.mxu0 0.0
      %1292 = vmatpush1.msra.mxu0 0.0
      %1293 = vmatprep.subr.mxu0 0.0
      %1294 = vmatpush1.msra.mxu0 0.0
      %1295 = vmatprep.subr.mxu0 0.0
      %1296 = vmatpush1.msra.mxu0 0.0
      %1297 = vmatprep.subr.mxu0 0.0
      %1298 = vmatpush1.msra.mxu0 0.0
      %1299 = vmatprep.subr.mxu0 0.0
      %1300 = vmatpush1.msra.mxu0 0.0
      %1301 = vmatprep.subr.mxu0 0.0
      %1302 = vmatpush1.msra.mxu0 0.0
      %1303 = vmatprep.subr.mxu0 0.0
      %1304 = vmatpush1.msra.mxu0 0.0
      %1305 = vmatprep.subr.mxu0 0.0
      %1306 = vmatpush1.msra.mxu0 0.0
      %1307 = vmatprep.subr.mxu0 0.0
      %1308 = vmatpush1.msra.mxu0 0.0
      %1309 = vmatprep.subr.mxu0 0.0
      %1310 = vmatpush1.msra.mxu0 0.0
      %1311 = vmatprep.subr.mxu0 0.0
      %1312 = vmatpush1.msra.mxu0 0.0
      %1313 = vmatprep.subr.mxu0 0.0
      %1314 = vmatpush1.msra.mxu0 0.0
      %1315 = vmatprep.subr.mxu0 0.0
      %1316 = vmatpush1.msra.mxu0 0.0
      %1317 = vmatprep.subr.mxu0 0.0
      %1318 = vmatpush1.msra.mxu0 0.0
      %1319 = vmatprep.subr.mxu0 0.0
      %1320 = vmatpush1.msra.mxu0 0.0
      %1321 = vmatprep.subr.mxu0 0.0
      %1322 = vmatpush1.msra.mxu0 %v1266
      %1323 = vmatprep.subr.mxu0 0.0
      %1324 = vmatpush2.msra.mxu0 0.0
      %1325 = vmatprep.subr.mxu0 0.0
      %1326 = vmatpush2.msra.mxu0 0.0
      %1327 = vmatprep.subr.mxu0 0.0
      %1328 = vmatpush2.msra.mxu0 0.0
      %1329 = vmatprep.subr.mxu0 0.0
      %1330 = vmatpush2.msra.mxu0 0.0
      %1331 = vmatprep.subr.mxu0 0.0
      %1332 = vmatpush2.msra.mxu0 0.0
      %1333 = vmatprep.subr.mxu0 0.0
      %1334 = vmatpush2.msra.mxu0 0.0
      %1335 = vmatprep.subr.mxu0 0.0
      %1336 = vmatpush2.msra.mxu0 0.0
      %1337 = vmatprep.subr.mxu0 0.0
      %1338 = vmatpush2.msra.mxu0 0.0
      %1339 = vmatprep.subr.mxu0 0.0
      %1340 = vmatpush2.msra.mxu0 0.0
      %1341 = vmatprep.subr.mxu0 0.0
      %1342 = vmatpush2.msra.mxu0 0.0
      %1343 = vmatprep.subr.mxu0 0.0
      %1344 = vmatpush2.msra.mxu0 0.0
      %1345 = vmatprep.subr.mxu0 0.0
      %1346 = vmatpush2.msra.mxu0 0.0
      %1347 = vmatprep.subr.mxu0 0.0
      %1348 = vmatpush2.msra.mxu0 0.0
      %1349 = vmatprep.subr.mxu0 0.0
      %1350 = vmatpush2.msra.mxu0 0.0
      %1351 = vmatprep.subr.mxu0 0.0
      %1352 = vmatpush2.msra.mxu0 0.0
      %1353 = vmatprep.subr.mxu0 0.0
      %1354 = vmatpush2.msra.mxu0 0.0
      %1355 = vmatprep.mubr.f32.mxu0 0.0
      %1356 = vmatmul.mubr.f32.gmra.mxu0 %v1268
      %v1357 = vpop.f32.mrf.mxu0
      %v1358 = vadd.f32 0.0, %v1357
      %v1359 = vpop.f32.mrf.mxu0
      %1360 = vmatprep.mubr.f32.mxu0 0.0
      %1361 = vmatmul.mubr.f32.gmra.mxu0 %v1271
      %v1362 = vpop.f32.mrf.mxu0
      %v1363 = vadd.f32 0.0, %v1362
      %v1364 = vpop.f32.mrf.mxu0
      %1365 = vmatprep.mubr.f32.mxu0 0.0
      %1366 = vmatmul.mubr.f32.gmra.mxu0 %v1274
      %v1367 = vpop.f32.mrf.mxu0
      %v1368 = vadd.f32 0.0, %v1367
      %v1369 = vpop.f32.mrf.mxu0
      %1370 = vmatprep.mubr.f32.mxu0 0.0
      %1371 = vmatmul.mubr.f32.gmra.mxu0 %v1277
      %v1372 = vpop.f32.mrf.mxu0
      %v1373 = vadd.f32 0.0, %v1372
      %v1374 = vpop.f32.mrf.mxu0
      %1375 = vmatprep.mubr.f32.mxu0 0.0
      %1376 = vmatmul.mubr.f32.gmra.mxu0 %v1280
      %v1377 = vpop.f32.mrf.mxu0
      %v1378 = vadd.f32 0.0, %v1377
      %v1379 = vpop.f32.mrf.mxu0
      %1380 = vmatprep.mubr.f32.mxu0 0.0
      %1381 = vmatmul.mubr.f32.gmra.mxu0 %v1283
      %v1382 = vpop.f32.mrf.mxu0
      %v1383 = vadd.f32 0.0, %v1382
      %v1384 = vpop.f32.mrf.mxu0
      %1385 = vmatprep.mubr.f32.mxu0 0.0
      %1386 = vmatmul.mubr.f32.gmra.mxu0 %v1286
      %v1387 = vpop.f32.mrf.mxu0
      %v1388 = vadd.f32 0.0, %v1387
      %v1389 = vpop.f32.mrf.mxu0
      %1390 = vmatprep.mubr.f32.mxu0 0.0
      %1391 = vmatmul.mubr.f32.gmra.mxu0 %v1289
      %v1392 = vpop.f32.mrf.mxu0
      %v1393 = vadd.f32 0.0, %v1392
      %v1394 = vpop.f32.mrf.mxu0
      %1395 = vdwg.mxu0
      %v1396 = vadd.f32 %v1249, %v1358
      %v1397 = vadd.f32 %v1250, %v1363
      %v1398 = vadd.f32 %v1251, %v1368
      %v1399 = vadd.f32 %v1252, %v1373
      %v1400 = vadd.f32 %v1253, %v1378
      %v1401 = vadd.f32 %v1254, %v1383
      %v1402 = vadd.f32 %v1255, %v1388
      %v1403 = vadd.f32 %v1256, %v1393
      %v1404 = vld [vmem:[#allocation2 + $0x12] sm:$0xff]
      %v1405 = vld [vmem:[#allocation2 + $0x1a] sm:$0xff]
      %v1406 = vld [vmem:[#allocation2 + $0x22] sm:$0xff]
      %v1407 = vld [vmem:[#allocation2 + $0x2a] sm:$0xff]
      %v1408 = vld [vmem:[#allocation2 + $0x32] sm:$0xff]
      %v1409 = vld [vmem:[#allocation2 + $0x3a] sm:$0xff]
      %v1410 = vld [vmem:[#allocation2 + $0x42] sm:$0xff]
      %v1411 = vld [vmem:[#allocation2 + $0x4a] sm:$0xff]
      %v1412 = vsel %vm947, %v1404, 0.0
      %v1413 = vsel %vm948, %v1405, 0.0
      %v1414 = vsel %vm949, %v1406, 0.0
      %v1415 = vsel %vm950, %v1407, 0.0
      %v1416 = vsel %vm951, %v1408, 0.0
      %v1417 = vsel %vm952, %v1409, 0.0
      %v1418 = vsel %vm953, %v1410, 0.0
      %v1419 = vsel %vm954, %v1411, 0.0
      %s1420 = scalar_lea.vmem %s1, 40
      %v1421 = vld [vmem:[%s1420] sm:$0xff]
      %v1423 = vsel %vm455, %v1412, 0
      %v1426 = vsel %vm455, %v1413, 0
      %v1429 = vsel %vm455, %v1414, 0
      %v1432 = vsel %vm455, %v1415, 0
      %v1435 = vsel %vm455, %v1416, 0
      %v1438 = vsel %vm455, %v1417, 0
      %v1441 = vsel %vm455, %v1418, 0
      %v1444 = vsel %vm455, %v1419, 0
      %1446 = vmatprep.subr.mxu0 0.0
      %1447 = vmatpush1.msra.mxu0 0.0
      %1448 = vmatprep.subr.mxu0 0.0
      %1449 = vmatpush1.msra.mxu0 0.0
      %1450 = vmatprep.subr.mxu0 0.0
      %1451 = vmatpush1.msra.mxu0 0.0
      %1452 = vmatprep.subr.mxu0 0.0
      %1453 = vmatpush1.msra.mxu0 0.0
      %1454 = vmatprep.subr.mxu0 0.0
      %1455 = vmatpush1.msra.mxu0 0.0
      %1456 = vmatprep.subr.mxu0 0.0
      %1457 = vmatpush1.msra.mxu0 0.0
      %1458 = vmatprep.subr.mxu0 0.0
      %1459 = vmatpush1.msra.mxu0 0.0
      %1460 = vmatprep.subr.mxu0 0.0
      %1461 = vmatpush1.msra.mxu0 0.0
      %1462 = vmatprep.subr.mxu0 0.0
      %1463 = vmatpush1.msra.mxu0 0.0
      %1464 = vmatprep.subr.mxu0 0.0
      %1465 = vmatpush1.msra.mxu0 0.0
      %1466 = vmatprep.subr.mxu0 0.0
      %1467 = vmatpush1.msra.mxu0 0.0
      %1468 = vmatprep.subr.mxu0 0.0
      %1469 = vmatpush1.msra.mxu0 0.0
      %1470 = vmatprep.subr.mxu0 0.0
      %1471 = vmatpush1.msra.mxu0 0.0
      %1472 = vmatprep.subr.mxu0 0.0
      %1473 = vmatpush1.msra.mxu0 0.0
      %1474 = vmatprep.subr.mxu0 0.0
      %1475 = vmatpush1.msra.mxu0 0.0
      %1476 = vmatprep.subr.mxu0 0.0
      %1477 = vmatpush1.msra.mxu0 %v1421
      %1478 = vmatprep.subr.mxu0 0.0
      %1479 = vmatpush2.msra.mxu0 0.0
      %1480 = vmatprep.subr.mxu0 0.0
      %1481 = vmatpush2.msra.mxu0 0.0
      %1482 = vmatprep.subr.mxu0 0.0
      %1483 = vmatpush2.msra.mxu0 0.0
      %1484 = vmatprep.subr.mxu0 0.0
      %1485 = vmatpush2.msra.mxu0 0.0
      %1486 = vmatprep.subr.mxu0 0.0
      %1487 = vmatpush2.msra.mxu0 0.0
      %1488 = vmatprep.subr.mxu0 0.0
      %1489 = vmatpush2.msra.mxu0 0.0
      %1490 = vmatprep.subr.mxu0 0.0
      %1491 = vmatpush2.msra.mxu0 0.0
      %1492 = vmatprep.subr.mxu0 0.0
      %1493 = vmatpush2.msra.mxu0 0.0
      %1494 = vmatprep.subr.mxu0 0.0
      %1495 = vmatpush2.msra.mxu0 0.0
      %1496 = vmatprep.subr.mxu0 0.0
      %1497 = vmatpush2.msra.mxu0 0.0
      %1498 = vmatprep.subr.mxu0 0.0
      %1499 = vmatpush2.msra.mxu0 0.0
      %1500 = vmatprep.subr.mxu0 0.0
      %1501 = vmatpush2.msra.mxu0 0.0
      %1502 = vmatprep.subr.mxu0 0.0
      %1503 = vmatpush2.msra.mxu0 0.0
      %1504 = vmatprep.subr.mxu0 0.0
      %1505 = vmatpush2.msra.mxu0 0.0
      %1506 = vmatprep.subr.mxu0 0.0
      %1507 = vmatpush2.msra.mxu0 0.0
      %1508 = vmatprep.subr.mxu0 0.0
      %1509 = vmatpush2.msra.mxu0 0.0
      %1510 = vmatprep.mubr.f32.mxu0 0.0
      %1511 = vmatmul.mubr.f32.gmra.mxu0 %v1423
      %v1512 = vpop.f32.mrf.mxu0
      %v1513 = vadd.f32 0.0, %v1512
      %v1514 = vpop.f32.mrf.mxu0
      %1515 = vmatprep.mubr.f32.mxu0 0.0
      %1516 = vmatmul.mubr.f32.gmra.mxu0 %v1426
      %v1517 = vpop.f32.mrf.mxu0
      %v1518 = vadd.f32 0.0, %v1517
      %v1519 = vpop.f32.mrf.mxu0
      %1520 = vmatprep.mubr.f32.mxu0 0.0
      %1521 = vmatmul.mubr.f32.gmra.mxu0 %v1429
      %v1522 = vpop.f32.mrf.mxu0
      %v1523 = vadd.f32 0.0, %v1522
      %v1524 = vpop.f32.mrf.mxu0
      %1525 = vmatprep.mubr.f32.mxu0 0.0
      %1526 = vmatmul.mubr.f32.gmra.mxu0 %v1432
      %v1527 = vpop.f32.mrf.mxu0
      %v1528 = vadd.f32 0.0, %v1527
      %v1529 = vpop.f32.mrf.mxu0
      %1530 = vmatprep.mubr.f32.mxu0 0.0
      %1531 = vmatmul.mubr.f32.gmra.mxu0 %v1435
      %v1532 = vpop.f32.mrf.mxu0
      %v1533 = vadd.f32 0.0, %v1532
      %v1534 = vpop.f32.mrf.mxu0
      %1535 = vmatprep.mubr.f32.mxu0 0.0
      %1536 = vmatmul.mubr.f32.gmra.mxu0 %v1438
      %v1537 = vpop.f32.mrf.mxu0
      %v1538 = vadd.f32 0.0, %v1537
      %v1539 = vpop.f32.mrf.mxu0
      %1540 = vmatprep.mubr.f32.mxu0 0.0
      %1541 = vmatmul.mubr.f32.gmra.mxu0 %v1441
      %v1542 = vpop.f32.mrf.mxu0
      %v1543 = vadd.f32 0.0, %v1542
      %v1544 = vpop.f32.mrf.mxu0
      %1545 = vmatprep.mubr.f32.mxu0 0.0
      %1546 = vmatmul.mubr.f32.gmra.mxu0 %v1444
      %v1547 = vpop.f32.mrf.mxu0
      %v1548 = vadd.f32 0.0, %v1547
      %v1549 = vpop.f32.mrf.mxu0
      %1550 = vdwg.mxu0
      %v1551 = vadd.f32 %v1396, %v1513
      %v1552 = vadd.f32 %v1397, %v1518
      %v1553 = vadd.f32 %v1398, %v1523
      %v1554 = vadd.f32 %v1399, %v1528
      %v1555 = vadd.f32 %v1400, %v1533
      %v1556 = vadd.f32 %v1401, %v1538
      %v1557 = vadd.f32 %v1402, %v1543
      %v1558 = vadd.f32 %v1403, %v1548
      %v1559 = vld [vmem:[#allocation2 + $0x20] sm:$0xff]
      %v1560 = vld [vmem:[#allocation2 + $0x28] sm:$0xff]
      %v1561 = vld [vmem:[#allocation2 + $0x30] sm:$0xff]
      %v1562 = vld [vmem:[#allocation2 + $0x38] sm:$0xff]
      %v1563 = vld [vmem:[#allocation2 + $0x40] sm:$0xff]
      %v1564 = vld [vmem:[#allocation2 + $0x48] sm:$0xff]
      %v1565 = vld [vmem:[#allocation2 + $0x50] sm:$0xff]
      %v1566 = vld [vmem:[#allocation2 + $0x58] sm:$0xff]
      %v1567 = vsel %vm614, %v1559, 0.0
      %v1568 = vsel %vm615, %v1560, 0.0
      %v1569 = vsel %vm616, %v1561, 0.0
      %v1570 = vsel %vm617, %v1562, 0.0
      %v1571 = vsel %vm618, %v1563, 0.0
      %v1572 = vsel %vm619, %v1564, 0.0
      %v1573 = vsel %vm620, %v1565, 0.0
      %v1574 = vsel %vm621, %v1566, 0.0
      %s1575 = scalar_lea.vmem %s1, 48
      %v1576 = vld [vmem:[%s1575] sm:$0xff]
      %v1578 = vsel %vm455, %v1567, 0
      %v1581 = vsel %vm455, %v1568, 0
      %v1584 = vsel %vm455, %v1569, 0
      %v1587 = vsel %vm455, %v1570, 0
      %v1590 = vsel %vm455, %v1571, 0
      %v1593 = vsel %vm455, %v1572, 0
      %v1596 = vsel %vm455, %v1573, 0
      %v1599 = vsel %vm455, %v1574, 0
      %1601 = vmatprep.subr.mxu0 0.0
      %1602 = vmatpush1.msra.mxu0 0.0
      %1603 = vmatprep.subr.mxu0 0.0
      %1604 = vmatpush1.msra.mxu0 0.0
      %1605 = vmatprep.subr.mxu0 0.0
      %1606 = vmatpush1.msra.mxu0 0.0
      %1607 = vmatprep.subr.mxu0 0.0
      %1608 = vmatpush1.msra.mxu0 0.0
      %1609 = vmatprep.subr.mxu0 0.0
      %1610 = vmatpush1.msra.mxu0 0.0
      %1611 = vmatprep.subr.mxu0 0.0
      %1612 = vmatpush1.msra.mxu0 0.0
      %1613 = vmatprep.subr.mxu0 0.0
      %1614 = vmatpush1.msra.mxu0 0.0
      %1615 = vmatprep.subr.mxu0 0.0
      %1616 = vmatpush1.msra.mxu0 0.0
      %1617 = vmatprep.subr.mxu0 0.0
      %1618 = vmatpush1.msra.mxu0 0.0
      %1619 = vmatprep.subr.mxu0 0.0
      %1620 = vmatpush1.msra.mxu0 0.0
      %1621 = vmatprep.subr.mxu0 0.0
      %1622 = vmatpush1.msra.mxu0 0.0
      %1623 = vmatprep.subr.mxu0 0.0
      %1624 = vmatpush1.msra.mxu0 0.0
      %1625 = vmatprep.subr.mxu0 0.0
      %1626 = vmatpush1.msra.mxu0 0.0
      %1627 = vmatprep.subr.mxu0 0.0
      %1628 = vmatpush1.msra.mxu0 0.0
      %1629 = vmatprep.subr.mxu0 0.0
      %1630 = vmatpush1.msra.mxu0 0.0
      %1631 = vmatprep.subr.mxu0 0.0
      %1632 = vmatpush1.msra.mxu0 %v1576
      %1633 = vmatprep.subr.mxu0 0.0
      %1634 = vmatpush2.msra.mxu0 0.0
      %1635 = vmatprep.subr.mxu0 0.0
      %1636 = vmatpush2.msra.mxu0 0.0
      %1637 = vmatprep.subr.mxu0 0.0
      %1638 = vmatpush2.msra.mxu0 0.0
      %1639 = vmatprep.subr.mxu0 0.0
      %1640 = vmatpush2.msra.mxu0 0.0
      %1641 = vmatprep.subr.mxu0 0.0
      %1642 = vmatpush2.msra.mxu0 0.0
      %1643 = vmatprep.subr.mxu0 0.0
      %1644 = vmatpush2.msra.mxu0 0.0
      %1645 = vmatprep.subr.mxu0 0.0
      %1646 = vmatpush2.msra.mxu0 0.0
      %1647 = vmatprep.subr.mxu0 0.0
      %1648 = vmatpush2.msra.mxu0 0.0
      %1649 = vmatprep.subr.mxu0 0.0
      %1650 = vmatpush2.msra.mxu0 0.0
      %1651 = vmatprep.subr.mxu0 0.0
      %1652 = vmatpush2.msra.mxu0 0.0
      %1653 = vmatprep.subr.mxu0 0.0
      %1654 = vmatpush2.msra.mxu0 0.0
      %1655 = vmatprep.subr.mxu0 0.0
      %1656 = vmatpush2.msra.mxu0 0.0
      %1657 = vmatprep.subr.mxu0 0.0
      %1658 = vmatpush2.msra.mxu0 0.0
      %1659 = vmatprep.subr.mxu0 0.0
      %1660 = vmatpush2.msra.mxu0 0.0
      %1661 = vmatprep.subr.mxu0 0.0
      %1662 = vmatpush2.msra.mxu0 0.0
      %1663 = vmatprep.subr.mxu0 0.0
      %1664 = vmatpush2.msra.mxu0 0.0
      %1665 = vmatprep.mubr.f32.mxu0 0.0
      %1666 = vmatmul.mubr.f32.gmra.mxu0 %v1578
      %v1667 = vpop.f32.mrf.mxu0
      %v1668 = vadd.f32 0.0, %v1667
      %v1669 = vpop.f32.mrf.mxu0
      %1670 = vmatprep.mubr.f32.mxu0 0.0
      %1671 = vmatmul.mubr.f32.gmra.mxu0 %v1581
      %v1672 = vpop.f32.mrf.mxu0
      %v1673 = vadd.f32 0.0, %v1672
      %v1674 = vpop.f32.mrf.mxu0
      %1675 = vmatprep.mubr.f32.mxu0 0.0
      %1676 = vmatmul.mubr.f32.gmra.mxu0 %v1584
      %v1677 = vpop.f32.mrf.mxu0
      %v1678 = vadd.f32 0.0, %v1677
      %v1679 = vpop.f32.mrf.mxu0
      %1680 = vmatprep.mubr.f32.mxu0 0.0
      %1681 = vmatmul.mubr.f32.gmra.mxu0 %v1587
      %v1682 = vpop.f32.mrf.mxu0
      %v1683 = vadd.f32 0.0, %v1682
      %v1684 = vpop.f32.mrf.mxu0
      %1685 = vmatprep.mubr.f32.mxu0 0.0
      %1686 = vmatmul.mubr.f32.gmra.mxu0 %v1590
      %v1687 = vpop.f32.mrf.mxu0
      %v1688 = vadd.f32 0.0, %v1687
      %v1689 = vpop.f32.mrf.mxu0
      %1690 = vmatprep.mubr.f32.mxu0 0.0
      %1691 = vmatmul.mubr.f32.gmra.mxu0 %v1593
      %v1692 = vpop.f32.mrf.mxu0
      %v1693 = vadd.f32 0.0, %v1692
      %v1694 = vpop.f32.mrf.mxu0
      %1695 = vmatprep.mubr.f32.mxu0 0.0
      %1696 = vmatmul.mubr.f32.gmra.mxu0 %v1596
      %v1697 = vpop.f32.mrf.mxu0
      %v1698 = vadd.f32 0.0, %v1697
      %v1699 = vpop.f32.mrf.mxu0
      %1700 = vmatprep.mubr.f32.mxu0 0.0
      %1701 = vmatmul.mubr.f32.gmra.mxu0 %v1599
      %v1702 = vpop.f32.mrf.mxu0
      %v1703 = vadd.f32 0.0, %v1702
      %v1704 = vpop.f32.mrf.mxu0
      %1705 = vdwg.mxu0
      %v1706 = vadd.f32 %v1551, %v1668
      %v1707 = vadd.f32 %v1552, %v1673
      %v1708 = vadd.f32 %v1553, %v1678
      %v1709 = vadd.f32 %v1554, %v1683
      %v1710 = vadd.f32 %v1555, %v1688
      %v1711 = vadd.f32 %v1556, %v1693
      %v1712 = vadd.f32 %v1557, %v1698
      %v1713 = vadd.f32 %v1558, %v1703
      %v1714 = vld [vmem:[#allocation2 + $0x21] sm:$0xff]
      %v1715 = vld [vmem:[#allocation2 + $0x29] sm:$0xff]
      %v1716 = vld [vmem:[#allocation2 + $0x31] sm:$0xff]
      %v1717 = vld [vmem:[#allocation2 + $0x39] sm:$0xff]
      %v1718 = vld [vmem:[#allocation2 + $0x41] sm:$0xff]
      %v1719 = vld [vmem:[#allocation2 + $0x49] sm:$0xff]
      %v1720 = vld [vmem:[#allocation2 + $0x51] sm:$0xff]
      %v1721 = vld [vmem:[#allocation2 + $0x59] sm:$0xff]
      %s1722 = scalar_lea.vmem %s1, 56
      %v1723 = vld [vmem:[%s1722] sm:$0xff]
      %v1725 = vsel %vm455, %v1714, 0
      %v1728 = vsel %vm455, %v1715, 0
      %v1731 = vsel %vm455, %v1716, 0
      %v1734 = vsel %vm455, %v1717, 0
      %v1737 = vsel %vm455, %v1718, 0
      %v1740 = vsel %vm455, %v1719, 0
      %v1743 = vsel %vm455, %v1720, 0
      %v1746 = vsel %vm455, %v1721, 0
      %1748 = vmatprep.subr.mxu0 0.0
      %1749 = vmatpush1.msra.mxu0 0.0
      %1750 = vmatprep.subr.mxu0 0.0
      %1751 = vmatpush1.msra.mxu0 0.0
      %1752 = vmatprep.subr.mxu0 0.0
      %1753 = vmatpush1.msra.mxu0 0.0
      %1754 = vmatprep.subr.mxu0 0.0
      %1755 = vmatpush1.msra.mxu0 0.0
      %1756 = vmatprep.subr.mxu0 0.0
      %1757 = vmatpush1.msra.mxu0 0.0
      %1758 = vmatprep.subr.mxu0 0.0
      %1759 = vmatpush1.msra.mxu0 0.0
      %1760 = vmatprep.subr.mxu0 0.0
      %1761 = vmatpush1.msra.mxu0 0.0
      %1762 = vmatprep.subr.mxu0 0.0
      %1763 = vmatpush1.msra.mxu0 0.0
      %1764 = vmatprep.subr.mxu0 0.0
      %1765 = vmatpush1.msra.mxu0 0.0
      %1766 = vmatprep.subr.mxu0 0.0
      %1767 = vmatpush1.msra.mxu0 0.0
      %1768 = vmatprep.subr.mxu0 0.0
      %1769 = vmatpush1.msra.mxu0 0.0
      %1770 = vmatprep.subr.mxu0 0.0
      %1771 = vmatpush1.msra.mxu0 0.0
      %1772 = vmatprep.subr.mxu0 0.0
      %1773 = vmatpush1.msra.mxu0 0.0
      %1774 = vmatprep.subr.mxu0 0.0
      %1775 = vmatpush1.msra.mxu0 0.0
      %1776 = vmatprep.subr.mxu0 0.0
      %1777 = vmatpush1.msra.mxu0 0.0
      %1778 = vmatprep.subr.mxu0 0.0
      %1779 = vmatpush1.msra.mxu0 %v1723
      %1780 = vmatprep.subr.mxu0 0.0
      %1781 = vmatpush2.msra.mxu0 0.0
      %1782 = vmatprep.subr.mxu0 0.0
      %1783 = vmatpush2.msra.mxu0 0.0
      %1784 = vmatprep.subr.mxu0 0.0
      %1785 = vmatpush2.msra.mxu0 0.0
      %1786 = vmatprep.subr.mxu0 0.0
      %1787 = vmatpush2.msra.mxu0 0.0
      %1788 = vmatprep.subr.mxu0 0.0
      %1789 = vmatpush2.msra.mxu0 0.0
      %1790 = vmatprep.subr.mxu0 0.0
      %1791 = vmatpush2.msra.mxu0 0.0
      %1792 = vmatprep.subr.mxu0 0.0
      %1793 = vmatpush2.msra.mxu0 0.0
      %1794 = vmatprep.subr.mxu0 0.0
      %1795 = vmatpush2.msra.mxu0 0.0
      %1796 = vmatprep.subr.mxu0 0.0
      %1797 = vmatpush2.msra.mxu0 0.0
      %1798 = vmatprep.subr.mxu0 0.0
      %1799 = vmatpush2.msra.mxu0 0.0
      %1800 = vmatprep.subr.mxu0 0.0
      %1801 = vmatpush2.msra.mxu0 0.0
      %1802 = vmatprep.subr.mxu0 0.0
      %1803 = vmatpush2.msra.mxu0 0.0
      %1804 = vmatprep.subr.mxu0 0.0
      %1805 = vmatpush2.msra.mxu0 0.0
      %1806 = vmatprep.subr.mxu0 0.0
      %1807 = vmatpush2.msra.mxu0 0.0
      %1808 = vmatprep.subr.mxu0 0.0
      %1809 = vmatpush2.msra.mxu0 0.0
      %1810 = vmatprep.subr.mxu0 0.0
      %1811 = vmatpush2.msra.mxu0 0.0
      %1812 = vmatprep.mubr.f32.mxu0 0.0
      %1813 = vmatmul.mubr.f32.gmra.mxu0 %v1725
      %v1814 = vpop.f32.mrf.mxu0
      %v1815 = vadd.f32 0.0, %v1814
      %v1816 = vpop.f32.mrf.mxu0
      %1817 = vmatprep.mubr.f32.mxu0 0.0
      %1818 = vmatmul.mubr.f32.gmra.mxu0 %v1728
      %v1819 = vpop.f32.mrf.mxu0
      %v1820 = vadd.f32 0.0, %v1819
      %v1821 = vpop.f32.mrf.mxu0
      %1822 = vmatprep.mubr.f32.mxu0 0.0
      %1823 = vmatmul.mubr.f32.gmra.mxu0 %v1731
      %v1824 = vpop.f32.mrf.mxu0
      %v1825 = vadd.f32 0.0, %v1824
      %v1826 = vpop.f32.mrf.mxu0
      %1827 = vmatprep.mubr.f32.mxu0 0.0
      %1828 = vmatmul.mubr.f32.gmra.mxu0 %v1734
      %v1829 = vpop.f32.mrf.mxu0
      %v1830 = vadd.f32 0.0, %v1829
      %v1831 = vpop.f32.mrf.mxu0
      %1832 = vmatprep.mubr.f32.mxu0 0.0
      %1833 = vmatmul.mubr.f32.gmra.mxu0 %v1737
      %v1834 = vpop.f32.mrf.mxu0
      %v1835 = vadd.f32 0.0, %v1834
      %v1836 = vpop.f32.mrf.mxu0
      %1837 = vmatprep.mubr.f32.mxu0 0.0
      %1838 = vmatmul.mubr.f32.gmra.mxu0 %v1740
      %v1839 = vpop.f32.mrf.mxu0
      %v1840 = vadd.f32 0.0, %v1839
      %v1841 = vpop.f32.mrf.mxu0
      %1842 = vmatprep.mubr.f32.mxu0 0.0
      %1843 = vmatmul.mubr.f32.gmra.mxu0 %v1743
      %v1844 = vpop.f32.mrf.mxu0
      %v1845 = vadd.f32 0.0, %v1844
      %v1846 = vpop.f32.mrf.mxu0
      %1847 = vmatprep.mubr.f32.mxu0 0.0
      %1848 = vmatmul.mubr.f32.gmra.mxu0 %v1746
      %v1849 = vpop.f32.mrf.mxu0
      %v1850 = vadd.f32 0.0, %v1849
      %v1851 = vpop.f32.mrf.mxu0
      %1852 = vdwg.mxu0
      %v1853 = vadd.f32 %v1706, %v1815
      %v1854 = vadd.f32 %v1707, %v1820
      %v1855 = vadd.f32 %v1708, %v1825
      %v1856 = vadd.f32 %v1709, %v1830
      %v1857 = vadd.f32 %v1710, %v1835
      %v1858 = vadd.f32 %v1711, %v1840
      %v1859 = vadd.f32 %v1712, %v1845
      %v1860 = vadd.f32 %v1713, %v1850
      %v1861 = vld [vmem:[#allocation2 + $0x22] sm:$0xff]
      %v1862 = vld [vmem:[#allocation2 + $0x2a] sm:$0xff]
      %v1863 = vld [vmem:[#allocation2 + $0x32] sm:$0xff]
      %v1864 = vld [vmem:[#allocation2 + $0x3a] sm:$0xff]
      %v1865 = vld [vmem:[#allocation2 + $0x42] sm:$0xff]
      %v1866 = vld [vmem:[#allocation2 + $0x4a] sm:$0xff]
      %v1867 = vld [vmem:[#allocation2 + $0x52] sm:$0xff]
      %v1868 = vld [vmem:[#allocation2 + $0x5a] sm:$0xff]
      %v1869 = vsel %vm947, %v1861, 0.0
      %v1870 = vsel %vm948, %v1862, 0.0
      %v1871 = vsel %vm949, %v1863, 0.0
      %v1872 = vsel %vm950, %v1864, 0.0
      %v1873 = vsel %vm951, %v1865, 0.0
      %v1874 = vsel %vm952, %v1866, 0.0
      %v1875 = vsel %vm953, %v1867, 0.0
      %v1876 = vsel %vm954, %v1868, 0.0
      %s1877 = scalar_lea.vmem %s1, 64
      %v1878 = vld [vmem:[%s1877] sm:$0xff]
      %v1880 = vsel %vm455, %v1869, 0
      %v1883 = vsel %vm455, %v1870, 0
      %v1886 = vsel %vm455, %v1871, 0
      %v1889 = vsel %vm455, %v1872, 0
      %v1892 = vsel %vm455, %v1873, 0
      %v1895 = vsel %vm455, %v1874, 0
      %v1898 = vsel %vm455, %v1875, 0
      %v1901 = vsel %vm455, %v1876, 0
      %1903 = vmatprep.subr.mxu0 0.0
      %1904 = vmatpush1.msra.mxu0 0.0
      %1905 = vmatprep.subr.mxu0 0.0
      %1906 = vmatpush1.msra.mxu0 0.0
      %1907 = vmatprep.subr.mxu0 0.0
      %1908 = vmatpush1.msra.mxu0 0.0
      %1909 = vmatprep.subr.mxu0 0.0
      %1910 = vmatpush1.msra.mxu0 0.0
      %1911 = vmatprep.subr.mxu0 0.0
      %1912 = vmatpush1.msra.mxu0 0.0
      %1913 = vmatprep.subr.mxu0 0.0
      %1914 = vmatpush1.msra.mxu0 0.0
      %1915 = vmatprep.subr.mxu0 0.0
      %1916 = vmatpush1.msra.mxu0 0.0
      %1917 = vmatprep.subr.mxu0 0.0
      %1918 = vmatpush1.msra.mxu0 0.0
      %1919 = vmatprep.subr.mxu0 0.0
      %1920 = vmatpush1.msra.mxu0 0.0
      %1921 = vmatprep.subr.mxu0 0.0
      %1922 = vmatpush1.msra.mxu0 0.0
      %1923 = vmatprep.subr.mxu0 0.0
      %1924 = vmatpush1.msra.mxu0 0.0
      %1925 = vmatprep.subr.mxu0 0.0
      %1926 = vmatpush1.msra.mxu0 0.0
      %1927 = vmatprep.subr.mxu0 0.0
      %1928 = vmatpush1.msra.mxu0 0.0
      %1929 = vmatprep.subr.mxu0 0.0
      %1930 = vmatpush1.msra.mxu0 0.0
      %1931 = vmatprep.subr.mxu0 0.0
      %1932 = vmatpush1.msra.mxu0 0.0
      %1933 = vmatprep.subr.mxu0 0.0
      %1934 = vmatpush1.msra.mxu0 %v1878
      %1935 = vmatprep.subr.mxu0 0.0
      %1936 = vmatpush2.msra.mxu0 0.0
      %1937 = vmatprep.subr.mxu0 0.0
      %1938 = vmatpush2.msra.mxu0 0.0
      %1939 = vmatprep.subr.mxu0 0.0
      %1940 = vmatpush2.msra.mxu0 0.0
      %1941 = vmatprep.subr.mxu0 0.0
      %1942 = vmatpush2.msra.mxu0 0.0
      %1943 = vmatprep.subr.mxu0 0.0
      %1944 = vmatpush2.msra.mxu0 0.0
      %1945 = vmatprep.subr.mxu0 0.0
      %1946 = vmatpush2.msra.mxu0 0.0
      %1947 = vmatprep.subr.mxu0 0.0
      %1948 = vmatpush2.msra.mxu0 0.0
      %1949 = vmatprep.subr.mxu0 0.0
      %1950 = vmatpush2.msra.mxu0 0.0
      %1951 = vmatprep.subr.mxu0 0.0
      %1952 = vmatpush2.msra.mxu0 0.0
      %1953 = vmatprep.subr.mxu0 0.0
      %1954 = vmatpush2.msra.mxu0 0.0
      %1955 = vmatprep.subr.mxu0 0.0
      %1956 = vmatpush2.msra.mxu0 0.0
      %1957 = vmatprep.subr.mxu0 0.0
      %1958 = vmatpush2.msra.mxu0 0.0
      %1959 = vmatprep.subr.mxu0 0.0
      %1960 = vmatpush2.msra.mxu0 0.0
      %1961 = vmatprep.subr.mxu0 0.0
      %1962 = vmatpush2.msra.mxu0 0.0
      %1963 = vmatprep.subr.mxu0 0.0
      %1964 = vmatpush2.msra.mxu0 0.0
      %1965 = vmatprep.subr.mxu0 0.0
      %1966 = vmatpush2.msra.mxu0 0.0
      %1967 = vmatprep.mubr.f32.mxu0 0.0
      %1968 = vmatmul.mubr.f32.gmra.mxu0 %v1880
      %v1969 = vpop.f32.mrf.mxu0
      %v1970 = vadd.f32 0.0, %v1969
      %v1971 = vpop.f32.mrf.mxu0
      %1972 = vmatprep.mubr.f32.mxu0 0.0
      %1973 = vmatmul.mubr.f32.gmra.mxu0 %v1883
      %v1974 = vpop.f32.mrf.mxu0
      %v1975 = vadd.f32 0.0, %v1974
      %v1976 = vpop.f32.mrf.mxu0
      %1977 = vmatprep.mubr.f32.mxu0 0.0
      %1978 = vmatmul.mubr.f32.gmra.mxu0 %v1886
      %v1979 = vpop.f32.mrf.mxu0
      %v1980 = vadd.f32 0.0, %v1979
      %v1981 = vpop.f32.mrf.mxu0
      %1982 = vmatprep.mubr.f32.mxu0 0.0
      %1983 = vmatmul.mubr.f32.gmra.mxu0 %v1889
      %v1984 = vpop.f32.mrf.mxu0
      %v1985 = vadd.f32 0.0, %v1984
      %v1986 = vpop.f32.mrf.mxu0
      %1987 = vmatprep.mubr.f32.mxu0 0.0
      %1988 = vmatmul.mubr.f32.gmra.mxu0 %v1892
      %v1989 = vpop.f32.mrf.mxu0
      %v1990 = vadd.f32 0.0, %v1989
      %v1991 = vpop.f32.mrf.mxu0
      %1992 = vmatprep.mubr.f32.mxu0 0.0
      %1993 = vmatmul.mubr.f32.gmra.mxu0 %v1895
      %v1994 = vpop.f32.mrf.mxu0
      %v1995 = vadd.f32 0.0, %v1994
      %v1996 = vpop.f32.mrf.mxu0
      %1997 = vmatprep.mubr.f32.mxu0 0.0
      %1998 = vmatmul.mubr.f32.gmra.mxu0 %v1898
      %v1999 = vpop.f32.mrf.mxu0
      %v2000 = vadd.f32 0.0, %v1999
      %v2001 = vpop.f32.mrf.mxu0
      %2002 = vmatprep.mubr.f32.mxu0 0.0
      %2003 = vmatmul.mubr.f32.gmra.mxu0 %v1901
      %v2004 = vpop.f32.mrf.mxu0
      %v2005 = vadd.f32 0.0, %v2004
      %v2006 = vpop.f32.mrf.mxu0
      %2007 = vdwg.mxu0
      %v2008 = vadd.f32 %v1853, %v1970
      %v2009 = vadd.f32 %v1854, %v1975
      %v2010 = vadd.f32 %v1855, %v1980
      %v2011 = vadd.f32 %v1856, %v1985
      %v2012 = vadd.f32 %v1857, %v1990
      %v2013 = vadd.f32 %v1858, %v1995
      %v2014 = vadd.f32 %v1859, %v2000
      %v2015 = vadd.f32 %v1860, %v2005
      %vm2016 = vcmask 130048
      %2017 = vst.msk [vmem:[%s273] sm:$0xff] %vm2016, %v2008
      %2018 = vst.msk [vmem:[%s273 + $0x8] sm:$0xff] %vm2016, %v2009
      %2019 = vst.msk [vmem:[%s273 + $0x10] sm:$0xff] %vm2016, %v2010
      %2020 = vst.msk [vmem:[%s273 + $0x18] sm:$0xff] %vm2016, %v2011
      %2021 = vst.msk [vmem:[%s273 + $0x20] sm:$0xff] %vm2016, %v2012
      %2022 = vst.msk [vmem:[%s273 + $0x28] sm:$0xff] %vm2016, %v2013
      %2023 = vst.msk [vmem:[%s273 + $0x30] sm:$0xff] %vm2016, %v2014
      %2024 = vst.msk [vmem:[%s273 + $0x38] sm:$0xff] %vm2016, %v2015
      %v2025 = vsel %vm2016, %v2008, 0.0
      %v2026 = vsel %vm2016, %v2009, 0.0
      %v2027 = vadd.f32 %v2025, %v2026
      %v2028 = vsel %vm2016, %v2010, 0.0
      %v2029 = vadd.f32 %v2027, %v2028
      %v2030 = vsel %vm2016, %v2011, 0.0
      %v2031 = vadd.f32 %v2029, %v2030
      %v2032 = vsel %vm2016, %v2012, 0.0
      %v2033 = vadd.f32 %v2031, %v2032
      %v2034 = vsel %vm2016, %v2013, 0.0
      %v2035 = vadd.f32 %v2033, %v2034
      %v2036 = vsel %vm2016, %v2014, 0.0
      %v2037 = vadd.f32 %v2035, %v2036
      %v2038 = vsel %vm2016, %v2015, 0.0
      %v2039 = vadd.f32 %v2037, %v2038
      %v2040 = vrot.slane %v2039, 4
      %v2041 = vadd.f32 %v2039, %v2040
      %v2042 = vrot.slane %v2041, 2
      %v2043 = vadd.f32 %v2041, %v2042
      %v2044 = vrot.slane %v2043, 1
      %v2045 = vadd.f32 %v2043, %v2044
      %v2046 = vmul.f32 %v2008, %v2008
      %v2047 = vmul.f32 %v2009, %v2009
      %v2048 = vmul.f32 %v2010, %v2010
      %v2049 = vmul.f32 %v2011, %v2011
      %v2050 = vmul.f32 %v2012, %v2012
      %v2051 = vmul.f32 %v2013, %v2013
      %v2052 = vmul.f32 %v2014, %v2014
      %v2053 = vmul.f32 %v2015, %v2015
      %v2054 = vsel %vm2016, %v2046, 0.0
      %v2055 = vsel %vm2016, %v2047, 0.0
      %v2056 = vadd.f32 %v2054, %v2055
      %v2057 = vsel %vm2016, %v2048, 0.0
      %v2058 = vadd.f32 %v2056, %v2057
      %v2059 = vsel %vm2016, %v2049, 0.0
      %v2060 = vadd.f32 %v2058, %v2059
      %v2061 = vsel %vm2016, %v2050, 0.0
      %v2062 = vadd.f32 %v2060, %v2061
      %v2063 = vsel %vm2016, %v2051, 0.0
      %v2064 = vadd.f32 %v2062, %v2063
      %v2065 = vsel %vm2016, %v2052, 0.0
      %v2066 = vadd.f32 %v2064, %v2065
      %v2067 = vsel %vm2016, %v2053, 0.0
      %v2068 = vadd.f32 %v2066, %v2067
      %v2069 = vrot.slane %v2068, 4
      %v2070 = vadd.f32 %v2068, %v2069
      %v2071 = vrot.slane %v2070, 2
      %v2072 = vadd.f32 %v2070, %v2071
      %v2073 = vrot.slane %v2072, 1
      %v2074 = vadd.f32 %v2072, %v2073
      %vm2075 = vcmask 1040384
      %v2076 = vsel %vm2075, %v2045, %v2074
      %vm2077 = vcmask 123904
      %2078 = vst.msk [vmem:[%s281] sm:$0x3] %vm2077, %v2076
      %p2079 = scmp.lt.s32.totalorder %s21, 1
      %s2080 = scalar_select %p2079, %s21, 1
      %p2081 = scmp.lt.s32.totalorder %s22, 3
      %s2082 = scalar_select %p2081, %s22, 3
      %s2083 = smul.addr %s2082, 8
      %s2084 = smul.addr %s2080, 32
      %s2085 = sadd.s32 %s2083, %s2084
      %s2086 = smul.addr %s2085, 8
      %s2087 = scalar_lea.vmem %s4, %s2086
      %p2088 = scmp.lt.s32.totalorder %s21, 1
      %s2089 = scalar_select %p2088, %s21, 1
      %p2090 = scmp.lt.s32.totalorder %s22, 3
      %s2091 = scalar_select %p2090, %s22, 3
      %s2092 = smul.addr %s2089, 4
      %s2093 = sadd.s32 %s2091, %s2092
      %s2094 = smul.addr %s2093, 2
      %s2095 = scalar_lea.vmem %s5, %s2094
      // Predicated region
      $region37: #{complex_inception_forward.10} parent=35 // pred_check
        %p2096 = pneg %p140
      $region38: #{complex_inception_forward.10} parent=35 // pred_check_branch
        %2098 = sbr.rel (%p2096) target = $region40
      $region39: #{complex_inception_forward.10} parent=35 // pred_region
        _
      $region40: #{complex_inception_forward.10} parent=35 // pred_fallthru
        _
      // Predicated region
      $region41: #{complex_inception_forward.10} parent=35 // pred_check
        %p2099 = pneg %p168
      $region42: #{complex_inception_forward.10} parent=35 // pred_check_branch
        %2101 = sbr.rel (%p2099) target = $region44
      $region43: #{complex_inception_forward.10} parent=35 // pred_region
        _
      $region44: #{complex_inception_forward.10} parent=35 // pred_fallthru
        _
    $region36: #{complex_inception_forward.10} parent=5 // pred_fallthru
      _
    %p2102 = scmp.le.s32.totalorder 2, %s12
    // Predicated region
    $region45: #{complex_inception_forward.10} parent=5 // pred_check
      %p2103 = pneg %p2102
    $region46: #{complex_inception_forward.10} parent=5 // pred_check_branch
      %2105 = sbr.rel (%p2103) target = $region48
    $region47: #{complex_inception_forward.10} parent=5 // pred_region
      %s2106 = ssub.s32 %s12, 2
      // Predicated region
      $region49: #{complex_inception_forward.10} parent=47 // pred_check
        %p2107 = pneg %p146
      $region50: #{complex_inception_forward.10} parent=47 // pred_check_branch
        %2109 = sbr.rel (%p2107) target = $region52
      $region51: #{complex_inception_forward.10} parent=47 // pred_region
        %p2110 = scmp.lt.s32.totalorder %s23, 1
        %s2111 = scalar_select %p2110, %s23, 1
        %p2112 = scmp.lt.s32.totalorder %s24, 3
        %s2113 = scalar_select %p2112, %s24, 3
        %s2114 = smul.addr %s2113, 8
        %s2115 = smul.addr %s2111, 32
        %s2116 = sadd.s32 %s2114, %s2115
        %s2117 = smul.addr %s2116, 8
        %s2118 = scalar_lea.vmem %s4, %s2117
      $region52: #{complex_inception_forward.10} parent=47 // pred_fallthru
        _
      // Predicated region
      $region53: #{complex_inception_forward.10} parent=47 // pred_check
        %p2119 = pneg %p174
      $region54: #{complex_inception_forward.10} parent=47 // pred_check_branch
        %2121 = sbr.rel (%p2119) target = $region56
      $region55: #{complex_inception_forward.10} parent=47 // pred_region
        %p2122 = scmp.lt.s32.totalorder %s23, 1
        %s2123 = scalar_select %p2122, %s23, 1
        %p2124 = scmp.lt.s32.totalorder %s24, 3
        %s2125 = scalar_select %p2124, %s24, 3
        %s2126 = smul.addr %s2123, 4
        %s2127 = sadd.s32 %s2125, %s2126
        %s2128 = smul.addr %s2127, 2
        %s2129 = scalar_lea.vmem %s5, %s2128
      $region56: #{complex_inception_forward.10} parent=47 // pred_fallthru
        _
    $region48: #{complex_inception_forward.10} parent=5 // pred_fallthru
      _
  $region6: #{complex_inception_forward.10} parent=0 // loop_footer
    %s16 = sadd.s32 1, %s12
  $region7: #{complex_inception_forward.10} parent=0 // loop_footer_branch
    %11 = sbr.rel target = $region3
  $region8: #{complex_inception_forward.10} parent=0 // loop_exit
    _

// kernel: complex_inception_forward.12
$region0: #{complex_inception_forward.12}
  #allocation0 [shape = 'u32[]', space=smem, size = 0x4, offset = 0x4, fixed_abs, tag = 'smem constant byte address 0x4 - core index']
  #allocation1 [shape = 'u32[144,128]{1,0:T(1,128)}', space=vmem, size = 0x12000, scoped, tag = 'internal scratch']
  #allocation2 [shape = 'f32[132,4]{1,0:T(8,128)}', space=vmem, size = 0x11000, scoped, tag = 'scratch operand']
  %s0 = inlined_call_operand.vmem [shape: f32[2,4,132,4], index: 0, kind: input, shape index: {}]
  %s1 = inlined_call_operand.vmem [shape: f32[25,4,8], index: 1, kind: input, shape index: {}]
  %s2 = inlined_call_operand.vmem [shape: f32[1,4], index: 2, kind: input, shape index: {}]
  %s3 = inlined_call_operand.vmem [shape: f32[1,4], index: 3, kind: input, shape index: {}]
  %s4 = inlined_call_operand.vmem [shape: f32[2,4,64,8], index: 4, kind: output, shape index: {0}]
  %s5 = inlined_call_operand.vmem [shape: f32[2,4,2,8], index: 5, kind: output, shape index: {1}]
  %6 = xla_tuple %s4, %s5
  %s7 = sld [smem:[#allocation0]]
  $region57: #{complex_inception_forward.12} parent=0
    _
  %s9 = ssub.s32 1, %s7
  %s10 = scalar_select 0, %s9, %s7
  loop: start=0, step=1, limit=10
  $region2: #{complex_inception_forward.12} parent=0 // loop_pre_header
    _
  $region3: #{complex_inception_forward.12} parent=0 // loop_header
    %s12 = sphi 0, %s16
    %p13 = scmp.ge.s32.totalorder %s12, 10
    %s19 = sphi 0, %s31
    %s20 = sphi 0, %s27
    %s21 = sphi 0, %s19
    %s22 = sphi 0, %s20
    %s23 = sphi 0, %s21
    %s24 = sphi 0, %s22
    %s36 = sphi 0, %s38
    %s39 = sphi 0, %s36
    %s40 = sphi 0, %s39
    %s56 = sphi 0, %s40
    %s60 = sphi 0, %s60
    %s62 = sphi 0, %s60
    %s63 = sphi 0, %s62
    %s77 = sphi 0, %s63
    %s81 = sphi 0, %s81
    %s83 = sphi 0, %s81
    %s84 = sphi 0, %s83
    %s98 = sphi 0, %s84
    %s102 = sphi 0, %s102
    %s104 = sphi 0, %s102
    %s105 = sphi 0, %s104
    %s119 = sphi 0, %s105
    %s127 = sphi 0, %s129
    %s130 = sphi 0, %s127
    %s131 = sphi 0, %s130
    %s147 = sphi 0, %s131
    %s155 = sphi 0, %s157
    %s158 = sphi 0, %s155
    %s159 = sphi 0, %s158
    %s175 = sphi 0, %s159
  $region4: #{complex_inception_forward.12} parent=0 // loop_header_branch
    %15 = sbr.rel (%p13) target = $region8
  $region5: #{complex_inception_forward.12} parent=0 // loop_body
    %s17 = ssub.s32 %s12, 1
    %s18 = ssub.s32 %s12, 2
    %s25 = sadd.s32 1, %s20
    %p26 = scmp.ge.s32.totalorder %s25, 4
    %s27 = scalar_select %p26, 0, %s25
    %s28 = sadd.s32 1, %s19
    %s29 = scalar_select %p26, %s28, %s19
    %p30 = scmp.ge.s32.totalorder %s29, 2
    %s31 = scalar_select %p30, 0, %s29
    %s32 = ssub.s32 %s19, %s31
    %s33 = ssub.s32 %s20, %s27
    %s34 = sor.u32 %s32, %s33
    %p35 = scmp.eq.s32.totalorder %s34, 0
    %s37 = sadd.s32 %s36, 1
    %s38 = scalar_select %p35, %s36, %s37
    %p41 = pneg %p35
    %p42 = scmp.eq.s32.totalorder %s12, 7
    %p43 = por %p41, %p42
    %p44 = scmp.ne.s32.totalorder %s36, %s39
    %p45 = scmp.eq.s32.totalorder %s12, 0
    %p46 = por %p44, %p45
    %p47 = scmp.ne.s32.totalorder %s36, %s39
    %p48 = scmp.eq.s32.totalorder %s17, 7
    %p49 = por %p47, %p48
    %p50 = scmp.ne.s32.totalorder %s39, %s40
    %p51 = scmp.eq.s32.totalorder %s17, 0
    %p52 = por %p50, %p51
    %p53 = scmp.ne.s32.totalorder %s39, %s40
    %p54 = scmp.eq.s32.totalorder %s18, 7
    %p55 = por %p53, %p54
    %p57 = scmp.ne.s32.totalorder %s40, %s56
    %p58 = scmp.eq.s32.totalorder %s18, 0
    %p59 = por %p57, %p58
    %s61 = sadd.s32 %s60, 1
    %p64 = scmp.eq.s32.totalorder %s12, 7
    %p65 = scmp.ne.s32.totalorder %s60, %s62
    %p66 = scmp.eq.s32.totalorder %s12, 0
    %p67 = por %p65, %p66
    %p68 = scmp.ne.s32.totalorder %s60, %s62
    %p69 = scmp.eq.s32.totalorder %s17, 7
    %p70 = por %p68, %p69
    %p71 = scmp.ne.s32.totalorder %s62, %s63
    %p72 = scmp.eq.s32.totalorder %s17, 0
    %p73 = por %p71, %p72
    %p74 = scmp.ne.s32.totalorder %s62, %s63
    %p75 = scmp.eq.s32.totalorder %s18, 7
    %p76 = por %p74, %p75
    %p78 = scmp.ne.s32.totalorder %s63, %s77
    %p79 = scmp.eq.s32.totalorder %s18, 0
    %p80 = por %p78, %p79
    %s82 = sadd.s32 %s81, 1
    %p85 = scmp.eq.s32.totalorder %s12, 7
    %p86 = scmp.ne.s32.totalorder %s81, %s83
    %p87 = scmp.eq.s32.totalorder %s12, 0
    %p88 = por %p86, %p87
    %p89 = scmp.ne.s32.totalorder %s81, %s83
    %p90 = scmp.eq.s32.totalorder %s17, 7
    %p91 = por %p89, %p90
    %p92 = scmp.ne.s32.totalorder %s83, %s84
    %p93 = scmp.eq.s32.totalorder %s17, 0
    %p94 = por %p92, %p93
    %p95 = scmp.ne.s32.totalorder %s83, %s84
    %p96 = scmp.eq.s32.totalorder %s18, 7
    %p97 = por %p95, %p96
    %p99 = scmp.ne.s32.totalorder %s84, %s98
    %p100 = scmp.eq.s32.totalorder %s18, 0
    %p101 = por %p99, %p100
    %s103 = sadd.s32 %s102, 1
    %p106 = scmp.eq.s32.totalorder %s12, 7
    %p107 = scmp.ne.s32.totalorder %s102, %s104
    %p108 = scmp.eq.s32.totalorder %s12, 0
    %p109 = por %p107, %p108
    %p110 = scmp.ne.s32.totalorder %s102, %s104
    %p111 = scmp.eq.s32.totalorder %s17, 7
    %p112 = por %p110, %p111
    %p113 = scmp.ne.s32.totalorder %s104, %s105
    %p114 = scmp.eq.s32.totalorder %s17, 0
    %p115 = por %p113, %p114
    %p116 = scmp.ne.s32.totalorder %s104, %s105
    %p117 = scmp.eq.s32.totalorder %s18, 7
    %p118 = por %p116, %p117
    %p120 = scmp.ne.s32.totalorder %s105, %s119
    %p121 = scmp.eq.s32.totalorder %s18, 0
    %p122 = por %p120, %p121
    %s123 = ssub.s32 %s19, %s31
    %s124 = ssub.s32 %s20, %s27
    %s125 = sor.u32 %s123, %s124
    %p126 = scmp.eq.s32.totalorder %s125, 0
    %s128 = sadd.s32 %s127, 1
    %s129 = scalar_select %p126, %s127, %s128
    %p132 = pneg %p126
    %p133 = scmp.eq.s32.totalorder %s12, 7
    %p134 = por %p132, %p133
    %p135 = scmp.ne.s32.totalorder %s127, %s130
    %p136 = scmp.eq.s32.totalorder %s12, 0
    %p137 = por %p135, %p136
    %p138 = scmp.ne.s32.totalorder %s127, %s130
    %p139 = scmp.eq.s32.totalorder %s17, 7
    %p140 = por %p138, %p139
    %p141 = scmp.ne.s32.totalorder %s130, %s131
    %p142 = scmp.eq.s32.totalorder %s17, 0
    %p143 = por %p141, %p142
    %p144 = scmp.ne.s32.totalorder %s130, %s131
    %p145 = scmp.eq.s32.totalorder %s18, 7
    %p146 = por %p144, %p145
    %p148 = scmp.ne.s32.totalorder %s131, %s147
    %p149 = scmp.eq.s32.totalorder %s18, 0
    %p150 = por %p148, %p149
    %s151 = ssub.s32 %s19, %s31
    %s152 = ssub.s32 %s20, %s27
    %s153 = sor.u32 %s151, %s152
    %p154 = scmp.eq.s32.totalorder %s153, 0
    %s156 = sadd.s32 %s155, 1
    %s157 = scalar_select %p154, %s155, %s156
    %p160 = pneg %p154
    %p161 = scmp.eq.s32.totalorder %s12, 7
    %p162 = por %p160, %p161
    %p163 = scmp.ne.s32.totalorder %s155, %s158
    %p164 = scmp.eq.s32.totalorder %s12, 0
    %p165 = por %p163, %p164
    %p166 = scmp.ne.s32.totalorder %s155, %s158
    %p167 = scmp.eq.s32.totalorder %s17, 7
    %p168 = por %p166, %p167
    %p169 = scmp.ne.s32.totalorder %s158, %s159
    %p170 = scmp.eq.s32.totalorder %s17, 0
    %p171 = por %p169, %p170
    %p172 = scmp.ne.s32.totalorder %s158, %s159
    %p173 = scmp.eq.s32.totalorder %s18, 7
    %p174 = por %p172, %p173
    %p176 = scmp.ne.s32.totalorder %s159, %s175
    %p177 = scmp.eq.s32.totalorder %s18, 0
    %p178 = por %p176, %p177
    %p179 = scmp.le.s32.totalorder 1, %s12
    %p180 = scmp.lt.s32.totalorder %s12, 9
    %p181 = pnand %p179, %p180
    %p182 = pneg %p181
    // Predicated region
    $region9: #{complex_inception_forward.12} parent=5 // pred_check
      _
    $region10: #{complex_inception_forward.12} parent=5 // pred_check_branch
      %184 = sbr.rel (%p181) target = $region12
    $region11: #{complex_inception_forward.12} parent=5 // pred_region
      %s185 = ssub.s32 %s12, 1
      // Predicated region
      $region13: #{complex_inception_forward.12} parent=11 // pred_check
        %p186 = pneg %p73
      $region14: #{complex_inception_forward.12} parent=11 // pred_check_branch
        %188 = sbr.rel (%p186) target = $region16
      $region15: #{complex_inception_forward.12} parent=11 // pred_region
        _
      $region16: #{complex_inception_forward.12} parent=11 // pred_fallthru
        _
      // Predicated region
      $region17: #{complex_inception_forward.12} parent=11 // pred_check
        %p189 = pneg %p94
      $region18: #{complex_inception_forward.12} parent=11 // pred_check_branch
        %191 = sbr.rel (%p189) target = $region20
      $region19: #{complex_inception_forward.12} parent=11 // pred_region
        _
      $region20: #{complex_inception_forward.12} parent=11 // pred_fallthru
        _
      // Predicated region
      $region21: #{complex_inception_forward.12} parent=11 // pred_check
        %p192 = pneg %p115
      $region22: #{complex_inception_forward.12} parent=11 // pred_check_branch
        %194 = sbr.rel (%p192) target = $region24
      $region23: #{complex_inception_forward.12} parent=11 // pred_region
        _
      $region24: #{complex_inception_forward.12} parent=11 // pred_fallthru
        _
    $region12: #{complex_inception_forward.12} parent=5 // pred_fallthru
      _
    %p195 = scmp.lt.s32.totalorder %s12, 8
    // Predicated region
    $region25: #{complex_inception_forward.12} parent=5 // pred_check
      %p196 = pneg %p195
    $region26: #{complex_inception_forward.12} parent=5 // pred_check_branch
      %198 = sbr.rel (%p196) target = $region28
    $region27: #{complex_inception_forward.12} parent=5 // pred_region
      // Predicated region
      $region29: #{complex_inception_forward.12} parent=27 // pred_check
        %p199 = pneg %p46
      $region30: #{complex_inception_forward.12} parent=27 // pred_check_branch
        %201 = sbr.rel (%p199) target = $region32
      $region31: #{complex_inception_forward.12} parent=27 // pred_region
        %p202 = scmp.lt.s32.totalorder %s19, 1
        %s203 = scalar_select %p202, %s19, 1
        %p204 = scmp.lt.s32.totalorder %s20, 3
        %s205 = scalar_select %p204, %s20, 3
        %s206 = smul.addr %s205, 17
        %s207 = smul.addr %s203, 68
        %s208 = sadd.s32 %s206, %s207
        %s209 = smul.addr %s208, 8
        %s210 = scalar_lea.vmem %s0, %s209
      $region32: #{complex_inception_forward.12} parent=27 // pred_fallthru
        _
    $region28: #{complex_inception_forward.12} parent=5 // pred_fallthru
      _
    %p211 = scmp.le.s32.totalorder 1, %s12
    %p212 = scmp.lt.s32.totalorder %s12, 9
    %p213 = pnand %p211, %p212
    %p214 = pneg %p213
    // Predicated region
    $region33: #{complex_inception_forward.12} parent=5 // pred_check
      _
    $region34: #{complex_inception_forward.12} parent=5 // pred_check_branch
      %216 = sbr.rel (%p213) target = $region36
    $region35: #{complex_inception_forward.12} parent=5 // pred_region
      %s217 = ssub.s32 %s12, 1
      %p218 = scmp.lt.s32.totalorder %s21, 1
      %s219 = scalar_select %p218, %s21, 1
      %p220 = scmp.lt.s32.totalorder %s22, 3
      %s221 = scalar_select %p220, %s22, 3
      %s222 = smul.addr %s221, 17
      %s223 = smul.addr %s219, 68
      %s224 = sadd.s32 %s222, %s223
      %s225 = smul.addr %s224, 8
      %s226 = scalar_lea.vmem %s0, %s225
      %p227 = pneg %p52
      %p228 = pneg %p49
      %p229 = pneg %p73
      %p230 = pneg %p70
      %p231 = pneg %p94
      %p232 = pneg %p91
      %p233 = pneg %p115
      %p234 = pneg %p112
      %p235 = pneg %p143
      %p236 = pneg %p140
      %p237 = scmp.lt.s32.totalorder %s21, 1
      %s238 = scalar_select %p237, %s21, 1
      %p239 = scmp.lt.s32.totalorder %s22, 3
      %s240 = scalar_select %p239, %s22, 3
      %s241 = smul.addr %s240, 8
      %s242 = smul.addr %s238, 32
      %s243 = sadd.s32 %s241, %s242
      %s244 = smul.addr %s243, 8
      %s245 = scalar_lea.vmem %s4, %s244
      %p246 = pneg %p171
      %p247 = pneg %p168
      %p248 = scmp.lt.s32.totalorder %s21, 1
      %s249 = scalar_select %p248, %s21, 1
      %p250 = scmp.lt.s32.totalorder %s22, 3
      %s251 = scalar_select %p250, %s22, 3
      %s252 = smul.addr %s249, 4
      %s253 = sadd.s32 %s251, %s252
      %s254 = smul.addr %s253, 2
      %s255 = scalar_lea.vmem %s5, %s254
      %p256 = scmp.lt.s32.totalorder %s21, 1
      %s257 = scalar_select %p256, %s21, 1
      %p258 = scmp.lt.s32.totalorder %s22, 3
      %s259 = scalar_select %p258, %s22, 3
      %s260 = smul.addr %s259, 17
      %s261 = smul.addr %s257, 68
      %s262 = sadd.s32 %s260, %s261
      %s263 = smul.addr %s262, 8
      %s264 = scalar_lea.vmem %s0, %s263
      %p265 = scmp.lt.s32.totalorder %s21, 1
      %s266 = scalar_select %p265, %s21, 1
      %p267 = scmp.lt.s32.totalorder %s22, 3
      %s268 = scalar_select %p267, %s22, 3
      %s269 = smul.addr %s268, 8
      %s270 = smul.addr %s266, 32
      %s271 = sadd.s32 %s269, %s270
      %s272 = smul.addr %s271, 8
      %s273 = scalar_lea.vmem %s4, %s272
      %p274 = scmp.lt.s32.totalorder %s21, 1
      %s275 = scalar_select %p274, %s21, 1
      %p276 = scmp.lt.s32.totalorder %s22, 3
      %s277 = scalar_select %p276, %s22, 3
      %s278 = smul.addr %s275, 4
      %s279 = sadd.s32 %s277, %s278
      %s280 = smul.addr %s279, 2
      %s281 = scalar_lea.vmem %s5, %s280
      %v282 = vlaneseq
      %v283 = vshrl.u32 %v282, 7
      %v284 = vadd.s32 %v283, 8
      %v285 = vadd.s32 %v283, 16
      %v286 = vadd.s32 %v283, 24
      %v287 = vadd.s32 %v283, 32
      %v288 = vadd.s32 %v283, 40
      %v289 = vadd.s32 %v283, 48
      %v290 = vadd.s32 %v283, 56
      %v291 = vadd.s32 %v283, 64
      %v292 = vadd.s32 %v283, 72
      %v293 = vadd.s32 %v283, 80
      %v294 = vadd.s32 %v283, 88
      %v295 = vadd.s32 %v283, 96
      %v296 = vadd.s32 %v283, 104
      %v297 = vadd.s32 %v283, 112
      %v298 = vadd.s32 %v283, 120
      %v299 = vadd.s32 %v283, 128
      %s300 = smul.u32 %s22, 64
      %v301 = vstv %s300
      %v302 = vadd.s32 %v301, %v283
      %v303 = vadd.s32 %v301, %v284
      %v304 = vadd.s32 %v301, %v285
      %v305 = vadd.s32 %v301, %v286
      %v306 = vadd.s32 %v301, %v287
      %v307 = vadd.s32 %v301, %v288
      %v308 = vadd.s32 %v301, %v289
      %v309 = vadd.s32 %v301, %v290
      %v310 = vadd.s32 %v301, %v291
      %v311 = vadd.s32 %v301, %v292
      %v312 = vadd.s32 %v301, %v293
      %v313 = vadd.s32 %v301, %v294
      %v314 = vadd.s32 %v301, %v295
      %v315 = vadd.s32 %v301, %v296
      %v316 = vadd.s32 %v301, %v297
      %v317 = vadd.s32 %v301, %v298
      %v318 = vadd.s32 %v301, %v299
      %vm319 = vcmp.ge.s32.totalorder %v302, 34
      %vm320 = vcmp.ge.s32.totalorder %v303, 34
      %vm321 = vcmp.ge.s32.totalorder %v304, 34
      %vm322 = vcmp.ge.s32.totalorder %v305, 34
      %vm323 = vcmp.ge.s32.totalorder %v306, 34
      %vm324 = vcmp.ge.s32.totalorder %v307, 34
      %vm325 = vcmp.ge.s32.totalorder %v308, 34
      %vm326 = vcmp.ge.s32.totalorder %v309, 34
      %vm327 = vcmp.ge.s32.totalorder %v310, 34
      %vm328 = vcmp.ge.s32.totalorder %v311, 34
      %vm329 = vcmp.ge.s32.totalorder %v312, 34
      %vm330 = vcmp.ge.s32.totalorder %v313, 34
      %vm331 = vcmp.ge.s32.totalorder %v314, 34
      %vm332 = vcmp.ge.s32.totalorder %v315, 34
      %vm333 = vcmp.ge.s32.totalorder %v316, 34
      %vm334 = vcmp.ge.s32.totalorder %v317, 34
      %vm335 = vcmp.ge.s32.totalorder %v318, 34
      %vm336 = vcmp.lt.s32.totalorder %v302, 290
      %vm337 = vcmp.lt.s32.totalorder %v303, 290
      %vm338 = vcmp.lt.s32.totalorder %v304, 290
      %vm339 = vcmp.lt.s32.totalorder %v305, 290
      %vm340 = vcmp.lt.s32.totalorder %v306, 290
      %vm341 = vcmp.lt.s32.totalorder %v307, 290
      %vm342 = vcmp.lt.s32.totalorder %v308, 290
      %vm343 = vcmp.lt.s32.totalorder %v309, 290
      %vm344 = vcmp.lt.s32.totalorder %v310, 290
      %vm345 = vcmp.lt.s32.totalorder %v311, 290
      %vm346 = vcmp.lt.s32.totalorder %v312, 290
      %vm347 = vcmp.lt.s32.totalorder %v313, 290
      %vm348 = vcmp.lt.s32.totalorder %v314, 290
      %vm349 = vcmp.lt.s32.totalorder %v315, 290
      %vm350 = vcmp.lt.s32.totalorder %v316, 290
      %vm351 = vcmp.lt.s32.totalorder %v317, 290
      %vm352 = vcmp.lt.s32.totalorder %v318, 290
      %vm353 = vmand %vm319, %vm336
      %vm354 = vmand %vm320, %vm337
      %vm355 = vmand %vm321, %vm338
      %vm356 = vmand %vm322, %vm339
      %vm357 = vmand %vm323, %vm340
      %vm358 = vmand %vm324, %vm341
      %vm359 = vmand %vm325, %vm342
      %vm360 = vmand %vm326, %vm343
      %vm361 = vmand %vm327, %vm344
      %vm362 = vmand %vm328, %vm345
      %vm363 = vmand %vm329, %vm346
      %vm364 = vmand %vm330, %vm347
      %vm365 = vmand %vm331, %vm348
      %vm366 = vmand %vm332, %vm349
      %vm367 = vmand %vm333, %vm350
      %vm368 = vmand %vm334, %vm351
      %vm369 = vmand %vm335, %vm352
      %v370 = vld [vmem:[%s264] sm:$0xff]
      %v371 = vld [vmem:[%s264 + $0x8] sm:$0xff]
      %v372 = vld [vmem:[%s264 + $0x10] sm:$0xff]
      %v373 = vld [vmem:[%s264 + $0x18] sm:$0xff]
      %v374 = vld [vmem:[%s264 + $0x20] sm:$0xff]
      %v375 = vld [vmem:[%s264 + $0x28] sm:$0xff]
      %v376 = vld [vmem:[%s264 + $0x30] sm:$0xff]
      %v377 = vld [vmem:[%s264 + $0x38] sm:$0xff]
      %v378 = vld [vmem:[%s264 + $0x40] sm:$0xff]
      %v379 = vld [vmem:[%s264 + $0x48] sm:$0xff]
      %v380 = vld [vmem:[%s264 + $0x50] sm:$0xff]
      %v381 = vld [vmem:[%s264 + $0x58] sm:$0xff]
      %v382 = vld [vmem:[%s264 + $0x60] sm:$0xff]
      %v383 = vld [vmem:[%s264 + $0x68] sm:$0xff]
      %v384 = vld [vmem:[%s264 + $0x70] sm:$0xff]
      %v385 = vld [vmem:[%s264 + $0x78] sm:$0xff]
      %v386 = vld [vmem:[%s264 + $0x80] sm:$0xf]
      %v387 = vld [vmem:[%s2] sm:$0x1]
      %v389 = vlaneseq
      %v390 = vshrl.u32 %v389, 7
      %v391 = vsub.s32 0, %v390
      %v392 = vrot.slane %v387, %v391
      %v394 = vmul.f32 %v370, %v392
      %v395 = vmul.f32 %v371, %v392
      %v396 = vmul.f32 %v372, %v392
      %v397 = vmul.f32 %v373, %v392
      %v398 = vmul.f32 %v374, %v392
      %v399 = vmul.f32 %v375, %v392
      %v400 = vmul.f32 %v376, %v392
      %v401 = vmul.f32 %v377, %v392
      %v402 = vmul.f32 %v378, %v392
      %v403 = vmul.f32 %v379, %v392
      %v404 = vmul.f32 %v380, %v392
      %v405 = vmul.f32 %v381, %v392
      %v406 = vmul.f32 %v382, %v392
      %v407 = vmul.f32 %v383, %v392
      %v408 = vmul.f32 %v384, %v392
      %v409 = vmul.f32 %v385, %v392
      %v410 = vmul.f32 %v386, %v392
      %v411 = vld [vmem:[%s3] sm:$0x1]
      %v413 = vlaneseq
      %v414 = vshrl.u32 %v413, 7
      %v415 = vsub.s32 0, %v414
      %v416 = vrot.slane %v411, %v415
      %v418 = vadd.f32 %v394, %v416
      %v419 = vadd.f32 %v395, %v416
      %v420 = vadd.f32 %v396, %v416
      %v421 = vadd.f32 %v397, %v416
      %v422 = vadd.f32 %v398, %v416
      %v423 = vadd.f32 %v399, %v416
      %v424 = vadd.f32 %v400, %v416
      %v425 = vadd.f32 %v401, %v416
      %v426 = vadd.f32 %v402, %v416
      %v427 = vadd.f32 %v403, %v416
      %v428 = vadd.f32 %v404, %v416
      %v429 = vadd.f32 %v405, %v416
      %v430 = vadd.f32 %v406, %v416
      %v431 = vadd.f32 %v407, %v416
      %v432 = vadd.f32 %v408, %v416
      %v433 = vadd.f32 %v409, %v416
      %v434 = vadd.f32 %v410, %v416
      %v435 = vmax.f32 %v418, 0.0
      %v436 = vmax.f32 %v419, 0.0
      %v437 = vmax.f32 %v420, 0.0
      %v438 = vmax.f32 %v421, 0.0
      %v439 = vmax.f32 %v422, 0.0
      %v440 = vmax.f32 %v423, 0.0
      %v441 = vmax.f32 %v424, 0.0
      %v442 = vmax.f32 %v425, 0.0
      %v443 = vmax.f32 %v426, 0.0
      %v444 = vmax.f32 %v427, 0.0
      %v445 = vmax.f32 %v428, 0.0
      %v446 = vmax.f32 %v429, 0.0
      %v447 = vmax.f32 %v430, 0.0
      %v448 = vmax.f32 %v431, 0.0
      %v449 = vmax.f32 %v432, 0.0
      %v450 = vmax.f32 %v433, 0.0
      %v451 = vmax.f32 %v434, 0.0
      %v452 = vsel %vm353, 1, 0
      %v453 = vsel %vm354, 1, 0
      %v454 = vsel %vm355, 1, 0
      %v455 = vsel %vm356, 1, 0
      %v456 = vsel %vm357, 1, 0
      %v457 = vsel %vm358, 1, 0
      %v458 = vsel %vm359, 1, 0
      %v459 = vsel %vm360, 1, 0
      %v460 = vsel %vm361, 1, 0
      %v461 = vsel %vm362, 1, 0
      %v462 = vsel %vm363, 1, 0
      %v463 = vsel %vm364, 1, 0
      %v464 = vsel %vm365, 1, 0
      %v465 = vsel %vm366, 1, 0
      %v466 = vsel %vm367, 1, 0
      %v467 = vsel %vm368, 1, 0
      %v468 = vsel %vm369, 1, 0
      %vm469 = vcmp.eq.s32.totalorder %v452, 1
      %vm470 = vcmp.eq.s32.totalorder %v453, 1
      %vm471 = vcmp.eq.s32.totalorder %v454, 1
      %vm472 = vcmp.eq.s32.totalorder %v455, 1
      %vm473 = vcmp.eq.s32.totalorder %v456, 1
      %vm474 = vcmp.eq.s32.totalorder %v457, 1
      %vm475 = vcmp.eq.s32.totalorder %v458, 1
      %vm476 = vcmp.eq.s32.totalorder %v459, 1
      %vm477 = vcmp.eq.s32.totalorder %v460, 1
      %vm478 = vcmp.eq.s32.totalorder %v461, 1
      %vm479 = vcmp.eq.s32.totalorder %v462, 1
      %vm480 = vcmp.eq.s32.totalorder %v463, 1
      %vm481 = vcmp.eq.s32.totalorder %v464, 1
      %vm482 = vcmp.eq.s32.totalorder %v465, 1
      %vm483 = vcmp.eq.s32.totalorder %v466, 1
      %vm484 = vcmp.eq.s32.totalorder %v467, 1
      %vm485 = vcmp.eq.s32.totalorder %v468, 1
      %v486 = vsel %vm469, %v435, 0.0
      %v487 = vsel %vm470, %v436, 0.0
      %v488 = vsel %vm471, %v437, 0.0
      %v489 = vsel %vm472, %v438, 0.0
      %v490 = vsel %vm473, %v439, 0.0
      %v491 = vsel %vm474, %v440, 0.0
      %v492 = vsel %vm475, %v441, 0.0
      %v493 = vsel %vm476, %v442, 0.0
      %v494 = vsel %vm477, %v443, 0.0
      %v495 = vsel %vm478, %v444, 0.0
      %v496 = vsel %vm479, %v445, 0.0
      %v497 = vsel %vm480, %v446, 0.0
      %v498 = vsel %vm481, %v447, 0.0
      %v499 = vsel %vm482, %v448, 0.0
      %v500 = vsel %vm483, %v449, 0.0
      %v501 = vsel %vm484, %v450, 0.0
      %v502 = vsel %vm485, %v451, 0.0
      %vm503 = vcmask 31744
      %504 = vst.msk [vmem:[#allocation2] sm:$0xff] %vm503, %v486
      %505 = vst.msk [vmem:[#allocation2 + $0x8] sm:$0xff] %vm503, %v487
      %506 = vst.msk [vmem:[#allocation2 + $0x10] sm:$0xff] %vm503, %v488
      %507 = vst.msk [vmem:[#allocation2 + $0x18] sm:$0xff] %vm503, %v489
      %508 = vst.msk [vmem:[#allocation2 + $0x20] sm:$0xff] %vm503, %v490
      %509 = vst.msk [vmem:[#allocation2 + $0x28] sm:$0xff] %vm503, %v491
      %510 = vst.msk [vmem:[#allocation2 + $0x30] sm:$0xff] %vm503, %v492
      %511 = vst.msk [vmem:[#allocation2 + $0x38] sm:$0xff] %vm503, %v493
      %512 = vst.msk [vmem:[#allocation2 + $0x40] sm:$0xff] %vm503, %v494
      %513 = vst.msk [vmem:[#allocation2 + $0x48] sm:$0xff] %vm503, %v495
      %514 = vst.msk [vmem:[#allocation2 + $0x50] sm:$0xff] %vm503, %v496
      %515 = vst.msk [vmem:[#allocation2 + $0x58] sm:$0xff] %vm503, %v497
      %516 = vst.msk [vmem:[#allocation2 + $0x60] sm:$0xff] %vm503, %v498
      %517 = vst.msk [vmem:[#allocation2 + $0x68] sm:$0xff] %vm503, %v499
      %518 = vst.msk [vmem:[#allocation2 + $0x70] sm:$0xff] %vm503, %v500
      %519 = vst.msk [vmem:[#allocation2 + $0x78] sm:$0xff] %vm503, %v501
      %vm520 = vcmask 27648
      %521 = vst.msk [vmem:[#allocation2 + $0x80] sm:$0xf] %vm520, %v502
      %vm522 = vcmp.lt.s32.totalorder %v283, 0
      %v523 = vsub.s32 0, %v283
      %v524 = vsel %vm522, %v523, %v283
      %v525 = vshrl.u32 %v524, 4
      %v526 = vand.u32 %v524, 15
      %v527 = vsub.s32 0, %v526
      %v528 = vsel %vm522, %v527, %v526
      %vm529 = vcmp.lt.s32.totalorder %v284, 0
      %v530 = vsub.s32 0, %v284
      %v531 = vsel %vm529, %v530, %v284
      %v532 = vshrl.u32 %v531, 4
      %v533 = vand.u32 %v531, 15
      %v534 = vsub.s32 0, %v533
      %v535 = vsel %vm529, %v534, %v533
      %vm536 = vcmp.lt.s32.totalorder %v285, 0
      %v537 = vsub.s32 0, %v285
      %v538 = vsel %vm536, %v537, %v285
      %v539 = vshrl.u32 %v538, 4
      %v540 = vand.u32 %v538, 15
      %v541 = vsub.s32 0, %v540
      %v542 = vsel %vm536, %v541, %v540
      %vm543 = vcmp.lt.s32.totalorder %v286, 0
      %v544 = vsub.s32 0, %v286
      %v545 = vsel %vm543, %v544, %v286
      %v546 = vshrl.u32 %v545, 4
      %v547 = vand.u32 %v545, 15
      %v548 = vsub.s32 0, %v547
      %v549 = vsel %vm543, %v548, %v547
      %vm550 = vcmp.lt.s32.totalorder %v287, 0
      %v551 = vsub.s32 0, %v287
      %v552 = vsel %vm550, %v551, %v287
      %v553 = vshrl.u32 %v552, 4
      %v554 = vand.u32 %v552, 15
      %v555 = vsub.s32 0, %v554
      %v556 = vsel %vm550, %v555, %v554
      %vm557 = vcmp.lt.s32.totalorder %v288, 0
      %v558 = vsub.s32 0, %v288
      %v559 = vsel %vm557, %v558, %v288
      %v560 = vshrl.u32 %v559, 4
      %v561 = vand.u32 %v559, 15
      %v562 = vsub.s32 0, %v561
      %v563 = vsel %vm557, %v562, %v561
      %vm564 = vcmp.lt.s32.totalorder %v289, 0
      %v565 = vsub.s32 0, %v289
      %v566 = vsel %vm564, %v565, %v289
      %v567 = vshrl.u32 %v566, 4
      %v568 = vand.u32 %v566, 15
      %v569 = vsub.s32 0, %v568
      %v570 = vsel %vm564, %v569, %v568
      %vm571 = vcmp.lt.s32.totalorder %v290, 0
      %v572 = vsub.s32 0, %v290
      %v573 = vsel %vm571, %v572, %v290
      %v574 = vshrl.u32 %v573, 4
      %v575 = vand.u32 %v573, 15
      %v576 = vsub.s32 0, %v575
      %v577 = vsel %vm571, %v576, %v575
      %vm578 = vcmp.ne.s32.totalorder %v528, 0
      %vm579 = vcmp.ne.s32.totalorder %v535, 0
      %vm580 = vcmp.ne.s32.totalorder %v542, 0
      %vm581 = vcmp.ne.s32.totalorder %v549, 0
      %vm582 = vcmp.ne.s32.totalorder %v556, 0
      %vm583 = vcmp.ne.s32.totalorder %v563, 0
      %vm584 = vcmp.ne.s32.totalorder %v570, 0
      %vm585 = vcmp.ne.s32.totalorder %v577, 0
      %vm586 = vcmp.lt.s32.totalorder %v528, 0
      %vm587 = vcmp.lt.s32.totalorder %v535, 0
      %vm588 = vcmp.lt.s32.totalorder %v542, 0
      %vm589 = vcmp.lt.s32.totalorder %v549, 0
      %vm590 = vcmp.lt.s32.totalorder %v556, 0
      %vm591 = vcmp.lt.s32.totalorder %v563, 0
      %vm592 = vcmp.lt.s32.totalorder %v570, 0
      %vm593 = vcmp.lt.s32.totalorder %v577, 0
      %vm594 = vmand %vm586, %vm578
      %vm595 = vmand %vm587, %vm579
      %vm596 = vmand %vm588, %vm580
      %vm597 = vmand %vm589, %vm581
      %vm598 = vmand %vm590, %vm582
      %vm599 = vmand %vm591, %vm583
      %vm600 = vmand %vm592, %vm584
      %vm601 = vmand %vm593, %vm585
      %v602 = vadd.s32 %v528, 16
      %v603 = vadd.s32 %v535, 16
      %v604 = vadd.s32 %v542, 16
      %v605 = vadd.s32 %v549, 16
      %v606 = vadd.s32 %v556, 16
      %v607 = vadd.s32 %v563, 16
      %v608 = vadd.s32 %v570, 16
      %v609 = vadd.s32 %v577, 16
      %v610 = vsel %vm594, %v602, %v528
      %v611 = vsel %vm595, %v603, %v535
      %v612 = vsel %vm596, %v604, %v542
      %v613 = vsel %vm597, %v605, %v549
      %v614 = vsel %vm598, %v606, %v556
      %v615 = vsel %vm599, %v607, %v563
      %v616 = vsel %vm600, %v608, %v570
      %v617 = vsel %vm601, %v609, %v577
      %v618 = vld [vmem:[#allocation2] sm:$0xff]
      %v619 = vld [vmem:[#allocation2 + $0x8] sm:$0xff]
      %v620 = vld [vmem:[#allocation2 + $0x10] sm:$0xff]
      %v621 = vld [vmem:[#allocation2 + $0x18] sm:$0xff]
      %v622 = vld [vmem:[#allocation2 + $0x20] sm:$0xff]
      %v623 = vld [vmem:[#allocation2 + $0x28] sm:$0xff]
      %v624 = vld [vmem:[#allocation2 + $0x30] sm:$0xff]
      %v625 = vld [vmem:[#allocation2 + $0x38] sm:$0xff]
      %v626 = vadd.s32 %v610, 4294967294
      %v627 = vadd.s32 %v611, 4294967294
      %v628 = vadd.s32 %v612, 4294967294
      %v629 = vadd.s32 %v613, 4294967294
      %v630 = vadd.s32 %v614, 4294967294
      %v631 = vadd.s32 %v615, 4294967294
      %v632 = vadd.s32 %v616, 4294967294
      %v633 = vadd.s32 %v617, 4294967294
      %vm634 = vcmp.ge.s32.totalorder %v626, 0
      %vm635 = vcmp.ge.s32.totalorder %v627, 0
      %vm636 = vcmp.ge.s32.totalorder %v628, 0
      %vm637 = vcmp.ge.s32.totalorder %v629, 0
      %vm638 = vcmp.ge.s32.totalorder %v630, 0
      %vm639 = vcmp.ge.s32.totalorder %v631, 0
      %vm640 = vcmp.ge.s32.totalorder %v632, 0
      %vm641 = vcmp.ge.s32.totalorder %v633, 0
      %vm642 = vcmp.lt.s32.totalorder %v626, 16
      %vm643 = vcmp.lt.s32.totalorder %v627, 16
      %vm644 = vcmp.lt.s32.totalorder %v628, 16
      %vm645 = vcmp.lt.s32.totalorder %v629, 16
      %vm646 = vcmp.lt.s32.totalorder %v630, 16
      %vm647 = vcmp.lt.s32.totalorder %v631, 16
      %vm648 = vcmp.lt.s32.totalorder %v632, 16
      %vm649 = vcmp.lt.s32.totalorder %v633, 16
      %vm650 = vmand %vm634, %vm642
      %vm651 = vmand %vm635, %vm643
      %vm652 = vmand %vm636, %vm644
      %vm653 = vmand %vm637, %vm645
      %vm654 = vmand %vm638, %vm646
      %vm655 = vmand %vm639, %vm647
      %vm656 = vmand %vm640, %vm648
      %vm657 = vmand %vm641, %vm649
      %v658 = vsel %vm650, 1, 0
      %v659 = vsel %vm651, 1, 0
      %v660 = vsel %vm652, 1, 0
      %v661 = vsel %vm653, 1, 0
      %v662 = vsel %vm654, 1, 0
      %v663 = vsel %vm655, 1, 0
      %v664 = vsel %vm656, 1, 0
      %v665 = vsel %vm657, 1, 0
      %vm666 = vcmp.eq.s32.totalorder %v658, 1
      %vm667 = vcmp.eq.s32.totalorder %v659, 1
      %vm668 = vcmp.eq.s32.totalorder %v660, 1
      %vm669 = vcmp.eq.s32.totalorder %v661, 1
      %vm670 = vcmp.eq.s32.totalorder %v662, 1
      %vm671 = vcmp.eq.s32.totalorder %v663, 1
      %vm672 = vcmp.eq.s32.totalorder %v664, 1
      %vm673 = vcmp.eq.s32.totalorder %v665, 1
      %v674 = vsel %vm666, %v618, 0.0
      %v675 = vsel %vm667, %v619, 0.0
      %v676 = vsel %vm668, %v620, 0.0
      %v677 = vsel %vm669, %v621, 0.0
      %v678 = vsel %vm670, %v622, 0.0
      %v679 = vsel %vm671, %v623, 0.0
      %v680 = vsel %vm672, %v624, 0.0
      %v681 = vsel %vm673, %v625, 0.0
      %v682 = vld [vmem:[%s1] sm:$0xf]
      %v683 = vld [vmem:[#allocation2 + $0x1] sm:$0xff]
      %v684 = vld [vmem:[#allocation2 + $0x9] sm:$0xff]
      %v685 = vld [vmem:[#allocation2 + $0x11] sm:$0xff]
      %v686 = vld [vmem:[#allocation2 + $0x19] sm:$0xff]
      %v687 = vld [vmem:[#allocation2 + $0x21] sm:$0xff]
      %v688 = vld [vmem:[#allocation2 + $0x29] sm:$0xff]
      %v689 = vld [vmem:[#allocation2 + $0x31] sm:$0xff]
      %v690 = vld [vmem:[#allocation2 + $0x39] sm:$0xff]
      %v691 = vadd.s32 %v610, 4294967295
      %v692 = vadd.s32 %v611, 4294967295
      %v693 = vadd.s32 %v612, 4294967295
      %v694 = vadd.s32 %v613, 4294967295
      %v695 = vadd.s32 %v614, 4294967295
      %v696 = vadd.s32 %v615, 4294967295
      %v697 = vadd.s32 %v616, 4294967295
      %v698 = vadd.s32 %v617, 4294967295
      %vm699 = vcmp.ge.s32.totalorder %v691, 0
      %vm700 = vcmp.ge.s32.totalorder %v692, 0
      %vm701 = vcmp.ge.s32.totalorder %v693, 0
      %vm702 = vcmp.ge.s32.totalorder %v694, 0
      %vm703 = vcmp.ge.s32.totalorder %v695, 0
      %vm704 = vcmp.ge.s32.totalorder %v696, 0
      %vm705 = vcmp.ge.s32.totalorder %v697, 0
      %vm706 = vcmp.ge.s32.totalorder %v698, 0
      %vm707 = vcmp.lt.s32.totalorder %v691, 16
      %vm708 = vcmp.lt.s32.totalorder %v692, 16
      %vm709 = vcmp.lt.s32.totalorder %v693, 16
      %vm710 = vcmp.lt.s32.totalorder %v694, 16
      %vm711 = vcmp.lt.s32.totalorder %v695, 16
      %vm712 = vcmp.lt.s32.totalorder %v696, 16
      %vm713 = vcmp.lt.s32.totalorder %v697, 16
      %vm714 = vcmp.lt.s32.totalorder %v698, 16
      %vm715 = vmand %vm699, %vm707
      %vm716 = vmand %vm700, %vm708
      %vm717 = vmand %vm701, %vm709
      %vm718 = vmand %vm702, %vm710
      %vm719 = vmand %vm703, %vm711
      %vm720 = vmand %vm704, %vm712
      %vm721 = vmand %vm705, %vm713
      %vm722 = vmand %vm706, %vm714
      %v723 = vsel %vm715, 1, 0
      %v724 = vsel %vm716, 1, 0
      %v725 = vsel %vm717, 1, 0
      %v726 = vsel %vm718, 1, 0
      %v727 = vsel %vm719, 1, 0
      %v728 = vsel %vm720, 1, 0
      %v729 = vsel %vm721, 1, 0
      %v730 = vsel %vm722, 1, 0
      %vm731 = vcmp.eq.s32.totalorder %v723, 1
      %vm732 = vcmp.eq.s32.totalorder %v724, 1
      %vm733 = vcmp.eq.s32.totalorder %v725, 1
      %vm734 = vcmp.eq.s32.totalorder %v726, 1
      %vm735 = vcmp.eq.s32.totalorder %v727, 1
      %vm736 = vcmp.eq.s32.totalorder %v728, 1
      %vm737 = vcmp.eq.s32.totalorder %v729, 1
      %vm738 = vcmp.eq.s32.totalorder %v730, 1
      %v739 = vsel %vm731, %v683, 0.0
      %v740 = vsel %vm732, %v684, 0.0
      %v741 = vsel %vm733, %v685, 0.0
      %v742 = vsel %vm734, %v686, 0.0
      %v743 = vsel %vm735, %v687, 0.0
      %v744 = vsel %vm736, %v688, 0.0
      %v745 = vsel %vm737, %v689, 0.0
      %v746 = vsel %vm738, %v690, 0.0
      %s747 = scalar_lea.vmem %s1, 4
      %v748 = vld [vmem:[%s747] sm:$0xf]
      %v750 = vsel %vm503, %v739, 0
      %v753 = vsel %vm503, %v740, 0
      %v756 = vsel %vm503, %v741, 0
      %v759 = vsel %vm503, %v742, 0
      %v762 = vsel %vm503, %v743, 0
      %v765 = vsel %vm503, %v744, 0
      %v768 = vsel %vm503, %v745, 0
      %v771 = vsel %vm503, %v746, 0
      %vm773 = vcmask 1043456
      %v775 = vsel %vm773, %v748, 0
      %777 = vmatprep.subr.mxu0 0.0
      %778 = vmatpush1.msra.mxu0 0.0
      %779 = vmatprep.subr.mxu0 0.0
      %780 = vmatpush1.msra.mxu0 0.0
      %781 = vmatprep.subr.mxu0 0.0
      %782 = vmatpush1.msra.mxu0 0.0
      %783 = vmatprep.subr.mxu0 0.0
      %784 = vmatpush1.msra.mxu0 0.0
      %785 = vmatprep.subr.mxu0 0.0
      %786 = vmatpush1.msra.mxu0 0.0
      %787 = vmatprep.subr.mxu0 0.0
      %788 = vmatpush1.msra.mxu0 0.0
      %789 = vmatprep.subr.mxu0 0.0
      %790 = vmatpush1.msra.mxu0 0.0
      %791 = vmatprep.subr.mxu0 0.0
      %792 = vmatpush1.msra.mxu0 0.0
      %793 = vmatprep.subr.mxu0 0.0
      %794 = vmatpush1.msra.mxu0 0.0
      %795 = vmatprep.subr.mxu0 0.0
      %796 = vmatpush1.msra.mxu0 0.0
      %797 = vmatprep.subr.mxu0 0.0
      %798 = vmatpush1.msra.mxu0 0.0
      %799 = vmatprep.subr.mxu0 0.0
      %800 = vmatpush1.msra.mxu0 0.0
      %801 = vmatprep.subr.mxu0 0.0
      %802 = vmatpush1.msra.mxu0 0.0
      %803 = vmatprep.subr.mxu0 0.0
      %804 = vmatpush1.msra.mxu0 0.0
      %805 = vmatprep.subr.mxu0 0.0
      %806 = vmatpush1.msra.mxu0 0.0
      %807 = vmatprep.subr.mxu0 0.0
      %808 = vmatpush1.msra.mxu0 %v775
      %809 = vmatprep.subr.mxu0 0.0
      %810 = vmatpush2.msra.mxu0 0.0
      %811 = vmatprep.subr.mxu0 0.0
      %812 = vmatpush2.msra.mxu0 0.0
      %813 = vmatprep.subr.mxu0 0.0
      %814 = vmatpush2.msra.mxu0 0.0
      %815 = vmatprep.subr.mxu0 0.0
      %816 = vmatpush2.msra.mxu0 0.0
      %817 = vmatprep.subr.mxu0 0.0
      %818 = vmatpush2.msra.mxu0 0.0
      %819 = vmatprep.subr.mxu0 0.0
      %820 = vmatpush2.msra.mxu0 0.0
      %821 = vmatprep.subr.mxu0 0.0
      %822 = vmatpush2.msra.mxu0 0.0
      %823 = vmatprep.subr.mxu0 0.0
      %824 = vmatpush2.msra.mxu0 0.0
      %825 = vmatprep.subr.mxu0 0.0
      %826 = vmatpush2.msra.mxu0 0.0
      %827 = vmatprep.subr.mxu0 0.0
      %828 = vmatpush2.msra.mxu0 0.0
      %829 = vmatprep.subr.mxu0 0.0
      %830 = vmatpush2.msra.mxu0 0.0
      %831 = vmatprep.subr.mxu0 0.0
      %832 = vmatpush2.msra.mxu0 0.0
      %833 = vmatprep.subr.mxu0 0.0
      %834 = vmatpush2.msra.mxu0 0.0
      %835 = vmatprep.subr.mxu0 0.0
      %836 = vmatpush2.msra.mxu0 0.0
      %837 = vmatprep.subr.mxu0 0.0
      %838 = vmatpush2.msra.mxu0 0.0
      %839 = vmatprep.subr.mxu0 0.0
      %840 = vmatpush2.msra.mxu0 0.0
      %841 = vmatprep.mubr.f32.mxu0 0.0
      %842 = vmatmul.mubr.f32.gmra.mxu0 %v750
      %v843 = vpop.f32.mrf.mxu0
      %v844 = vadd.f32 0.0, %v843
      %v845 = vpop.f32.mrf.mxu0
      %846 = vmatprep.mubr.f32.mxu0 0.0
      %847 = vmatmul.mubr.f32.gmra.mxu0 %v753
      %v848 = vpop.f32.mrf.mxu0
      %v849 = vadd.f32 0.0, %v848
      %v850 = vpop.f32.mrf.mxu0
      %851 = vmatprep.mubr.f32.mxu0 0.0
      %852 = vmatmul.mubr.f32.gmra.mxu0 %v756
      %v853 = vpop.f32.mrf.mxu0
      %v854 = vadd.f32 0.0, %v853
      %v855 = vpop.f32.mrf.mxu0
      %856 = vmatprep.mubr.f32.mxu0 0.0
      %857 = vmatmul.mubr.f32.gmra.mxu0 %v759
      %v858 = vpop.f32.mrf.mxu0
      %v859 = vadd.f32 0.0, %v858
      %v860 = vpop.f32.mrf.mxu0
      %861 = vmatprep.mubr.f32.mxu0 0.0
      %862 = vmatmul.mubr.f32.gmra.mxu0 %v762
      %v863 = vpop.f32.mrf.mxu0
      %v864 = vadd.f32 0.0, %v863
      %v865 = vpop.f32.mrf.mxu0
      %866 = vmatprep.mubr.f32.mxu0 0.0
      %867 = vmatmul.mubr.f32.gmra.mxu0 %v765
      %v868 = vpop.f32.mrf.mxu0
      %v869 = vadd.f32 0.0, %v868
      %v870 = vpop.f32.mrf.mxu0
      %871 = vmatprep.mubr.f32.mxu0 0.0
      %872 = vmatmul.mubr.f32.gmra.mxu0 %v768
      %v873 = vpop.f32.mrf.mxu0
      %v874 = vadd.f32 0.0, %v873
      %v875 = vpop.f32.mrf.mxu0
      %876 = vmatprep.mubr.f32.mxu0 0.0
      %877 = vmatmul.mubr.f32.gmra.mxu0 %v771
      %v878 = vpop.f32.mrf.mxu0
      %v879 = vadd.f32 0.0, %v878
      %v880 = vpop.f32.mrf.mxu0
      %881 = vdwg.mxu0
      %v883 = vsel %vm503, %v674, 0
      %v886 = vsel %vm503, %v675, 0
      %v889 = vsel %vm503, %v676, 0
      %v892 = vsel %vm503, %v677, 0
      %v895 = vsel %vm503, %v678, 0
      %v898 = vsel %vm503, %v679, 0
      %v901 = vsel %vm503, %v680, 0
      %v904 = vsel %vm503, %v681, 0
      %v907 = vsel %vm773, %v682, 0
      %909 = vmatprep.subr.mxu0 0.0
      %910 = vmatpush1.msra.mxu0 0.0
      %911 = vmatprep.subr.mxu0 0.0
      %912 = vmatpush1.msra.mxu0 0.0
      %913 = vmatprep.subr.mxu0 0.0
      %914 = vmatpush1.msra.mxu0 0.0
      %915 = vmatprep.subr.mxu0 0.0
      %916 = vmatpush1.msra.mxu0 0.0
      %917 = vmatprep.subr.mxu0 0.0
      %918 = vmatpush1.msra.mxu0 0.0
      %919 = vmatprep.subr.mxu0 0.0
      %920 = vmatpush1.msra.mxu0 0.0
      %921 = vmatprep.subr.mxu0 0.0
      %922 = vmatpush1.msra.mxu0 0.0
      %923 = vmatprep.subr.mxu0 0.0
      %924 = vmatpush1.msra.mxu0 0.0
      %925 = vmatprep.subr.mxu0 0.0
      %926 = vmatpush1.msra.mxu0 0.0
      %927 = vmatprep.subr.mxu0 0.0
      %928 = vmatpush1.msra.mxu0 0.0
      %929 = vmatprep.subr.mxu0 0.0
      %930 = vmatpush1.msra.mxu0 0.0
      %931 = vmatprep.subr.mxu0 0.0
      %932 = vmatpush1.msra.mxu0 0.0
      %933 = vmatprep.subr.mxu0 0.0
      %934 = vmatpush1.msra.mxu0 0.0
      %935 = vmatprep.subr.mxu0 0.0
      %936 = vmatpush1.msra.mxu0 0.0
      %937 = vmatprep.subr.mxu0 0.0
      %938 = vmatpush1.msra.mxu0 0.0
      %939 = vmatprep.subr.mxu0 0.0
      %940 = vmatpush1.msra.mxu0 %v907
      %941 = vmatprep.subr.mxu0 0.0
      %942 = vmatpush2.msra.mxu0 0.0
      %943 = vmatprep.subr.mxu0 0.0
      %944 = vmatpush2.msra.mxu0 0.0
      %945 = vmatprep.subr.mxu0 0.0
      %946 = vmatpush2.msra.mxu0 0.0
      %947 = vmatprep.subr.mxu0 0.0
      %948 = vmatpush2.msra.mxu0 0.0
      %949 = vmatprep.subr.mxu0 0.0
      %950 = vmatpush2.msra.mxu0 0.0
      %951 = vmatprep.subr.mxu0 0.0
      %952 = vmatpush2.msra.mxu0 0.0
      %953 = vmatprep.subr.mxu0 0.0
      %954 = vmatpush2.msra.mxu0 0.0
      %955 = vmatprep.subr.mxu0 0.0
      %956 = vmatpush2.msra.mxu0 0.0
      %957 = vmatprep.subr.mxu0 0.0
      %958 = vmatpush2.msra.mxu0 0.0
      %959 = vmatprep.subr.mxu0 0.0
      %960 = vmatpush2.msra.mxu0 0.0
      %961 = vmatprep.subr.mxu0 0.0
      %962 = vmatpush2.msra.mxu0 0.0
      %963 = vmatprep.subr.mxu0 0.0
      %964 = vmatpush2.msra.mxu0 0.0
      %965 = vmatprep.subr.mxu0 0.0
      %966 = vmatpush2.msra.mxu0 0.0
      %967 = vmatprep.subr.mxu0 0.0
      %968 = vmatpush2.msra.mxu0 0.0
      %969 = vmatprep.subr.mxu0 0.0
      %970 = vmatpush2.msra.mxu0 0.0
      %971 = vmatprep.subr.mxu0 0.0
      %972 = vmatpush2.msra.mxu0 0.0
      %973 = vmatprep.mubr.f32.mxu0 0.0
      %974 = vmatmul.mubr.f32.gmra.mxu0 %v883
      %v975 = vpop.f32.mrf.mxu0
      %v976 = vadd.f32 %v844, %v975
      %v977 = vpop.f32.mrf.mxu0
      %978 = vmatprep.mubr.f32.mxu0 0.0
      %979 = vmatmul.mubr.f32.gmra.mxu0 %v886
      %v980 = vpop.f32.mrf.mxu0
      %v981 = vadd.f32 %v849, %v980
      %v982 = vpop.f32.mrf.mxu0
      %983 = vmatprep.mubr.f32.mxu0 0.0
      %984 = vmatmul.mubr.f32.gmra.mxu0 %v889
      %v985 = vpop.f32.mrf.mxu0
      %v986 = vadd.f32 %v854, %v985
      %v987 = vpop.f32.mrf.mxu0
      %988 = vmatprep.mubr.f32.mxu0 0.0
      %989 = vmatmul.mubr.f32.gmra.mxu0 %v892
      %v990 = vpop.f32.mrf.mxu0
      %v991 = vadd.f32 %v859, %v990
      %v992 = vpop.f32.mrf.mxu0
      %993 = vmatprep.mubr.f32.mxu0 0.0
      %994 = vmatmul.mubr.f32.gmra.mxu0 %v895
      %v995 = vpop.f32.mrf.mxu0
      %v996 = vadd.f32 %v864, %v995
      %v997 = vpop.f32.mrf.mxu0
      %998 = vmatprep.mubr.f32.mxu0 0.0
      %999 = vmatmul.mubr.f32.gmra.mxu0 %v898
      %v1000 = vpop.f32.mrf.mxu0
      %v1001 = vadd.f32 %v869, %v1000
      %v1002 = vpop.f32.mrf.mxu0
      %1003 = vmatprep.mubr.f32.mxu0 0.0
      %1004 = vmatmul.mubr.f32.gmra.mxu0 %v901
      %v1005 = vpop.f32.mrf.mxu0
      %v1006 = vadd.f32 %v874, %v1005
      %v1007 = vpop.f32.mrf.mxu0
      %1008 = vmatprep.mubr.f32.mxu0 0.0
      %1009 = vmatmul.mubr.f32.gmra.mxu0 %v904
      %v1010 = vpop.f32.mrf.mxu0
      %v1011 = vadd.f32 %v879, %v1010
      %v1012 = vpop.f32.mrf.mxu0
      %1013 = vdwg.mxu0
      %v1014 = vld [vmem:[#allocation2 + $0x2] sm:$0xff]
      %v1015 = vld [vmem:[#allocation2 + $0xa] sm:$0xff]
      %v1016 = vld [vmem:[#allocation2 + $0x12] sm:$0xff]
      %v1017 = vld [vmem:[#allocation2 + $0x1a] sm:$0xff]
      %v1018 = vld [vmem:[#allocation2 + $0x22] sm:$0xff]
      %v1019 = vld [vmem:[#allocation2 + $0x2a] sm:$0xff]
      %v1020 = vld [vmem:[#allocation2 + $0x32] sm:$0xff]
      %v1021 = vld [vmem:[#allocation2 + $0x3a] sm:$0xff]
      %s1022 = scalar_lea.vmem %s1, 8
      %v1023 = vld [vmem:[%s1022] sm:$0xf]
      %v1025 = vsel %vm503, %v1014, 0
      %v1028 = vsel %vm503, %v1015, 0
      %v1031 = vsel %vm503, %v1016, 0
      %v1034 = vsel %vm503, %v1017, 0
      %v1037 = vsel %vm503, %v1018, 0
      %v1040 = vsel %vm503, %v1019, 0
      %v1043 = vsel %vm503, %v1020, 0
      %v1046 = vsel %vm503, %v1021, 0
      %v1049 = vsel %vm773, %v1023, 0
      %1051 = vmatprep.subr.mxu0 0.0
      %1052 = vmatpush1.msra.mxu0 0.0
      %1053 = vmatprep.subr.mxu0 0.0
      %1054 = vmatpush1.msra.mxu0 0.0
      %1055 = vmatprep.subr.mxu0 0.0
      %1056 = vmatpush1.msra.mxu0 0.0
      %1057 = vmatprep.subr.mxu0 0.0
      %1058 = vmatpush1.msra.mxu0 0.0
      %1059 = vmatprep.subr.mxu0 0.0
      %1060 = vmatpush1.msra.mxu0 0.0
      %1061 = vmatprep.subr.mxu0 0.0
      %1062 = vmatpush1.msra.mxu0 0.0
      %1063 = vmatprep.subr.mxu0 0.0
      %1064 = vmatpush1.msra.mxu0 0.0
      %1065 = vmatprep.subr.mxu0 0.0
      %1066 = vmatpush1.msra.mxu0 0.0
      %1067 = vmatprep.subr.mxu0 0.0
      %1068 = vmatpush1.msra.mxu0 0.0
      %1069 = vmatprep.subr.mxu0 0.0
      %1070 = vmatpush1.msra.mxu0 0.0
      %1071 = vmatprep.subr.mxu0 0.0
      %1072 = vmatpush1.msra.mxu0 0.0
      %1073 = vmatprep.subr.mxu0 0.0
      %1074 = vmatpush1.msra.mxu0 0.0
      %1075 = vmatprep.subr.mxu0 0.0
      %1076 = vmatpush1.msra.mxu0 0.0
      %1077 = vmatprep.subr.mxu0 0.0
      %1078 = vmatpush1.msra.mxu0 0.0
      %1079 = vmatprep.subr.mxu0 0.0
      %1080 = vmatpush1.msra.mxu0 0.0
      %1081 = vmatprep.subr.mxu0 0.0
      %1082 = vmatpush1.msra.mxu0 %v1049
      %1083 = vmatprep.subr.mxu0 0.0
      %1084 = vmatpush2.msra.mxu0 0.0
      %1085 = vmatprep.subr.mxu0 0.0
      %1086 = vmatpush2.msra.mxu0 0.0
      %1087 = vmatprep.subr.mxu0 0.0
      %1088 = vmatpush2.msra.mxu0 0.0
      %1089 = vmatprep.subr.mxu0 0.0
      %1090 = vmatpush2.msra.mxu0 0.0
      %1091 = vmatprep.subr.mxu0 0.0
      %1092 = vmatpush2.msra.mxu0 0.0
      %1093 = vmatprep.subr.mxu0 0.0
      %1094 = vmatpush2.msra.mxu0 0.0
      %1095 = vmatprep.subr.mxu0 0.0
      %1096 = vmatpush2.msra.mxu0 0.0
      %1097 = vmatprep.subr.mxu0 0.0
      %1098 = vmatpush2.msra.mxu0 0.0
      %1099 = vmatprep.subr.mxu0 0.0
      %1100 = vmatpush2.msra.mxu0 0.0
      %1101 = vmatprep.subr.mxu0 0.0
      %1102 = vmatpush2.msra.mxu0 0.0
      %1103 = vmatprep.subr.mxu0 0.0
      %1104 = vmatpush2.msra.mxu0 0.0
      %1105 = vmatprep.subr.mxu0 0.0
      %1106 = vmatpush2.msra.mxu0 0.0
      %1107 = vmatprep.subr.mxu0 0.0
      %1108 = vmatpush2.msra.mxu0 0.0
      %1109 = vmatprep.subr.mxu0 0.0
      %1110 = vmatpush2.msra.mxu0 0.0
      %1111 = vmatprep.subr.mxu0 0.0
      %1112 = vmatpush2.msra.mxu0 0.0
      %1113 = vmatprep.subr.mxu0 0.0
      %1114 = vmatpush2.msra.mxu0 0.0
      %1115 = vmatprep.mubr.f32.mxu0 0.0
      %1116 = vmatmul.mubr.f32.gmra.mxu0 %v1025
      %v1117 = vpop.f32.mrf.mxu0
      %v1118 = vadd.f32 0.0, %v1117
      %v1119 = vpop.f32.mrf.mxu0
      %1120 = vmatprep.mubr.f32.mxu0 0.0
      %1121 = vmatmul.mubr.f32.gmra.mxu0 %v1028
      %v1122 = vpop.f32.mrf.mxu0
      %v1123 = vadd.f32 0.0, %v1122
      %v1124 = vpop.f32.mrf.mxu0
      %1125 = vmatprep.mubr.f32.mxu0 0.0
      %1126 = vmatmul.mubr.f32.gmra.mxu0 %v1031
      %v1127 = vpop.f32.mrf.mxu0
      %v1128 = vadd.f32 0.0, %v1127
      %v1129 = vpop.f32.mrf.mxu0
      %1130 = vmatprep.mubr.f32.mxu0 0.0
      %1131 = vmatmul.mubr.f32.gmra.mxu0 %v1034
      %v1132 = vpop.f32.mrf.mxu0
      %v1133 = vadd.f32 0.0, %v1132
      %v1134 = vpop.f32.mrf.mxu0
      %1135 = vmatprep.mubr.f32.mxu0 0.0
      %1136 = vmatmul.mubr.f32.gmra.mxu0 %v1037
      %v1137 = vpop.f32.mrf.mxu0
      %v1138 = vadd.f32 0.0, %v1137
      %v1139 = vpop.f32.mrf.mxu0
      %1140 = vmatprep.mubr.f32.mxu0 0.0
      %1141 = vmatmul.mubr.f32.gmra.mxu0 %v1040
      %v1142 = vpop.f32.mrf.mxu0
      %v1143 = vadd.f32 0.0, %v1142
      %v1144 = vpop.f32.mrf.mxu0
      %1145 = vmatprep.mubr.f32.mxu0 0.0
      %1146 = vmatmul.mubr.f32.gmra.mxu0 %v1043
      %v1147 = vpop.f32.mrf.mxu0
      %v1148 = vadd.f32 0.0, %v1147
      %v1149 = vpop.f32.mrf.mxu0
      %1150 = vmatprep.mubr.f32.mxu0 0.0
      %1151 = vmatmul.mubr.f32.gmra.mxu0 %v1046
      %v1152 = vpop.f32.mrf.mxu0
      %v1153 = vadd.f32 0.0, %v1152
      %v1154 = vpop.f32.mrf.mxu0
      %1155 = vdwg.mxu0
      %v1156 = vadd.f32 %v976, %v1118
      %v1157 = vadd.f32 %v981, %v1123
      %v1158 = vadd.f32 %v986, %v1128
      %v1159 = vadd.f32 %v991, %v1133
      %v1160 = vadd.f32 %v996, %v1138
      %v1161 = vadd.f32 %v1001, %v1143
      %v1162 = vadd.f32 %v1006, %v1148
      %v1163 = vadd.f32 %v1011, %v1153
      %v1164 = vld [vmem:[#allocation2 + $0x3] sm:$0xff]
      %v1165 = vld [vmem:[#allocation2 + $0xb] sm:$0xff]
      %v1166 = vld [vmem:[#allocation2 + $0x13] sm:$0xff]
      %v1167 = vld [vmem:[#allocation2 + $0x1b] sm:$0xff]
      %v1168 = vld [vmem:[#allocation2 + $0x23] sm:$0xff]
      %v1169 = vld [vmem:[#allocation2 + $0x2b] sm:$0xff]
      %v1170 = vld [vmem:[#allocation2 + $0x33] sm:$0xff]
      %v1171 = vld [vmem:[#allocation2 + $0x3b] sm:$0xff]
      %v1172 = vadd.s32 %v610, 1
      %v1173 = vadd.s32 %v611, 1
      %v1174 = vadd.s32 %v612, 1
      %v1175 = vadd.s32 %v613, 1
      %v1176 = vadd.s32 %v614, 1
      %v1177 = vadd.s32 %v615, 1
      %v1178 = vadd.s32 %v616, 1
      %v1179 = vadd.s32 %v617, 1
      %vm1180 = vcmp.ge.s32.totalorder %v1172, 0
      %vm1181 = vcmp.ge.s32.totalorder %v1173, 0
      %vm1182 = vcmp.ge.s32.totalorder %v1174, 0
      %vm1183 = vcmp.ge.s32.totalorder %v1175, 0
      %vm1184 = vcmp.ge.s32.totalorder %v1176, 0
      %vm1185 = vcmp.ge.s32.totalorder %v1177, 0
      %vm1186 = vcmp.ge.s32.totalorder %v1178, 0
      %vm1187 = vcmp.ge.s32.totalorder %v1179, 0
      %vm1188 = vcmp.lt.s32.totalorder %v1172, 16
      %vm1189 = vcmp.lt.s32.totalorder %v1173, 16
      %vm1190 = vcmp.lt.s32.totalorder %v1174, 16
      %vm1191 = vcmp.lt.s32.totalorder %v1175, 16
      %vm1192 = vcmp.lt.s32.totalorder %v1176, 16
      %vm1193 = vcmp.lt.s32.totalorder %v1177, 16
      %vm1194 = vcmp.lt.s32.totalorder %v1178, 16
      %vm1195 = vcmp.lt.s32.totalorder %v1179, 16
      %vm1196 = vmand %vm1180, %vm1188
      %vm1197 = vmand %vm1181, %vm1189
      %vm1198 = vmand %vm1182, %vm1190
      %vm1199 = vmand %vm1183, %vm1191
      %vm1200 = vmand %vm1184, %vm1192
      %vm1201 = vmand %vm1185, %vm1193
      %vm1202 = vmand %vm1186, %vm1194
      %vm1203 = vmand %vm1187, %vm1195
      %v1204 = vsel %vm1196, 1, 0
      %v1205 = vsel %vm1197, 1, 0
      %v1206 = vsel %vm1198, 1, 0
      %v1207 = vsel %vm1199, 1, 0
      %v1208 = vsel %vm1200, 1, 0
      %v1209 = vsel %vm1201, 1, 0
      %v1210 = vsel %vm1202, 1, 0
      %v1211 = vsel %vm1203, 1, 0
      %vm1212 = vcmp.eq.s32.totalorder %v1204, 1
      %vm1213 = vcmp.eq.s32.totalorder %v1205, 1
      %vm1214 = vcmp.eq.s32.totalorder %v1206, 1
      %vm1215 = vcmp.eq.s32.totalorder %v1207, 1
      %vm1216 = vcmp.eq.s32.totalorder %v1208, 1
      %vm1217 = vcmp.eq.s32.totalorder %v1209, 1
      %vm1218 = vcmp.eq.s32.totalorder %v1210, 1
      %vm1219 = vcmp.eq.s32.totalorder %v1211, 1
      %v1220 = vsel %vm1212, %v1164, 0.0
      %v1221 = vsel %vm1213, %v1165, 0.0
      %v1222 = vsel %vm1214, %v1166, 0.0
      %v1223 = vsel %vm1215, %v1167, 0.0
      %v1224 = vsel %vm1216, %v1168, 0.0
      %v1225 = vsel %vm1217, %v1169, 0.0
      %v1226 = vsel %vm1218, %v1170, 0.0
      %v1227 = vsel %vm1219, %v1171, 0.0
      %s1228 = scalar_lea.vmem %s1, 12
      %v1229 = vld [vmem:[%s1228] sm:$0xf]
      %v1231 = vsel %vm503, %v1220, 0
      %v1234 = vsel %vm503, %v1221, 0
      %v1237 = vsel %vm503, %v1222, 0
      %v1240 = vsel %vm503, %v1223, 0
      %v1243 = vsel %vm503, %v1224, 0
      %v1246 = vsel %vm503, %v1225, 0
      %v1249 = vsel %vm503, %v1226, 0
      %v1252 = vsel %vm503, %v1227, 0
      %v1255 = vsel %vm773, %v1229, 0
      %1257 = vmatprep.subr.mxu0 0.0
      %1258 = vmatpush1.msra.mxu0 0.0
      %1259 = vmatprep.subr.mxu0 0.0
      %1260 = vmatpush1.msra.mxu0 0.0
      %1261 = vmatprep.subr.mxu0 0.0
      %1262 = vmatpush1.msra.mxu0 0.0
      %1263 = vmatprep.subr.mxu0 0.0
      %1264 = vmatpush1.msra.mxu0 0.0
      %1265 = vmatprep.subr.mxu0 0.0
      %1266 = vmatpush1.msra.mxu0 0.0
      %1267 = vmatprep.subr.mxu0 0.0
      %1268 = vmatpush1.msra.mxu0 0.0
      %1269 = vmatprep.subr.mxu0 0.0
      %1270 = vmatpush1.msra.mxu0 0.0
      %1271 = vmatprep.subr.mxu0 0.0
      %1272 = vmatpush1.msra.mxu0 0.0
      %1273 = vmatprep.subr.mxu0 0.0
      %1274 = vmatpush1.msra.mxu0 0.0
      %1275 = vmatprep.subr.mxu0 0.0
      %1276 = vmatpush1.msra.mxu0 0.0
      %1277 = vmatprep.subr.mxu0 0.0
      %1278 = vmatpush1.msra.mxu0 0.0
      %1279 = vmatprep.subr.mxu0 0.0
      %1280 = vmatpush1.msra.mxu0 0.0
      %1281 = vmatprep.subr.mxu0 0.0
      %1282 = vmatpush1.msra.mxu0 0.0
      %1283 = vmatprep.subr.mxu0 0.0
      %1284 = vmatpush1.msra.mxu0 0.0
      %1285 = vmatprep.subr.mxu0 0.0
      %1286 = vmatpush1.msra.mxu0 0.0
      %1287 = vmatprep.subr.mxu0 0.0
      %1288 = vmatpush1.msra.mxu0 %v1255
      %1289 = vmatprep.subr.mxu0 0.0
      %1290 = vmatpush2.msra.mxu0 0.0
      %1291 = vmatprep.subr.mxu0 0.0
      %1292 = vmatpush2.msra.mxu0 0.0
      %1293 = vmatprep.subr.mxu0 0.0
      %1294 = vmatpush2.msra.mxu0 0.0
      %1295 = vmatprep.subr.mxu0 0.0
      %1296 = vmatpush2.msra.mxu0 0.0
      %1297 = vmatprep.subr.mxu0 0.0
      %1298 = vmatpush2.msra.mxu0 0.0
      %1299 = vmatprep.subr.mxu0 0.0
      %1300 = vmatpush2.msra.mxu0 0.0
      %1301 = vmatprep.subr.mxu0 0.0
      %1302 = vmatpush2.msra.mxu0 0.0
      %1303 = vmatprep.subr.mxu0 0.0
      %1304 = vmatpush2.msra.mxu0 0.0
      %1305 = vmatprep.subr.mxu0 0.0
      %1306 = vmatpush2.msra.mxu0 0.0
      %1307 = vmatprep.subr.mxu0 0.0
      %1308 = vmatpush2.msra.mxu0 0.0
      %1309 = vmatprep.subr.mxu0 0.0
      %1310 = vmatpush2.msra.mxu0 0.0
      %1311 = vmatprep.subr.mxu0 0.0
      %1312 = vmatpush2.msra.mxu0 0.0
      %1313 = vmatprep.subr.mxu0 0.0
      %1314 = vmatpush2.msra.mxu0 0.0
      %1315 = vmatprep.subr.mxu0 0.0
      %1316 = vmatpush2.msra.mxu0 0.0
      %1317 = vmatprep.subr.mxu0 0.0
      %1318 = vmatpush2.msra.mxu0 0.0
      %1319 = vmatprep.subr.mxu0 0.0
      %1320 = vmatpush2.msra.mxu0 0.0
      %1321 = vmatprep.mubr.f32.mxu0 0.0
      %1322 = vmatmul.mubr.f32.gmra.mxu0 %v1231
      %v1323 = vpop.f32.mrf.mxu0
      %v1324 = vadd.f32 0.0, %v1323
      %v1325 = vpop.f32.mrf.mxu0
      %1326 = vmatprep.mubr.f32.mxu0 0.0
      %1327 = vmatmul.mubr.f32.gmra.mxu0 %v1234
      %v1328 = vpop.f32.mrf.mxu0
      %v1329 = vadd.f32 0.0, %v1328
      %v1330 = vpop.f32.mrf.mxu0
      %1331 = vmatprep.mubr.f32.mxu0 0.0
      %1332 = vmatmul.mubr.f32.gmra.mxu0 %v1237
      %v1333 = vpop.f32.mrf.mxu0
      %v1334 = vadd.f32 0.0, %v1333
      %v1335 = vpop.f32.mrf.mxu0
      %1336 = vmatprep.mubr.f32.mxu0 0.0
      %1337 = vmatmul.mubr.f32.gmra.mxu0 %v1240
      %v1338 = vpop.f32.mrf.mxu0
      %v1339 = vadd.f32 0.0, %v1338
      %v1340 = vpop.f32.mrf.mxu0
      %1341 = vmatprep.mubr.f32.mxu0 0.0
      %1342 = vmatmul.mubr.f32.gmra.mxu0 %v1243
      %v1343 = vpop.f32.mrf.mxu0
      %v1344 = vadd.f32 0.0, %v1343
      %v1345 = vpop.f32.mrf.mxu0
      %1346 = vmatprep.mubr.f32.mxu0 0.0
      %1347 = vmatmul.mubr.f32.gmra.mxu0 %v1246
      %v1348 = vpop.f32.mrf.mxu0
      %v1349 = vadd.f32 0.0, %v1348
      %v1350 = vpop.f32.mrf.mxu0
      %1351 = vmatprep.mubr.f32.mxu0 0.0
      %1352 = vmatmul.mubr.f32.gmra.mxu0 %v1249
      %v1353 = vpop.f32.mrf.mxu0
      %v1354 = vadd.f32 0.0, %v1353
      %v1355 = vpop.f32.mrf.mxu0
      %1356 = vmatprep.mubr.f32.mxu0 0.0
      %1357 = vmatmul.mubr.f32.gmra.mxu0 %v1252
      %v1358 = vpop.f32.mrf.mxu0
      %v1359 = vadd.f32 0.0, %v1358
      %v1360 = vpop.f32.mrf.mxu0
      %1361 = vdwg.mxu0
      %v1362 = vadd.f32 %v1156, %v1324
      %v1363 = vadd.f32 %v1157, %v1329
      %v1364 = vadd.f32 %v1158, %v1334
      %v1365 = vadd.f32 %v1159, %v1339
      %v1366 = vadd.f32 %v1160, %v1344
      %v1367 = vadd.f32 %v1161, %v1349
      %v1368 = vadd.f32 %v1162, %v1354
      %v1369 = vadd.f32 %v1163, %v1359
      %v1370 = vld [vmem:[#allocation2 + $0x4] sm:$0xff]
      %v1371 = vld [vmem:[#allocation2 + $0xc] sm:$0xff]
      %v1372 = vld [vmem:[#allocation2 + $0x14] sm:$0xff]
      %v1373 = vld [vmem:[#allocation2 + $0x1c] sm:$0xff]
      %v1374 = vld [vmem:[#allocation2 + $0x24] sm:$0xff]
      %v1375 = vld [vmem:[#allocation2 + $0x2c] sm:$0xff]
      %v1376 = vld [vmem:[#allocation2 + $0x34] sm:$0xff]
      %v1377 = vld [vmem:[#allocation2 + $0x3c] sm:$0xff]
      %v1378 = vadd.s32 %v610, 2
      %v1379 = vadd.s32 %v611, 2
      %v1380 = vadd.s32 %v612, 2
      %v1381 = vadd.s32 %v613, 2
      %v1382 = vadd.s32 %v614, 2
      %v1383 = vadd.s32 %v615, 2
      %v1384 = vadd.s32 %v616, 2
      %v1385 = vadd.s32 %v617, 2
      %vm1386 = vcmp.ge.s32.totalorder %v1378, 0
      %vm1387 = vcmp.ge.s32.totalorder %v1379, 0
      %vm1388 = vcmp.ge.s32.totalorder %v1380, 0
      %vm1389 = vcmp.ge.s32.totalorder %v1381, 0
      %vm1390 = vcmp.ge.s32.totalorder %v1382, 0
      %vm1391 = vcmp.ge.s32.totalorder %v1383, 0
      %vm1392 = vcmp.ge.s32.totalorder %v1384, 0
      %vm1393 = vcmp.ge.s32.totalorder %v1385, 0
      %vm1394 = vcmp.lt.s32.totalorder %v1378, 16
      %vm1395 = vcmp.lt.s32.totalorder %v1379, 16
      %vm1396 = vcmp.lt.s32.totalorder %v1380, 16
      %vm1397 = vcmp.lt.s32.totalorder %v1381, 16
      %vm1398 = vcmp.lt.s32.totalorder %v1382, 16
      %vm1399 = vcmp.lt.s32.totalorder %v1383, 16
      %vm1400 = vcmp.lt.s32.totalorder %v1384, 16
      %vm1401 = vcmp.lt.s32.totalorder %v1385, 16
      %vm1402 = vmand %vm1386, %vm1394
      %vm1403 = vmand %vm1387, %vm1395
      %vm1404 = vmand %vm1388, %vm1396
      %vm1405 = vmand %vm1389, %vm1397
      %vm1406 = vmand %vm1390, %vm1398
      %vm1407 = vmand %vm1391, %vm1399
      %vm1408 = vmand %vm1392, %vm1400
      %vm1409 = vmand %vm1393, %vm1401
      %v1410 = vsel %vm1402, 1, 0
      %v1411 = vsel %vm1403, 1, 0
      %v1412 = vsel %vm1404, 1, 0
      %v1413 = vsel %vm1405, 1, 0
      %v1414 = vsel %vm1406, 1, 0
      %v1415 = vsel %vm1407, 1, 0
      %v1416 = vsel %vm1408, 1, 0
      %v1417 = vsel %vm1409, 1, 0
      %vm1418 = vcmp.eq.s32.totalorder %v1410, 1
      %vm1419 = vcmp.eq.s32.totalorder %v1411, 1
      %vm1420 = vcmp.eq.s32.totalorder %v1412, 1
      %vm1421 = vcmp.eq.s32.totalorder %v1413, 1
      %vm1422 = vcmp.eq.s32.totalorder %v1414, 1
      %vm1423 = vcmp.eq.s32.totalorder %v1415, 1
      %vm1424 = vcmp.eq.s32.totalorder %v1416, 1
      %vm1425 = vcmp.eq.s32.totalorder %v1417, 1
      %v1426 = vsel %vm1418, %v1370, 0.0
      %v1427 = vsel %vm1419, %v1371, 0.0
      %v1428 = vsel %vm1420, %v1372, 0.0
      %v1429 = vsel %vm1421, %v1373, 0.0
      %v1430 = vsel %vm1422, %v1374, 0.0
      %v1431 = vsel %vm1423, %v1375, 0.0
      %v1432 = vsel %vm1424, %v1376, 0.0
      %v1433 = vsel %vm1425, %v1377, 0.0
      %s1434 = scalar_lea.vmem %s1, 16
      %v1435 = vld [vmem:[%s1434] sm:$0xf]
      %v1437 = vsel %vm503, %v1426, 0
      %v1440 = vsel %vm503, %v1427, 0
      %v1443 = vsel %vm503, %v1428, 0
      %v1446 = vsel %vm503, %v1429, 0
      %v1449 = vsel %vm503, %v1430, 0
      %v1452 = vsel %vm503, %v1431, 0
      %v1455 = vsel %vm503, %v1432, 0
      %v1458 = vsel %vm503, %v1433, 0
      %v1461 = vsel %vm773, %v1435, 0
      %1463 = vmatprep.subr.mxu0 0.0
      %1464 = vmatpush1.msra.mxu0 0.0
      %1465 = vmatprep.subr.mxu0 0.0
      %1466 = vmatpush1.msra.mxu0 0.0
      %1467 = vmatprep.subr.mxu0 0.0
      %1468 = vmatpush1.msra.mxu0 0.0
      %1469 = vmatprep.subr.mxu0 0.0
      %1470 = vmatpush1.msra.mxu0 0.0
      %1471 = vmatprep.subr.mxu0 0.0
      %1472 = vmatpush1.msra.mxu0 0.0
      %1473 = vmatprep.subr.mxu0 0.0
      %1474 = vmatpush1.msra.mxu0 0.0
      %1475 = vmatprep.subr.mxu0 0.0
      %1476 = vmatpush1.msra.mxu0 0.0
      %1477 = vmatprep.subr.mxu0 0.0
      %1478 = vmatpush1.msra.mxu0 0.0
      %1479 = vmatprep.subr.mxu0 0.0
      %1480 = vmatpush1.msra.mxu0 0.0
      %1481 = vmatprep.subr.mxu0 0.0
      %1482 = vmatpush1.msra.mxu0 0.0
      %1483 = vmatprep.subr.mxu0 0.0
      %1484 = vmatpush1.msra.mxu0 0.0
      %1485 = vmatprep.subr.mxu0 0.0
      %1486 = vmatpush1.msra.mxu0 0.0
      %1487 = vmatprep.subr.mxu0 0.0
      %1488 = vmatpush1.msra.mxu0 0.0
      %1489 = vmatprep.subr.mxu0 0.0
      %1490 = vmatpush1.msra.mxu0 0.0
      %1491 = vmatprep.subr.mxu0 0.0
      %1492 = vmatpush1.msra.mxu0 0.0
      %1493 = vmatprep.subr.mxu0 0.0
      %1494 = vmatpush1.msra.mxu0 %v1461
      %1495 = vmatprep.subr.mxu0 0.0
      %1496 = vmatpush2.msra.mxu0 0.0
      %1497 = vmatprep.subr.mxu0 0.0
      %1498 = vmatpush2.msra.mxu0 0.0
      %1499 = vmatprep.subr.mxu0 0.0
      %1500 = vmatpush2.msra.mxu0 0.0
      %1501 = vmatprep.subr.mxu0 0.0
      %1502 = vmatpush2.msra.mxu0 0.0
      %1503 = vmatprep.subr.mxu0 0.0
      %1504 = vmatpush2.msra.mxu0 0.0
      %1505 = vmatprep.subr.mxu0 0.0
      %1506 = vmatpush2.msra.mxu0 0.0
      %1507 = vmatprep.subr.mxu0 0.0
      %1508 = vmatpush2.msra.mxu0 0.0
      %1509 = vmatprep.subr.mxu0 0.0
      %1510 = vmatpush2.msra.mxu0 0.0
      %1511 = vmatprep.subr.mxu0 0.0
      %1512 = vmatpush2.msra.mxu0 0.0
      %1513 = vmatprep.subr.mxu0 0.0
      %1514 = vmatpush2.msra.mxu0 0.0
      %1515 = vmatprep.subr.mxu0 0.0
      %1516 = vmatpush2.msra.mxu0 0.0
      %1517 = vmatprep.subr.mxu0 0.0
      %1518 = vmatpush2.msra.mxu0 0.0
      %1519 = vmatprep.subr.mxu0 0.0
      %1520 = vmatpush2.msra.mxu0 0.0
      %1521 = vmatprep.subr.mxu0 0.0
      %1522 = vmatpush2.msra.mxu0 0.0
      %1523 = vmatprep.subr.mxu0 0.0
      %1524 = vmatpush2.msra.mxu0 0.0
      %1525 = vmatprep.subr.mxu0 0.0
      %1526 = vmatpush2.msra.mxu0 0.0
      %1527 = vmatprep.mubr.f32.mxu0 0.0
      %1528 = vmatmul.mubr.f32.gmra.mxu0 %v1437
      %v1529 = vpop.f32.mrf.mxu0
      %v1530 = vadd.f32 0.0, %v1529
      %v1531 = vpop.f32.mrf.mxu0
      %1532 = vmatprep.mubr.f32.mxu0 0.0
      %1533 = vmatmul.mubr.f32.gmra.mxu0 %v1440
      %v1534 = vpop.f32.mrf.mxu0
      %v1535 = vadd.f32 0.0, %v1534
      %v1536 = vpop.f32.mrf.mxu0
      %1537 = vmatprep.mubr.f32.mxu0 0.0
      %1538 = vmatmul.mubr.f32.gmra.mxu0 %v1443
      %v1539 = vpop.f32.mrf.mxu0
      %v1540 = vadd.f32 0.0, %v1539
      %v1541 = vpop.f32.mrf.mxu0
      %1542 = vmatprep.mubr.f32.mxu0 0.0
      %1543 = vmatmul.mubr.f32.gmra.mxu0 %v1446
      %v1544 = vpop.f32.mrf.mxu0
      %v1545 = vadd.f32 0.0, %v1544
      %v1546 = vpop.f32.mrf.mxu0
      %1547 = vmatprep.mubr.f32.mxu0 0.0
      %1548 = vmatmul.mubr.f32.gmra.mxu0 %v1449
      %v1549 = vpop.f32.mrf.mxu0
      %v1550 = vadd.f32 0.0, %v1549
      %v1551 = vpop.f32.mrf.mxu0
      %1552 = vmatprep.mubr.f32.mxu0 0.0
      %1553 = vmatmul.mubr.f32.gmra.mxu0 %v1452
      %v1554 = vpop.f32.mrf.mxu0
      %v1555 = vadd.f32 0.0, %v1554
      %v1556 = vpop.f32.mrf.mxu0
      %1557 = vmatprep.mubr.f32.mxu0 0.0
      %1558 = vmatmul.mubr.f32.gmra.mxu0 %v1455
      %v1559 = vpop.f32.mrf.mxu0
      %v1560 = vadd.f32 0.0, %v1559
      %v1561 = vpop.f32.mrf.mxu0
      %1562 = vmatprep.mubr.f32.mxu0 0.0
      %1563 = vmatmul.mubr.f32.gmra.mxu0 %v1458
      %v1564 = vpop.f32.mrf.mxu0
      %v1565 = vadd.f32 0.0, %v1564
      %v1566 = vpop.f32.mrf.mxu0
      %1567 = vdwg.mxu0
      %v1568 = vadd.f32 %v1362, %v1530
      %v1569 = vadd.f32 %v1363, %v1535
      %v1570 = vadd.f32 %v1364, %v1540
      %v1571 = vadd.f32 %v1365, %v1545
      %v1572 = vadd.f32 %v1366, %v1550
      %v1573 = vadd.f32 %v1367, %v1555
      %v1574 = vadd.f32 %v1368, %v1560
      %v1575 = vadd.f32 %v1369, %v1565
      %v1576 = vld [vmem:[#allocation2 + $0x10] sm:$0xff]
      %v1577 = vld [vmem:[#allocation2 + $0x18] sm:$0xff]
      %v1578 = vld [vmem:[#allocation2 + $0x20] sm:$0xff]
      %v1579 = vld [vmem:[#allocation2 + $0x28] sm:$0xff]
      %v1580 = vld [vmem:[#allocation2 + $0x30] sm:$0xff]
      %v1581 = vld [vmem:[#allocation2 + $0x38] sm:$0xff]
      %v1582 = vld [vmem:[#allocation2 + $0x40] sm:$0xff]
      %v1583 = vld [vmem:[#allocation2 + $0x48] sm:$0xff]
      %v1584 = vsel %vm666, %v1576, 0.0
      %v1585 = vsel %vm667, %v1577, 0.0
      %v1586 = vsel %vm668, %v1578, 0.0
      %v1587 = vsel %vm669, %v1579, 0.0
      %v1588 = vsel %vm670, %v1580, 0.0
      %v1589 = vsel %vm671, %v1581, 0.0
      %v1590 = vsel %vm672, %v1582, 0.0
      %v1591 = vsel %vm673, %v1583, 0.0
      %s1592 = scalar_lea.vmem %s1, 20
      %v1593 = vld [vmem:[%s1592] sm:$0xf]
      %v1595 = vsel %vm503, %v1584, 0
      %v1598 = vsel %vm503, %v1585, 0
      %v1601 = vsel %vm503, %v1586, 0
      %v1604 = vsel %vm503, %v1587, 0
      %v1607 = vsel %vm503, %v1588, 0
      %v1610 = vsel %vm503, %v1589, 0
      %v1613 = vsel %vm503, %v1590, 0
      %v1616 = vsel %vm503, %v1591, 0
      %v1619 = vsel %vm773, %v1593, 0
      %1621 = vmatprep.subr.mxu0 0.0
      %1622 = vmatpush1.msra.mxu0 0.0
      %1623 = vmatprep.subr.mxu0 0.0
      %1624 = vmatpush1.msra.mxu0 0.0
      %1625 = vmatprep.subr.mxu0 0.0
      %1626 = vmatpush1.msra.mxu0 0.0
      %1627 = vmatprep.subr.mxu0 0.0
      %1628 = vmatpush1.msra.mxu0 0.0
      %1629 = vmatprep.subr.mxu0 0.0
      %1630 = vmatpush1.msra.mxu0 0.0
      %1631 = vmatprep.subr.mxu0 0.0
      %1632 = vmatpush1.msra.mxu0 0.0
      %1633 = vmatprep.subr.mxu0 0.0
      %1634 = vmatpush1.msra.mxu0 0.0
      %1635 = vmatprep.subr.mxu0 0.0
      %1636 = vmatpush1.msra.mxu0 0.0
      %1637 = vmatprep.subr.mxu0 0.0
      %1638 = vmatpush1.msra.mxu0 0.0
      %1639 = vmatprep.subr.mxu0 0.0
      %1640 = vmatpush1.msra.mxu0 0.0
      %1641 = vmatprep.subr.mxu0 0.0
      %1642 = vmatpush1.msra.mxu0 0.0
      %1643 = vmatprep.subr.mxu0 0.0
      %1644 = vmatpush1.msra.mxu0 0.0
      %1645 = vmatprep.subr.mxu0 0.0
      %1646 = vmatpush1.msra.mxu0 0.0
      %1647 = vmatprep.subr.mxu0 0.0
      %1648 = vmatpush1.msra.mxu0 0.0
      %1649 = vmatprep.subr.mxu0 0.0
      %1650 = vmatpush1.msra.mxu0 0.0
      %1651 = vmatprep.subr.mxu0 0.0
      %1652 = vmatpush1.msra.mxu0 %v1619
      %1653 = vmatprep.subr.mxu0 0.0
      %1654 = vmatpush2.msra.mxu0 0.0
      %1655 = vmatprep.subr.mxu0 0.0
      %1656 = vmatpush2.msra.mxu0 0.0
      %1657 = vmatprep.subr.mxu0 0.0
      %1658 = vmatpush2.msra.mxu0 0.0
      %1659 = vmatprep.subr.mxu0 0.0
      %1660 = vmatpush2.msra.mxu0 0.0
      %1661 = vmatprep.subr.mxu0 0.0
      %1662 = vmatpush2.msra.mxu0 0.0
      %1663 = vmatprep.subr.mxu0 0.0
      %1664 = vmatpush2.msra.mxu0 0.0
      %1665 = vmatprep.subr.mxu0 0.0
      %1666 = vmatpush2.msra.mxu0 0.0
      %1667 = vmatprep.subr.mxu0 0.0
      %1668 = vmatpush2.msra.mxu0 0.0
      %1669 = vmatprep.subr.mxu0 0.0
      %1670 = vmatpush2.msra.mxu0 0.0
      %1671 = vmatprep.subr.mxu0 0.0
      %1672 = vmatpush2.msra.mxu0 0.0
      %1673 = vmatprep.subr.mxu0 0.0
      %1674 = vmatpush2.msra.mxu0 0.0
      %1675 = vmatprep.subr.mxu0 0.0
      %1676 = vmatpush2.msra.mxu0 0.0
      %1677 = vmatprep.subr.mxu0 0.0
      %1678 = vmatpush2.msra.mxu0 0.0
      %1679 = vmatprep.subr.mxu0 0.0
      %1680 = vmatpush2.msra.mxu0 0.0
      %1681 = vmatprep.subr.mxu0 0.0
      %1682 = vmatpush2.msra.mxu0 0.0
      %1683 = vmatprep.subr.mxu0 0.0
      %1684 = vmatpush2.msra.mxu0 0.0
      %1685 = vmatprep.mubr.f32.mxu0 0.0
      %1686 = vmatmul.mubr.f32.gmra.mxu0 %v1595
      %v1687 = vpop.f32.mrf.mxu0
      %v1688 = vadd.f32 0.0, %v1687
      %v1689 = vpop.f32.mrf.mxu0
      %1690 = vmatprep.mubr.f32.mxu0 0.0
      %1691 = vmatmul.mubr.f32.gmra.mxu0 %v1598
      %v1692 = vpop.f32.mrf.mxu0
      %v1693 = vadd.f32 0.0, %v1692
      %v1694 = vpop.f32.mrf.mxu0
      %1695 = vmatprep.mubr.f32.mxu0 0.0
      %1696 = vmatmul.mubr.f32.gmra.mxu0 %v1601
      %v1697 = vpop.f32.mrf.mxu0
      %v1698 = vadd.f32 0.0, %v1697
      %v1699 = vpop.f32.mrf.mxu0
      %1700 = vmatprep.mubr.f32.mxu0 0.0
      %1701 = vmatmul.mubr.f32.gmra.mxu0 %v1604
      %v1702 = vpop.f32.mrf.mxu0
      %v1703 = vadd.f32 0.0, %v1702
      %v1704 = vpop.f32.mrf.mxu0
      %1705 = vmatprep.mubr.f32.mxu0 0.0
      %1706 = vmatmul.mubr.f32.gmra.mxu0 %v1607
      %v1707 = vpop.f32.mrf.mxu0
      %v1708 = vadd.f32 0.0, %v1707
      %v1709 = vpop.f32.mrf.mxu0
      %1710 = vmatprep.mubr.f32.mxu0 0.0
      %1711 = vmatmul.mubr.f32.gmra.mxu0 %v1610
      %v1712 = vpop.f32.mrf.mxu0
      %v1713 = vadd.f32 0.0, %v1712
      %v1714 = vpop.f32.mrf.mxu0
      %1715 = vmatprep.mubr.f32.mxu0 0.0
      %1716 = vmatmul.mubr.f32.gmra.mxu0 %v1613
      %v1717 = vpop.f32.mrf.mxu0
      %v1718 = vadd.f32 0.0, %v1717
      %v1719 = vpop.f32.mrf.mxu0
      %1720 = vmatprep.mubr.f32.mxu0 0.0
      %1721 = vmatmul.mubr.f32.gmra.mxu0 %v1616
      %v1722 = vpop.f32.mrf.mxu0
      %v1723 = vadd.f32 0.0, %v1722
      %v1724 = vpop.f32.mrf.mxu0
      %1725 = vdwg.mxu0
      %v1726 = vadd.f32 %v1568, %v1688
      %v1727 = vadd.f32 %v1569, %v1693
      %v1728 = vadd.f32 %v1570, %v1698
      %v1729 = vadd.f32 %v1571, %v1703
      %v1730 = vadd.f32 %v1572, %v1708
      %v1731 = vadd.f32 %v1573, %v1713
      %v1732 = vadd.f32 %v1574, %v1718
      %v1733 = vadd.f32 %v1575, %v1723
      %v1734 = vld [vmem:[#allocation2 + $0x11] sm:$0xff]
      %v1735 = vld [vmem:[#allocation2 + $0x19] sm:$0xff]
      %v1736 = vld [vmem:[#allocation2 + $0x21] sm:$0xff]
      %v1737 = vld [vmem:[#allocation2 + $0x29] sm:$0xff]
      %v1738 = vld [vmem:[#allocation2 + $0x31] sm:$0xff]
      %v1739 = vld [vmem:[#allocation2 + $0x39] sm:$0xff]
      %v1740 = vld [vmem:[#allocation2 + $0x41] sm:$0xff]
      %v1741 = vld [vmem:[#allocation2 + $0x49] sm:$0xff]
      %v1742 = vsel %vm731, %v1734, 0.0
      %v1743 = vsel %vm732, %v1735, 0.0
      %v1744 = vsel %vm733, %v1736, 0.0
      %v1745 = vsel %vm734, %v1737, 0.0
      %v1746 = vsel %vm735, %v1738, 0.0
      %v1747 = vsel %vm736, %v1739, 0.0
      %v1748 = vsel %vm737, %v1740, 0.0
      %v1749 = vsel %vm738, %v1741, 0.0
      %s1750 = scalar_lea.vmem %s1, 24
      %v1751 = vld [vmem:[%s1750] sm:$0xf]
      %v1753 = vsel %vm503, %v1742, 0
      %v1756 = vsel %vm503, %v1743, 0
      %v1759 = vsel %vm503, %v1744, 0
      %v1762 = vsel %vm503, %v1745, 0
      %v1765 = vsel %vm503, %v1746, 0
      %v1768 = vsel %vm503, %v1747, 0
      %v1771 = vsel %vm503, %v1748, 0
      %v1774 = vsel %vm503, %v1749, 0
      %v1777 = vsel %vm773, %v1751, 0
      %1779 = vmatprep.subr.mxu0 0.0
      %1780 = vmatpush1.msra.mxu0 0.0
      %1781 = vmatprep.subr.mxu0 0.0
      %1782 = vmatpush1.msra.mxu0 0.0
      %1783 = vmatprep.subr.mxu0 0.0
      %1784 = vmatpush1.msra.mxu0 0.0
      %1785 = vmatprep.subr.mxu0 0.0
      %1786 = vmatpush1.msra.mxu0 0.0
      %1787 = vmatprep.subr.mxu0 0.0
      %1788 = vmatpush1.msra.mxu0 0.0
      %1789 = vmatprep.subr.mxu0 0.0
      %1790 = vmatpush1.msra.mxu0 0.0
      %1791 = vmatprep.subr.mxu0 0.0
      %1792 = vmatpush1.msra.mxu0 0.0
      %1793 = vmatprep.subr.mxu0 0.0
      %1794 = vmatpush1.msra.mxu0 0.0
      %1795 = vmatprep.subr.mxu0 0.0
      %1796 = vmatpush1.msra.mxu0 0.0
      %1797 = vmatprep.subr.mxu0 0.0
      %1798 = vmatpush1.msra.mxu0 0.0
      %1799 = vmatprep.subr.mxu0 0.0
      %1800 = vmatpush1.msra.mxu0 0.0
      %1801 = vmatprep.subr.mxu0 0.0
      %1802 = vmatpush1.msra.mxu0 0.0
      %1803 = vmatprep.subr.mxu0 0.0
      %1804 = vmatpush1.msra.mxu0 0.0
      %1805 = vmatprep.subr.mxu0 0.0
      %1806 = vmatpush1.msra.mxu0 0.0
      %1807 = vmatprep.subr.mxu0 0.0
      %1808 = vmatpush1.msra.mxu0 0.0
      %1809 = vmatprep.subr.mxu0 0.0
      %1810 = vmatpush1.msra.mxu0 %v1777
      %1811 = vmatprep.subr.mxu0 0.0
      %1812 = vmatpush2.msra.mxu0 0.0
      %1813 = vmatprep.subr.mxu0 0.0
      %1814 = vmatpush2.msra.mxu0 0.0
      %1815 = vmatprep.subr.mxu0 0.0
      %1816 = vmatpush2.msra.mxu0 0.0
      %1817 = vmatprep.subr.mxu0 0.0
      %1818 = vmatpush2.msra.mxu0 0.0
      %1819 = vmatprep.subr.mxu0 0.0
      %1820 = vmatpush2.msra.mxu0 0.0
      %1821 = vmatprep.subr.mxu0 0.0
      %1822 = vmatpush2.msra.mxu0 0.0
      %1823 = vmatprep.subr.mxu0 0.0
      %1824 = vmatpush2.msra.mxu0 0.0
      %1825 = vmatprep.subr.mxu0 0.0
      %1826 = vmatpush2.msra.mxu0 0.0
      %1827 = vmatprep.subr.mxu0 0.0
      %1828 = vmatpush2.msra.mxu0 0.0
      %1829 = vmatprep.subr.mxu0 0.0
      %1830 = vmatpush2.msra.mxu0 0.0
      %1831 = vmatprep.subr.mxu0 0.0
      %1832 = vmatpush2.msra.mxu0 0.0
      %1833 = vmatprep.subr.mxu0 0.0
      %1834 = vmatpush2.msra.mxu0 0.0
      %1835 = vmatprep.subr.mxu0 0.0
      %1836 = vmatpush2.msra.mxu0 0.0
      %1837 = vmatprep.subr.mxu0 0.0
      %1838 = vmatpush2.msra.mxu0 0.0
      %1839 = vmatprep.subr.mxu0 0.0
      %1840 = vmatpush2.msra.mxu0 0.0
      %1841 = vmatprep.subr.mxu0 0.0
      %1842 = vmatpush2.msra.mxu0 0.0
      %1843 = vmatprep.mubr.f32.mxu0 0.0
      %1844 = vmatmul.mubr.f32.gmra.mxu0 %v1753
      %v1845 = vpop.f32.mrf.mxu0
      %v1846 = vadd.f32 0.0, %v1845
      %v1847 = vpop.f32.mrf.mxu0
      %1848 = vmatprep.mubr.f32.mxu0 0.0
      %1849 = vmatmul.mubr.f32.gmra.mxu0 %v1756
      %v1850 = vpop.f32.mrf.mxu0
      %v1851 = vadd.f32 0.0, %v1850
      %v1852 = vpop.f32.mrf.mxu0
      %1853 = vmatprep.mubr.f32.mxu0 0.0
      %1854 = vmatmul.mubr.f32.gmra.mxu0 %v1759
      %v1855 = vpop.f32.mrf.mxu0
      %v1856 = vadd.f32 0.0, %v1855
      %v1857 = vpop.f32.mrf.mxu0
      %1858 = vmatprep.mubr.f32.mxu0 0.0
      %1859 = vmatmul.mubr.f32.gmra.mxu0 %v1762
      %v1860 = vpop.f32.mrf.mxu0
      %v1861 = vadd.f32 0.0, %v1860
      %v1862 = vpop.f32.mrf.mxu0
      %1863 = vmatprep.mubr.f32.mxu0 0.0
      %1864 = vmatmul.mubr.f32.gmra.mxu0 %v1765
      %v1865 = vpop.f32.mrf.mxu0
      %v1866 = vadd.f32 0.0, %v1865
      %v1867 = vpop.f32.mrf.mxu0
      %1868 = vmatprep.mubr.f32.mxu0 0.0
      %1869 = vmatmul.mubr.f32.gmra.mxu0 %v1768
      %v1870 = vpop.f32.mrf.mxu0
      %v1871 = vadd.f32 0.0, %v1870
      %v1872 = vpop.f32.mrf.mxu0
      %1873 = vmatprep.mubr.f32.mxu0 0.0
      %1874 = vmatmul.mubr.f32.gmra.mxu0 %v1771
      %v1875 = vpop.f32.mrf.mxu0
      %v1876 = vadd.f32 0.0, %v1875
      %v1877 = vpop.f32.mrf.mxu0
      %1878 = vmatprep.mubr.f32.mxu0 0.0
      %1879 = vmatmul.mubr.f32.gmra.mxu0 %v1774
      %v1880 = vpop.f32.mrf.mxu0
      %v1881 = vadd.f32 0.0, %v1880
      %v1882 = vpop.f32.mrf.mxu0
      %1883 = vdwg.mxu0
      %v1884 = vadd.f32 %v1726, %v1846
      %v1885 = vadd.f32 %v1727, %v1851
      %v1886 = vadd.f32 %v1728, %v1856
      %v1887 = vadd.f32 %v1729, %v1861
      %v1888 = vadd.f32 %v1730, %v1866
      %v1889 = vadd.f32 %v1731, %v1871
      %v1890 = vadd.f32 %v1732, %v1876
      %v1891 = vadd.f32 %v1733, %v1881
      %v1892 = vld [vmem:[#allocation2 + $0x12] sm:$0xff]
      %v1893 = vld [vmem:[#allocation2 + $0x1a] sm:$0xff]
      %v1894 = vld [vmem:[#allocation2 + $0x22] sm:$0xff]
      %v1895 = vld [vmem:[#allocation2 + $0x2a] sm:$0xff]
      %v1896 = vld [vmem:[#allocation2 + $0x32] sm:$0xff]
      %v1897 = vld [vmem:[#allocation2 + $0x3a] sm:$0xff]
      %v1898 = vld [vmem:[#allocation2 + $0x42] sm:$0xff]
      %v1899 = vld [vmem:[#allocation2 + $0x4a] sm:$0xff]
      %s1900 = scalar_lea.vmem %s1, 28
      %v1901 = vld [vmem:[%s1900] sm:$0xf]
      %v1903 = vsel %vm503, %v1892, 0
      %v1906 = vsel %vm503, %v1893, 0
      %v1909 = vsel %vm503, %v1894, 0
      %v1912 = vsel %vm503, %v1895, 0
      %v1915 = vsel %vm503, %v1896, 0
      %v1918 = vsel %vm503, %v1897, 0
      %v1921 = vsel %vm503, %v1898, 0
      %v1924 = vsel %vm503, %v1899, 0
      %v1927 = vsel %vm773, %v1901, 0
      %1929 = vmatprep.subr.mxu0 0.0
      %1930 = vmatpush1.msra.mxu0 0.0
      %1931 = vmatprep.subr.mxu0 0.0
      %1932 = vmatpush1.msra.mxu0 0.0
      %1933 = vmatprep.subr.mxu0 0.0
      %1934 = vmatpush1.msra.mxu0 0.0
      %1935 = vmatprep.subr.mxu0 0.0
      %1936 = vmatpush1.msra.mxu0 0.0
      %1937 = vmatprep.subr.mxu0 0.0
      %1938 = vmatpush1.msra.mxu0 0.0
      %1939 = vmatprep.subr.mxu0 0.0
      %1940 = vmatpush1.msra.mxu0 0.0
      %1941 = vmatprep.subr.mxu0 0.0
      %1942 = vmatpush1.msra.mxu0 0.0
      %1943 = vmatprep.subr.mxu0 0.0
      %1944 = vmatpush1.msra.mxu0 0.0
      %1945 = vmatprep.subr.mxu0 0.0
      %1946 = vmatpush1.msra.mxu0 0.0
      %1947 = vmatprep.subr.mxu0 0.0
      %1948 = vmatpush1.msra.mxu0 0.0
      %1949 = vmatprep.subr.mxu0 0.0
      %1950 = vmatpush1.msra.mxu0 0.0
      %1951 = vmatprep.subr.mxu0 0.0
      %1952 = vmatpush1.msra.mxu0 0.0
      %1953 = vmatprep.subr.mxu0 0.0
      %1954 = vmatpush1.msra.mxu0 0.0
      %1955 = vmatprep.subr.mxu0 0.0
      %1956 = vmatpush1.msra.mxu0 0.0
      %1957 = vmatprep.subr.mxu0 0.0
      %1958 = vmatpush1.msra.mxu0 0.0
      %1959 = vmatprep.subr.mxu0 0.0
      %1960 = vmatpush1.msra.mxu0 %v1927
      %1961 = vmatprep.subr.mxu0 0.0
      %1962 = vmatpush2.msra.mxu0 0.0
      %1963 = vmatprep.subr.mxu0 0.0
      %1964 = vmatpush2.msra.mxu0 0.0
      %1965 = vmatprep.subr.mxu0 0.0
      %1966 = vmatpush2.msra.mxu0 0.0
      %1967 = vmatprep.subr.mxu0 0.0
      %1968 = vmatpush2.msra.mxu0 0.0
      %1969 = vmatprep.subr.mxu0 0.0
      %1970 = vmatpush2.msra.mxu0 0.0
      %1971 = vmatprep.subr.mxu0 0.0
      %1972 = vmatpush2.msra.mxu0 0.0
      %1973 = vmatprep.subr.mxu0 0.0
      %1974 = vmatpush2.msra.mxu0 0.0
      %1975 = vmatprep.subr.mxu0 0.0
      %1976 = vmatpush2.msra.mxu0 0.0
      %1977 = vmatprep.subr.mxu0 0.0
      %1978 = vmatpush2.msra.mxu0 0.0
      %1979 = vmatprep.subr.mxu0 0.0
      %1980 = vmatpush2.msra.mxu0 0.0
      %1981 = vmatprep.subr.mxu0 0.0
      %1982 = vmatpush2.msra.mxu0 0.0
      %1983 = vmatprep.subr.mxu0 0.0
      %1984 = vmatpush2.msra.mxu0 0.0
      %1985 = vmatprep.subr.mxu0 0.0
      %1986 = vmatpush2.msra.mxu0 0.0
      %1987 = vmatprep.subr.mxu0 0.0
      %1988 = vmatpush2.msra.mxu0 0.0
      %1989 = vmatprep.subr.mxu0 0.0
      %1990 = vmatpush2.msra.mxu0 0.0
      %1991 = vmatprep.subr.mxu0 0.0
      %1992 = vmatpush2.msra.mxu0 0.0
      %1993 = vmatprep.mubr.f32.mxu0 0.0
      %1994 = vmatmul.mubr.f32.gmra.mxu0 %v1903
      %v1995 = vpop.f32.mrf.mxu0
      %v1996 = vadd.f32 0.0, %v1995
      %v1997 = vpop.f32.mrf.mxu0
      %1998 = vmatprep.mubr.f32.mxu0 0.0
      %1999 = vmatmul.mubr.f32.gmra.mxu0 %v1906
      %v2000 = vpop.f32.mrf.mxu0
      %v2001 = vadd.f32 0.0, %v2000
      %v2002 = vpop.f32.mrf.mxu0
      %2003 = vmatprep.mubr.f32.mxu0 0.0
      %2004 = vmatmul.mubr.f32.gmra.mxu0 %v1909
      %v2005 = vpop.f32.mrf.mxu0
      %v2006 = vadd.f32 0.0, %v2005
      %v2007 = vpop.f32.mrf.mxu0
      %2008 = vmatprep.mubr.f32.mxu0 0.0
      %2009 = vmatmul.mubr.f32.gmra.mxu0 %v1912
      %v2010 = vpop.f32.mrf.mxu0
      %v2011 = vadd.f32 0.0, %v2010
      %v2012 = vpop.f32.mrf.mxu0
      %2013 = vmatprep.mubr.f32.mxu0 0.0
      %2014 = vmatmul.mubr.f32.gmra.mxu0 %v1915
      %v2015 = vpop.f32.mrf.mxu0
      %v2016 = vadd.f32 0.0, %v2015
      %v2017 = vpop.f32.mrf.mxu0
      %2018 = vmatprep.mubr.f32.mxu0 0.0
      %2019 = vmatmul.mubr.f32.gmra.mxu0 %v1918
      %v2020 = vpop.f32.mrf.mxu0
      %v2021 = vadd.f32 0.0, %v2020
      %v2022 = vpop.f32.mrf.mxu0
      %2023 = vmatprep.mubr.f32.mxu0 0.0
      %2024 = vmatmul.mubr.f32.gmra.mxu0 %v1921
      %v2025 = vpop.f32.mrf.mxu0
      %v2026 = vadd.f32 0.0, %v2025
      %v2027 = vpop.f32.mrf.mxu0
      %2028 = vmatprep.mubr.f32.mxu0 0.0
      %2029 = vmatmul.mubr.f32.gmra.mxu0 %v1924
      %v2030 = vpop.f32.mrf.mxu0
      %v2031 = vadd.f32 0.0, %v2030
      %v2032 = vpop.f32.mrf.mxu0
      %2033 = vdwg.mxu0
      %v2034 = vadd.f32 %v1884, %v1996
      %v2035 = vadd.f32 %v1885, %v2001
      %v2036 = vadd.f32 %v1886, %v2006
      %v2037 = vadd.f32 %v1887, %v2011
      %v2038 = vadd.f32 %v1888, %v2016
      %v2039 = vadd.f32 %v1889, %v2021
      %v2040 = vadd.f32 %v1890, %v2026
      %v2041 = vadd.f32 %v1891, %v2031
      %v2042 = vld [vmem:[#allocation2 + $0x13] sm:$0xff]
      %v2043 = vld [vmem:[#allocation2 + $0x1b] sm:$0xff]
      %v2044 = vld [vmem:[#allocation2 + $0x23] sm:$0xff]
      %v2045 = vld [vmem:[#allocation2 + $0x2b] sm:$0xff]
      %v2046 = vld [vmem:[#allocation2 + $0x33] sm:$0xff]
      %v2047 = vld [vmem:[#allocation2 + $0x3b] sm:$0xff]
      %v2048 = vld [vmem:[#allocation2 + $0x43] sm:$0xff]
      %v2049 = vld [vmem:[#allocation2 + $0x4b] sm:$0xff]
      %v2050 = vsel %vm1212, %v2042, 0.0
      %v2051 = vsel %vm1213, %v2043, 0.0
      %v2052 = vsel %vm1214, %v2044, 0.0
      %v2053 = vsel %vm1215, %v2045, 0.0
      %v2054 = vsel %vm1216, %v2046, 0.0
      %v2055 = vsel %vm1217, %v2047, 0.0
      %v2056 = vsel %vm1218, %v2048, 0.0
      %v2057 = vsel %vm1219, %v2049, 0.0
      %s2058 = scalar_lea.vmem %s1, 32
      %v2059 = vld [vmem:[%s2058] sm:$0xf]
      %v2061 = vsel %vm503, %v2050, 0
      %v2064 = vsel %vm503, %v2051, 0
      %v2067 = vsel %vm503, %v2052, 0
      %v2070 = vsel %vm503, %v2053, 0
      %v2073 = vsel %vm503, %v2054, 0
      %v2076 = vsel %vm503, %v2055, 0
      %v2079 = vsel %vm503, %v2056, 0
      %v2082 = vsel %vm503, %v2057, 0
      %v2085 = vsel %vm773, %v2059, 0
      %2087 = vmatprep.subr.mxu0 0.0
      %2088 = vmatpush1.msra.mxu0 0.0
      %2089 = vmatprep.subr.mxu0 0.0
      %2090 = vmatpush1.msra.mxu0 0.0
      %2091 = vmatprep.subr.mxu0 0.0
      %2092 = vmatpush1.msra.mxu0 0.0
      %2093 = vmatprep.subr.mxu0 0.0
      %2094 = vmatpush1.msra.mxu0 0.0
      %2095 = vmatprep.subr.mxu0 0.0
      %2096 = vmatpush1.msra.mxu0 0.0
      %2097 = vmatprep.subr.mxu0 0.0
      %2098 = vmatpush1.msra.mxu0 0.0
      %2099 = vmatprep.subr.mxu0 0.0
      %2100 = vmatpush1.msra.mxu0 0.0
      %2101 = vmatprep.subr.mxu0 0.0
      %2102 = vmatpush1.msra.mxu0 0.0
      %2103 = vmatprep.subr.mxu0 0.0
      %2104 = vmatpush1.msra.mxu0 0.0
      %2105 = vmatprep.subr.mxu0 0.0
      %2106 = vmatpush1.msra.mxu0 0.0
      %2107 = vmatprep.subr.mxu0 0.0
      %2108 = vmatpush1.msra.mxu0 0.0
      %2109 = vmatprep.subr.mxu0 0.0
      %2110 = vmatpush1.msra.mxu0 0.0
      %2111 = vmatprep.subr.mxu0 0.0
      %2112 = vmatpush1.msra.mxu0 0.0
      %2113 = vmatprep.subr.mxu0 0.0
      %2114 = vmatpush1.msra.mxu0 0.0
      %2115 = vmatprep.subr.mxu0 0.0
      %2116 = vmatpush1.msra.mxu0 0.0
      %2117 = vmatprep.subr.mxu0 0.0
      %2118 = vmatpush1.msra.mxu0 %v2085
      %2119 = vmatprep.subr.mxu0 0.0
      %2120 = vmatpush2.msra.mxu0 0.0
      %2121 = vmatprep.subr.mxu0 0.0
      %2122 = vmatpush2.msra.mxu0 0.0
      %2123 = vmatprep.subr.mxu0 0.0
      %2124 = vmatpush2.msra.mxu0 0.0
      %2125 = vmatprep.subr.mxu0 0.0
      %2126 = vmatpush2.msra.mxu0 0.0
      %2127 = vmatprep.subr.mxu0 0.0
      %2128 = vmatpush2.msra.mxu0 0.0
      %2129 = vmatprep.subr.mxu0 0.0
      %2130 = vmatpush2.msra.mxu0 0.0
      %2131 = vmatprep.subr.mxu0 0.0
      %2132 = vmatpush2.msra.mxu0 0.0
      %2133 = vmatprep.subr.mxu0 0.0
      %2134 = vmatpush2.msra.mxu0 0.0
      %2135 = vmatprep.subr.mxu0 0.0
      %2136 = vmatpush2.msra.mxu0 0.0
      %2137 = vmatprep.subr.mxu0 0.0
      %2138 = vmatpush2.msra.mxu0 0.0
      %2139 = vmatprep.subr.mxu0 0.0
      %2140 = vmatpush2.msra.mxu0 0.0
      %2141 = vmatprep.subr.mxu0 0.0
      %2142 = vmatpush2.msra.mxu0 0.0
      %2143 = vmatprep.subr.mxu0 0.0
      %2144 = vmatpush2.msra.mxu0 0.0
      %2145 = vmatprep.subr.mxu0 0.0
      %2146 = vmatpush2.msra.mxu0 0.0
      %2147 = vmatprep.subr.mxu0 0.0
      %2148 = vmatpush2.msra.mxu0 0.0
      %2149 = vmatprep.subr.mxu0 0.0
      %2150 = vmatpush2.msra.mxu0 0.0
      %2151 = vmatprep.mubr.f32.mxu0 0.0
      %2152 = vmatmul.mubr.f32.gmra.mxu0 %v2061
      %v2153 = vpop.f32.mrf.mxu0
      %v2154 = vadd.f32 0.0, %v2153
      %v2155 = vpop.f32.mrf.mxu0
      %2156 = vmatprep.mubr.f32.mxu0 0.0
      %2157 = vmatmul.mubr.f32.gmra.mxu0 %v2064
      %v2158 = vpop.f32.mrf.mxu0
      %v2159 = vadd.f32 0.0, %v2158
      %v2160 = vpop.f32.mrf.mxu0
      %2161 = vmatprep.mubr.f32.mxu0 0.0
      %2162 = vmatmul.mubr.f32.gmra.mxu0 %v2067
      %v2163 = vpop.f32.mrf.mxu0
      %v2164 = vadd.f32 0.0, %v2163
      %v2165 = vpop.f32.mrf.mxu0
      %2166 = vmatprep.mubr.f32.mxu0 0.0
      %2167 = vmatmul.mubr.f32.gmra.mxu0 %v2070
      %v2168 = vpop.f32.mrf.mxu0
      %v2169 = vadd.f32 0.0, %v2168
      %v2170 = vpop.f32.mrf.mxu0
      %2171 = vmatprep.mubr.f32.mxu0 0.0
      %2172 = vmatmul.mubr.f32.gmra.mxu0 %v2073
      %v2173 = vpop.f32.mrf.mxu0
      %v2174 = vadd.f32 0.0, %v2173
      %v2175 = vpop.f32.mrf.mxu0
      %2176 = vmatprep.mubr.f32.mxu0 0.0
      %2177 = vmatmul.mubr.f32.gmra.mxu0 %v2076
      %v2178 = vpop.f32.mrf.mxu0
      %v2179 = vadd.f32 0.0, %v2178
      %v2180 = vpop.f32.mrf.mxu0
      %2181 = vmatprep.mubr.f32.mxu0 0.0
      %2182 = vmatmul.mubr.f32.gmra.mxu0 %v2079
      %v2183 = vpop.f32.mrf.mxu0
      %v2184 = vadd.f32 0.0, %v2183
      %v2185 = vpop.f32.mrf.mxu0
      %2186 = vmatprep.mubr.f32.mxu0 0.0
      %2187 = vmatmul.mubr.f32.gmra.mxu0 %v2082
      %v2188 = vpop.f32.mrf.mxu0
      %v2189 = vadd.f32 0.0, %v2188
      %v2190 = vpop.f32.mrf.mxu0
      %2191 = vdwg.mxu0
      %v2192 = vadd.f32 %v2034, %v2154
      %v2193 = vadd.f32 %v2035, %v2159
      %v2194 = vadd.f32 %v2036, %v2164
      %v2195 = vadd.f32 %v2037, %v2169
      %v2196 = vadd.f32 %v2038, %v2174
      %v2197 = vadd.f32 %v2039, %v2179
      %v2198 = vadd.f32 %v2040, %v2184
      %v2199 = vadd.f32 %v2041, %v2189
      %v2200 = vld [vmem:[#allocation2 + $0x14] sm:$0xff]
      %v2201 = vld [vmem:[#allocation2 + $0x1c] sm:$0xff]
      %v2202 = vld [vmem:[#allocation2 + $0x24] sm:$0xff]
      %v2203 = vld [vmem:[#allocation2 + $0x2c] sm:$0xff]
      %v2204 = vld [vmem:[#allocation2 + $0x34] sm:$0xff]
      %v2205 = vld [vmem:[#allocation2 + $0x3c] sm:$0xff]
      %v2206 = vld [vmem:[#allocation2 + $0x44] sm:$0xff]
      %v2207 = vld [vmem:[#allocation2 + $0x4c] sm:$0xff]
      %v2208 = vsel %vm1418, %v2200, 0.0
      %v2209 = vsel %vm1419, %v2201, 0.0
      %v2210 = vsel %vm1420, %v2202, 0.0
      %v2211 = vsel %vm1421, %v2203, 0.0
      %v2212 = vsel %vm1422, %v2204, 0.0
      %v2213 = vsel %vm1423, %v2205, 0.0
      %v2214 = vsel %vm1424, %v2206, 0.0
      %v2215 = vsel %vm1425, %v2207, 0.0
      %s2216 = scalar_lea.vmem %s1, 36
      %v2217 = vld [vmem:[%s2216] sm:$0xf]
      %v2219 = vsel %vm503, %v2208, 0
      %v2222 = vsel %vm503, %v2209, 0
      %v2225 = vsel %vm503, %v2210, 0
      %v2228 = vsel %vm503, %v2211, 0
      %v2231 = vsel %vm503, %v2212, 0
      %v2234 = vsel %vm503, %v2213, 0
      %v2237 = vsel %vm503, %v2214, 0
      %v2240 = vsel %vm503, %v2215, 0
      %v2243 = vsel %vm773, %v2217, 0
      %2245 = vmatprep.subr.mxu0 0.0
      %2246 = vmatpush1.msra.mxu0 0.0
      %2247 = vmatprep.subr.mxu0 0.0
      %2248 = vmatpush1.msra.mxu0 0.0
      %2249 = vmatprep.subr.mxu0 0.0
      %2250 = vmatpush1.msra.mxu0 0.0
      %2251 = vmatprep.subr.mxu0 0.0
      %2252 = vmatpush1.msra.mxu0 0.0
      %2253 = vmatprep.subr.mxu0 0.0
      %2254 = vmatpush1.msra.mxu0 0.0
      %2255 = vmatprep.subr.mxu0 0.0
      %2256 = vmatpush1.msra.mxu0 0.0
      %2257 = vmatprep.subr.mxu0 0.0
      %2258 = vmatpush1.msra.mxu0 0.0
      %2259 = vmatprep.subr.mxu0 0.0
      %2260 = vmatpush1.msra.mxu0 0.0
      %2261 = vmatprep.subr.mxu0 0.0
      %2262 = vmatpush1.msra.mxu0 0.0
      %2263 = vmatprep.subr.mxu0 0.0
      %2264 = vmatpush1.msra.mxu0 0.0
      %2265 = vmatprep.subr.mxu0 0.0
      %2266 = vmatpush1.msra.mxu0 0.0
      %2267 = vmatprep.subr.mxu0 0.0
      %2268 = vmatpush1.msra.mxu0 0.0
      %2269 = vmatprep.subr.mxu0 0.0
      %2270 = vmatpush1.msra.mxu0 0.0
      %2271 = vmatprep.subr.mxu0 0.0
      %2272 = vmatpush1.msra.mxu0 0.0
      %2273 = vmatprep.subr.mxu0 0.0
      %2274 = vmatpush1.msra.mxu0 0.0
      %2275 = vmatprep.subr.mxu0 0.0
      %2276 = vmatpush1.msra.mxu0 %v2243
      %2277 = vmatprep.subr.mxu0 0.0
      %2278 = vmatpush2.msra.mxu0 0.0
      %2279 = vmatprep.subr.mxu0 0.0
      %2280 = vmatpush2.msra.mxu0 0.0
      %2281 = vmatprep.subr.mxu0 0.0
      %2282 = vmatpush2.msra.mxu0 0.0
      %2283 = vmatprep.subr.mxu0 0.0
      %2284 = vmatpush2.msra.mxu0 0.0
      %2285 = vmatprep.subr.mxu0 0.0
      %2286 = vmatpush2.msra.mxu0 0.0
      %2287 = vmatprep.subr.mxu0 0.0
      %2288 = vmatpush2.msra.mxu0 0.0
      %2289 = vmatprep.subr.mxu0 0.0
      %2290 = vmatpush2.msra.mxu0 0.0
      %2291 = vmatprep.subr.mxu0 0.0
      %2292 = vmatpush2.msra.mxu0 0.0
      %2293 = vmatprep.subr.mxu0 0.0
      %2294 = vmatpush2.msra.mxu0 0.0
      %2295 = vmatprep.subr.mxu0 0.0
      %2296 = vmatpush2.msra.mxu0 0.0
      %2297 = vmatprep.subr.mxu0 0.0
      %2298 = vmatpush2.msra.mxu0 0.0
      %2299 = vmatprep.subr.mxu0 0.0
      %2300 = vmatpush2.msra.mxu0 0.0
      %2301 = vmatprep.subr.mxu0 0.0
      %2302 = vmatpush2.msra.mxu0 0.0
      %2303 = vmatprep.subr.mxu0 0.0
      %2304 = vmatpush2.msra.mxu0 0.0
      %2305 = vmatprep.subr.mxu0 0.0
      %2306 = vmatpush2.msra.mxu0 0.0
      %2307 = vmatprep.subr.mxu0 0.0
      %2308 = vmatpush2.msra.mxu0 0.0
      %2309 = vmatprep.mubr.f32.mxu0 0.0
      %2310 = vmatmul.mubr.f32.gmra.mxu0 %v2219
      %v2311 = vpop.f32.mrf.mxu0
      %v2312 = vadd.f32 0.0, %v2311
      %v2313 = vpop.f32.mrf.mxu0
      %2314 = vmatprep.mubr.f32.mxu0 0.0
      %2315 = vmatmul.mubr.f32.gmra.mxu0 %v2222
      %v2316 = vpop.f32.mrf.mxu0
      %v2317 = vadd.f32 0.0, %v2316
      %v2318 = vpop.f32.mrf.mxu0
      %2319 = vmatprep.mubr.f32.mxu0 0.0
      %2320 = vmatmul.mubr.f32.gmra.mxu0 %v2225
      %v2321 = vpop.f32.mrf.mxu0
      %v2322 = vadd.f32 0.0, %v2321
      %v2323 = vpop.f32.mrf.mxu0
      %2324 = vmatprep.mubr.f32.mxu0 0.0
      %2325 = vmatmul.mubr.f32.gmra.mxu0 %v2228
      %v2326 = vpop.f32.mrf.mxu0
      %v2327 = vadd.f32 0.0, %v2326
      %v2328 = vpop.f32.mrf.mxu0
      %2329 = vmatprep.mubr.f32.mxu0 0.0
      %2330 = vmatmul.mubr.f32.gmra.mxu0 %v2231
      %v2331 = vpop.f32.mrf.mxu0
      %v2332 = vadd.f32 0.0, %v2331
      %v2333 = vpop.f32.mrf.mxu0
      %2334 = vmatprep.mubr.f32.mxu0 0.0
      %2335 = vmatmul.mubr.f32.gmra.mxu0 %v2234
      %v2336 = vpop.f32.mrf.mxu0
      %v2337 = vadd.f32 0.0, %v2336
      %v2338 = vpop.f32.mrf.mxu0
      %2339 = vmatprep.mubr.f32.mxu0 0.0
      %2340 = vmatmul.mubr.f32.gmra.mxu0 %v2237
      %v2341 = vpop.f32.mrf.mxu0
      %v2342 = vadd.f32 0.0, %v2341
      %v2343 = vpop.f32.mrf.mxu0
      %2344 = vmatprep.mubr.f32.mxu0 0.0
      %2345 = vmatmul.mubr.f32.gmra.mxu0 %v2240
      %v2346 = vpop.f32.mrf.mxu0
      %v2347 = vadd.f32 0.0, %v2346
      %v2348 = vpop.f32.mrf.mxu0
      %2349 = vdwg.mxu0
      %v2350 = vadd.f32 %v2192, %v2312
      %v2351 = vadd.f32 %v2193, %v2317
      %v2352 = vadd.f32 %v2194, %v2322
      %v2353 = vadd.f32 %v2195, %v2327
      %v2354 = vadd.f32 %v2196, %v2332
      %v2355 = vadd.f32 %v2197, %v2337
      %v2356 = vadd.f32 %v2198, %v2342
      %v2357 = vadd.f32 %v2199, %v2347
      %v2358 = vld [vmem:[#allocation2 + $0x20] sm:$0xff]
      %v2359 = vld [vmem:[#allocation2 + $0x28] sm:$0xff]
      %v2360 = vld [vmem:[#allocation2 + $0x30] sm:$0xff]
      %v2361 = vld [vmem:[#allocation2 + $0x38] sm:$0xff]
      %v2362 = vld [vmem:[#allocation2 + $0x40] sm:$0xff]
      %v2363 = vld [vmem:[#allocation2 + $0x48] sm:$0xff]
      %v2364 = vld [vmem:[#allocation2 + $0x50] sm:$0xff]
      %v2365 = vld [vmem:[#allocation2 + $0x58] sm:$0xff]
      %v2366 = vsel %vm666, %v2358, 0.0
      %v2367 = vsel %vm667, %v2359, 0.0
      %v2368 = vsel %vm668, %v2360, 0.0
      %v2369 = vsel %vm669, %v2361, 0.0
      %v2370 = vsel %vm670, %v2362, 0.0
      %v2371 = vsel %vm671, %v2363, 0.0
      %v2372 = vsel %vm672, %v2364, 0.0
      %v2373 = vsel %vm673, %v2365, 0.0
      %s2374 = scalar_lea.vmem %s1, 40
      %v2375 = vld [vmem:[%s2374] sm:$0xf]
      %v2377 = vsel %vm503, %v2366, 0
      %v2380 = vsel %vm503, %v2367, 0
      %v2383 = vsel %vm503, %v2368, 0
      %v2386 = vsel %vm503, %v2369, 0
      %v2389 = vsel %vm503, %v2370, 0
      %v2392 = vsel %vm503, %v2371, 0
      %v2395 = vsel %vm503, %v2372, 0
      %v2398 = vsel %vm503, %v2373, 0
      %v2401 = vsel %vm773, %v2375, 0
      %2403 = vmatprep.subr.mxu0 0.0
      %2404 = vmatpush1.msra.mxu0 0.0
      %2405 = vmatprep.subr.mxu0 0.0
      %2406 = vmatpush1.msra.mxu0 0.0
      %2407 = vmatprep.subr.mxu0 0.0
      %2408 = vmatpush1.msra.mxu0 0.0
      %2409 = vmatprep.subr.mxu0 0.0
      %2410 = vmatpush1.msra.mxu0 0.0
      %2411 = vmatprep.subr.mxu0 0.0
      %2412 = vmatpush1.msra.mxu0 0.0
      %2413 = vmatprep.subr.mxu0 0.0
      %2414 = vmatpush1.msra.mxu0 0.0
      %2415 = vmatprep.subr.mxu0 0.0
      %2416 = vmatpush1.msra.mxu0 0.0
      %2417 = vmatprep.subr.mxu0 0.0
      %2418 = vmatpush1.msra.mxu0 0.0
      %2419 = vmatprep.subr.mxu0 0.0
      %2420 = vmatpush1.msra.mxu0 0.0
      %2421 = vmatprep.subr.mxu0 0.0
      %2422 = vmatpush1.msra.mxu0 0.0
      %2423 = vmatprep.subr.mxu0 0.0
      %2424 = vmatpush1.msra.mxu0 0.0
      %2425 = vmatprep.subr.mxu0 0.0
      %2426 = vmatpush1.msra.mxu0 0.0
      %2427 = vmatprep.subr.mxu0 0.0
      %2428 = vmatpush1.msra.mxu0 0.0
      %2429 = vmatprep.subr.mxu0 0.0
      %2430 = vmatpush1.msra.mxu0 0.0
      %2431 = vmatprep.subr.mxu0 0.0
      %2432 = vmatpush1.msra.mxu0 0.0
      %2433 = vmatprep.subr.mxu0 0.0
      %2434 = vmatpush1.msra.mxu0 %v2401
      %2435 = vmatprep.subr.mxu0 0.0
      %2436 = vmatpush2.msra.mxu0 0.0
      %2437 = vmatprep.subr.mxu0 0.0
      %2438 = vmatpush2.msra.mxu0 0.0
      %2439 = vmatprep.subr.mxu0 0.0
      %2440 = vmatpush2.msra.mxu0 0.0
      %2441 = vmatprep.subr.mxu0 0.0
      %2442 = vmatpush2.msra.mxu0 0.0
      %2443 = vmatprep.subr.mxu0 0.0
      %2444 = vmatpush2.msra.mxu0 0.0
      %2445 = vmatprep.subr.mxu0 0.0
      %2446 = vmatpush2.msra.mxu0 0.0
      %2447 = vmatprep.subr.mxu0 0.0
      %2448 = vmatpush2.msra.mxu0 0.0
      %2449 = vmatprep.subr.mxu0 0.0
      %2450 = vmatpush2.msra.mxu0 0.0
      %2451 = vmatprep.subr.mxu0 0.0
      %2452 = vmatpush2.msra.mxu0 0.0
      %2453 = vmatprep.subr.mxu0 0.0
      %2454 = vmatpush2.msra.mxu0 0.0
      %2455 = vmatprep.subr.mxu0 0.0
      %2456 = vmatpush2.msra.mxu0 0.0
      %2457 = vmatprep.subr.mxu0 0.0
      %2458 = vmatpush2.msra.mxu0 0.0
      %2459 = vmatprep.subr.mxu0 0.0
      %2460 = vmatpush2.msra.mxu0 0.0
      %2461 = vmatprep.subr.mxu0 0.0
      %2462 = vmatpush2.msra.mxu0 0.0
      %2463 = vmatprep.subr.mxu0 0.0
      %2464 = vmatpush2.msra.mxu0 0.0
      %2465 = vmatprep.subr.mxu0 0.0
      %2466 = vmatpush2.msra.mxu0 0.0
      %2467 = vmatprep.mubr.f32.mxu0 0.0
      %2468 = vmatmul.mubr.f32.gmra.mxu0 %v2377
      %v2469 = vpop.f32.mrf.mxu0
      %v2470 = vadd.f32 0.0, %v2469
      %v2471 = vpop.f32.mrf.mxu0
      %2472 = vmatprep.mubr.f32.mxu0 0.0
      %2473 = vmatmul.mubr.f32.gmra.mxu0 %v2380
      %v2474 = vpop.f32.mrf.mxu0
      %v2475 = vadd.f32 0.0, %v2474
      %v2476 = vpop.f32.mrf.mxu0
      %2477 = vmatprep.mubr.f32.mxu0 0.0
      %2478 = vmatmul.mubr.f32.gmra.mxu0 %v2383
      %v2479 = vpop.f32.mrf.mxu0
      %v2480 = vadd.f32 0.0, %v2479
      %v2481 = vpop.f32.mrf.mxu0
      %2482 = vmatprep.mubr.f32.mxu0 0.0
      %2483 = vmatmul.mubr.f32.gmra.mxu0 %v2386
      %v2484 = vpop.f32.mrf.mxu0
      %v2485 = vadd.f32 0.0, %v2484
      %v2486 = vpop.f32.mrf.mxu0
      %2487 = vmatprep.mubr.f32.mxu0 0.0
      %2488 = vmatmul.mubr.f32.gmra.mxu0 %v2389
      %v2489 = vpop.f32.mrf.mxu0
      %v2490 = vadd.f32 0.0, %v2489
      %v2491 = vpop.f32.mrf.mxu0
      %2492 = vmatprep.mubr.f32.mxu0 0.0
      %2493 = vmatmul.mubr.f32.gmra.mxu0 %v2392
      %v2494 = vpop.f32.mrf.mxu0
      %v2495 = vadd.f32 0.0, %v2494
      %v2496 = vpop.f32.mrf.mxu0
      %2497 = vmatprep.mubr.f32.mxu0 0.0
      %2498 = vmatmul.mubr.f32.gmra.mxu0 %v2395
      %v2499 = vpop.f32.mrf.mxu0
      %v2500 = vadd.f32 0.0, %v2499
      %v2501 = vpop.f32.mrf.mxu0
      %2502 = vmatprep.mubr.f32.mxu0 0.0
      %2503 = vmatmul.mubr.f32.gmra.mxu0 %v2398
      %v2504 = vpop.f32.mrf.mxu0
      %v2505 = vadd.f32 0.0, %v2504
      %v2506 = vpop.f32.mrf.mxu0
      %2507 = vdwg.mxu0
      %v2508 = vadd.f32 %v2350, %v2470
      %v2509 = vadd.f32 %v2351, %v2475
      %v2510 = vadd.f32 %v2352, %v2480
      %v2511 = vadd.f32 %v2353, %v2485
      %v2512 = vadd.f32 %v2354, %v2490
      %v2513 = vadd.f32 %v2355, %v2495
      %v2514 = vadd.f32 %v2356, %v2500
      %v2515 = vadd.f32 %v2357, %v2505
      %v2516 = vld [vmem:[#allocation2 + $0x21] sm:$0xff]
      %v2517 = vld [vmem:[#allocation2 + $0x29] sm:$0xff]
      %v2518 = vld [vmem:[#allocation2 + $0x31] sm:$0xff]
      %v2519 = vld [vmem:[#allocation2 + $0x39] sm:$0xff]
      %v2520 = vld [vmem:[#allocation2 + $0x41] sm:$0xff]
      %v2521 = vld [vmem:[#allocation2 + $0x49] sm:$0xff]
      %v2522 = vld [vmem:[#allocation2 + $0x51] sm:$0xff]
      %v2523 = vld [vmem:[#allocation2 + $0x59] sm:$0xff]
      %v2524 = vsel %vm731, %v2516, 0.0
      %v2525 = vsel %vm732, %v2517, 0.0
      %v2526 = vsel %vm733, %v2518, 0.0
      %v2527 = vsel %vm734, %v2519, 0.0
      %v2528 = vsel %vm735, %v2520, 0.0
      %v2529 = vsel %vm736, %v2521, 0.0
      %v2530 = vsel %vm737, %v2522, 0.0
      %v2531 = vsel %vm738, %v2523, 0.0
      %s2532 = scalar_lea.vmem %s1, 44
      %v2533 = vld [vmem:[%s2532] sm:$0xf]
      %v2535 = vsel %vm503, %v2524, 0
      %v2538 = vsel %vm503, %v2525, 0
      %v2541 = vsel %vm503, %v2526, 0
      %v2544 = vsel %vm503, %v2527, 0
      %v2547 = vsel %vm503, %v2528, 0
      %v2550 = vsel %vm503, %v2529, 0
      %v2553 = vsel %vm503, %v2530, 0
      %v2556 = vsel %vm503, %v2531, 0
      %v2559 = vsel %vm773, %v2533, 0
      %2561 = vmatprep.subr.mxu0 0.0
      %2562 = vmatpush1.msra.mxu0 0.0
      %2563 = vmatprep.subr.mxu0 0.0
      %2564 = vmatpush1.msra.mxu0 0.0
      %2565 = vmatprep.subr.mxu0 0.0
      %2566 = vmatpush1.msra.mxu0 0.0
      %2567 = vmatprep.subr.mxu0 0.0
      %2568 = vmatpush1.msra.mxu0 0.0
      %2569 = vmatprep.subr.mxu0 0.0
      %2570 = vmatpush1.msra.mxu0 0.0
      %2571 = vmatprep.subr.mxu0 0.0
      %2572 = vmatpush1.msra.mxu0 0.0
      %2573 = vmatprep.subr.mxu0 0.0
      %2574 = vmatpush1.msra.mxu0 0.0
      %2575 = vmatprep.subr.mxu0 0.0
      %2576 = vmatpush1.msra.mxu0 0.0
      %2577 = vmatprep.subr.mxu0 0.0
      %2578 = vmatpush1.msra.mxu0 0.0
      %2579 = vmatprep.subr.mxu0 0.0
      %2580 = vmatpush1.msra.mxu0 0.0
      %2581 = vmatprep.subr.mxu0 0.0
      %2582 = vmatpush1.msra.mxu0 0.0
      %2583 = vmatprep.subr.mxu0 0.0
      %2584 = vmatpush1.msra.mxu0 0.0
      %2585 = vmatprep.subr.mxu0 0.0
      %2586 = vmatpush1.msra.mxu0 0.0
      %2587 = vmatprep.subr.mxu0 0.0
      %2588 = vmatpush1.msra.mxu0 0.0
      %2589 = vmatprep.subr.mxu0 0.0
      %2590 = vmatpush1.msra.mxu0 0.0
      %2591 = vmatprep.subr.mxu0 0.0
      %2592 = vmatpush1.msra.mxu0 %v2559
      %2593 = vmatprep.subr.mxu0 0.0
      %2594 = vmatpush2.msra.mxu0 0.0
      %2595 = vmatprep.subr.mxu0 0.0
      %2596 = vmatpush2.msra.mxu0 0.0
      %2597 = vmatprep.subr.mxu0 0.0
      %2598 = vmatpush2.msra.mxu0 0.0
      %2599 = vmatprep.subr.mxu0 0.0
      %2600 = vmatpush2.msra.mxu0 0.0
      %2601 = vmatprep.subr.mxu0 0.0
      %2602 = vmatpush2.msra.mxu0 0.0
      %2603 = vmatprep.subr.mxu0 0.0
      %2604 = vmatpush2.msra.mxu0 0.0
      %2605 = vmatprep.subr.mxu0 0.0
      %2606 = vmatpush2.msra.mxu0 0.0
      %2607 = vmatprep.subr.mxu0 0.0
      %2608 = vmatpush2.msra.mxu0 0.0
      %2609 = vmatprep.subr.mxu0 0.0
      %2610 = vmatpush2.msra.mxu0 0.0
      %2611 = vmatprep.subr.mxu0 0.0
      %2612 = vmatpush2.msra.mxu0 0.0
      %2613 = vmatprep.subr.mxu0 0.0
      %2614 = vmatpush2.msra.mxu0 0.0
      %2615 = vmatprep.subr.mxu0 0.0
      %2616 = vmatpush2.msra.mxu0 0.0
      %2617 = vmatprep.subr.mxu0 0.0
      %2618 = vmatpush2.msra.mxu0 0.0
      %2619 = vmatprep.subr.mxu0 0.0
      %2620 = vmatpush2.msra.mxu0 0.0
      %2621 = vmatprep.subr.mxu0 0.0
      %2622 = vmatpush2.msra.mxu0 0.0
      %2623 = vmatprep.subr.mxu0 0.0
      %2624 = vmatpush2.msra.mxu0 0.0
      %2625 = vmatprep.mubr.f32.mxu0 0.0
      %2626 = vmatmul.mubr.f32.gmra.mxu0 %v2535
      %v2627 = vpop.f32.mrf.mxu0
      %v2628 = vadd.f32 0.0, %v2627
      %v2629 = vpop.f32.mrf.mxu0
      %2630 = vmatprep.mubr.f32.mxu0 0.0
      %2631 = vmatmul.mubr.f32.gmra.mxu0 %v2538
      %v2632 = vpop.f32.mrf.mxu0
      %v2633 = vadd.f32 0.0, %v2632
      %v2634 = vpop.f32.mrf.mxu0
      %2635 = vmatprep.mubr.f32.mxu0 0.0
      %2636 = vmatmul.mubr.f32.gmra.mxu0 %v2541
      %v2637 = vpop.f32.mrf.mxu0
      %v2638 = vadd.f32 0.0, %v2637
      %v2639 = vpop.f32.mrf.mxu0
      %2640 = vmatprep.mubr.f32.mxu0 0.0
      %2641 = vmatmul.mubr.f32.gmra.mxu0 %v2544
      %v2642 = vpop.f32.mrf.mxu0
      %v2643 = vadd.f32 0.0, %v2642
      %v2644 = vpop.f32.mrf.mxu0
      %2645 = vmatprep.mubr.f32.mxu0 0.0
      %2646 = vmatmul.mubr.f32.gmra.mxu0 %v2547
      %v2647 = vpop.f32.mrf.mxu0
      %v2648 = vadd.f32 0.0, %v2647
      %v2649 = vpop.f32.mrf.mxu0
      %2650 = vmatprep.mubr.f32.mxu0 0.0
      %2651 = vmatmul.mubr.f32.gmra.mxu0 %v2550
      %v2652 = vpop.f32.mrf.mxu0
      %v2653 = vadd.f32 0.0, %v2652
      %v2654 = vpop.f32.mrf.mxu0
      %2655 = vmatprep.mubr.f32.mxu0 0.0
      %2656 = vmatmul.mubr.f32.gmra.mxu0 %v2553
      %v2657 = vpop.f32.mrf.mxu0
      %v2658 = vadd.f32 0.0, %v2657
      %v2659 = vpop.f32.mrf.mxu0
      %2660 = vmatprep.mubr.f32.mxu0 0.0
      %2661 = vmatmul.mubr.f32.gmra.mxu0 %v2556
      %v2662 = vpop.f32.mrf.mxu0
      %v2663 = vadd.f32 0.0, %v2662
      %v2664 = vpop.f32.mrf.mxu0
      %2665 = vdwg.mxu0
      %v2666 = vadd.f32 %v2508, %v2628
      %v2667 = vadd.f32 %v2509, %v2633
      %v2668 = vadd.f32 %v2510, %v2638
      %v2669 = vadd.f32 %v2511, %v2643
      %v2670 = vadd.f32 %v2512, %v2648
      %v2671 = vadd.f32 %v2513, %v2653
      %v2672 = vadd.f32 %v2514, %v2658
      %v2673 = vadd.f32 %v2515, %v2663
      %v2674 = vld [vmem:[#allocation2 + $0x22] sm:$0xff]
      %v2675 = vld [vmem:[#allocation2 + $0x2a] sm:$0xff]
      %v2676 = vld [vmem:[#allocation2 + $0x32] sm:$0xff]
      %v2677 = vld [vmem:[#allocation2 + $0x3a] sm:$0xff]
      %v2678 = vld [vmem:[#allocation2 + $0x42] sm:$0xff]
      %v2679 = vld [vmem:[#allocation2 + $0x4a] sm:$0xff]
      %v2680 = vld [vmem:[#allocation2 + $0x52] sm:$0xff]
      %v2681 = vld [vmem:[#allocation2 + $0x5a] sm:$0xff]
      %s2682 = scalar_lea.vmem %s1, 48
      %v2683 = vld [vmem:[%s2682] sm:$0xf]
      %v2685 = vsel %vm503, %v2674, 0
      %v2688 = vsel %vm503, %v2675, 0
      %v2691 = vsel %vm503, %v2676, 0
      %v2694 = vsel %vm503, %v2677, 0
      %v2697 = vsel %vm503, %v2678, 0
      %v2700 = vsel %vm503, %v2679, 0
      %v2703 = vsel %vm503, %v2680, 0
      %v2706 = vsel %vm503, %v2681, 0
      %v2709 = vsel %vm773, %v2683, 0
      %2711 = vmatprep.subr.mxu0 0.0
      %2712 = vmatpush1.msra.mxu0 0.0
      %2713 = vmatprep.subr.mxu0 0.0
      %2714 = vmatpush1.msra.mxu0 0.0
      %2715 = vmatprep.subr.mxu0 0.0
      %2716 = vmatpush1.msra.mxu0 0.0
      %2717 = vmatprep.subr.mxu0 0.0
      %2718 = vmatpush1.msra.mxu0 0.0
      %2719 = vmatprep.subr.mxu0 0.0
      %2720 = vmatpush1.msra.mxu0 0.0
      %2721 = vmatprep.subr.mxu0 0.0
      %2722 = vmatpush1.msra.mxu0 0.0
      %2723 = vmatprep.subr.mxu0 0.0
      %2724 = vmatpush1.msra.mxu0 0.0
      %2725 = vmatprep.subr.mxu0 0.0
      %2726 = vmatpush1.msra.mxu0 0.0
      %2727 = vmatprep.subr.mxu0 0.0
      %2728 = vmatpush1.msra.mxu0 0.0
      %2729 = vmatprep.subr.mxu0 0.0
      %2730 = vmatpush1.msra.mxu0 0.0
      %2731 = vmatprep.subr.mxu0 0.0
      %2732 = vmatpush1.msra.mxu0 0.0
      %2733 = vmatprep.subr.mxu0 0.0
      %2734 = vmatpush1.msra.mxu0 0.0
      %2735 = vmatprep.subr.mxu0 0.0
      %2736 = vmatpush1.msra.mxu0 0.0
      %2737 = vmatprep.subr.mxu0 0.0
      %2738 = vmatpush1.msra.mxu0 0.0
      %2739 = vmatprep.subr.mxu0 0.0
      %2740 = vmatpush1.msra.mxu0 0.0
      %2741 = vmatprep.subr.mxu0 0.0
      %2742 = vmatpush1.msra.mxu0 %v2709
      %2743 = vmatprep.subr.mxu0 0.0
      %2744 = vmatpush2.msra.mxu0 0.0
      %2745 = vmatprep.subr.mxu0 0.0
      %2746 = vmatpush2.msra.mxu0 0.0
      %2747 = vmatprep.subr.mxu0 0.0
      %2748 = vmatpush2.msra.mxu0 0.0
      %2749 = vmatprep.subr.mxu0 0.0
      %2750 = vmatpush2.msra.mxu0 0.0
      %2751 = vmatprep.subr.mxu0 0.0
      %2752 = vmatpush2.msra.mxu0 0.0
      %2753 = vmatprep.subr.mxu0 0.0
      %2754 = vmatpush2.msra.mxu0 0.0
      %2755 = vmatprep.subr.mxu0 0.0
      %2756 = vmatpush2.msra.mxu0 0.0
      %2757 = vmatprep.subr.mxu0 0.0
      %2758 = vmatpush2.msra.mxu0 0.0
      %2759 = vmatprep.subr.mxu0 0.0
      %2760 = vmatpush2.msra.mxu0 0.0
      %2761 = vmatprep.subr.mxu0 0.0
      %2762 = vmatpush2.msra.mxu0 0.0
      %2763 = vmatprep.subr.mxu0 0.0
      %2764 = vmatpush2.msra.mxu0 0.0
      %2765 = vmatprep.subr.mxu0 0.0
      %2766 = vmatpush2.msra.mxu0 0.0
      %2767 = vmatprep.subr.mxu0 0.0
      %2768 = vmatpush2.msra.mxu0 0.0
      %2769 = vmatprep.subr.mxu0 0.0
      %2770 = vmatpush2.msra.mxu0 0.0
      %2771 = vmatprep.subr.mxu0 0.0
      %2772 = vmatpush2.msra.mxu0 0.0
      %2773 = vmatprep.subr.mxu0 0.0
      %2774 = vmatpush2.msra.mxu0 0.0
      %2775 = vmatprep.mubr.f32.mxu0 0.0
      %2776 = vmatmul.mubr.f32.gmra.mxu0 %v2685
      %v2777 = vpop.f32.mrf.mxu0
      %v2778 = vadd.f32 0.0, %v2777
      %v2779 = vpop.f32.mrf.mxu0
      %2780 = vmatprep.mubr.f32.mxu0 0.0
      %2781 = vmatmul.mubr.f32.gmra.mxu0 %v2688
      %v2782 = vpop.f32.mrf.mxu0
      %v2783 = vadd.f32 0.0, %v2782
      %v2784 = vpop.f32.mrf.mxu0
      %2785 = vmatprep.mubr.f32.mxu0 0.0
      %2786 = vmatmul.mubr.f32.gmra.mxu0 %v2691
      %v2787 = vpop.f32.mrf.mxu0
      %v2788 = vadd.f32 0.0, %v2787
      %v2789 = vpop.f32.mrf.mxu0
      %2790 = vmatprep.mubr.f32.mxu0 0.0
      %2791 = vmatmul.mubr.f32.gmra.mxu0 %v2694
      %v2792 = vpop.f32.mrf.mxu0
      %v2793 = vadd.f32 0.0, %v2792
      %v2794 = vpop.f32.mrf.mxu0
      %2795 = vmatprep.mubr.f32.mxu0 0.0
      %2796 = vmatmul.mubr.f32.gmra.mxu0 %v2697
      %v2797 = vpop.f32.mrf.mxu0
      %v2798 = vadd.f32 0.0, %v2797
      %v2799 = vpop.f32.mrf.mxu0
      %2800 = vmatprep.mubr.f32.mxu0 0.0
      %2801 = vmatmul.mubr.f32.gmra.mxu0 %v2700
      %v2802 = vpop.f32.mrf.mxu0
      %v2803 = vadd.f32 0.0, %v2802
      %v2804 = vpop.f32.mrf.mxu0
      %2805 = vmatprep.mubr.f32.mxu0 0.0
      %2806 = vmatmul.mubr.f32.gmra.mxu0 %v2703
      %v2807 = vpop.f32.mrf.mxu0
      %v2808 = vadd.f32 0.0, %v2807
      %v2809 = vpop.f32.mrf.mxu0
      %2810 = vmatprep.mubr.f32.mxu0 0.0
      %2811 = vmatmul.mubr.f32.gmra.mxu0 %v2706
      %v2812 = vpop.f32.mrf.mxu0
      %v2813 = vadd.f32 0.0, %v2812
      %v2814 = vpop.f32.mrf.mxu0
      %2815 = vdwg.mxu0
      %v2816 = vadd.f32 %v2666, %v2778
      %v2817 = vadd.f32 %v2667, %v2783
      %v2818 = vadd.f32 %v2668, %v2788
      %v2819 = vadd.f32 %v2669, %v2793
      %v2820 = vadd.f32 %v2670, %v2798
      %v2821 = vadd.f32 %v2671, %v2803
      %v2822 = vadd.f32 %v2672, %v2808
      %v2823 = vadd.f32 %v2673, %v2813
      %v2824 = vld [vmem:[#allocation2 + $0x23] sm:$0xff]
      %v2825 = vld [vmem:[#allocation2 + $0x2b] sm:$0xff]
      %v2826 = vld [vmem:[#allocation2 + $0x33] sm:$0xff]
      %v2827 = vld [vmem:[#allocation2 + $0x3b] sm:$0xff]
      %v2828 = vld [vmem:[#allocation2 + $0x43] sm:$0xff]
      %v2829 = vld [vmem:[#allocation2 + $0x4b] sm:$0xff]
      %v2830 = vld [vmem:[#allocation2 + $0x53] sm:$0xff]
      %v2831 = vld [vmem:[#allocation2 + $0x5b] sm:$0xff]
      %v2832 = vsel %vm1212, %v2824, 0.0
      %v2833 = vsel %vm1213, %v2825, 0.0
      %v2834 = vsel %vm1214, %v2826, 0.0
      %v2835 = vsel %vm1215, %v2827, 0.0
      %v2836 = vsel %vm1216, %v2828, 0.0
      %v2837 = vsel %vm1217, %v2829, 0.0
      %v2838 = vsel %vm1218, %v2830, 0.0
      %v2839 = vsel %vm1219, %v2831, 0.0
      %s2840 = scalar_lea.vmem %s1, 52
      %v2841 = vld [vmem:[%s2840] sm:$0xf]
      %v2843 = vsel %vm503, %v2832, 0
      %v2846 = vsel %vm503, %v2833, 0
      %v2849 = vsel %vm503, %v2834, 0
      %v2852 = vsel %vm503, %v2835, 0
      %v2855 = vsel %vm503, %v2836, 0
      %v2858 = vsel %vm503, %v2837, 0
      %v2861 = vsel %vm503, %v2838, 0
      %v2864 = vsel %vm503, %v2839, 0
      %v2867 = vsel %vm773, %v2841, 0
      %2869 = vmatprep.subr.mxu0 0.0
      %2870 = vmatpush1.msra.mxu0 0.0
      %2871 = vmatprep.subr.mxu0 0.0
      %2872 = vmatpush1.msra.mxu0 0.0
      %2873 = vmatprep.subr.mxu0 0.0
      %2874 = vmatpush1.msra.mxu0 0.0
      %2875 = vmatprep.subr.mxu0 0.0
      %2876 = vmatpush1.msra.mxu0 0.0
      %2877 = vmatprep.subr.mxu0 0.0
      %2878 = vmatpush1.msra.mxu0 0.0
      %2879 = vmatprep.subr.mxu0 0.0
      %2880 = vmatpush1.msra.mxu0 0.0
      %2881 = vmatprep.subr.mxu0 0.0
      %2882 = vmatpush1.msra.mxu0 0.0
      %2883 = vmatprep.subr.mxu0 0.0
      %2884 = vmatpush1.msra.mxu0 0.0
      %2885 = vmatprep.subr.mxu0 0.0
      %2886 = vmatpush1.msra.mxu0 0.0
      %2887 = vmatprep.subr.mxu0 0.0
      %2888 = vmatpush1.msra.mxu0 0.0
      %2889 = vmatprep.subr.mxu0 0.0
      %2890 = vmatpush1.msra.mxu0 0.0
      %2891 = vmatprep.subr.mxu0 0.0
      %2892 = vmatpush1.msra.mxu0 0.0
      %2893 = vmatprep.subr.mxu0 0.0
      %2894 = vmatpush1.msra.mxu0 0.0
      %2895 = vmatprep.subr.mxu0 0.0
      %2896 = vmatpush1.msra.mxu0 0.0
      %2897 = vmatprep.subr.mxu0 0.0
      %2898 = vmatpush1.msra.mxu0 0.0
      %2899 = vmatprep.subr.mxu0 0.0
      %2900 = vmatpush1.msra.mxu0 %v2867
      %2901 = vmatprep.subr.mxu0 0.0
      %2902 = vmatpush2.msra.mxu0 0.0
      %2903 = vmatprep.subr.mxu0 0.0
      %2904 = vmatpush2.msra.mxu0 0.0
      %2905 = vmatprep.subr.mxu0 0.0
      %2906 = vmatpush2.msra.mxu0 0.0
      %2907 = vmatprep.subr.mxu0 0.0
      %2908 = vmatpush2.msra.mxu0 0.0
      %2909 = vmatprep.subr.mxu0 0.0
      %2910 = vmatpush2.msra.mxu0 0.0
      %2911 = vmatprep.subr.mxu0 0.0
      %2912 = vmatpush2.msra.mxu0 0.0
      %2913 = vmatprep.subr.mxu0 0.0
      %2914 = vmatpush2.msra.mxu0 0.0
      %2915 = vmatprep.subr.mxu0 0.0
      %2916 = vmatpush2.msra.mxu0 0.0
      %2917 = vmatprep.subr.mxu0 0.0
      %2918 = vmatpush2.msra.mxu0 0.0
      %2919 = vmatprep.subr.mxu0 0.0
      %2920 = vmatpush2.msra.mxu0 0.0
      %2921 = vmatprep.subr.mxu0 0.0
      %2922 = vmatpush2.msra.mxu0 0.0
      %2923 = vmatprep.subr.mxu0 0.0
      %2924 = vmatpush2.msra.mxu0 0.0
      %2925 = vmatprep.subr.mxu0 0.0
      %2926 = vmatpush2.msra.mxu0 0.0
      %2927 = vmatprep.subr.mxu0 0.0
      %2928 = vmatpush2.msra.mxu0 0.0
      %2929 = vmatprep.subr.mxu0 0.0
      %2930 = vmatpush2.msra.mxu0 0.0
      %2931 = vmatprep.subr.mxu0 0.0
      %2932 = vmatpush2.msra.mxu0 0.0
      %2933 = vmatprep.mubr.f32.mxu0 0.0
      %2934 = vmatmul.mubr.f32.gmra.mxu0 %v2843
      %v2935 = vpop.f32.mrf.mxu0
      %v2936 = vadd.f32 0.0, %v2935
      %v2937 = vpop.f32.mrf.mxu0
      %2938 = vmatprep.mubr.f32.mxu0 0.0
      %2939 = vmatmul.mubr.f32.gmra.mxu0 %v2846
      %v2940 = vpop.f32.mrf.mxu0
      %v2941 = vadd.f32 0.0, %v2940
      %v2942 = vpop.f32.mrf.mxu0
      %2943 = vmatprep.mubr.f32.mxu0 0.0
      %2944 = vmatmul.mubr.f32.gmra.mxu0 %v2849
      %v2945 = vpop.f32.mrf.mxu0
      %v2946 = vadd.f32 0.0, %v2945
      %v2947 = vpop.f32.mrf.mxu0
      %2948 = vmatprep.mubr.f32.mxu0 0.0
      %2949 = vmatmul.mubr.f32.gmra.mxu0 %v2852
      %v2950 = vpop.f32.mrf.mxu0
      %v2951 = vadd.f32 0.0, %v2950
      %v2952 = vpop.f32.mrf.mxu0
      %2953 = vmatprep.mubr.f32.mxu0 0.0
      %2954 = vmatmul.mubr.f32.gmra.mxu0 %v2855
      %v2955 = vpop.f32.mrf.mxu0
      %v2956 = vadd.f32 0.0, %v2955
      %v2957 = vpop.f32.mrf.mxu0
      %2958 = vmatprep.mubr.f32.mxu0 0.0
      %2959 = vmatmul.mubr.f32.gmra.mxu0 %v2858
      %v2960 = vpop.f32.mrf.mxu0
      %v2961 = vadd.f32 0.0, %v2960
      %v2962 = vpop.f32.mrf.mxu0
      %2963 = vmatprep.mubr.f32.mxu0 0.0
      %2964 = vmatmul.mubr.f32.gmra.mxu0 %v2861
      %v2965 = vpop.f32.mrf.mxu0
      %v2966 = vadd.f32 0.0, %v2965
      %v2967 = vpop.f32.mrf.mxu0
      %2968 = vmatprep.mubr.f32.mxu0 0.0
      %2969 = vmatmul.mubr.f32.gmra.mxu0 %v2864
      %v2970 = vpop.f32.mrf.mxu0
      %v2971 = vadd.f32 0.0, %v2970
      %v2972 = vpop.f32.mrf.mxu0
      %2973 = vdwg.mxu0
      %v2974 = vadd.f32 %v2816, %v2936
      %v2975 = vadd.f32 %v2817, %v2941
      %v2976 = vadd.f32 %v2818, %v2946
      %v2977 = vadd.f32 %v2819, %v2951
      %v2978 = vadd.f32 %v2820, %v2956
      %v2979 = vadd.f32 %v2821, %v2961
      %v2980 = vadd.f32 %v2822, %v2966
      %v2981 = vadd.f32 %v2823, %v2971
      %v2982 = vld [vmem:[#allocation2 + $0x24] sm:$0xff]
      %v2983 = vld [vmem:[#allocation2 + $0x2c] sm:$0xff]
      %v2984 = vld [vmem:[#allocation2 + $0x34] sm:$0xff]
      %v2985 = vld [vmem:[#allocation2 + $0x3c] sm:$0xff]
      %v2986 = vld [vmem:[#allocation2 + $0x44] sm:$0xff]
      %v2987 = vld [vmem:[#allocation2 + $0x4c] sm:$0xff]
      %v2988 = vld [vmem:[#allocation2 + $0x54] sm:$0xff]
      %v2989 = vld [vmem:[#allocation2 + $0x5c] sm:$0xff]
      %v2990 = vsel %vm1418, %v2982, 0.0
      %v2991 = vsel %vm1419, %v2983, 0.0
      %v2992 = vsel %vm1420, %v2984, 0.0
      %v2993 = vsel %vm1421, %v2985, 0.0
      %v2994 = vsel %vm1422, %v2986, 0.0
      %v2995 = vsel %vm1423, %v2987, 0.0
      %v2996 = vsel %vm1424, %v2988, 0.0
      %v2997 = vsel %vm1425, %v2989, 0.0
      %s2998 = scalar_lea.vmem %s1, 56
      %v2999 = vld [vmem:[%s2998] sm:$0xf]
      %v3001 = vsel %vm503, %v2990, 0
      %v3004 = vsel %vm503, %v2991, 0
      %v3007 = vsel %vm503, %v2992, 0
      %v3010 = vsel %vm503, %v2993, 0
      %v3013 = vsel %vm503, %v2994, 0
      %v3016 = vsel %vm503, %v2995, 0
      %v3019 = vsel %vm503, %v2996, 0
      %v3022 = vsel %vm503, %v2997, 0
      %v3025 = vsel %vm773, %v2999, 0
      %3027 = vmatprep.subr.mxu0 0.0
      %3028 = vmatpush1.msra.mxu0 0.0
      %3029 = vmatprep.subr.mxu0 0.0
      %3030 = vmatpush1.msra.mxu0 0.0
      %3031 = vmatprep.subr.mxu0 0.0
      %3032 = vmatpush1.msra.mxu0 0.0
      %3033 = vmatprep.subr.mxu0 0.0
      %3034 = vmatpush1.msra.mxu0 0.0
      %3035 = vmatprep.subr.mxu0 0.0
      %3036 = vmatpush1.msra.mxu0 0.0
      %3037 = vmatprep.subr.mxu0 0.0
      %3038 = vmatpush1.msra.mxu0 0.0
      %3039 = vmatprep.subr.mxu0 0.0
      %3040 = vmatpush1.msra.mxu0 0.0
      %3041 = vmatprep.subr.mxu0 0.0
      %3042 = vmatpush1.msra.mxu0 0.0
      %3043 = vmatprep.subr.mxu0 0.0
      %3044 = vmatpush1.msra.mxu0 0.0
      %3045 = vmatprep.subr.mxu0 0.0
      %3046 = vmatpush1.msra.mxu0 0.0
      %3047 = vmatprep.subr.mxu0 0.0
      %3048 = vmatpush1.msra.mxu0 0.0
      %3049 = vmatprep.subr.mxu0 0.0
      %3050 = vmatpush1.msra.mxu0 0.0
      %3051 = vmatprep.subr.mxu0 0.0
      %3052 = vmatpush1.msra.mxu0 0.0
      %3053 = vmatprep.subr.mxu0 0.0
      %3054 = vmatpush1.msra.mxu0 0.0
      %3055 = vmatprep.subr.mxu0 0.0
      %3056 = vmatpush1.msra.mxu0 0.0
      %3057 = vmatprep.subr.mxu0 0.0
      %3058 = vmatpush1.msra.mxu0 %v3025
      %3059 = vmatprep.subr.mxu0 0.0
      %3060 = vmatpush2.msra.mxu0 0.0
      %3061 = vmatprep.subr.mxu0 0.0
      %3062 = vmatpush2.msra.mxu0 0.0
      %3063 = vmatprep.subr.mxu0 0.0
      %3064 = vmatpush2.msra.mxu0 0.0
      %3065 = vmatprep.subr.mxu0 0.0
      %3066 = vmatpush2.msra.mxu0 0.0
      %3067 = vmatprep.subr.mxu0 0.0
      %3068 = vmatpush2.msra.mxu0 0.0
      %3069 = vmatprep.subr.mxu0 0.0
      %3070 = vmatpush2.msra.mxu0 0.0
      %3071 = vmatprep.subr.mxu0 0.0
      %3072 = vmatpush2.msra.mxu0 0.0
      %3073 = vmatprep.subr.mxu0 0.0
      %3074 = vmatpush2.msra.mxu0 0.0
      %3075 = vmatprep.subr.mxu0 0.0
      %3076 = vmatpush2.msra.mxu0 0.0
      %3077 = vmatprep.subr.mxu0 0.0
      %3078 = vmatpush2.msra.mxu0 0.0
      %3079 = vmatprep.subr.mxu0 0.0
      %3080 = vmatpush2.msra.mxu0 0.0
      %3081 = vmatprep.subr.mxu0 0.0
      %3082 = vmatpush2.msra.mxu0 0.0
      %3083 = vmatprep.subr.mxu0 0.0
      %3084 = vmatpush2.msra.mxu0 0.0
      %3085 = vmatprep.subr.mxu0 0.0
      %3086 = vmatpush2.msra.mxu0 0.0
      %3087 = vmatprep.subr.mxu0 0.0
      %3088 = vmatpush2.msra.mxu0 0.0
      %3089 = vmatprep.subr.mxu0 0.0
      %3090 = vmatpush2.msra.mxu0 0.0
      %3091 = vmatprep.mubr.f32.mxu0 0.0
      %3092 = vmatmul.mubr.f32.gmra.mxu0 %v3001
      %v3093 = vpop.f32.mrf.mxu0
      %v3094 = vadd.f32 0.0, %v3093
      %v3095 = vpop.f32.mrf.mxu0
      %3096 = vmatprep.mubr.f32.mxu0 0.0
      %3097 = vmatmul.mubr.f32.gmra.mxu0 %v3004
      %v3098 = vpop.f32.mrf.mxu0
      %v3099 = vadd.f32 0.0, %v3098
      %v3100 = vpop.f32.mrf.mxu0
      %3101 = vmatprep.mubr.f32.mxu0 0.0
      %3102 = vmatmul.mubr.f32.gmra.mxu0 %v3007
      %v3103 = vpop.f32.mrf.mxu0
      %v3104 = vadd.f32 0.0, %v3103
      %v3105 = vpop.f32.mrf.mxu0
      %3106 = vmatprep.mubr.f32.mxu0 0.0
      %3107 = vmatmul.mubr.f32.gmra.mxu0 %v3010
      %v3108 = vpop.f32.mrf.mxu0
      %v3109 = vadd.f32 0.0, %v3108
      %v3110 = vpop.f32.mrf.mxu0
      %3111 = vmatprep.mubr.f32.mxu0 0.0
      %3112 = vmatmul.mubr.f32.gmra.mxu0 %v3013
      %v3113 = vpop.f32.mrf.mxu0
      %v3114 = vadd.f32 0.0, %v3113
      %v3115 = vpop.f32.mrf.mxu0
      %3116 = vmatprep.mubr.f32.mxu0 0.0
      %3117 = vmatmul.mubr.f32.gmra.mxu0 %v3016
      %v3118 = vpop.f32.mrf.mxu0
      %v3119 = vadd.f32 0.0, %v3118
      %v3120 = vpop.f32.mrf.mxu0
      %3121 = vmatprep.mubr.f32.mxu0 0.0
      %3122 = vmatmul.mubr.f32.gmra.mxu0 %v3019
      %v3123 = vpop.f32.mrf.mxu0
      %v3124 = vadd.f32 0.0, %v3123
      %v3125 = vpop.f32.mrf.mxu0
      %3126 = vmatprep.mubr.f32.mxu0 0.0
      %3127 = vmatmul.mubr.f32.gmra.mxu0 %v3022
      %v3128 = vpop.f32.mrf.mxu0
      %v3129 = vadd.f32 0.0, %v3128
      %v3130 = vpop.f32.mrf.mxu0
      %3131 = vdwg.mxu0
      %v3132 = vadd.f32 %v2974, %v3094
      %v3133 = vadd.f32 %v2975, %v3099
      %v3134 = vadd.f32 %v2976, %v3104
      %v3135 = vadd.f32 %v2977, %v3109
      %v3136 = vadd.f32 %v2978, %v3114
      %v3137 = vadd.f32 %v2979, %v3119
      %v3138 = vadd.f32 %v2980, %v3124
      %v3139 = vadd.f32 %v2981, %v3129
      %v3140 = vld [vmem:[#allocation2 + $0x30] sm:$0xff]
      %v3141 = vld [vmem:[#allocation2 + $0x38] sm:$0xff]
      %v3142 = vld [vmem:[#allocation2 + $0x40] sm:$0xff]
      %v3143 = vld [vmem:[#allocation2 + $0x48] sm:$0xff]
      %v3144 = vld [vmem:[#allocation2 + $0x50] sm:$0xff]
      %v3145 = vld [vmem:[#allocation2 + $0x58] sm:$0xff]
      %v3146 = vld [vmem:[#allocation2 + $0x60] sm:$0xff]
      %v3147 = vld [vmem:[#allocation2 + $0x68] sm:$0xff]
      %v3148 = vsel %vm666, %v3140, 0.0
      %v3149 = vsel %vm667, %v3141, 0.0
      %v3150 = vsel %vm668, %v3142, 0.0
      %v3151 = vsel %vm669, %v3143, 0.0
      %v3152 = vsel %vm670, %v3144, 0.0
      %v3153 = vsel %vm671, %v3145, 0.0
      %v3154 = vsel %vm672, %v3146, 0.0
      %v3155 = vsel %vm673, %v3147, 0.0
      %s3156 = scalar_lea.vmem %s1, 60
      %v3157 = vld [vmem:[%s3156] sm:$0xf]
      %v3159 = vsel %vm503, %v3148, 0
      %v3162 = vsel %vm503, %v3149, 0
      %v3165 = vsel %vm503, %v3150, 0
      %v3168 = vsel %vm503, %v3151, 0
      %v3171 = vsel %vm503, %v3152, 0
      %v3174 = vsel %vm503, %v3153, 0
      %v3177 = vsel %vm503, %v3154, 0
      %v3180 = vsel %vm503, %v3155, 0
      %v3183 = vsel %vm773, %v3157, 0
      %3185 = vmatprep.subr.mxu0 0.0
      %3186 = vmatpush1.msra.mxu0 0.0
      %3187 = vmatprep.subr.mxu0 0.0
      %3188 = vmatpush1.msra.mxu0 0.0
      %3189 = vmatprep.subr.mxu0 0.0
      %3190 = vmatpush1.msra.mxu0 0.0
      %3191 = vmatprep.subr.mxu0 0.0
      %3192 = vmatpush1.msra.mxu0 0.0
      %3193 = vmatprep.subr.mxu0 0.0
      %3194 = vmatpush1.msra.mxu0 0.0
      %3195 = vmatprep.subr.mxu0 0.0
      %3196 = vmatpush1.msra.mxu0 0.0
      %3197 = vmatprep.subr.mxu0 0.0
      %3198 = vmatpush1.msra.mxu0 0.0
      %3199 = vmatprep.subr.mxu0 0.0
      %3200 = vmatpush1.msra.mxu0 0.0
      %3201 = vmatprep.subr.mxu0 0.0
      %3202 = vmatpush1.msra.mxu0 0.0
      %3203 = vmatprep.subr.mxu0 0.0
      %3204 = vmatpush1.msra.mxu0 0.0
      %3205 = vmatprep.subr.mxu0 0.0
      %3206 = vmatpush1.msra.mxu0 0.0
      %3207 = vmatprep.subr.mxu0 0.0
      %3208 = vmatpush1.msra.mxu0 0.0
      %3209 = vmatprep.subr.mxu0 0.0
      %3210 = vmatpush1.msra.mxu0 0.0
      %3211 = vmatprep.subr.mxu0 0.0
      %3212 = vmatpush1.msra.mxu0 0.0
      %3213 = vmatprep.subr.mxu0 0.0
      %3214 = vmatpush1.msra.mxu0 0.0
      %3215 = vmatprep.subr.mxu0 0.0
      %3216 = vmatpush1.msra.mxu0 %v3183
      %3217 = vmatprep.subr.mxu0 0.0
      %3218 = vmatpush2.msra.mxu0 0.0
      %3219 = vmatprep.subr.mxu0 0.0
      %3220 = vmatpush2.msra.mxu0 0.0
      %3221 = vmatprep.subr.mxu0 0.0
      %3222 = vmatpush2.msra.mxu0 0.0
      %3223 = vmatprep.subr.mxu0 0.0
      %3224 = vmatpush2.msra.mxu0 0.0
      %3225 = vmatprep.subr.mxu0 0.0
      %3226 = vmatpush2.msra.mxu0 0.0
      %3227 = vmatprep.subr.mxu0 0.0
      %3228 = vmatpush2.msra.mxu0 0.0
      %3229 = vmatprep.subr.mxu0 0.0
      %3230 = vmatpush2.msra.mxu0 0.0
      %3231 = vmatprep.subr.mxu0 0.0
      %3232 = vmatpush2.msra.mxu0 0.0
      %3233 = vmatprep.subr.mxu0 0.0
      %3234 = vmatpush2.msra.mxu0 0.0
      %3235 = vmatprep.subr.mxu0 0.0
      %3236 = vmatpush2.msra.mxu0 0.0
      %3237 = vmatprep.subr.mxu0 0.0
      %3238 = vmatpush2.msra.mxu0 0.0
      %3239 = vmatprep.subr.mxu0 0.0
      %3240 = vmatpush2.msra.mxu0 0.0
      %3241 = vmatprep.subr.mxu0 0.0
      %3242 = vmatpush2.msra.mxu0 0.0
      %3243 = vmatprep.subr.mxu0 0.0
      %3244 = vmatpush2.msra.mxu0 0.0
      %3245 = vmatprep.subr.mxu0 0.0
      %3246 = vmatpush2.msra.mxu0 0.0
      %3247 = vmatprep.subr.mxu0 0.0
      %3248 = vmatpush2.msra.mxu0 0.0
      %3249 = vmatprep.mubr.f32.mxu0 0.0
      %3250 = vmatmul.mubr.f32.gmra.mxu0 %v3159
      %v3251 = vpop.f32.mrf.mxu0
      %v3252 = vadd.f32 0.0, %v3251
      %v3253 = vpop.f32.mrf.mxu0
      %3254 = vmatprep.mubr.f32.mxu0 0.0
      %3255 = vmatmul.mubr.f32.gmra.mxu0 %v3162
      %v3256 = vpop.f32.mrf.mxu0
      %v3257 = vadd.f32 0.0, %v3256
      %v3258 = vpop.f32.mrf.mxu0
      %3259 = vmatprep.mubr.f32.mxu0 0.0
      %3260 = vmatmul.mubr.f32.gmra.mxu0 %v3165
      %v3261 = vpop.f32.mrf.mxu0
      %v3262 = vadd.f32 0.0, %v3261
      %v3263 = vpop.f32.mrf.mxu0
      %3264 = vmatprep.mubr.f32.mxu0 0.0
      %3265 = vmatmul.mubr.f32.gmra.mxu0 %v3168
      %v3266 = vpop.f32.mrf.mxu0
      %v3267 = vadd.f32 0.0, %v3266
      %v3268 = vpop.f32.mrf.mxu0
      %3269 = vmatprep.mubr.f32.mxu0 0.0
      %3270 = vmatmul.mubr.f32.gmra.mxu0 %v3171
      %v3271 = vpop.f32.mrf.mxu0
      %v3272 = vadd.f32 0.0, %v3271
      %v3273 = vpop.f32.mrf.mxu0
      %3274 = vmatprep.mubr.f32.mxu0 0.0
      %3275 = vmatmul.mubr.f32.gmra.mxu0 %v3174
      %v3276 = vpop.f32.mrf.mxu0
      %v3277 = vadd.f32 0.0, %v3276
      %v3278 = vpop.f32.mrf.mxu0
      %3279 = vmatprep.mubr.f32.mxu0 0.0
      %3280 = vmatmul.mubr.f32.gmra.mxu0 %v3177
      %v3281 = vpop.f32.mrf.mxu0
      %v3282 = vadd.f32 0.0, %v3281
      %v3283 = vpop.f32.mrf.mxu0
      %3284 = vmatprep.mubr.f32.mxu0 0.0
      %3285 = vmatmul.mubr.f32.gmra.mxu0 %v3180
      %v3286 = vpop.f32.mrf.mxu0
      %v3287 = vadd.f32 0.0, %v3286
      %v3288 = vpop.f32.mrf.mxu0
      %3289 = vdwg.mxu0
      %v3290 = vadd.f32 %v3132, %v3252
      %v3291 = vadd.f32 %v3133, %v3257
      %v3292 = vadd.f32 %v3134, %v3262
      %v3293 = vadd.f32 %v3135, %v3267
      %v3294 = vadd.f32 %v3136, %v3272
      %v3295 = vadd.f32 %v3137, %v3277
      %v3296 = vadd.f32 %v3138, %v3282
      %v3297 = vadd.f32 %v3139, %v3287
      %v3298 = vld [vmem:[#allocation2 + $0x31] sm:$0xff]
      %v3299 = vld [vmem:[#allocation2 + $0x39] sm:$0xff]
      %v3300 = vld [vmem:[#allocation2 + $0x41] sm:$0xff]
      %v3301 = vld [vmem:[#allocation2 + $0x49] sm:$0xff]
      %v3302 = vld [vmem:[#allocation2 + $0x51] sm:$0xff]
      %v3303 = vld [vmem:[#allocation2 + $0x59] sm:$0xff]
      %v3304 = vld [vmem:[#allocation2 + $0x61] sm:$0xff]
      %v3305 = vld [vmem:[#allocation2 + $0x69] sm:$0xff]
      %v3306 = vsel %vm731, %v3298, 0.0
      %v3307 = vsel %vm732, %v3299, 0.0
      %v3308 = vsel %vm733, %v3300, 0.0
      %v3309 = vsel %vm734, %v3301, 0.0
      %v3310 = vsel %vm735, %v3302, 0.0
      %v3311 = vsel %vm736, %v3303, 0.0
      %v3312 = vsel %vm737, %v3304, 0.0
      %v3313 = vsel %vm738, %v3305, 0.0
      %s3314 = scalar_lea.vmem %s1, 64
      %v3315 = vld [vmem:[%s3314] sm:$0xf]
      %v3317 = vsel %vm503, %v3306, 0
      %v3320 = vsel %vm503, %v3307, 0
      %v3323 = vsel %vm503, %v3308, 0
      %v3326 = vsel %vm503, %v3309, 0
      %v3329 = vsel %vm503, %v3310, 0
      %v3332 = vsel %vm503, %v3311, 0
      %v3335 = vsel %vm503, %v3312, 0
      %v3338 = vsel %vm503, %v3313, 0
      %v3341 = vsel %vm773, %v3315, 0
      %3343 = vmatprep.subr.mxu0 0.0
      %3344 = vmatpush1.msra.mxu0 0.0
      %3345 = vmatprep.subr.mxu0 0.0
      %3346 = vmatpush1.msra.mxu0 0.0
      %3347 = vmatprep.subr.mxu0 0.0
      %3348 = vmatpush1.msra.mxu0 0.0
      %3349 = vmatprep.subr.mxu0 0.0
      %3350 = vmatpush1.msra.mxu0 0.0
      %3351 = vmatprep.subr.mxu0 0.0
      %3352 = vmatpush1.msra.mxu0 0.0
      %3353 = vmatprep.subr.mxu0 0.0
      %3354 = vmatpush1.msra.mxu0 0.0
      %3355 = vmatprep.subr.mxu0 0.0
      %3356 = vmatpush1.msra.mxu0 0.0
      %3357 = vmatprep.subr.mxu0 0.0
      %3358 = vmatpush1.msra.mxu0 0.0
      %3359 = vmatprep.subr.mxu0 0.0
      %3360 = vmatpush1.msra.mxu0 0.0
      %3361 = vmatprep.subr.mxu0 0.0
      %3362 = vmatpush1.msra.mxu0 0.0
      %3363 = vmatprep.subr.mxu0 0.0
      %3364 = vmatpush1.msra.mxu0 0.0
      %3365 = vmatprep.subr.mxu0 0.0
      %3366 = vmatpush1.msra.mxu0 0.0
      %3367 = vmatprep.subr.mxu0 0.0
      %3368 = vmatpush1.msra.mxu0 0.0
      %3369 = vmatprep.subr.mxu0 0.0
      %3370 = vmatpush1.msra.mxu0 0.0
      %3371 = vmatprep.subr.mxu0 0.0
      %3372 = vmatpush1.msra.mxu0 0.0
      %3373 = vmatprep.subr.mxu0 0.0
      %3374 = vmatpush1.msra.mxu0 %v3341
      %3375 = vmatprep.subr.mxu0 0.0
      %3376 = vmatpush2.msra.mxu0 0.0
      %3377 = vmatprep.subr.mxu0 0.0
      %3378 = vmatpush2.msra.mxu0 0.0
      %3379 = vmatprep.subr.mxu0 0.0
      %3380 = vmatpush2.msra.mxu0 0.0
      %3381 = vmatprep.subr.mxu0 0.0
      %3382 = vmatpush2.msra.mxu0 0.0
      %3383 = vmatprep.subr.mxu0 0.0
      %3384 = vmatpush2.msra.mxu0 0.0
      %3385 = vmatprep.subr.mxu0 0.0
      %3386 = vmatpush2.msra.mxu0 0.0
      %3387 = vmatprep.subr.mxu0 0.0
      %3388 = vmatpush2.msra.mxu0 0.0
      %3389 = vmatprep.subr.mxu0 0.0
      %3390 = vmatpush2.msra.mxu0 0.0
      %3391 = vmatprep.subr.mxu0 0.0
      %3392 = vmatpush2.msra.mxu0 0.0
      %3393 = vmatprep.subr.mxu0 0.0
      %3394 = vmatpush2.msra.mxu0 0.0
      %3395 = vmatprep.subr.mxu0 0.0
      %3396 = vmatpush2.msra.mxu0 0.0
      %3397 = vmatprep.subr.mxu0 0.0
      %3398 = vmatpush2.msra.mxu0 0.0
      %3399 = vmatprep.subr.mxu0 0.0
      %3400 = vmatpush2.msra.mxu0 0.0
      %3401 = vmatprep.subr.mxu0 0.0
      %3402 = vmatpush2.msra.mxu0 0.0
      %3403 = vmatprep.subr.mxu0 0.0
      %3404 = vmatpush2.msra.mxu0 0.0
      %3405 = vmatprep.subr.mxu0 0.0
      %3406 = vmatpush2.msra.mxu0 0.0
      %3407 = vmatprep.mubr.f32.mxu0 0.0
      %3408 = vmatmul.mubr.f32.gmra.mxu0 %v3317
      %v3409 = vpop.f32.mrf.mxu0
      %v3410 = vadd.f32 0.0, %v3409
      %v3411 = vpop.f32.mrf.mxu0
      %3412 = vmatprep.mubr.f32.mxu0 0.0
      %3413 = vmatmul.mubr.f32.gmra.mxu0 %v3320
      %v3414 = vpop.f32.mrf.mxu0
      %v3415 = vadd.f32 0.0, %v3414
      %v3416 = vpop.f32.mrf.mxu0
      %3417 = vmatprep.mubr.f32.mxu0 0.0
      %3418 = vmatmul.mubr.f32.gmra.mxu0 %v3323
      %v3419 = vpop.f32.mrf.mxu0
      %v3420 = vadd.f32 0.0, %v3419
      %v3421 = vpop.f32.mrf.mxu0
      %3422 = vmatprep.mubr.f32.mxu0 0.0
      %3423 = vmatmul.mubr.f32.gmra.mxu0 %v3326
      %v3424 = vpop.f32.mrf.mxu0
      %v3425 = vadd.f32 0.0, %v3424
      %v3426 = vpop.f32.mrf.mxu0
      %3427 = vmatprep.mubr.f32.mxu0 0.0
      %3428 = vmatmul.mubr.f32.gmra.mxu0 %v3329
      %v3429 = vpop.f32.mrf.mxu0
      %v3430 = vadd.f32 0.0, %v3429
      %v3431 = vpop.f32.mrf.mxu0
      %3432 = vmatprep.mubr.f32.mxu0 0.0
      %3433 = vmatmul.mubr.f32.gmra.mxu0 %v3332
      %v3434 = vpop.f32.mrf.mxu0
      %v3435 = vadd.f32 0.0, %v3434
      %v3436 = vpop.f32.mrf.mxu0
      %3437 = vmatprep.mubr.f32.mxu0 0.0
      %3438 = vmatmul.mubr.f32.gmra.mxu0 %v3335
      %v3439 = vpop.f32.mrf.mxu0
      %v3440 = vadd.f32 0.0, %v3439
      %v3441 = vpop.f32.mrf.mxu0
      %3442 = vmatprep.mubr.f32.mxu0 0.0
      %3443 = vmatmul.mubr.f32.gmra.mxu0 %v3338
      %v3444 = vpop.f32.mrf.mxu0
      %v3445 = vadd.f32 0.0, %v3444
      %v3446 = vpop.f32.mrf.mxu0
      %3447 = vdwg.mxu0
      %v3448 = vadd.f32 %v3290, %v3410
      %v3449 = vadd.f32 %v3291, %v3415
      %v3450 = vadd.f32 %v3292, %v3420
      %v3451 = vadd.f32 %v3293, %v3425
      %v3452 = vadd.f32 %v3294, %v3430
      %v3453 = vadd.f32 %v3295, %v3435
      %v3454 = vadd.f32 %v3296, %v3440
      %v3455 = vadd.f32 %v3297, %v3445
      %v3456 = vld [vmem:[#allocation2 + $0x32] sm:$0xff]
      %v3457 = vld [vmem:[#allocation2 + $0x3a] sm:$0xff]
      %v3458 = vld [vmem:[#allocation2 + $0x42] sm:$0xff]
      %v3459 = vld [vmem:[#allocation2 + $0x4a] sm:$0xff]
      %v3460 = vld [vmem:[#allocation2 + $0x52] sm:$0xff]
      %v3461 = vld [vmem:[#allocation2 + $0x5a] sm:$0xff]
      %v3462 = vld [vmem:[#allocation2 + $0x62] sm:$0xff]
      %v3463 = vld [vmem:[#allocation2 + $0x6a] sm:$0xff]
      %s3464 = scalar_lea.vmem %s1, 68
      %v3465 = vld [vmem:[%s3464] sm:$0xf]
      %v3467 = vsel %vm503, %v3456, 0
      %v3470 = vsel %vm503, %v3457, 0
      %v3473 = vsel %vm503, %v3458, 0
      %v3476 = vsel %vm503, %v3459, 0
      %v3479 = vsel %vm503, %v3460, 0
      %v3482 = vsel %vm503, %v3461, 0
      %v3485 = vsel %vm503, %v3462, 0
      %v3488 = vsel %vm503, %v3463, 0
      %v3491 = vsel %vm773, %v3465, 0
      %3493 = vmatprep.subr.mxu0 0.0
      %3494 = vmatpush1.msra.mxu0 0.0
      %3495 = vmatprep.subr.mxu0 0.0
      %3496 = vmatpush1.msra.mxu0 0.0
      %3497 = vmatprep.subr.mxu0 0.0
      %3498 = vmatpush1.msra.mxu0 0.0
      %3499 = vmatprep.subr.mxu0 0.0
      %3500 = vmatpush1.msra.mxu0 0.0
      %3501 = vmatprep.subr.mxu0 0.0
      %3502 = vmatpush1.msra.mxu0 0.0
      %3503 = vmatprep.subr.mxu0 0.0
      %3504 = vmatpush1.msra.mxu0 0.0
      %3505 = vmatprep.subr.mxu0 0.0
      %3506 = vmatpush1.msra.mxu0 0.0
      %3507 = vmatprep.subr.mxu0 0.0
      %3508 = vmatpush1.msra.mxu0 0.0
      %3509 = vmatprep.subr.mxu0 0.0
      %3510 = vmatpush1.msra.mxu0 0.0
      %3511 = vmatprep.subr.mxu0 0.0
      %3512 = vmatpush1.msra.mxu0 0.0
      %3513 = vmatprep.subr.mxu0 0.0
      %3514 = vmatpush1.msra.mxu0 0.0
      %3515 = vmatprep.subr.mxu0 0.0
      %3516 = vmatpush1.msra.mxu0 0.0
      %3517 = vmatprep.subr.mxu0 0.0
      %3518 = vmatpush1.msra.mxu0 0.0
      %3519 = vmatprep.subr.mxu0 0.0
      %3520 = vmatpush1.msra.mxu0 0.0
      %3521 = vmatprep.subr.mxu0 0.0
      %3522 = vmatpush1.msra.mxu0 0.0
      %3523 = vmatprep.subr.mxu0 0.0
      %3524 = vmatpush1.msra.mxu0 %v3491
      %3525 = vmatprep.subr.mxu0 0.0
      %3526 = vmatpush2.msra.mxu0 0.0
      %3527 = vmatprep.subr.mxu0 0.0
      %3528 = vmatpush2.msra.mxu0 0.0
      %3529 = vmatprep.subr.mxu0 0.0
      %3530 = vmatpush2.msra.mxu0 0.0
      %3531 = vmatprep.subr.mxu0 0.0
      %3532 = vmatpush2.msra.mxu0 0.0
      %3533 = vmatprep.subr.mxu0 0.0
      %3534 = vmatpush2.msra.mxu0 0.0
      %3535 = vmatprep.subr.mxu0 0.0
      %3536 = vmatpush2.msra.mxu0 0.0
      %3537 = vmatprep.subr.mxu0 0.0
      %3538 = vmatpush2.msra.mxu0 0.0
      %3539 = vmatprep.subr.mxu0 0.0
      %3540 = vmatpush2.msra.mxu0 0.0
      %3541 = vmatprep.subr.mxu0 0.0
      %3542 = vmatpush2.msra.mxu0 0.0
      %3543 = vmatprep.subr.mxu0 0.0
      %3544 = vmatpush2.msra.mxu0 0.0
      %3545 = vmatprep.subr.mxu0 0.0
      %3546 = vmatpush2.msra.mxu0 0.0
      %3547 = vmatprep.subr.mxu0 0.0
      %3548 = vmatpush2.msra.mxu0 0.0
      %3549 = vmatprep.subr.mxu0 0.0
      %3550 = vmatpush2.msra.mxu0 0.0
      %3551 = vmatprep.subr.mxu0 0.0
      %3552 = vmatpush2.msra.mxu0 0.0
      %3553 = vmatprep.subr.mxu0 0.0
      %3554 = vmatpush2.msra.mxu0 0.0
      %3555 = vmatprep.subr.mxu0 0.0
      %3556 = vmatpush2.msra.mxu0 0.0
      %3557 = vmatprep.mubr.f32.mxu0 0.0
      %3558 = vmatmul.mubr.f32.gmra.mxu0 %v3467
      %v3559 = vpop.f32.mrf.mxu0
      %v3560 = vadd.f32 0.0, %v3559
      %v3561 = vpop.f32.mrf.mxu0
      %3562 = vmatprep.mubr.f32.mxu0 0.0
      %3563 = vmatmul.mubr.f32.gmra.mxu0 %v3470
      %v3564 = vpop.f32.mrf.mxu0
      %v3565 = vadd.f32 0.0, %v3564
      %v3566 = vpop.f32.mrf.mxu0
      %3567 = vmatprep.mubr.f32.mxu0 0.0
      %3568 = vmatmul.mubr.f32.gmra.mxu0 %v3473
      %v3569 = vpop.f32.mrf.mxu0
      %v3570 = vadd.f32 0.0, %v3569
      %v3571 = vpop.f32.mrf.mxu0
      %3572 = vmatprep.mubr.f32.mxu0 0.0
      %3573 = vmatmul.mubr.f32.gmra.mxu0 %v3476
      %v3574 = vpop.f32.mrf.mxu0
      %v3575 = vadd.f32 0.0, %v3574
      %v3576 = vpop.f32.mrf.mxu0
      %3577 = vmatprep.mubr.f32.mxu0 0.0
      %3578 = vmatmul.mubr.f32.gmra.mxu0 %v3479
      %v3579 = vpop.f32.mrf.mxu0
      %v3580 = vadd.f32 0.0, %v3579
      %v3581 = vpop.f32.mrf.mxu0
      %3582 = vmatprep.mubr.f32.mxu0 0.0
      %3583 = vmatmul.mubr.f32.gmra.mxu0 %v3482
      %v3584 = vpop.f32.mrf.mxu0
      %v3585 = vadd.f32 0.0, %v3584
      %v3586 = vpop.f32.mrf.mxu0
      %3587 = vmatprep.mubr.f32.mxu0 0.0
      %3588 = vmatmul.mubr.f32.gmra.mxu0 %v3485
      %v3589 = vpop.f32.mrf.mxu0
      %v3590 = vadd.f32 0.0, %v3589
      %v3591 = vpop.f32.mrf.mxu0
      %3592 = vmatprep.mubr.f32.mxu0 0.0
      %3593 = vmatmul.mubr.f32.gmra.mxu0 %v3488
      %v3594 = vpop.f32.mrf.mxu0
      %v3595 = vadd.f32 0.0, %v3594
      %v3596 = vpop.f32.mrf.mxu0
      %3597 = vdwg.mxu0
      %v3598 = vadd.f32 %v3448, %v3560
      %v3599 = vadd.f32 %v3449, %v3565
      %v3600 = vadd.f32 %v3450, %v3570
      %v3601 = vadd.f32 %v3451, %v3575
      %v3602 = vadd.f32 %v3452, %v3580
      %v3603 = vadd.f32 %v3453, %v3585
      %v3604 = vadd.f32 %v3454, %v3590
      %v3605 = vadd.f32 %v3455, %v3595
      %v3606 = vld [vmem:[#allocation2 + $0x33] sm:$0xff]
      %v3607 = vld [vmem:[#allocation2 + $0x3b] sm:$0xff]
      %v3608 = vld [vmem:[#allocation2 + $0x43] sm:$0xff]
      %v3609 = vld [vmem:[#allocation2 + $0x4b] sm:$0xff]
      %v3610 = vld [vmem:[#allocation2 + $0x53] sm:$0xff]
      %v3611 = vld [vmem:[#allocation2 + $0x5b] sm:$0xff]
      %v3612 = vld [vmem:[#allocation2 + $0x63] sm:$0xff]
      %v3613 = vld [vmem:[#allocation2 + $0x6b] sm:$0xff]
      %v3614 = vsel %vm1212, %v3606, 0.0
      %v3615 = vsel %vm1213, %v3607, 0.0
      %v3616 = vsel %vm1214, %v3608, 0.0
      %v3617 = vsel %vm1215, %v3609, 0.0
      %v3618 = vsel %vm1216, %v3610, 0.0
      %v3619 = vsel %vm1217, %v3611, 0.0
      %v3620 = vsel %vm1218, %v3612, 0.0
      %v3621 = vsel %vm1219, %v3613, 0.0
      %s3622 = scalar_lea.vmem %s1, 72
      %v3623 = vld [vmem:[%s3622] sm:$0xf]
      %v3625 = vsel %vm503, %v3614, 0
      %v3628 = vsel %vm503, %v3615, 0
      %v3631 = vsel %vm503, %v3616, 0
      %v3634 = vsel %vm503, %v3617, 0
      %v3637 = vsel %vm503, %v3618, 0
      %v3640 = vsel %vm503, %v3619, 0
      %v3643 = vsel %vm503, %v3620, 0
      %v3646 = vsel %vm503, %v3621, 0
      %v3649 = vsel %vm773, %v3623, 0
      %3651 = vmatprep.subr.mxu0 0.0
      %3652 = vmatpush1.msra.mxu0 0.0
      %3653 = vmatprep.subr.mxu0 0.0
      %3654 = vmatpush1.msra.mxu0 0.0
      %3655 = vmatprep.subr.mxu0 0.0
      %3656 = vmatpush1.msra.mxu0 0.0
      %3657 = vmatprep.subr.mxu0 0.0
      %3658 = vmatpush1.msra.mxu0 0.0
      %3659 = vmatprep.subr.mxu0 0.0
      %3660 = vmatpush1.msra.mxu0 0.0
      %3661 = vmatprep.subr.mxu0 0.0
      %3662 = vmatpush1.msra.mxu0 0.0
      %3663 = vmatprep.subr.mxu0 0.0
      %3664 = vmatpush1.msra.mxu0 0.0
      %3665 = vmatprep.subr.mxu0 0.0
      %3666 = vmatpush1.msra.mxu0 0.0
      %3667 = vmatprep.subr.mxu0 0.0
      %3668 = vmatpush1.msra.mxu0 0.0
      %3669 = vmatprep.subr.mxu0 0.0
      %3670 = vmatpush1.msra.mxu0 0.0
      %3671 = vmatprep.subr.mxu0 0.0
      %3672 = vmatpush1.msra.mxu0 0.0
      %3673 = vmatprep.subr.mxu0 0.0
      %3674 = vmatpush1.msra.mxu0 0.0
      %3675 = vmatprep.subr.mxu0 0.0
      %3676 = vmatpush1.msra.mxu0 0.0
      %3677 = vmatprep.subr.mxu0 0.0
      %3678 = vmatpush1.msra.mxu0 0.0
      %3679 = vmatprep.subr.mxu0 0.0
      %3680 = vmatpush1.msra.mxu0 0.0
      %3681 = vmatprep.subr.mxu0 0.0
      %3682 = vmatpush1.msra.mxu0 %v3649
      %3683 = vmatprep.subr.mxu0 0.0
      %3684 = vmatpush2.msra.mxu0 0.0
      %3685 = vmatprep.subr.mxu0 0.0
      %3686 = vmatpush2.msra.mxu0 0.0
      %3687 = vmatprep.subr.mxu0 0.0
      %3688 = vmatpush2.msra.mxu0 0.0
      %3689 = vmatprep.subr.mxu0 0.0
      %3690 = vmatpush2.msra.mxu0 0.0
      %3691 = vmatprep.subr.mxu0 0.0
      %3692 = vmatpush2.msra.mxu0 0.0
      %3693 = vmatprep.subr.mxu0 0.0
      %3694 = vmatpush2.msra.mxu0 0.0
      %3695 = vmatprep.subr.mxu0 0.0
      %3696 = vmatpush2.msra.mxu0 0.0
      %3697 = vmatprep.subr.mxu0 0.0
      %3698 = vmatpush2.msra.mxu0 0.0
      %3699 = vmatprep.subr.mxu0 0.0
      %3700 = vmatpush2.msra.mxu0 0.0
      %3701 = vmatprep.subr.mxu0 0.0
      %3702 = vmatpush2.msra.mxu0 0.0
      %3703 = vmatprep.subr.mxu0 0.0
      %3704 = vmatpush2.msra.mxu0 0.0
      %3705 = vmatprep.subr.mxu0 0.0
      %3706 = vmatpush2.msra.mxu0 0.0
      %3707 = vmatprep.subr.mxu0 0.0
      %3708 = vmatpush2.msra.mxu0 0.0
      %3709 = vmatprep.subr.mxu0 0.0
      %3710 = vmatpush2.msra.mxu0 0.0
      %3711 = vmatprep.subr.mxu0 0.0
      %3712 = vmatpush2.msra.mxu0 0.0
      %3713 = vmatprep.subr.mxu0 0.0
      %3714 = vmatpush2.msra.mxu0 0.0
      %3715 = vmatprep.mubr.f32.mxu0 0.0
      %3716 = vmatmul.mubr.f32.gmra.mxu0 %v3625
      %v3717 = vpop.f32.mrf.mxu0
      %v3718 = vadd.f32 0.0, %v3717
      %v3719 = vpop.f32.mrf.mxu0
      %3720 = vmatprep.mubr.f32.mxu0 0.0
      %3721 = vmatmul.mubr.f32.gmra.mxu0 %v3628
      %v3722 = vpop.f32.mrf.mxu0
      %v3723 = vadd.f32 0.0, %v3722
      %v3724 = vpop.f32.mrf.mxu0
      %3725 = vmatprep.mubr.f32.mxu0 0.0
      %3726 = vmatmul.mubr.f32.gmra.mxu0 %v3631
      %v3727 = vpop.f32.mrf.mxu0
      %v3728 = vadd.f32 0.0, %v3727
      %v3729 = vpop.f32.mrf.mxu0
      %3730 = vmatprep.mubr.f32.mxu0 0.0
      %3731 = vmatmul.mubr.f32.gmra.mxu0 %v3634
      %v3732 = vpop.f32.mrf.mxu0
      %v3733 = vadd.f32 0.0, %v3732
      %v3734 = vpop.f32.mrf.mxu0
      %3735 = vmatprep.mubr.f32.mxu0 0.0
      %3736 = vmatmul.mubr.f32.gmra.mxu0 %v3637
      %v3737 = vpop.f32.mrf.mxu0
      %v3738 = vadd.f32 0.0, %v3737
      %v3739 = vpop.f32.mrf.mxu0
      %3740 = vmatprep.mubr.f32.mxu0 0.0
      %3741 = vmatmul.mubr.f32.gmra.mxu0 %v3640
      %v3742 = vpop.f32.mrf.mxu0
      %v3743 = vadd.f32 0.0, %v3742
      %v3744 = vpop.f32.mrf.mxu0
      %3745 = vmatprep.mubr.f32.mxu0 0.0
      %3746 = vmatmul.mubr.f32.gmra.mxu0 %v3643
      %v3747 = vpop.f32.mrf.mxu0
      %v3748 = vadd.f32 0.0, %v3747
      %v3749 = vpop.f32.mrf.mxu0
      %3750 = vmatprep.mubr.f32.mxu0 0.0
      %3751 = vmatmul.mubr.f32.gmra.mxu0 %v3646
      %v3752 = vpop.f32.mrf.mxu0
      %v3753 = vadd.f32 0.0, %v3752
      %v3754 = vpop.f32.mrf.mxu0
      %3755 = vdwg.mxu0
      %v3756 = vadd.f32 %v3598, %v3718
      %v3757 = vadd.f32 %v3599, %v3723
      %v3758 = vadd.f32 %v3600, %v3728
      %v3759 = vadd.f32 %v3601, %v3733
      %v3760 = vadd.f32 %v3602, %v3738
      %v3761 = vadd.f32 %v3603, %v3743
      %v3762 = vadd.f32 %v3604, %v3748
      %v3763 = vadd.f32 %v3605, %v3753
      %v3764 = vld [vmem:[#allocation2 + $0x34] sm:$0xff]
      %v3765 = vld [vmem:[#allocation2 + $0x3c] sm:$0xff]
      %v3766 = vld [vmem:[#allocation2 + $0x44] sm:$0xff]
      %v3767 = vld [vmem:[#allocation2 + $0x4c] sm:$0xff]
      %v3768 = vld [vmem:[#allocation2 + $0x54] sm:$0xff]
      %v3769 = vld [vmem:[#allocation2 + $0x5c] sm:$0xff]
      %v3770 = vld [vmem:[#allocation2 + $0x64] sm:$0xff]
      %v3771 = vld [vmem:[#allocation2 + $0x6c] sm:$0xff]
      %v3772 = vsel %vm1418, %v3764, 0.0
      %v3773 = vsel %vm1419, %v3765, 0.0
      %v3774 = vsel %vm1420, %v3766, 0.0
      %v3775 = vsel %vm1421, %v3767, 0.0
      %v3776 = vsel %vm1422, %v3768, 0.0
      %v3777 = vsel %vm1423, %v3769, 0.0
      %v3778 = vsel %vm1424, %v3770, 0.0
      %v3779 = vsel %vm1425, %v3771, 0.0
      %s3780 = scalar_lea.vmem %s1, 76
      %v3781 = vld [vmem:[%s3780] sm:$0xf]
      %v3783 = vsel %vm503, %v3772, 0
      %v3786 = vsel %vm503, %v3773, 0
      %v3789 = vsel %vm503, %v3774, 0
      %v3792 = vsel %vm503, %v3775, 0
      %v3795 = vsel %vm503, %v3776, 0
      %v3798 = vsel %vm503, %v3777, 0
      %v3801 = vsel %vm503, %v3778, 0
      %v3804 = vsel %vm503, %v3779, 0
      %v3807 = vsel %vm773, %v3781, 0
      %3809 = vmatprep.subr.mxu0 0.0
      %3810 = vmatpush1.msra.mxu0 0.0
      %3811 = vmatprep.subr.mxu0 0.0
      %3812 = vmatpush1.msra.mxu0 0.0
      %3813 = vmatprep.subr.mxu0 0.0
      %3814 = vmatpush1.msra.mxu0 0.0
      %3815 = vmatprep.subr.mxu0 0.0
      %3816 = vmatpush1.msra.mxu0 0.0
      %3817 = vmatprep.subr.mxu0 0.0
      %3818 = vmatpush1.msra.mxu0 0.0
      %3819 = vmatprep.subr.mxu0 0.0
      %3820 = vmatpush1.msra.mxu0 0.0
      %3821 = vmatprep.subr.mxu0 0.0
      %3822 = vmatpush1.msra.mxu0 0.0
      %3823 = vmatprep.subr.mxu0 0.0
      %3824 = vmatpush1.msra.mxu0 0.0
      %3825 = vmatprep.subr.mxu0 0.0
      %3826 = vmatpush1.msra.mxu0 0.0
      %3827 = vmatprep.subr.mxu0 0.0
      %3828 = vmatpush1.msra.mxu0 0.0
      %3829 = vmatprep.subr.mxu0 0.0
      %3830 = vmatpush1.msra.mxu0 0.0
      %3831 = vmatprep.subr.mxu0 0.0
      %3832 = vmatpush1.msra.mxu0 0.0
      %3833 = vmatprep.subr.mxu0 0.0
      %3834 = vmatpush1.msra.mxu0 0.0
      %3835 = vmatprep.subr.mxu0 0.0
      %3836 = vmatpush1.msra.mxu0 0.0
      %3837 = vmatprep.subr.mxu0 0.0
      %3838 = vmatpush1.msra.mxu0 0.0
      %3839 = vmatprep.subr.mxu0 0.0
      %3840 = vmatpush1.msra.mxu0 %v3807
      %3841 = vmatprep.subr.mxu0 0.0
      %3842 = vmatpush2.msra.mxu0 0.0
      %3843 = vmatprep.subr.mxu0 0.0
      %3844 = vmatpush2.msra.mxu0 0.0
      %3845 = vmatprep.subr.mxu0 0.0
      %3846 = vmatpush2.msra.mxu0 0.0
      %3847 = vmatprep.subr.mxu0 0.0
      %3848 = vmatpush2.msra.mxu0 0.0
      %3849 = vmatprep.subr.mxu0 0.0
      %3850 = vmatpush2.msra.mxu0 0.0
      %3851 = vmatprep.subr.mxu0 0.0
      %3852 = vmatpush2.msra.mxu0 0.0
      %3853 = vmatprep.subr.mxu0 0.0
      %3854 = vmatpush2.msra.mxu0 0.0
      %3855 = vmatprep.subr.mxu0 0.0
      %3856 = vmatpush2.msra.mxu0 0.0
      %3857 = vmatprep.subr.mxu0 0.0
      %3858 = vmatpush2.msra.mxu0 0.0
      %3859 = vmatprep.subr.mxu0 0.0
      %3860 = vmatpush2.msra.mxu0 0.0
      %3861 = vmatprep.subr.mxu0 0.0
      %3862 = vmatpush2.msra.mxu0 0.0
      %3863 = vmatprep.subr.mxu0 0.0
      %3864 = vmatpush2.msra.mxu0 0.0
      %3865 = vmatprep.subr.mxu0 0.0
      %3866 = vmatpush2.msra.mxu0 0.0
      %3867 = vmatprep.subr.mxu0 0.0
      %3868 = vmatpush2.msra.mxu0 0.0
      %3869 = vmatprep.subr.mxu0 0.0
      %3870 = vmatpush2.msra.mxu0 0.0
      %3871 = vmatprep.subr.mxu0 0.0
      %3872 = vmatpush2.msra.mxu0 0.0
      %3873 = vmatprep.mubr.f32.mxu0 0.0
      %3874 = vmatmul.mubr.f32.gmra.mxu0 %v3783
      %v3875 = vpop.f32.mrf.mxu0
      %v3876 = vadd.f32 0.0, %v3875
      %v3877 = vpop.f32.mrf.mxu0
      %3878 = vmatprep.mubr.f32.mxu0 0.0
      %3879 = vmatmul.mubr.f32.gmra.mxu0 %v3786
      %v3880 = vpop.f32.mrf.mxu0
      %v3881 = vadd.f32 0.0, %v3880
      %v3882 = vpop.f32.mrf.mxu0
      %3883 = vmatprep.mubr.f32.mxu0 0.0
      %3884 = vmatmul.mubr.f32.gmra.mxu0 %v3789
      %v3885 = vpop.f32.mrf.mxu0
      %v3886 = vadd.f32 0.0, %v3885
      %v3887 = vpop.f32.mrf.mxu0
      %3888 = vmatprep.mubr.f32.mxu0 0.0
      %3889 = vmatmul.mubr.f32.gmra.mxu0 %v3792
      %v3890 = vpop.f32.mrf.mxu0
      %v3891 = vadd.f32 0.0, %v3890
      %v3892 = vpop.f32.mrf.mxu0
      %3893 = vmatprep.mubr.f32.mxu0 0.0
      %3894 = vmatmul.mubr.f32.gmra.mxu0 %v3795
      %v3895 = vpop.f32.mrf.mxu0
      %v3896 = vadd.f32 0.0, %v3895
      %v3897 = vpop.f32.mrf.mxu0
      %3898 = vmatprep.mubr.f32.mxu0 0.0
      %3899 = vmatmul.mubr.f32.gmra.mxu0 %v3798
      %v3900 = vpop.f32.mrf.mxu0
      %v3901 = vadd.f32 0.0, %v3900
      %v3902 = vpop.f32.mrf.mxu0
      %3903 = vmatprep.mubr.f32.mxu0 0.0
      %3904 = vmatmul.mubr.f32.gmra.mxu0 %v3801
      %v3905 = vpop.f32.mrf.mxu0
      %v3906 = vadd.f32 0.0, %v3905
      %v3907 = vpop.f32.mrf.mxu0
      %3908 = vmatprep.mubr.f32.mxu0 0.0
      %3909 = vmatmul.mubr.f32.gmra.mxu0 %v3804
      %v3910 = vpop.f32.mrf.mxu0
      %v3911 = vadd.f32 0.0, %v3910
      %v3912 = vpop.f32.mrf.mxu0
      %3913 = vdwg.mxu0
      %v3914 = vadd.f32 %v3756, %v3876
      %v3915 = vadd.f32 %v3757, %v3881
      %v3916 = vadd.f32 %v3758, %v3886
      %v3917 = vadd.f32 %v3759, %v3891
      %v3918 = vadd.f32 %v3760, %v3896
      %v3919 = vadd.f32 %v3761, %v3901
      %v3920 = vadd.f32 %v3762, %v3906
      %v3921 = vadd.f32 %v3763, %v3911
      %v3922 = vld [vmem:[#allocation2 + $0x40] sm:$0xff]
      %v3923 = vld [vmem:[#allocation2 + $0x48] sm:$0xff]
      %v3924 = vld [vmem:[#allocation2 + $0x50] sm:$0xff]
      %v3925 = vld [vmem:[#allocation2 + $0x58] sm:$0xff]
      %v3926 = vld [vmem:[#allocation2 + $0x60] sm:$0xff]
      %v3927 = vld [vmem:[#allocation2 + $0x68] sm:$0xff]
      %v3928 = vld [vmem:[#allocation2 + $0x70] sm:$0xff]
      %v3929 = vld [vmem:[#allocation2 + $0x78] sm:$0xff]
      %v3930 = vsel %vm666, %v3922, 0.0
      %v3931 = vsel %vm667, %v3923, 0.0
      %v3932 = vsel %vm668, %v3924, 0.0
      %v3933 = vsel %vm669, %v3925, 0.0
      %v3934 = vsel %vm670, %v3926, 0.0
      %v3935 = vsel %vm671, %v3927, 0.0
      %v3936 = vsel %vm672, %v3928, 0.0
      %v3937 = vsel %vm673, %v3929, 0.0
      %s3938 = scalar_lea.vmem %s1, 80
      %v3939 = vld [vmem:[%s3938] sm:$0xf]
      %v3941 = vsel %vm503, %v3930, 0
      %v3944 = vsel %vm503, %v3931, 0
      %v3947 = vsel %vm503, %v3932, 0
      %v3950 = vsel %vm503, %v3933, 0
      %v3953 = vsel %vm503, %v3934, 0
      %v3956 = vsel %vm503, %v3935, 0
      %v3959 = vsel %vm503, %v3936, 0
      %v3962 = vsel %vm503, %v3937, 0
      %v3965 = vsel %vm773, %v3939, 0
      %3967 = vmatprep.subr.mxu0 0.0
      %3968 = vmatpush1.msra.mxu0 0.0
      %3969 = vmatprep.subr.mxu0 0.0
      %3970 = vmatpush1.msra.mxu0 0.0
      %3971 = vmatprep.subr.mxu0 0.0
      %3972 = vmatpush1.msra.mxu0 0.0
      %3973 = vmatprep.subr.mxu0 0.0
      %3974 = vmatpush1.msra.mxu0 0.0
      %3975 = vmatprep.subr.mxu0 0.0
      %3976 = vmatpush1.msra.mxu0 0.0
      %3977 = vmatprep.subr.mxu0 0.0
      %3978 = vmatpush1.msra.mxu0 0.0
      %3979 = vmatprep.subr.mxu0 0.0
      %3980 = vmatpush1.msra.mxu0 0.0
      %3981 = vmatprep.subr.mxu0 0.0
      %3982 = vmatpush1.msra.mxu0 0.0
      %3983 = vmatprep.subr.mxu0 0.0
      %3984 = vmatpush1.msra.mxu0 0.0
      %3985 = vmatprep.subr.mxu0 0.0
      %3986 = vmatpush1.msra.mxu0 0.0
      %3987 = vmatprep.subr.mxu0 0.0
      %3988 = vmatpush1.msra.mxu0 0.0
      %3989 = vmatprep.subr.mxu0 0.0
      %3990 = vmatpush1.msra.mxu0 0.0
      %3991 = vmatprep.subr.mxu0 0.0
      %3992 = vmatpush1.msra.mxu0 0.0
      %3993 = vmatprep.subr.mxu0 0.0
      %3994 = vmatpush1.msra.mxu0 0.0
      %3995 = vmatprep.subr.mxu0 0.0
      %3996 = vmatpush1.msra.mxu0 0.0
      %3997 = vmatprep.subr.mxu0 0.0
      %3998 = vmatpush1.msra.mxu0 %v3965
      %3999 = vmatprep.subr.mxu0 0.0
      %4000 = vmatpush2.msra.mxu0 0.0
      %4001 = vmatprep.subr.mxu0 0.0
      %4002 = vmatpush2.msra.mxu0 0.0
      %4003 = vmatprep.subr.mxu0 0.0
      %4004 = vmatpush2.msra.mxu0 0.0
      %4005 = vmatprep.subr.mxu0 0.0
      %4006 = vmatpush2.msra.mxu0 0.0
      %4007 = vmatprep.subr.mxu0 0.0
      %4008 = vmatpush2.msra.mxu0 0.0
      %4009 = vmatprep.subr.mxu0 0.0
      %4010 = vmatpush2.msra.mxu0 0.0
      %4011 = vmatprep.subr.mxu0 0.0
      %4012 = vmatpush2.msra.mxu0 0.0
      %4013 = vmatprep.subr.mxu0 0.0
      %4014 = vmatpush2.msra.mxu0 0.0
      %4015 = vmatprep.subr.mxu0 0.0
      %4016 = vmatpush2.msra.mxu0 0.0
      %4017 = vmatprep.subr.mxu0 0.0
      %4018 = vmatpush2.msra.mxu0 0.0
      %4019 = vmatprep.subr.mxu0 0.0
      %4020 = vmatpush2.msra.mxu0 0.0
      %4021 = vmatprep.subr.mxu0 0.0
      %4022 = vmatpush2.msra.mxu0 0.0
      %4023 = vmatprep.subr.mxu0 0.0
      %4024 = vmatpush2.msra.mxu0 0.0
      %4025 = vmatprep.subr.mxu0 0.0
      %4026 = vmatpush2.msra.mxu0 0.0
      %4027 = vmatprep.subr.mxu0 0.0
      %4028 = vmatpush2.msra.mxu0 0.0
      %4029 = vmatprep.subr.mxu0 0.0
      %4030 = vmatpush2.msra.mxu0 0.0
      %4031 = vmatprep.mubr.f32.mxu0 0.0
      %4032 = vmatmul.mubr.f32.gmra.mxu0 %v3941
      %v4033 = vpop.f32.mrf.mxu0
      %v4034 = vadd.f32 0.0, %v4033
      %v4035 = vpop.f32.mrf.mxu0
      %4036 = vmatprep.mubr.f32.mxu0 0.0
      %4037 = vmatmul.mubr.f32.gmra.mxu0 %v3944
      %v4038 = vpop.f32.mrf.mxu0
      %v4039 = vadd.f32 0.0, %v4038
      %v4040 = vpop.f32.mrf.mxu0
      %4041 = vmatprep.mubr.f32.mxu0 0.0
      %4042 = vmatmul.mubr.f32.gmra.mxu0 %v3947
      %v4043 = vpop.f32.mrf.mxu0
      %v4044 = vadd.f32 0.0, %v4043
      %v4045 = vpop.f32.mrf.mxu0
      %4046 = vmatprep.mubr.f32.mxu0 0.0
      %4047 = vmatmul.mubr.f32.gmra.mxu0 %v3950
      %v4048 = vpop.f32.mrf.mxu0
      %v4049 = vadd.f32 0.0, %v4048
      %v4050 = vpop.f32.mrf.mxu0
      %4051 = vmatprep.mubr.f32.mxu0 0.0
      %4052 = vmatmul.mubr.f32.gmra.mxu0 %v3953
      %v4053 = vpop.f32.mrf.mxu0
      %v4054 = vadd.f32 0.0, %v4053
      %v4055 = vpop.f32.mrf.mxu0
      %4056 = vmatprep.mubr.f32.mxu0 0.0
      %4057 = vmatmul.mubr.f32.gmra.mxu0 %v3956
      %v4058 = vpop.f32.mrf.mxu0
      %v4059 = vadd.f32 0.0, %v4058
      %v4060 = vpop.f32.mrf.mxu0
      %4061 = vmatprep.mubr.f32.mxu0 0.0
      %4062 = vmatmul.mubr.f32.gmra.mxu0 %v3959
      %v4063 = vpop.f32.mrf.mxu0
      %v4064 = vadd.f32 0.0, %v4063
      %v4065 = vpop.f32.mrf.mxu0
      %4066 = vmatprep.mubr.f32.mxu0 0.0
      %4067 = vmatmul.mubr.f32.gmra.mxu0 %v3962
      %v4068 = vpop.f32.mrf.mxu0
      %v4069 = vadd.f32 0.0, %v4068
      %v4070 = vpop.f32.mrf.mxu0
      %4071 = vdwg.mxu0
      %v4072 = vadd.f32 %v3914, %v4034
      %v4073 = vadd.f32 %v3915, %v4039
      %v4074 = vadd.f32 %v3916, %v4044
      %v4075 = vadd.f32 %v3917, %v4049
      %v4076 = vadd.f32 %v3918, %v4054
      %v4077 = vadd.f32 %v3919, %v4059
      %v4078 = vadd.f32 %v3920, %v4064
      %v4079 = vadd.f32 %v3921, %v4069
      %v4080 = vld [vmem:[#allocation2 + $0x41] sm:$0xff]
      %v4081 = vld [vmem:[#allocation2 + $0x49] sm:$0xff]
      %v4082 = vld [vmem:[#allocation2 + $0x51] sm:$0xff]
      %v4083 = vld [vmem:[#allocation2 + $0x59] sm:$0xff]
      %v4084 = vld [vmem:[#allocation2 + $0x61] sm:$0xff]
      %v4085 = vld [vmem:[#allocation2 + $0x69] sm:$0xff]
      %v4086 = vld [vmem:[#allocation2 + $0x71] sm:$0xff]
      %v4087 = vld [vmem:[#allocation2 + $0x79] sm:$0xff]
      %v4088 = vsel %vm731, %v4080, 0.0
      %v4089 = vsel %vm732, %v4081, 0.0
      %v4090 = vsel %vm733, %v4082, 0.0
      %v4091 = vsel %vm734, %v4083, 0.0
      %v4092 = vsel %vm735, %v4084, 0.0
      %v4093 = vsel %vm736, %v4085, 0.0
      %v4094 = vsel %vm737, %v4086, 0.0
      %v4095 = vsel %vm738, %v4087, 0.0
      %s4096 = scalar_lea.vmem %s1, 84
      %v4097 = vld [vmem:[%s4096] sm:$0xf]
      %v4099 = vsel %vm503, %v4088, 0
      %v4102 = vsel %vm503, %v4089, 0
      %v4105 = vsel %vm503, %v4090, 0
      %v4108 = vsel %vm503, %v4091, 0
      %v4111 = vsel %vm503, %v4092, 0
      %v4114 = vsel %vm503, %v4093, 0
      %v4117 = vsel %vm503, %v4094, 0
      %v4120 = vsel %vm503, %v4095, 0
      %v4123 = vsel %vm773, %v4097, 0
      %4125 = vmatprep.subr.mxu0 0.0
      %4126 = vmatpush1.msra.mxu0 0.0
      %4127 = vmatprep.subr.mxu0 0.0
      %4128 = vmatpush1.msra.mxu0 0.0
      %4129 = vmatprep.subr.mxu0 0.0
      %4130 = vmatpush1.msra.mxu0 0.0
      %4131 = vmatprep.subr.mxu0 0.0
      %4132 = vmatpush1.msra.mxu0 0.0
      %4133 = vmatprep.subr.mxu0 0.0
      %4134 = vmatpush1.msra.mxu0 0.0
      %4135 = vmatprep.subr.mxu0 0.0
      %4136 = vmatpush1.msra.mxu0 0.0
      %4137 = vmatprep.subr.mxu0 0.0
      %4138 = vmatpush1.msra.mxu0 0.0
      %4139 = vmatprep.subr.mxu0 0.0
      %4140 = vmatpush1.msra.mxu0 0.0
      %4141 = vmatprep.subr.mxu0 0.0
      %4142 = vmatpush1.msra.mxu0 0.0
      %4143 = vmatprep.subr.mxu0 0.0
      %4144 = vmatpush1.msra.mxu0 0.0
      %4145 = vmatprep.subr.mxu0 0.0
      %4146 = vmatpush1.msra.mxu0 0.0
      %4147 = vmatprep.subr.mxu0 0.0
      %4148 = vmatpush1.msra.mxu0 0.0
      %4149 = vmatprep.subr.mxu0 0.0
      %4150 = vmatpush1.msra.mxu0 0.0
      %4151 = vmatprep.subr.mxu0 0.0
      %4152 = vmatpush1.msra.mxu0 0.0
      %4153 = vmatprep.subr.mxu0 0.0
      %4154 = vmatpush1.msra.mxu0 0.0
      %4155 = vmatprep.subr.mxu0 0.0
      %4156 = vmatpush1.msra.mxu0 %v4123
      %4157 = vmatprep.subr.mxu0 0.0
      %4158 = vmatpush2.msra.mxu0 0.0
      %4159 = vmatprep.subr.mxu0 0.0
      %4160 = vmatpush2.msra.mxu0 0.0
      %4161 = vmatprep.subr.mxu0 0.0
      %4162 = vmatpush2.msra.mxu0 0.0
      %4163 = vmatprep.subr.mxu0 0.0
      %4164 = vmatpush2.msra.mxu0 0.0
      %4165 = vmatprep.subr.mxu0 0.0
      %4166 = vmatpush2.msra.mxu0 0.0
      %4167 = vmatprep.subr.mxu0 0.0
      %4168 = vmatpush2.msra.mxu0 0.0
      %4169 = vmatprep.subr.mxu0 0.0
      %4170 = vmatpush2.msra.mxu0 0.0
      %4171 = vmatprep.subr.mxu0 0.0
      %4172 = vmatpush2.msra.mxu0 0.0
      %4173 = vmatprep.subr.mxu0 0.0
      %4174 = vmatpush2.msra.mxu0 0.0
      %4175 = vmatprep.subr.mxu0 0.0
      %4176 = vmatpush2.msra.mxu0 0.0
      %4177 = vmatprep.subr.mxu0 0.0
      %4178 = vmatpush2.msra.mxu0 0.0
      %4179 = vmatprep.subr.mxu0 0.0
      %4180 = vmatpush2.msra.mxu0 0.0
      %4181 = vmatprep.subr.mxu0 0.0
      %4182 = vmatpush2.msra.mxu0 0.0
      %4183 = vmatprep.subr.mxu0 0.0
      %4184 = vmatpush2.msra.mxu0 0.0
      %4185 = vmatprep.subr.mxu0 0.0
      %4186 = vmatpush2.msra.mxu0 0.0
      %4187 = vmatprep.subr.mxu0 0.0
      %4188 = vmatpush2.msra.mxu0 0.0
      %4189 = vmatprep.mubr.f32.mxu0 0.0
      %4190 = vmatmul.mubr.f32.gmra.mxu0 %v4099
      %v4191 = vpop.f32.mrf.mxu0
      %v4192 = vadd.f32 0.0, %v4191
      %v4193 = vpop.f32.mrf.mxu0
      %4194 = vmatprep.mubr.f32.mxu0 0.0
      %4195 = vmatmul.mubr.f32.gmra.mxu0 %v4102
      %v4196 = vpop.f32.mrf.mxu0
      %v4197 = vadd.f32 0.0, %v4196
      %v4198 = vpop.f32.mrf.mxu0
      %4199 = vmatprep.mubr.f32.mxu0 0.0
      %4200 = vmatmul.mubr.f32.gmra.mxu0 %v4105
      %v4201 = vpop.f32.mrf.mxu0
      %v4202 = vadd.f32 0.0, %v4201
      %v4203 = vpop.f32.mrf.mxu0
      %4204 = vmatprep.mubr.f32.mxu0 0.0
      %4205 = vmatmul.mubr.f32.gmra.mxu0 %v4108
      %v4206 = vpop.f32.mrf.mxu0
      %v4207 = vadd.f32 0.0, %v4206
      %v4208 = vpop.f32.mrf.mxu0
      %4209 = vmatprep.mubr.f32.mxu0 0.0
      %4210 = vmatmul.mubr.f32.gmra.mxu0 %v4111
      %v4211 = vpop.f32.mrf.mxu0
      %v4212 = vadd.f32 0.0, %v4211
      %v4213 = vpop.f32.mrf.mxu0
      %4214 = vmatprep.mubr.f32.mxu0 0.0
      %4215 = vmatmul.mubr.f32.gmra.mxu0 %v4114
      %v4216 = vpop.f32.mrf.mxu0
      %v4217 = vadd.f32 0.0, %v4216
      %v4218 = vpop.f32.mrf.mxu0
      %4219 = vmatprep.mubr.f32.mxu0 0.0
      %4220 = vmatmul.mubr.f32.gmra.mxu0 %v4117
      %v4221 = vpop.f32.mrf.mxu0
      %v4222 = vadd.f32 0.0, %v4221
      %v4223 = vpop.f32.mrf.mxu0
      %4224 = vmatprep.mubr.f32.mxu0 0.0
      %4225 = vmatmul.mubr.f32.gmra.mxu0 %v4120
      %v4226 = vpop.f32.mrf.mxu0
      %v4227 = vadd.f32 0.0, %v4226
      %v4228 = vpop.f32.mrf.mxu0
      %4229 = vdwg.mxu0
      %v4230 = vadd.f32 %v4072, %v4192
      %v4231 = vadd.f32 %v4073, %v4197
      %v4232 = vadd.f32 %v4074, %v4202
      %v4233 = vadd.f32 %v4075, %v4207
      %v4234 = vadd.f32 %v4076, %v4212
      %v4235 = vadd.f32 %v4077, %v4217
      %v4236 = vadd.f32 %v4078, %v4222
      %v4237 = vadd.f32 %v4079, %v4227
      %v4238 = vld [vmem:[#allocation2 + $0x42] sm:$0xff]
      %v4239 = vld [vmem:[#allocation2 + $0x4a] sm:$0xff]
      %v4240 = vld [vmem:[#allocation2 + $0x52] sm:$0xff]
      %v4241 = vld [vmem:[#allocation2 + $0x5a] sm:$0xff]
      %v4242 = vld [vmem:[#allocation2 + $0x62] sm:$0xff]
      %v4243 = vld [vmem:[#allocation2 + $0x6a] sm:$0xff]
      %v4244 = vld [vmem:[#allocation2 + $0x72] sm:$0xff]
      %v4245 = vld [vmem:[#allocation2 + $0x7a] sm:$0xff]
      %s4246 = scalar_lea.vmem %s1, 88
      %v4247 = vld [vmem:[%s4246] sm:$0xf]
      %v4249 = vsel %vm503, %v4238, 0
      %v4252 = vsel %vm503, %v4239, 0
      %v4255 = vsel %vm503, %v4240, 0
      %v4258 = vsel %vm503, %v4241, 0
      %v4261 = vsel %vm503, %v4242, 0
      %v4264 = vsel %vm503, %v4243, 0
      %v4267 = vsel %vm503, %v4244, 0
      %v4270 = vsel %vm503, %v4245, 0
      %v4273 = vsel %vm773, %v4247, 0
      %4275 = vmatprep.subr.mxu0 0.0
      %4276 = vmatpush1.msra.mxu0 0.0
      %4277 = vmatprep.subr.mxu0 0.0
      %4278 = vmatpush1.msra.mxu0 0.0
      %4279 = vmatprep.subr.mxu0 0.0
      %4280 = vmatpush1.msra.mxu0 0.0
      %4281 = vmatprep.subr.mxu0 0.0
      %4282 = vmatpush1.msra.mxu0 0.0
      %4283 = vmatprep.subr.mxu0 0.0
      %4284 = vmatpush1.msra.mxu0 0.0
      %4285 = vmatprep.subr.mxu0 0.0
      %4286 = vmatpush1.msra.mxu0 0.0
      %4287 = vmatprep.subr.mxu0 0.0
      %4288 = vmatpush1.msra.mxu0 0.0
      %4289 = vmatprep.subr.mxu0 0.0
      %4290 = vmatpush1.msra.mxu0 0.0
      %4291 = vmatprep.subr.mxu0 0.0
      %4292 = vmatpush1.msra.mxu0 0.0
      %4293 = vmatprep.subr.mxu0 0.0
      %4294 = vmatpush1.msra.mxu0 0.0
      %4295 = vmatprep.subr.mxu0 0.0
      %4296 = vmatpush1.msra.mxu0 0.0
      %4297 = vmatprep.subr.mxu0 0.0
      %4298 = vmatpush1.msra.mxu0 0.0
      %4299 = vmatprep.subr.mxu0 0.0
      %4300 = vmatpush1.msra.mxu0 0.0
      %4301 = vmatprep.subr.mxu0 0.0
      %4302 = vmatpush1.msra.mxu0 0.0
      %4303 = vmatprep.subr.mxu0 0.0
      %4304 = vmatpush1.msra.mxu0 0.0
      %4305 = vmatprep.subr.mxu0 0.0
      %4306 = vmatpush1.msra.mxu0 %v4273
      %4307 = vmatprep.subr.mxu0 0.0
      %4308 = vmatpush2.msra.mxu0 0.0
      %4309 = vmatprep.subr.mxu0 0.0
      %4310 = vmatpush2.msra.mxu0 0.0
      %4311 = vmatprep.subr.mxu0 0.0
      %4312 = vmatpush2.msra.mxu0 0.0
      %4313 = vmatprep.subr.mxu0 0.0
      %4314 = vmatpush2.msra.mxu0 0.0
      %4315 = vmatprep.subr.mxu0 0.0
      %4316 = vmatpush2.msra.mxu0 0.0
      %4317 = vmatprep.subr.mxu0 0.0
      %4318 = vmatpush2.msra.mxu0 0.0
      %4319 = vmatprep.subr.mxu0 0.0
      %4320 = vmatpush2.msra.mxu0 0.0
      %4321 = vmatprep.subr.mxu0 0.0
      %4322 = vmatpush2.msra.mxu0 0.0
      %4323 = vmatprep.subr.mxu0 0.0
      %4324 = vmatpush2.msra.mxu0 0.0
      %4325 = vmatprep.subr.mxu0 0.0
      %4326 = vmatpush2.msra.mxu0 0.0
      %4327 = vmatprep.subr.mxu0 0.0
      %4328 = vmatpush2.msra.mxu0 0.0
      %4329 = vmatprep.subr.mxu0 0.0
      %4330 = vmatpush2.msra.mxu0 0.0
      %4331 = vmatprep.subr.mxu0 0.0
      %4332 = vmatpush2.msra.mxu0 0.0
      %4333 = vmatprep.subr.mxu0 0.0
      %4334 = vmatpush2.msra.mxu0 0.0
      %4335 = vmatprep.subr.mxu0 0.0
      %4336 = vmatpush2.msra.mxu0 0.0
      %4337 = vmatprep.subr.mxu0 0.0
      %4338 = vmatpush2.msra.mxu0 0.0
      %4339 = vmatprep.mubr.f32.mxu0 0.0
      %4340 = vmatmul.mubr.f32.gmra.mxu0 %v4249
      %v4341 = vpop.f32.mrf.mxu0
      %v4342 = vadd.f32 0.0, %v4341
      %v4343 = vpop.f32.mrf.mxu0
      %4344 = vmatprep.mubr.f32.mxu0 0.0
      %4345 = vmatmul.mubr.f32.gmra.mxu0 %v4252
      %v4346 = vpop.f32.mrf.mxu0
      %v4347 = vadd.f32 0.0, %v4346
      %v4348 = vpop.f32.mrf.mxu0
      %4349 = vmatprep.mubr.f32.mxu0 0.0
      %4350 = vmatmul.mubr.f32.gmra.mxu0 %v4255
      %v4351 = vpop.f32.mrf.mxu0
      %v4352 = vadd.f32 0.0, %v4351
      %v4353 = vpop.f32.mrf.mxu0
      %4354 = vmatprep.mubr.f32.mxu0 0.0
      %4355 = vmatmul.mubr.f32.gmra.mxu0 %v4258
      %v4356 = vpop.f32.mrf.mxu0
      %v4357 = vadd.f32 0.0, %v4356
      %v4358 = vpop.f32.mrf.mxu0
      %4359 = vmatprep.mubr.f32.mxu0 0.0
      %4360 = vmatmul.mubr.f32.gmra.mxu0 %v4261
      %v4361 = vpop.f32.mrf.mxu0
      %v4362 = vadd.f32 0.0, %v4361
      %v4363 = vpop.f32.mrf.mxu0
      %4364 = vmatprep.mubr.f32.mxu0 0.0
      %4365 = vmatmul.mubr.f32.gmra.mxu0 %v4264
      %v4366 = vpop.f32.mrf.mxu0
      %v4367 = vadd.f32 0.0, %v4366
      %v4368 = vpop.f32.mrf.mxu0
      %4369 = vmatprep.mubr.f32.mxu0 0.0
      %4370 = vmatmul.mubr.f32.gmra.mxu0 %v4267
      %v4371 = vpop.f32.mrf.mxu0
      %v4372 = vadd.f32 0.0, %v4371
      %v4373 = vpop.f32.mrf.mxu0
      %4374 = vmatprep.mubr.f32.mxu0 0.0
      %4375 = vmatmul.mubr.f32.gmra.mxu0 %v4270
      %v4376 = vpop.f32.mrf.mxu0
      %v4377 = vadd.f32 0.0, %v4376
      %v4378 = vpop.f32.mrf.mxu0
      %4379 = vdwg.mxu0
      %v4380 = vadd.f32 %v4230, %v4342
      %v4381 = vadd.f32 %v4231, %v4347
      %v4382 = vadd.f32 %v4232, %v4352
      %v4383 = vadd.f32 %v4233, %v4357
      %v4384 = vadd.f32 %v4234, %v4362
      %v4385 = vadd.f32 %v4235, %v4367
      %v4386 = vadd.f32 %v4236, %v4372
      %v4387 = vadd.f32 %v4237, %v4377
      %v4388 = vld [vmem:[#allocation2 + $0x43] sm:$0xff]
      %v4389 = vld [vmem:[#allocation2 + $0x4b] sm:$0xff]
      %v4390 = vld [vmem:[#allocation2 + $0x53] sm:$0xff]
      %v4391 = vld [vmem:[#allocation2 + $0x5b] sm:$0xff]
      %v4392 = vld [vmem:[#allocation2 + $0x63] sm:$0xff]
      %v4393 = vld [vmem:[#allocation2 + $0x6b] sm:$0xff]
      %v4394 = vld [vmem:[#allocation2 + $0x73] sm:$0xff]
      %v4395 = vld [vmem:[#allocation2 + $0x7b] sm:$0xff]
      %v4396 = vsel %vm1212, %v4388, 0.0
      %v4397 = vsel %vm1213, %v4389, 0.0
      %v4398 = vsel %vm1214, %v4390, 0.0
      %v4399 = vsel %vm1215, %v4391, 0.0
      %v4400 = vsel %vm1216, %v4392, 0.0
      %v4401 = vsel %vm1217, %v4393, 0.0
      %v4402 = vsel %vm1218, %v4394, 0.0
      %v4403 = vsel %vm1219, %v4395, 0.0
      %s4404 = scalar_lea.vmem %s1, 92
      %v4405 = vld [vmem:[%s4404] sm:$0xf]
      %v4407 = vsel %vm503, %v4396, 0
      %v4410 = vsel %vm503, %v4397, 0
      %v4413 = vsel %vm503, %v4398, 0
      %v4416 = vsel %vm503, %v4399, 0
      %v4419 = vsel %vm503, %v4400, 0
      %v4422 = vsel %vm503, %v4401, 0
      %v4425 = vsel %vm503, %v4402, 0
      %v4428 = vsel %vm503, %v4403, 0
      %v4431 = vsel %vm773, %v4405, 0
      %4433 = vmatprep.subr.mxu0 0.0
      %4434 = vmatpush1.msra.mxu0 0.0
      %4435 = vmatprep.subr.mxu0 0.0
      %4436 = vmatpush1.msra.mxu0 0.0
      %4437 = vmatprep.subr.mxu0 0.0
      %4438 = vmatpush1.msra.mxu0 0.0
      %4439 = vmatprep.subr.mxu0 0.0
      %4440 = vmatpush1.msra.mxu0 0.0
      %4441 = vmatprep.subr.mxu0 0.0
      %4442 = vmatpush1.msra.mxu0 0.0
      %4443 = vmatprep.subr.mxu0 0.0
      %4444 = vmatpush1.msra.mxu0 0.0
      %4445 = vmatprep.subr.mxu0 0.0
      %4446 = vmatpush1.msra.mxu0 0.0
      %4447 = vmatprep.subr.mxu0 0.0
      %4448 = vmatpush1.msra.mxu0 0.0
      %4449 = vmatprep.subr.mxu0 0.0
      %4450 = vmatpush1.msra.mxu0 0.0
      %4451 = vmatprep.subr.mxu0 0.0
      %4452 = vmatpush1.msra.mxu0 0.0
      %4453 = vmatprep.subr.mxu0 0.0
      %4454 = vmatpush1.msra.mxu0 0.0
      %4455 = vmatprep.subr.mxu0 0.0
      %4456 = vmatpush1.msra.mxu0 0.0
      %4457 = vmatprep.subr.mxu0 0.0
      %4458 = vmatpush1.msra.mxu0 0.0
      %4459 = vmatprep.subr.mxu0 0.0
      %4460 = vmatpush1.msra.mxu0 0.0
      %4461 = vmatprep.subr.mxu0 0.0
      %4462 = vmatpush1.msra.mxu0 0.0
      %4463 = vmatprep.subr.mxu0 0.0
      %4464 = vmatpush1.msra.mxu0 %v4431
      %4465 = vmatprep.subr.mxu0 0.0
      %4466 = vmatpush2.msra.mxu0 0.0
      %4467 = vmatprep.subr.mxu0 0.0
      %4468 = vmatpush2.msra.mxu0 0.0
      %4469 = vmatprep.subr.mxu0 0.0
      %4470 = vmatpush2.msra.mxu0 0.0
      %4471 = vmatprep.subr.mxu0 0.0
      %4472 = vmatpush2.msra.mxu0 0.0
      %4473 = vmatprep.subr.mxu0 0.0
      %4474 = vmatpush2.msra.mxu0 0.0
      %4475 = vmatprep.subr.mxu0 0.0
      %4476 = vmatpush2.msra.mxu0 0.0
      %4477 = vmatprep.subr.mxu0 0.0
      %4478 = vmatpush2.msra.mxu0 0.0
      %4479 = vmatprep.subr.mxu0 0.0
      %4480 = vmatpush2.msra.mxu0 0.0
      %4481 = vmatprep.subr.mxu0 0.0
      %4482 = vmatpush2.msra.mxu0 0.0
      %4483 = vmatprep.subr.mxu0 0.0
      %4484 = vmatpush2.msra.mxu0 0.0
      %4485 = vmatprep.subr.mxu0 0.0
      %4486 = vmatpush2.msra.mxu0 0.0
      %4487 = vmatprep.subr.mxu0 0.0
      %4488 = vmatpush2.msra.mxu0 0.0
      %4489 = vmatprep.subr.mxu0 0.0
      %4490 = vmatpush2.msra.mxu0 0.0
      %4491 = vmatprep.subr.mxu0 0.0
      %4492 = vmatpush2.msra.mxu0 0.0
      %4493 = vmatprep.subr.mxu0 0.0
      %4494 = vmatpush2.msra.mxu0 0.0
      %4495 = vmatprep.subr.mxu0 0.0
      %4496 = vmatpush2.msra.mxu0 0.0
      %4497 = vmatprep.mubr.f32.mxu0 0.0
      %4498 = vmatmul.mubr.f32.gmra.mxu0 %v4407
      %v4499 = vpop.f32.mrf.mxu0
      %v4500 = vadd.f32 0.0, %v4499
      %v4501 = vpop.f32.mrf.mxu0
      %4502 = vmatprep.mubr.f32.mxu0 0.0
      %4503 = vmatmul.mubr.f32.gmra.mxu0 %v4410
      %v4504 = vpop.f32.mrf.mxu0
      %v4505 = vadd.f32 0.0, %v4504
      %v4506 = vpop.f32.mrf.mxu0
      %4507 = vmatprep.mubr.f32.mxu0 0.0
      %4508 = vmatmul.mubr.f32.gmra.mxu0 %v4413
      %v4509 = vpop.f32.mrf.mxu0
      %v4510 = vadd.f32 0.0, %v4509
      %v4511 = vpop.f32.mrf.mxu0
      %4512 = vmatprep.mubr.f32.mxu0 0.0
      %4513 = vmatmul.mubr.f32.gmra.mxu0 %v4416
      %v4514 = vpop.f32.mrf.mxu0
      %v4515 = vadd.f32 0.0, %v4514
      %v4516 = vpop.f32.mrf.mxu0
      %4517 = vmatprep.mubr.f32.mxu0 0.0
      %4518 = vmatmul.mubr.f32.gmra.mxu0 %v4419
      %v4519 = vpop.f32.mrf.mxu0
      %v4520 = vadd.f32 0.0, %v4519
      %v4521 = vpop.f32.mrf.mxu0
      %4522 = vmatprep.mubr.f32.mxu0 0.0
      %4523 = vmatmul.mubr.f32.gmra.mxu0 %v4422
      %v4524 = vpop.f32.mrf.mxu0
      %v4525 = vadd.f32 0.0, %v4524
      %v4526 = vpop.f32.mrf.mxu0
      %4527 = vmatprep.mubr.f32.mxu0 0.0
      %4528 = vmatmul.mubr.f32.gmra.mxu0 %v4425
      %v4529 = vpop.f32.mrf.mxu0
      %v4530 = vadd.f32 0.0, %v4529
      %v4531 = vpop.f32.mrf.mxu0
      %4532 = vmatprep.mubr.f32.mxu0 0.0
      %4533 = vmatmul.mubr.f32.gmra.mxu0 %v4428
      %v4534 = vpop.f32.mrf.mxu0
      %v4535 = vadd.f32 0.0, %v4534
      %v4536 = vpop.f32.mrf.mxu0
      %4537 = vdwg.mxu0
      %v4538 = vadd.f32 %v4380, %v4500
      %v4539 = vadd.f32 %v4381, %v4505
      %v4540 = vadd.f32 %v4382, %v4510
      %v4541 = vadd.f32 %v4383, %v4515
      %v4542 = vadd.f32 %v4384, %v4520
      %v4543 = vadd.f32 %v4385, %v4525
      %v4544 = vadd.f32 %v4386, %v4530
      %v4545 = vadd.f32 %v4387, %v4535
      %v4546 = vld [vmem:[#allocation2 + $0x44] sm:$0xff]
      %v4547 = vld [vmem:[#allocation2 + $0x4c] sm:$0xff]
      %v4548 = vld [vmem:[#allocation2 + $0x54] sm:$0xff]
      %v4549 = vld [vmem:[#allocation2 + $0x5c] sm:$0xff]
      %v4550 = vld [vmem:[#allocation2 + $0x64] sm:$0xff]
      %v4551 = vld [vmem:[#allocation2 + $0x6c] sm:$0xff]
      %v4552 = vld [vmem:[#allocation2 + $0x74] sm:$0xff]
      %v4553 = vld [vmem:[#allocation2 + $0x7c] sm:$0xff]
      %v4554 = vsel %vm1418, %v4546, 0.0
      %v4555 = vsel %vm1419, %v4547, 0.0
      %v4556 = vsel %vm1420, %v4548, 0.0
      %v4557 = vsel %vm1421, %v4549, 0.0
      %v4558 = vsel %vm1422, %v4550, 0.0
      %v4559 = vsel %vm1423, %v4551, 0.0
      %v4560 = vsel %vm1424, %v4552, 0.0
      %v4561 = vsel %vm1425, %v4553, 0.0
      %s4562 = scalar_lea.vmem %s1, 96
      %v4563 = vld [vmem:[%s4562] sm:$0xf]
      %v4565 = vsel %vm503, %v4554, 0
      %v4568 = vsel %vm503, %v4555, 0
      %v4571 = vsel %vm503, %v4556, 0
      %v4574 = vsel %vm503, %v4557, 0
      %v4577 = vsel %vm503, %v4558, 0
      %v4580 = vsel %vm503, %v4559, 0
      %v4583 = vsel %vm503, %v4560, 0
      %v4586 = vsel %vm503, %v4561, 0
      %v4589 = vsel %vm773, %v4563, 0
      %4591 = vmatprep.subr.mxu0 0.0
      %4592 = vmatpush1.msra.mxu0 0.0
      %4593 = vmatprep.subr.mxu0 0.0
      %4594 = vmatpush1.msra.mxu0 0.0
      %4595 = vmatprep.subr.mxu0 0.0
      %4596 = vmatpush1.msra.mxu0 0.0
      %4597 = vmatprep.subr.mxu0 0.0
      %4598 = vmatpush1.msra.mxu0 0.0
      %4599 = vmatprep.subr.mxu0 0.0
      %4600 = vmatpush1.msra.mxu0 0.0
      %4601 = vmatprep.subr.mxu0 0.0
      %4602 = vmatpush1.msra.mxu0 0.0
      %4603 = vmatprep.subr.mxu0 0.0
      %4604 = vmatpush1.msra.mxu0 0.0
      %4605 = vmatprep.subr.mxu0 0.0
      %4606 = vmatpush1.msra.mxu0 0.0
      %4607 = vmatprep.subr.mxu0 0.0
      %4608 = vmatpush1.msra.mxu0 0.0
      %4609 = vmatprep.subr.mxu0 0.0
      %4610 = vmatpush1.msra.mxu0 0.0
      %4611 = vmatprep.subr.mxu0 0.0
      %4612 = vmatpush1.msra.mxu0 0.0
      %4613 = vmatprep.subr.mxu0 0.0
      %4614 = vmatpush1.msra.mxu0 0.0
      %4615 = vmatprep.subr.mxu0 0.0
      %4616 = vmatpush1.msra.mxu0 0.0
      %4617 = vmatprep.subr.mxu0 0.0
      %4618 = vmatpush1.msra.mxu0 0.0
      %4619 = vmatprep.subr.mxu0 0.0
      %4620 = vmatpush1.msra.mxu0 0.0
      %4621 = vmatprep.subr.mxu0 0.0
      %4622 = vmatpush1.msra.mxu0 %v4589
      %4623 = vmatprep.subr.mxu0 0.0
      %4624 = vmatpush2.msra.mxu0 0.0
      %4625 = vmatprep.subr.mxu0 0.0
      %4626 = vmatpush2.msra.mxu0 0.0
      %4627 = vmatprep.subr.mxu0 0.0
      %4628 = vmatpush2.msra.mxu0 0.0
      %4629 = vmatprep.subr.mxu0 0.0
      %4630 = vmatpush2.msra.mxu0 0.0
      %4631 = vmatprep.subr.mxu0 0.0
      %4632 = vmatpush2.msra.mxu0 0.0
      %4633 = vmatprep.subr.mxu0 0.0
      %4634 = vmatpush2.msra.mxu0 0.0
      %4635 = vmatprep.subr.mxu0 0.0
      %4636 = vmatpush2.msra.mxu0 0.0
      %4637 = vmatprep.subr.mxu0 0.0
      %4638 = vmatpush2.msra.mxu0 0.0
      %4639 = vmatprep.subr.mxu0 0.0
      %4640 = vmatpush2.msra.mxu0 0.0
      %4641 = vmatprep.subr.mxu0 0.0
      %4642 = vmatpush2.msra.mxu0 0.0
      %4643 = vmatprep.subr.mxu0 0.0
      %4644 = vmatpush2.msra.mxu0 0.0
      %4645 = vmatprep.subr.mxu0 0.0
      %4646 = vmatpush2.msra.mxu0 0.0
      %4647 = vmatprep.subr.mxu0 0.0
      %4648 = vmatpush2.msra.mxu0 0.0
      %4649 = vmatprep.subr.mxu0 0.0
      %4650 = vmatpush2.msra.mxu0 0.0
      %4651 = vmatprep.subr.mxu0 0.0
      %4652 = vmatpush2.msra.mxu0 0.0
      %4653 = vmatprep.subr.mxu0 0.0
      %4654 = vmatpush2.msra.mxu0 0.0
      %4655 = vmatprep.mubr.f32.mxu0 0.0
      %4656 = vmatmul.mubr.f32.gmra.mxu0 %v4565
      %v4657 = vpop.f32.mrf.mxu0
      %v4658 = vadd.f32 0.0, %v4657
      %v4659 = vpop.f32.mrf.mxu0
      %4660 = vmatprep.mubr.f32.mxu0 0.0
      %4661 = vmatmul.mubr.f32.gmra.mxu0 %v4568
      %v4662 = vpop.f32.mrf.mxu0
      %v4663 = vadd.f32 0.0, %v4662
      %v4664 = vpop.f32.mrf.mxu0
      %4665 = vmatprep.mubr.f32.mxu0 0.0
      %4666 = vmatmul.mubr.f32.gmra.mxu0 %v4571
      %v4667 = vpop.f32.mrf.mxu0
      %v4668 = vadd.f32 0.0, %v4667
      %v4669 = vpop.f32.mrf.mxu0
      %4670 = vmatprep.mubr.f32.mxu0 0.0
      %4671 = vmatmul.mubr.f32.gmra.mxu0 %v4574
      %v4672 = vpop.f32.mrf.mxu0
      %v4673 = vadd.f32 0.0, %v4672
      %v4674 = vpop.f32.mrf.mxu0
      %4675 = vmatprep.mubr.f32.mxu0 0.0
      %4676 = vmatmul.mubr.f32.gmra.mxu0 %v4577
      %v4677 = vpop.f32.mrf.mxu0
      %v4678 = vadd.f32 0.0, %v4677
      %v4679 = vpop.f32.mrf.mxu0
      %4680 = vmatprep.mubr.f32.mxu0 0.0
      %4681 = vmatmul.mubr.f32.gmra.mxu0 %v4580
      %v4682 = vpop.f32.mrf.mxu0
      %v4683 = vadd.f32 0.0, %v4682
      %v4684 = vpop.f32.mrf.mxu0
      %4685 = vmatprep.mubr.f32.mxu0 0.0
      %4686 = vmatmul.mubr.f32.gmra.mxu0 %v4583
      %v4687 = vpop.f32.mrf.mxu0
      %v4688 = vadd.f32 0.0, %v4687
      %v4689 = vpop.f32.mrf.mxu0
      %4690 = vmatprep.mubr.f32.mxu0 0.0
      %4691 = vmatmul.mubr.f32.gmra.mxu0 %v4586
      %v4692 = vpop.f32.mrf.mxu0
      %v4693 = vadd.f32 0.0, %v4692
      %v4694 = vpop.f32.mrf.mxu0
      %4695 = vdwg.mxu0
      %v4696 = vadd.f32 %v4538, %v4658
      %v4697 = vadd.f32 %v4539, %v4663
      %v4698 = vadd.f32 %v4540, %v4668
      %v4699 = vadd.f32 %v4541, %v4673
      %v4700 = vadd.f32 %v4542, %v4678
      %v4701 = vadd.f32 %v4543, %v4683
      %v4702 = vadd.f32 %v4544, %v4688
      %v4703 = vadd.f32 %v4545, %v4693
      %vm4704 = vcmask 64512
      %4705 = vst.msk [vmem:[%s273] sm:$0xff] %vm4704, %v4696
      %4706 = vst.msk [vmem:[%s273 + $0x8] sm:$0xff] %vm4704, %v4697
      %4707 = vst.msk [vmem:[%s273 + $0x10] sm:$0xff] %vm4704, %v4698
      %4708 = vst.msk [vmem:[%s273 + $0x18] sm:$0xff] %vm4704, %v4699
      %4709 = vst.msk [vmem:[%s273 + $0x20] sm:$0xff] %vm4704, %v4700
      %4710 = vst.msk [vmem:[%s273 + $0x28] sm:$0xff] %vm4704, %v4701
      %4711 = vst.msk [vmem:[%s273 + $0x30] sm:$0xff] %vm4704, %v4702
      %4712 = vst.msk [vmem:[%s273 + $0x38] sm:$0xff] %vm4704, %v4703
      %v4713 = vsel %vm4704, %v4696, 0.0
      %v4714 = vsel %vm4704, %v4697, 0.0
      %v4715 = vadd.f32 %v4713, %v4714
      %v4716 = vsel %vm4704, %v4698, 0.0
      %v4717 = vadd.f32 %v4715, %v4716
      %v4718 = vsel %vm4704, %v4699, 0.0
      %v4719 = vadd.f32 %v4717, %v4718
      %v4720 = vsel %vm4704, %v4700, 0.0
      %v4721 = vadd.f32 %v4719, %v4720
      %v4722 = vsel %vm4704, %v4701, 0.0
      %v4723 = vadd.f32 %v4721, %v4722
      %v4724 = vsel %vm4704, %v4702, 0.0
      %v4725 = vadd.f32 %v4723, %v4724
      %v4726 = vsel %vm4704, %v4703, 0.0
      %v4727 = vadd.f32 %v4725, %v4726
      %v4728 = vrot.slane %v4727, 4
      %v4729 = vadd.f32 %v4727, %v4728
      %v4730 = vrot.slane %v4729, 2
      %v4731 = vadd.f32 %v4729, %v4730
      %v4732 = vrot.slane %v4731, 1
      %v4733 = vadd.f32 %v4731, %v4732
      %v4734 = vmul.f32 %v4696, %v4696
      %v4735 = vmul.f32 %v4697, %v4697
      %v4736 = vmul.f32 %v4698, %v4698
      %v4737 = vmul.f32 %v4699, %v4699
      %v4738 = vmul.f32 %v4700, %v4700
      %v4739 = vmul.f32 %v4701, %v4701
      %v4740 = vmul.f32 %v4702, %v4702
      %v4741 = vmul.f32 %v4703, %v4703
      %v4742 = vsel %vm4704, %v4734, 0.0
      %v4743 = vsel %vm4704, %v4735, 0.0
      %v4744 = vadd.f32 %v4742, %v4743
      %v4745 = vsel %vm4704, %v4736, 0.0
      %v4746 = vadd.f32 %v4744, %v4745
      %v4747 = vsel %vm4704, %v4737, 0.0
      %v4748 = vadd.f32 %v4746, %v4747
      %v4749 = vsel %vm4704, %v4738, 0.0
      %v4750 = vadd.f32 %v4748, %v4749
      %v4751 = vsel %vm4704, %v4739, 0.0
      %v4752 = vadd.f32 %v4750, %v4751
      %v4753 = vsel %vm4704, %v4740, 0.0
      %v4754 = vadd.f32 %v4752, %v4753
      %v4755 = vsel %vm4704, %v4741, 0.0
      %v4756 = vadd.f32 %v4754, %v4755
      %v4757 = vrot.slane %v4756, 4
      %v4758 = vadd.f32 %v4756, %v4757
      %v4759 = vrot.slane %v4758, 2
      %v4760 = vadd.f32 %v4758, %v4759
      %v4761 = vrot.slane %v4760, 1
      %v4762 = vadd.f32 %v4760, %v4761
      %vm4763 = vcmask 1040384
      %v4764 = vsel %vm4763, %v4733, %v4762
      %vm4765 = vcmask 58368
      %4766 = vst.msk [vmem:[%s281] sm:$0x3] %vm4765, %v4764
      %p4767 = scmp.lt.s32.totalorder %s21, 1
      %s4768 = scalar_select %p4767, %s21, 1
      %p4769 = scmp.lt.s32.totalorder %s22, 3
      %s4770 = scalar_select %p4769, %s22, 3
      %s4771 = smul.addr %s4770, 8
      %s4772 = smul.addr %s4768, 32
      %s4773 = sadd.s32 %s4771, %s4772
      %s4774 = smul.addr %s4773, 8
      %s4775 = scalar_lea.vmem %s4, %s4774
      %p4776 = scmp.lt.s32.totalorder %s21, 1
      %s4777 = scalar_select %p4776, %s21, 1
      %p4778 = scmp.lt.s32.totalorder %s22, 3
      %s4779 = scalar_select %p4778, %s22, 3
      %s4780 = smul.addr %s4777, 4
      %s4781 = sadd.s32 %s4779, %s4780
      %s4782 = smul.addr %s4781, 2
      %s4783 = scalar_lea.vmem %s5, %s4782
      // Predicated region
      $region37: #{complex_inception_forward.12} parent=35 // pred_check
        %p4784 = pneg %p140
      $region38: #{complex_inception_forward.12} parent=35 // pred_check_branch
        %4786 = sbr.rel (%p4784) target = $region40
      $region39: #{complex_inception_forward.12} parent=35 // pred_region
        _
      $region40: #{complex_inception_forward.12} parent=35 // pred_fallthru
        _
      // Predicated region
      $region41: #{complex_inception_forward.12} parent=35 // pred_check
        %p4787 = pneg %p168
      $region42: #{complex_inception_forward.12} parent=35 // pred_check_branch
        %4789 = sbr.rel (%p4787) target = $region44
      $region43: #{complex_inception_forward.12} parent=35 // pred_region
        _
      $region44: #{complex_inception_forward.12} parent=35 // pred_fallthru
        _
    $region36: #{complex_inception_forward.12} parent=5 // pred_fallthru
      _
    %p4790 = scmp.le.s32.totalorder 2, %s12
    // Predicated region
    $region45: #{complex_inception_forward.12} parent=5 // pred_check
      %p4791 = pneg %p4790
    $region46: #{complex_inception_forward.12} parent=5 // pred_check_branch
      %4793 = sbr.rel (%p4791) target = $region48
    $region47: #{complex_inception_forward.12} parent=5 // pred_region
      %s4794 = ssub.s32 %s12, 2
      // Predicated region
      $region49: #{complex_inception_forward.12} parent=47 // pred_check
        %p4795 = pneg %p146
      $region50: #{complex_inception_forward.12} parent=47 // pred_check_branch
        %4797 = sbr.rel (%p4795) target = $region52
      $region51: #{complex_inception_forward.12} parent=47 // pred_region
        %p4798 = scmp.lt.s32.totalorder %s23, 1
        %s4799 = scalar_select %p4798, %s23, 1
        %p4800 = scmp.lt.s32.totalorder %s24, 3
        %s4801 = scalar_select %p4800, %s24, 3
        %s4802 = smul.addr %s4801, 8
        %s4803 = smul.addr %s4799, 32
        %s4804 = sadd.s32 %s4802, %s4803
        %s4805 = smul.addr %s4804, 8
        %s4806 = scalar_lea.vmem %s4, %s4805
      $region52: #{complex_inception_forward.12} parent=47 // pred_fallthru
        _
      // Predicated region
      $region53: #{complex_inception_forward.12} parent=47 // pred_check
        %p4807 = pneg %p174
      $region54: #{complex_inception_forward.12} parent=47 // pred_check_branch
        %4809 = sbr.rel (%p4807) target = $region56
      $region55: #{complex_inception_forward.12} parent=47 // pred_region
        %p4810 = scmp.lt.s32.totalorder %s23, 1
        %s4811 = scalar_select %p4810, %s23, 1
        %p4812 = scmp.lt.s32.totalorder %s24, 3
        %s4813 = scalar_select %p4812, %s24, 3
        %s4814 = smul.addr %s4811, 4
        %s4815 = sadd.s32 %s4813, %s4814
        %s4816 = smul.addr %s4815, 2
        %s4817 = scalar_lea.vmem %s5, %s4816
      $region56: #{complex_inception_forward.12} parent=47 // pred_fallthru
        _
    $region48: #{complex_inception_forward.12} parent=5 // pred_fallthru
      _
  $region6: #{complex_inception_forward.12} parent=0 // loop_footer
    %s16 = sadd.s32 1, %s12
  $region7: #{complex_inception_forward.12} parent=0 // loop_footer_branch
    %11 = sbr.rel target = $region3
  $region8: #{complex_inception_forward.12} parent=0 // loop_exit
    _

</llo_original>
